<compile_context>
chip_gen: v7x
topology: tpu7x:2x2x1
jax: 0.10.0
libtpu: 0.0.40
codegen_flags: <defaults>
</compile_context>

<pallas_src>
import functools

import jax
import jax.numpy as jnp
from jax.experimental import pallas as pl
from jax.experimental.pallas import tpu as pltpu

BN_EPS = 1e-5


# ----------------------------------------------------------------------------
# small helpers (plain-JAX glue)
# ----------------------------------------------------------------------------
def _round_up(x, m):
    return (x + m - 1) // m * m


def _pad_axis(x, mult, axis):
    size = x.shape[axis]
    pad = (-size) % mult
    if pad == 0:
        return x
    widths = [(0, 0)] * x.ndim
    widths[axis] = (0, pad)
    return jnp.pad(x, widths)


def _im2col(x, kh, kw, stride, pad):
    """x: (N, H, W, C) -> (N*Ho*Wo, kh*kw*C), (N, Ho, Wo).  Fallback path only."""
    N, H, W, C = x.shape
    if pad > 0:
        x = jnp.pad(x, ((0, 0), (pad, pad), (pad, pad), (0, 0)))
    Ho = (H + 2 * pad - kh) // stride + 1
    Wo = (W + 2 * pad - kw) // stride + 1
    cols = []
    for ky in range(kh):
        for kx in range(kw):
            cols.append(x[:, ky:ky + stride * (Ho - 1) + 1:stride,
                             kx:kx + stride * (Wo - 1) + 1:stride, :])
    patches = jnp.stack(cols, axis=3)          # (N, Ho, Wo, kh*kw, C)
    return patches.reshape(N * Ho * Wo, kh * kw * C), (N, Ho, Wo)


# ----------------------------------------------------------------------------
# shared in-kernel epilogue: bf16 cast of the fp32 accumulator + BN statistics
# ----------------------------------------------------------------------------
def _bn_stats_epilogue(acc, y_ref, sum_ref, sq_ref):
    y_ref[...] = acc.astype(y_ref.dtype)
    s = jnp.sum(acc, axis=0, keepdims=True)
    q = jnp.sum(acc * acc, axis=0, keepdims=True)
    row = jax.lax.broadcasted_iota(jnp.int32, sum_ref.shape, 0)
    sum_ref[...] = jnp.where(row == 0, jnp.broadcast_to(s, sum_ref.shape), 0.0)
    sq_ref[...] = jnp.where(row == 0, jnp.broadcast_to(q, sq_ref.shape), 0.0)


def _accumulate_and_finish(part, y_ref, sum_ref, sq_ref, acc_ref, nk):
    if nk == 1:
        # single k step: write the dot result directly, no RMW accumulate pass
        _bn_stats_epilogue(part, y_ref, sum_ref, sq_ref)
        return

    k = pl.program_id(2)

    @pl.when(k == 0)
    def _():
        acc_ref[...] = part

    @pl.when(k > 0)
    def _():
        acc_ref[...] = acc_ref[...] + part

    @pl.when(k == nk - 1)
    def _():
        _bn_stats_epilogue(acc_ref[...], y_ref, sum_ref, sq_ref)


# ----------------------------------------------------------------------------
# Pallas kernel 1: bf16 GEMM, fp32 accumulation, bf16 output + BN-stat epilogue
# (optionally with the previous layer's BN-affine+ReLU fused into the A load)
# ----------------------------------------------------------------------------
def _gemm_bn_kernel(a_ref, b_ref, y_ref, sum_ref, sq_ref, acc_ref, *, nk):
    part = jnp.dot(a_ref[...], b_ref[...], preferred_element_type=jnp.float32)
    _accumulate_and_finish(part, y_ref, sum_ref, sq_ref, acc_ref, nk)


def _gemm_affine_bn_kernel(a_ref, s_ref, t_ref, b_ref, y_ref, sum_ref, sq_ref,
                           acc_ref, *, nk, tm, true_m, mask_rows):
    # fused prologue: relu(a * scale + shift) applied to the previous conv's
    # raw bf16 output while building this layer's bf16 A tile
    a = jnp.maximum(a_ref[...].astype(jnp.float32) * s_ref[...] + t_ref[...],
                    0.0)
    if mask_rows:
        # keep padded M rows at exactly zero so the BN statistics stay correct
        row = (jax.lax.broadcasted_iota(jnp.int32, a.shape, 0)
               + pl.program_id(0) * tm)
        a = jnp.where(row < true_m, a, 0.0)
    part = jnp.dot(a.astype(jnp.bfloat16), b_ref[...],
                   preferred_element_type=jnp.float32)
    _accumulate_and_finish(part, y_ref, sum_ref, sq_ref, acc_ref, nk)


def _pick_tiles(M, K, N):
    tm = min(256, _round_up(M, 8))
    if M > 8 and M <= tm:
        tm = _round_up((M + 1) // 2, 8)          # >= 2 M-tiles for v7x 2-core
    tn = min(256, _round_up(N, 128)) if N >= 128 else N
    tk = K if K <= 2048 else 2048                # big k tiles; VMEM is cheap
    return tm, tn, tk


def pallas_gemm_bn(a, b, scale=None, shift=None, out_dtype=jnp.bfloat16):
    """a:(M,K) @ b:(K,N) -> (y out_dtype (M,N), col_sum (N,), col_sqsum (N,)).

    If scale/shift (shape (K,)) are given, the A operand is replaced in-kernel
    by relu(a * scale + shift) (fused BN-apply prologue of the previous layer).
    """
    M, K = a.shape
    K2, N = b.shape
    assert K == K2
    tm, tn, tk = _pick_tiles(M, K, N)

    a_p = _pad_axis(_pad_axis(a.astype(jnp.bfloat16), tm, 0), tk, 1)
    b_p = _pad_axis(_pad_axis(b.astype(jnp.bfloat16), tk, 0), tn, 1)
    Mp, Kp = a_p.shape
    Np = b_p.shape[1]
    gi, gj, gk = Mp // tm, Np // tn, Kp // tk

    if scale is None:
        kernel = functools.partial(_gemm_bn_kernel, nk=gk)
        in_specs = [pl.BlockSpec((tm, tk), lambda i, j, k: (i, k)),
                    pl.BlockSpec((tk, tn), lambda i, j, k: (k, j))]
        args = (a_p, b_p)
    else:
        s_p = _pad_axis(scale.reshape(1, K).astype(jnp.float32), tk, 1)
        t_p = _pad_axis(shift.reshape(1, K).astype(jnp.float32), tk, 1)
        kernel = functools.partial(_gemm_affine_bn_kernel, nk=gk, tm=tm,
                                   true_m=M, mask_rows=(Mp != M))
        in_specs = [pl.BlockSpec((tm, tk), lambda i, j, k: (i, k)),
                    pl.BlockSpec((1, tk), lambda i, j, k: (0, k)),
                    pl.BlockSpec((1, tk), lambda i, j, k: (0, k)),
                    pl.BlockSpec((tk, tn), lambda i, j, k: (k, j))]
        args = (a_p, s_p, t_p, b_p)

    y, psum, psq = pl.pallas_call(
        kernel,
        out_shape=(jax.ShapeDtypeStruct((Mp, Np), out_dtype),
                   jax.ShapeDtypeStruct((gi * 8, Np), jnp.float32),
                   jax.ShapeDtypeStruct((gi * 8, Np), jnp.float32)),
        grid_spec=pltpu.PrefetchScalarGridSpec(
            num_scalar_prefetch=0,
            grid=(gi, gj, gk),
            in_specs=in_specs,
            out_specs=(pl.BlockSpec((tm, tn), lambda i, j, k: (i, j)),
                       pl.BlockSpec((8, tn), lambda i, j, k: (i, j)),
                       pl.BlockSpec((8, tn), lambda i, j, k: (i, j))),
            scratch_shapes=[pltpu.VMEM((tm, tn), jnp.float32)]),
        compiler_params=pltpu.CompilerParams(
            dimension_semantics=("parallel", "parallel", "arbitrary")),
    )(*args)

    col_sum = jnp.sum(psum, axis=0)[:N]
    col_sq = jnp.sum(psq, axis=0)[:N]
    return y[:M, :N], col_sum, col_sq


# ----------------------------------------------------------------------------
# Pallas kernel 2: direct 3x3 / stride-1 / pad-1 conv (no im2col in HBM)
# 9 shifted-window GEMMs against a VMEM-resident padded sample + BN stats
# ----------------------------------------------------------------------------
def _conv3x3_bn_kernel(x_ref, w_ref, y_ref, sum_ref, sq_ref, *, H, W, C1, C2):
    acc = jnp.zeros((H * W, C2), jnp.float32)
    for ky in range(3):
        for kx in range(3):
            a = x_ref[ky:ky + H, kx:kx + W, :].reshape(H * W, C1)
            acc = acc + jnp.dot(a, w_ref[ky, kx],
                                preferred_element_type=jnp.float32)
    _bn_stats_epilogue(acc, y_ref, sum_ref, sq_ref)


def _conv3x3_fits(H, W, C1, C2):
    # keep the collapse-reshape layout-trivial and the per-sample block small
    vmem = (2 * (H + 2) * (W + 2) * C1 * 2      # padded input, double buffered
            + H * W * C2 * 4                    # fp32 accumulator
            + 2 * H * W * C2 * 2                # bf16 output, double buffered
            + 9 * C1 * C2 * 2)                  # weights
    return (W % 8 == 0) and vmem <= 24 * 1024 * 1024


def pallas_conv3x3_bn(x_nhwc, w, out_dtype=jnp.bfloat16):
    """x_nhwc: (N,H,W,C1); w: (3,3,C1,C2) -> (y (N*H*W,C2), col_sum, col_sq)."""
    N, H, W, C1 = x_nhwc.shape
    C2 = w.shape[-1]
    x_pad = jnp.pad(x_nhwc.astype(jnp.bfloat16),
                    ((0, 0), (1, 1), (1, 1), (0, 0)))
    w = w.astype(jnp.bfloat16)

    kernel = functools.partial(_conv3x3_bn_kernel, H=H, W=W, C1=C1, C2=C2)
    y, psum, psq = pl.pallas_call(
        kernel,
        out_shape=(jax.ShapeDtypeStruct((N, H * W, C2), out_dtype),
                   jax.ShapeDtypeStruct((N * 8, C2), jnp.float32),
                   jax.ShapeDtypeStruct((N * 8, C2), jnp.float32)),
        grid_spec=pltpu.PrefetchScalarGridSpec(
            num_scalar_prefetch=0,
            grid=(N,),
            in_specs=[pl.BlockSpec((None, H + 2, W + 2, C1),
                                   lambda n: (n, 0, 0, 0)),
                      pl.BlockSpec((3, 3, C1, C2), lambda n: (0, 0, 0, 0))],
            out_specs=(pl.BlockSpec((None, H * W, C2), lambda n: (n, 0, 0)),
                       pl.BlockSpec((8, C2), lambda n: (n, 0)),
                       pl.BlockSpec((8, C2), lambda n: (n, 0)))),
        compiler_params=pltpu.CompilerParams(
            dimension_semantics=("parallel",)),
    )(x_pad, w)

    return y.reshape(N * H * W, C2), jnp.sum(psum, axis=0), jnp.sum(psq, axis=0)


# ----------------------------------------------------------------------------
# Pallas kernel 3: fused BN-apply (+residual) (+ReLU), lane-dense elementwise
# ----------------------------------------------------------------------------
def _bn_affine_kernel(x_ref, s_ref, b_ref, o_ref, *, relu):
    y = x_ref[...].astype(jnp.float32) * s_ref[...] + b_ref[...]
    if relu:
        y = jnp.maximum(y, 0.0)
    o_ref[...] = y.astype(o_ref.dtype)


def _bn_affine_res_kernel(x_ref, s_ref, b_ref, r_ref, o_ref, *, relu):
    y = (x_ref[...].astype(jnp.float32) * s_ref[...] + b_ref[...]
         + r_ref[...].astype(jnp.float32))
    if relu:
        y = jnp.maximum(y, 0.0)
    o_ref[...] = y.astype(o_ref.dtype)


def pallas_bn_affine(x, scale, shift, residual=None, relu=True,
                     out_dtype=jnp.bfloat16):
    """x: (M, C) -> relu(x*scale + shift [+ residual]) in out_dtype."""
    M, C = x.shape
    scale = scale.reshape(1, C).astype(jnp.float32)
    shift = shift.reshape(1, C).astype(jnp.float32)

    # Lane-dense folding: e.g. C=64 -> view rows pairwise as 128 lanes so the
    # stores are unmasked (the channel pattern repeats every C lanes).
    fold = 1
    if C < 128 and 128 % C == 0 and M % (128 // C) == 0:
        fold = 128 // C
    Mf, Cf = M // fold, C * fold
    xf = x.reshape(Mf, Cf)
    sf = jnp.tile(scale, (1, fold))
    bf = jnp.tile(shift, (1, fold))
    rf = None if residual is None else residual.reshape(Mf, Cf)

    tm = min(512, _round_up(Mf, 8))
    if Mf > 8 and Mf // tm < 2:
        tm = _round_up((Mf + 1) // 2, 8)         # >= 2 programs for v7x 2-core
    xf = _pad_axis(xf, tm, 0)
    Mp = xf.shape[0]

    # bump the scoped-VMEM limit only when the double-buffered working set
    # would exceed v5e's 16 MiB default (wide channels at 512-row tiles)
    n_ops = 3 if rf is None else 4
    est = 2 * n_ops * tm * Cf * 4
    vmem_limit = 32 * 1024 * 1024 if est > 12 * 1024 * 1024 else None

    in_specs = [pl.BlockSpec((tm, Cf), lambda i: (i, 0)),
                pl.BlockSpec((1, Cf), lambda i: (0, 0)),
                pl.BlockSpec((1, Cf), lambda i: (0, 0))]
    args = [xf, sf, bf]
    if rf is not None:
        args.append(_pad_axis(rf, tm, 0))
        in_specs.append(pl.BlockSpec((tm, Cf), lambda i: (i, 0)))
        kernel = functools.partial(_bn_affine_res_kernel, relu=relu)
    else:
        kernel = functools.partial(_bn_affine_kernel, relu=relu)

    out = pl.pallas_call(
        kernel,
        out_shape=jax.ShapeDtypeStruct((Mp, Cf), out_dtype),
        grid_spec=pltpu.PrefetchScalarGridSpec(
            num_scalar_prefetch=0,
            grid=(Mp // tm,),
            in_specs=in_specs,
            out_specs=pl.BlockSpec((tm, Cf), lambda i: (i, 0))),
        compiler_params=pltpu.CompilerParams(
            dimension_semantics=("parallel",),
            vmem_limit_bytes=vmem_limit),
    )(*args)
    return out[:Mf].reshape(M, C)


# ----------------------------------------------------------------------------
# BatchNorm (training-mode, batch stats) scale/shift from fused GEMM statistics
# ----------------------------------------------------------------------------
def _bn_scale_shift(col_sum, col_sq, count, gamma, beta):
    mean = col_sum / count
    # biased batch variance; clamp guards E[x^2]-mean^2 cancellation with bf16
    var = jnp.maximum(col_sq / count - mean * mean, 0.0)
    scale = gamma * jax.lax.rsqrt(var + BN_EPS)
    shift = beta - mean * scale
    return scale, shift


# ----------------------------------------------------------------------------
# resnetblock4 forward (identity residual bottleneck, training-mode BN)
# ----------------------------------------------------------------------------
def resnetblock4_forward(params, x_nchw):
    N, Cin, H, W = x_nchw.shape
    # single bf16 cast at the layout change; reused as the bf16 residual read
    x = jnp.transpose(x_nchw, (0, 2, 3, 1)).astype(jnp.bfloat16)   # NHWC bf16
    M = N * H * W
    F1, F2, F3 = (params["w1"].shape[-1], params["w2"].shape[-1],
                  params["w3"].shape[-1])
    f = params["w2"].shape[0]

    # ---- conv1 (1x1) + bn1 statistics --------------------------------------
    y1, s1, q1 = pallas_gemm_bn(x.reshape(M, Cin),
                                params["w1"].reshape(Cin, F1))
    scale1, shift1 = _bn_scale_shift(s1, q1, M, params["g1"], params["b1"])
    # bn1+ReLU must be materialized: conv2's zero padding applies to the
    # post-affine activation, so it cannot be folded into conv2's A prologue.
    a1 = pallas_bn_affine(y1, scale1, shift1, relu=True,
                          out_dtype=jnp.bfloat16)

    # ---- conv2 (fxf, stride 1, padding=1) + bn2 statistics ------------------
    a1_nhwc = a1.reshape(N, H, W, F1)
    if f == 3 and _conv3x3_fits(H, W, F1, F2):
        y2, s2, q2 = pallas_conv3x3_bn(a1_nhwc, params["w2"])
        M2 = M
    else:
        # TODO(synk): generalize the direct (im2col-free) conv kernel to f != 3
        # and to halo-tiled spatial blocks for very large feature maps.
        cols, (n2, ho, wo) = _im2col(a1_nhwc, f, f, stride=1, pad=1)
        y2, s2, q2 = pallas_gemm_bn(cols, params["w2"].reshape(f * f * F1, F2))
        M2 = n2 * ho * wo
    scale2, shift2 = _bn_scale_shift(s2, q2, M2, params["g2"], params["b2"])

    # ---- conv3 (1x1) with bn2-affine+ReLU fused into the A prologue ---------
    y3, s3, q3 = pallas_gemm_bn(y2, params["w3"].reshape(F2, F3),
                                scale=scale2, shift=shift2)
    scale3, shift3 = _bn_scale_shift(s3, q3, M2, params["g3"], params["b3"])

    # ---- bn3 + residual + ReLU (fp32 output) --------------------------------
    out = pallas_bn_affine(y3, scale3, shift3, residual=x.reshape(M, F3),
                           relu=True, out_dtype=jnp.float32)
    return jnp.transpose(out.reshape(N, H, W, F3), (0, 3, 1, 2))   # NCHW


# ----------------------------------------------------------------------------
# deterministic parameter init (shapes from the PyTorch __init__)
# ----------------------------------------------------------------------------
def init_params(key, in_channel, f, filters):
    F1, F2, F3 = filters

    def conv_w(k, kh, kw, ci, co):
        std = (2.0 / (kh * kw * ci)) ** 0.5
        return jax.random.normal(k, (kh, kw, ci, co), jnp.float32) * std

    k1, k2, k3 = jax.random.split(key, 3)
    return dict(
        w1=conv_w(k1, 1, 1, in_channel, F1),
        g1=jnp.ones((F1,), jnp.float32), b1=jnp.zeros((F1,), jnp.float32),
        w2=conv_w(k2, f, f, F1, F2),
        g2=jnp.ones((F2,), jnp.float32), b2=jnp.zeros((F2,), jnp.float32),
        w3=conv_w(k3, 1, 1, F2, F3),
        g3=jnp.ones((F3,), jnp.float32), b3=jnp.zeros((F3,), jnp.float32),
    )


if __name__ == "__main__":
    key = jax.random.PRNGKey(0)
    pkey, xkey = jax.random.split(key)

    # Small shapes consistent with the module: identity block needs F3 == in_channel.
    in_channel, f, filters = 256, 3, (64, 64, 256)
    batch, spatial = 2, 16

    params = init_params(pkey, in_channel, f, filters)
    x = jax.random.normal(xkey, (batch, in_channel, spatial, spatial),
                          jnp.float32)

    fwd = jax.jit(resnetblock4_forward)
    out = jax.block_until_ready(fwd(params, x))

    assert out.shape == (batch, in_channel, spatial, spatial), out.shape
    assert bool(jnp.all(jnp.isfinite(out)))
    print("KERNEL_OK")
</pallas_src>

<mosaic_0001>
module attributes {stable_mosaic.version = 11 : i64} {
  func.func @_gemm_bn_kernel(%arg0: i32, %arg1: i32, %arg2: i32, %arg3: memref<256x256xbf16, #tpu.memory_space<vmem>>, %arg4: memref<256x64xbf16, #tpu.memory_space<vmem>>, %arg5: memref<256x64xbf16, #tpu.memory_space<vmem>>, %arg6: memref<8x64xf32, #tpu.memory_space<vmem>>, %arg7: memref<8x64xf32, #tpu.memory_space<vmem>>, %arg8: memref<256x64xf32, #tpu.memory_space<vmem>>) attributes {dimension_semantics = [#tpu.dimension_semantics<parallel>, #tpu.dimension_semantics<parallel>, #tpu.dimension_semantics<arbitrary>], iteration_bounds = array<i64: 2, 1, 1>, scalar_prefetch = 0 : i64, scratch_operands = 1 : i64, tpu.core_type = #tpu.core_type<tc>, window_params = [{transform_indices = @transform_0, window_bounds = array<i64: 256, 256>}, {transform_indices = @transform_1, window_bounds = array<i64: 256, 64>}, {transform_indices = @transform_2, window_bounds = array<i64: 256, 64>}, {transform_indices = @transform_3, window_bounds = array<i64: 8, 64>}, {transform_indices = @transform_4, window_bounds = array<i64: 8, 64>}]} {
    %c0 = arith.constant 0 : index
    %c0_0 = arith.constant 0 : index
    %0 = vector.load %arg3[%c0, %c0_0] : memref<256x256xbf16, #tpu.memory_space<vmem>>, vector<256x256xbf16>
    %c0_1 = arith.constant 0 : index
    %c0_2 = arith.constant 0 : index
    %1 = vector.load %arg4[%c0_1, %c0_2] : memref<256x64xbf16, #tpu.memory_space<vmem>>, vector<256x64xbf16>
    %cst = arith.constant dense<0.000000e+00> : vector<256x64xf32>
    %2 = tpu.matmul %0, %1, %cst {dimension_numbers = #tpu.dot_dimension_numbers<[1], [0], [0], [1], [0, 0, 1, 1], [], []>} : vector<256x256xbf16>, vector<256x64xbf16>, vector<256x64xf32> -> vector<256x64xf32>
    %3 = arith.truncf %2 : vector<256x64xf32> to vector<256x64xbf16>
    %c0_3 = arith.constant 0 : index
    %c0_4 = arith.constant 0 : index
    %4 = vector.load %arg5[%c0_3, %c0_4] : memref<256x64xbf16, #tpu.memory_space<vmem>>, vector<256x64xbf16>
    tpu.vector_store %arg5[%c0_3, %c0_4], %3 {strides = array<i32>} : memref<256x64xbf16, #tpu.memory_space<vmem>>, vector<256x64xbf16>,
    %cst_5 = arith.constant dense<0.000000e+00> : vector<64xf32>
    %5 = vector.multi_reduction <add>, %2, %cst_5 [0] : vector<256x64xf32> to vector<64xf32>
    %6 = vector.shape_cast %5 : vector<64xf32> to vector<1x64xf32>
    %7 = arith.mulf %2, %2 : vector<256x64xf32>
    %cst_6 = arith.constant dense<0.000000e+00> : vector<64xf32>
    %8 = vector.multi_reduction <add>, %7, %cst_6 [0] : vector<256x64xf32> to vector<64xf32>
    %9 = vector.shape_cast %8 : vector<64xf32> to vector<1x64xf32>
    %10 = tpu.iota {dimensions = array<i32: 0>} : vector<8x64xi32>
    %c0_i32 = arith.constant 0 : i32
    %11 = vector.broadcast %c0_i32 : i32 to vector<8x64xi32>
    %12 = arith.cmpi eq, %10, %11 : vector<8x64xi32>
    %13 = vector.shape_cast %6 : vector<1x64xf32> to vector<1x64xf32>
    %14 = vector.broadcast %13 : vector<1x64xf32> to vector<8x64xf32>
    %cst_7 = arith.constant 0.000000e+00 : f32
    %15 = vector.broadcast %cst_7 : f32 to vector<8x64xf32>
    %16 = arith.select %12, %14, %15 : vector<8x64xi1>, vector<8x64xf32>
    %c0_8 = arith.constant 0 : index
    %c0_9 = arith.constant 0 : index
    %17 = vector.load %arg6[%c0_8, %c0_9] : memref<8x64xf32, #tpu.memory_space<vmem>>, vector<8x64xf32>
    tpu.vector_store %arg6[%c0_8, %c0_9], %16 {strides = array<i32>} : memref<8x64xf32, #tpu.memory_space<vmem>>, vector<8x64xf32>,
    %c0_i32_10 = arith.constant 0 : i32
    %18 = vector.broadcast %c0_i32_10 : i32 to vector<8x64xi32>
    %19 = arith.cmpi eq, %10, %18 : vector<8x64xi32>
    %20 = vector.shape_cast %9 : vector<1x64xf32> to vector<1x64xf32>
    %21 = vector.broadcast %20 : vector<1x64xf32> to vector<8x64xf32>
    %cst_11 = arith.constant 0.000000e+00 : f32
    %22 = vector.broadcast %cst_11 : f32 to vector<8x64xf32>
    %23 = arith.select %19, %21, %22 : vector<8x64xi1>, vector<8x64xf32>
    %c0_12 = arith.constant 0 : index
    %c0_13 = arith.constant 0 : index
    %24 = vector.load %arg7[%c0_12, %c0_13] : memref<8x64xf32, #tpu.memory_space<vmem>>, vector<8x64xf32>
    tpu.vector_store %arg7[%c0_12, %c0_13], %23 {strides = array<i32>} : memref<8x64xf32, #tpu.memory_space<vmem>>, vector<8x64xf32>,
    return
  }
  func.func @transform_0(%arg0: i32, %arg1: i32, %arg2: i32) -> (i32, i32) {
    %c0_i32 = arith.constant 0 : i32
    return %arg0, %arg2 : i32, i32
  }
  func.func @transform_1(%arg0: i32, %arg1: i32, %arg2: i32) -> (i32, i32) {
    %c0_i32 = arith.constant 0 : i32
    return %arg2, %arg1 : i32, i32
  }
  func.func @transform_2(%arg0: i32, %arg1: i32, %arg2: i32) -> (i32, i32) {
    %c0_i32 = arith.constant 0 : i32
    return %arg0, %arg1 : i32, i32
  }
  func.func @transform_3(%arg0: i32, %arg1: i32, %arg2: i32) -> (i32, i32) {
    %c0_i32 = arith.constant 0 : i32
    return %arg0, %arg1 : i32, i32
  }
  func.func @transform_4(%arg0: i32, %arg1: i32, %arg2: i32) -> (i32, i32) {
    %c0_i32 = arith.constant 0 : i32
    return %arg0, %arg1 : i32, i32
  }
}

module attributes {stable_mosaic.version = 11 : i64} {
  func.func @_bn_affine_kernel(%arg0: i32, %arg1: memref<128x128xbf16, #tpu.memory_space<vmem>>, %arg2: memref<1x128xf32, #tpu.memory_space<vmem>>, %arg3: memref<1x128xf32, #tpu.memory_space<vmem>>, %arg4: memref<128x128xbf16, #tpu.memory_space<vmem>>) attributes {dimension_semantics = [#tpu.dimension_semantics<parallel>], iteration_bounds = array<i64: 2>, scalar_prefetch = 0 : i64, scratch_operands = 0 : i64, tpu.core_type = #tpu.core_type<tc>, window_params = [{transform_indices = @transform_0, window_bounds = array<i64: 128, 128>}, {pipeline_mode = #tpu.pipeline_mode<synchronous>, transform_indices = @transform_1, window_bounds = array<i64: 1, 128>}, {pipeline_mode = #tpu.pipeline_mode<synchronous>, transform_indices = @transform_2, window_bounds = array<i64: 1, 128>}, {transform_indices = @transform_3, window_bounds = array<i64: 128, 128>}]} {
    %c0 = arith.constant 0 : index
    %c0_0 = arith.constant 0 : index
    %0 = vector.load %arg1[%c0, %c0_0] : memref<128x128xbf16, #tpu.memory_space<vmem>>, vector<128x128xbf16>
    %1 = arith.extf %0 : vector<128x128xbf16> to vector<128x128xf32>
    %c0_1 = arith.constant 0 : index
    %c0_2 = arith.constant 0 : index
    %2 = vector.load %arg2[%c0_1, %c0_2] : memref<1x128xf32, #tpu.memory_space<vmem>>, vector<1x128xf32>
    %3 = vector.broadcast %2 : vector<1x128xf32> to vector<128x128xf32>
    %4 = arith.mulf %1, %3 : vector<128x128xf32>
    %c0_3 = arith.constant 0 : index
    %c0_4 = arith.constant 0 : index
    %5 = vector.load %arg3[%c0_3, %c0_4] : memref<1x128xf32, #tpu.memory_space<vmem>>, vector<1x128xf32>
    %6 = vector.broadcast %5 : vector<1x128xf32> to vector<128x128xf32>
    %7 = arith.addf %4, %6 : vector<128x128xf32>
    %cst = arith.constant 0.000000e+00 : f32
    %8 = vector.broadcast %cst : f32 to vector<128x128xf32>
    %9 = arith.maximumf %7, %8 : vector<128x128xf32>
    %10 = arith.truncf %9 : vector<128x128xf32> to vector<128x128xbf16>
    %c0_5 = arith.constant 0 : index
    %c0_6 = arith.constant 0 : index
    %11 = vector.load %arg4[%c0_5, %c0_6] : memref<128x128xbf16, #tpu.memory_space<vmem>>, vector<128x128xbf16>
    tpu.vector_store %arg4[%c0_5, %c0_6], %10 {strides = array<i32>} : memref<128x128xbf16, #tpu.memory_space<vmem>>, vector<128x128xbf16>,
    return
  }
  func.func @transform_0(%arg0: i32) -> (i32, i32) {
    %c0_i32 = arith.constant 0 : i32
    %c0_i32_0 = arith.constant 0 : i32
    return %arg0, %c0_i32 : i32, i32
  }
  func.func @transform_1(%arg0: i32) -> (i32, i32) {
    %c0_i32 = arith.constant 0 : i32
    %c0_i32_0 = arith.constant 0 : i32
    %c0_i32_1 = arith.constant 0 : i32
    return %c0_i32, %c0_i32_0 : i32, i32
  }
  func.func @transform_2(%arg0: i32) -> (i32, i32) {
    %c0_i32 = arith.constant 0 : i32
    %c0_i32_0 = arith.constant 0 : i32
    %c0_i32_1 = arith.constant 0 : i32
    return %c0_i32, %c0_i32_0 : i32, i32
  }
  func.func @transform_3(%arg0: i32) -> (i32, i32) {
    %c0_i32 = arith.constant 0 : i32
    %c0_i32_0 = arith.constant 0 : i32
    return %arg0, %c0_i32 : i32, i32
  }
}

module attributes {stable_mosaic.version = 11 : i64} {
  func.func @_conv3x3_bn_kernel(%arg0: i32, %arg1: memref<1x18x18x64xbf16, #tpu.memory_space<vmem>>, %arg2: memref<3x3x64x64xbf16, #tpu.memory_space<vmem>>, %arg3: memref<1x256x64xbf16, #tpu.memory_space<vmem>>, %arg4: memref<8x64xf32, #tpu.memory_space<vmem>>, %arg5: memref<8x64xf32, #tpu.memory_space<vmem>>) attributes {dimension_semantics = [#tpu.dimension_semantics<parallel>], iteration_bounds = array<i64: 2>, scalar_prefetch = 0 : i64, scratch_operands = 0 : i64, tpu.core_type = #tpu.core_type<tc>, window_params = [{transform_indices = @transform_0, window_bounds = array<i64: 1, 18, 18, 64>}, {pipeline_mode = #tpu.pipeline_mode<synchronous>, transform_indices = @transform_1, window_bounds = array<i64: 3, 3, 64, 64>}, {transform_indices = @transform_2, window_bounds = array<i64: 1, 256, 64>}, {transform_indices = @transform_3, window_bounds = array<i64: 8, 64>}, {transform_indices = @transform_4, window_bounds = array<i64: 8, 64>}]} {
    %cst = arith.constant 0.000000e+00 : f32
    %0 = vector.broadcast %cst : f32 to vector<256x64xf32>
    %c0 = arith.constant 0 : index
    %c0_0 = arith.constant 0 : index
    %c0_1 = arith.constant 0 : index
    %c0_2 = arith.constant 0 : index
    %1 = vector.load %arg1[%c0, %c0_0, %c0_1, %c0_2] : memref<1x18x18x64xbf16, #tpu.memory_space<vmem>>, vector<1x16x16x64xbf16>
    %2 = vector.shape_cast %1 : vector<1x16x16x64xbf16> to vector<16x16x64xbf16>
    %3 = vector.shape_cast %2 : vector<16x16x64xbf16> to vector<256x64xbf16>
    %c0_3 = arith.constant 0 : index
    %c0_4 = arith.constant 0 : index
    %c0_5 = arith.constant 0 : index
    %c0_6 = arith.constant 0 : index
    %4 = vector.load %arg2[%c0_3, %c0_4, %c0_5, %c0_6] : memref<3x3x64x64xbf16, #tpu.memory_space<vmem>>, vector<1x1x64x64xbf16>
    %5 = vector.shape_cast %4 : vector<1x1x64x64xbf16> to vector<64x64xbf16>
    %cst_7 = arith.constant dense<0.000000e+00> : vector<256x64xf32>
    %6 = tpu.matmul %3, %5, %cst_7 {dimension_numbers = #tpu.dot_dimension_numbers<[1], [0], [0], [1], [0, 0, 1, 1], [], []>} : vector<256x64xbf16>, vector<64x64xbf16>, vector<256x64xf32> -> vector<256x64xf32>
    %7 = arith.addf %0, %6 : vector<256x64xf32>
    %c0_8 = arith.constant 0 : index
    %c0_9 = arith.constant 0 : index
    %c1 = arith.constant 1 : index
    %c0_10 = arith.constant 0 : index
    %8 = vector.load %arg1[%c0_8, %c0_9, %c1, %c0_10] : memref<1x18x18x64xbf16, #tpu.memory_space<vmem>>, vector<1x16x16x64xbf16>
    %9 = vector.shape_cast %8 : vector<1x16x16x64xbf16> to vector<16x16x64xbf16>
    %10 = vector.shape_cast %9 : vector<16x16x64xbf16> to vector<256x64xbf16>
    %c0_11 = arith.constant 0 : index
    %c1_12 = arith.constant 1 : index
    %c0_13 = arith.constant 0 : index
    %c0_14 = arith.constant 0 : index
    %11 = vector.load %arg2[%c0_11, %c1_12, %c0_13, %c0_14] : memref<3x3x64x64xbf16, #tpu.memory_space<vmem>>, vector<1x1x64x64xbf16>
    %12 = vector.shape_cast %11 : vector<1x1x64x64xbf16> to vector<64x64xbf16>
    %cst_15 = arith.constant dense<0.000000e+00> : vector<256x64xf32>
    %13 = tpu.matmul %10, %12, %cst_15 {dimension_numbers = #tpu.dot_dimension_numbers<[1], [0], [0], [1], [0, 0, 1, 1], [], []>} : vector<256x64xbf16>, vector<64x64xbf16>, vector<256x64xf32> -> vector<256x64xf32>
    %14 = arith.addf %7, %13 : vector<256x64xf32>
    %c0_16 = arith.constant 0 : index
    %c0_17 = arith.constant 0 : index
    %c2 = arith.constant 2 : index
    %c0_18 = arith.constant 0 : index
    %15 = vector.load %arg1[%c0_16, %c0_17, %c2, %c0_18] : memref<1x18x18x64xbf16, #tpu.memory_space<vmem>>, vector<1x16x16x64xbf16>
    %16 = vector.shape_cast %15 : vector<1x16x16x64xbf16> to vector<16x16x64xbf16>
    %17 = vector.shape_cast %16 : vector<16x16x64xbf16> to vector<256x64xbf16>
    %c0_19 = arith.constant 0 : index
    %c2_20 = arith.constant 2 : index
    %c0_21 = arith.constant 0 : index
    %c0_22 = arith.constant 0 : index
    %18 = vector.load %arg2[%c0_19, %c2_20, %c0_21, %c0_22] : memref<3x3x64x64xbf16, #tpu.memory_space<vmem>>, vector<1x1x64x64xbf16>
    %19 = vector.shape_cast %18 : vector<1x1x64x64xbf16> to vector<64x64xbf16>
    %cst_23 = arith.constant dense<0.000000e+00> : vector<256x64xf32>
    %20 = tpu.matmul %17, %19, %cst_23 {dimension_numbers = #tpu.dot_dimension_numbers<[1], [0], [0], [1], [0, 0, 1, 1], [], []>} : vector<256x64xbf16>, vector<64x64xbf16>, vector<256x64xf32> -> vector<256x64xf32>
    %21 = arith.addf %14, %20 : vector<256x64xf32>
    %c0_24 = arith.constant 0 : index
    %c1_25 = arith.constant 1 : index
    %c0_26 = arith.constant 0 : index
    %c0_27 = arith.constant 0 : index
    %22 = vector.load %arg1[%c0_24, %c1_25, %c0_26, %c0_27] : memref<1x18x18x64xbf16, #tpu.memory_space<vmem>>, vector<1x16x16x64xbf16>
    %23 = vector.shape_cast %22 : vector<1x16x16x64xbf16> to vector<16x16x64xbf16>
    %24 = vector.shape_cast %23 : vector<16x16x64xbf16> to vector<256x64xbf16>
    %c1_28 = arith.constant 1 : index
    %c0_29 = arith.constant 0 : index
    %c0_30 = arith.constant 0 : index
    %c0_31 = arith.constant 0 : index
    %25 = vector.load %arg2[%c1_28, %c0_29, %c0_30, %c0_31] : memref<3x3x64x64xbf16, #tpu.memory_space<vmem>>, vector<1x1x64x64xbf16>
    %26 = vector.shape_cast %25 : vector<1x1x64x64xbf16> to vector<64x64xbf16>
    %cst_32 = arith.constant dense<0.000000e+00> : vector<256x64xf32>
    %27 = tpu.matmul %24, %26, %cst_32 {dimension_numbers = #tpu.dot_dimension_numbers<[1], [0], [0], [1], [0, 0, 1, 1], [], []>} : vector<256x64xbf16>, vector<64x64xbf16>, vector<256x64xf32> -> vector<256x64xf32>
    %28 = arith.addf %21, %27 : vector<256x64xf32>
    %c0_33 = arith.constant 0 : index
    %c1_34 = arith.constant 1 : index
    %c1_35 = arith.constant 1 : index
    %c0_36 = arith.constant 0 : index
    %29 = vector.load %arg1[%c0_33, %c1_34, %c1_35, %c0_36] : memref<1x18x18x64xbf16, #tpu.memory_space<vmem>>, vector<1x16x16x64xbf16>
    %30 = vector.shape_cast %29 : vector<1x16x16x64xbf16> to vector<16x16x64xbf16>
    %31 = vector.shape_cast %30 : vector<16x16x64xbf16> to vector<256x64xbf16>
    %c1_37 = arith.constant 1 : index
    %c1_38 = arith.constant 1 : index
    %c0_39 = arith.constant 0 : index
    %c0_40 = arith.constant 0 : index
    %32 = vector.load %arg2[%c1_37, %c1_38, %c0_39, %c0_40] : memref<3x3x64x64xbf16, #tpu.memory_space<vmem>>, vector<1x1x64x64xbf16>
    %33 = vector.shape_cast %32 : vector<1x1x64x64xbf16> to vector<64x64xbf16>
    %cst_41 = arith.constant dense<0.000000e+00> : vector<256x64xf32>
    %34 = tpu.matmul %31, %33, %cst_41 {dimension_numbers = #tpu.dot_dimension_numbers<[1], [0], [0], [1], [0, 0, 1, 1], [], []>} : vector<256x64xbf16>, vector<64x64xbf16>, vector<256x64xf32> -> vector<256x64xf32>
    %35 = arith.addf %28, %34 : vector<256x64xf32>
    %c0_42 = arith.constant 0 : index
    %c1_43 = arith.constant 1 : index
    %c2_44 = arith.constant 2 : index
    %c0_45 = arith.constant 0 : index
    %36 = vector.load %arg1[%c0_42, %c1_43, %c2_44, %c0_45] : memref<1x18x18x64xbf16, #tpu.memory_space<vmem>>, vector<1x16x16x64xbf16>
    %37 = vector.shape_cast %36 : vector<1x16x16x64xbf16> to vector<16x16x64xbf16>
    %38 = vector.shape_cast %37 : vector<16x16x64xbf16> to vector<256x64xbf16>
    %c1_46 = arith.constant 1 : index
    %c2_47 = arith.constant 2 : index
    %c0_48 = arith.constant 0 : index
    %c0_49 = arith.constant 0 : index
    %39 = vector.load %arg2[%c1_46, %c2_47, %c0_48, %c0_49] : memref<3x3x64x64xbf16, #tpu.memory_space<vmem>>, vector<1x1x64x64xbf16>
    %40 = vector.shape_cast %39 : vector<1x1x64x64xbf16> to vector<64x64xbf16>
    %cst_50 = arith.constant dense<0.000000e+00> : vector<256x64xf32>
    %41 = tpu.matmul %38, %40, %cst_50 {dimension_numbers = #tpu.dot_dimension_numbers<[1], [0], [0], [1], [0, 0, 1, 1], [], []>} : vector<256x64xbf16>, vector<64x64xbf16>, vector<256x64xf32> -> vector<256x64xf32>
    %42 = arith.addf %35, %41 : vector<256x64xf32>
    %c0_51 = arith.constant 0 : index
    %c2_52 = arith.constant 2 : index
    %c0_53 = arith.constant 0 : index
    %c0_54 = arith.constant 0 : index
    %43 = vector.load %arg1[%c0_51, %c2_52, %c0_53, %c0_54] : memref<1x18x18x64xbf16, #tpu.memory_space<vmem>>, vector<1x16x16x64xbf16>
    %44 = vector.shape_cast %43 : vector<1x16x16x64xbf16> to vector<16x16x64xbf16>
    %45 = vector.shape_cast %44 : vector<16x16x64xbf16> to vector<256x64xbf16>
    %c2_55 = arith.constant 2 : index
    %c0_56 = arith.constant 0 : index
    %c0_57 = arith.constant 0 : index
    %c0_58 = arith.constant 0 : index
    %46 = vector.load %arg2[%c2_55, %c0_56, %c0_57, %c0_58] : memref<3x3x64x64xbf16, #tpu.memory_space<vmem>>, vector<1x1x64x64xbf16>
    %47 = vector.shape_cast %46 : vector<1x1x64x64xbf16> to vector<64x64xbf16>
    %cst_59 = arith.constant dense<0.000000e+00> : vector<256x64xf32>
    %48 = tpu.matmul %45, %47, %cst_59 {dimension_numbers = #tpu.dot_dimension_numbers<[1], [0], [0], [1], [0, 0, 1, 1], [], []>} : vector<256x64xbf16>, vector<64x64xbf16>, vector<256x64xf32> -> vector<256x64xf32>
    %49 = arith.addf %42, %48 : vector<256x64xf32>
    %c0_60 = arith.constant 0 : index
    %c2_61 = arith.constant 2 : index
    %c1_62 = arith.constant 1 : index
    %c0_63 = arith.constant 0 : index
    %50 = vector.load %arg1[%c0_60, %c2_61, %c1_62, %c0_63] : memref<1x18x18x64xbf16, #tpu.memory_space<vmem>>, vector<1x16x16x64xbf16>
    %51 = vector.shape_cast %50 : vector<1x16x16x64xbf16> to vector<16x16x64xbf16>
    %52 = vector.shape_cast %51 : vector<16x16x64xbf16> to vector<256x64xbf16>
    %c2_64 = arith.constant 2 : index
    %c1_65 = arith.constant 1 : index
    %c0_66 = arith.constant 0 : index
    %c0_67 = arith.constant 0 : index
    %53 = vector.load %arg2[%c2_64, %c1_65, %c0_66, %c0_67] : memref<3x3x64x64xbf16, #tpu.memory_space<vmem>>, vector<1x1x64x64xbf16>
    %54 = vector.shape_cast %53 : vector<1x1x64x64xbf16> to vector<64x64xbf16>
    %cst_68 = arith.constant dense<0.000000e+00> : vector<256x64xf32>
    %55 = tpu.matmul %52, %54, %cst_68 {dimension_numbers = #tpu.dot_dimension_numbers<[1], [0], [0], [1], [0, 0, 1, 1], [], []>} : vector<256x64xbf16>, vector<64x64xbf16>, vector<256x64xf32> -> vector<256x64xf32>
    %56 = arith.addf %49, %55 : vector<256x64xf32>
    %c0_69 = arith.constant 0 : index
    %c2_70 = arith.constant 2 : index
    %c2_71 = arith.constant 2 : index
    %c0_72 = arith.constant 0 : index
    %57 = vector.load %arg1[%c0_69, %c2_70, %c2_71, %c0_72] : memref<1x18x18x64xbf16, #tpu.memory_space<vmem>>, vector<1x16x16x64xbf16>
    %58 = vector.shape_cast %57 : vector<1x16x16x64xbf16> to vector<16x16x64xbf16>
    %59 = vector.shape_cast %58 : vector<16x16x64xbf16> to vector<256x64xbf16>
    %c2_73 = arith.constant 2 : index
    %c2_74 = arith.constant 2 : index
    %c0_75 = arith.constant 0 : index
    %c0_76 = arith.constant 0 : index
    %60 = vector.load %arg2[%c2_73, %c2_74, %c0_75, %c0_76] : memref<3x3x64x64xbf16, #tpu.memory_space<vmem>>, vector<1x1x64x64xbf16>
    %61 = vector.shape_cast %60 : vector<1x1x64x64xbf16> to vector<64x64xbf16>
    %cst_77 = arith.constant dense<0.000000e+00> : vector<256x64xf32>
    %62 = tpu.matmul %59, %61, %cst_77 {dimension_numbers = #tpu.dot_dimension_numbers<[1], [0], [0], [1], [0, 0, 1, 1], [], []>} : vector<256x64xbf16>, vector<64x64xbf16>, vector<256x64xf32> -> vector<256x64xf32>
    %63 = arith.addf %56, %62 : vector<256x64xf32>
    %64 = arith.truncf %63 : vector<256x64xf32> to vector<256x64xbf16>
    %c0_78 = arith.constant 0 : index
    %c0_79 = arith.constant 0 : index
    %c0_80 = arith.constant 0 : index
    %65 = vector.load %arg3[%c0_78, %c0_79, %c0_80] : memref<1x256x64xbf16, #tpu.memory_space<vmem>>, vector<1x256x64xbf16>
    %66 = vector.shape_cast %65 : vector<1x256x64xbf16> to vector<256x64xbf16>
    %67 = vector.shape_cast %64 : vector<256x64xbf16> to vector<1x256x64xbf16>
    tpu.vector_store %arg3[%c0_78, %c0_79, %c0_80], %67 {strides = array<i32>} : memref<1x256x64xbf16, #tpu.memory_space<vmem>>, vector<1x256x64xbf16>,
    %cst_81 = arith.constant dense<0.000000e+00> : vector<64xf32>
    %68 = vector.multi_reduction <add>, %63, %cst_81 [0] : vector<256x64xf32> to vector<64xf32>
    %69 = vector.shape_cast %68 : vector<64xf32> to vector<1x64xf32>
    %70 = arith.mulf %63, %63 : vector<256x64xf32>
    %cst_82 = arith.constant dense<0.000000e+00> : vector<64xf32>
    %71 = vector.multi_reduction <add>, %70, %cst_82 [0] : vector<256x64xf32> to vector<64xf32>
    %72 = vector.shape_cast %71 : vector<64xf32> to vector<1x64xf32>
    %73 = tpu.iota {dimensions = array<i32: 0>} : vector<8x64xi32>
    %c0_i32 = arith.constant 0 : i32
    %74 = vector.broadcast %c0_i32 : i32 to vector<8x64xi32>
    %75 = arith.cmpi eq, %73, %74 : vector<8x64xi32>
    %76 = vector.shape_cast %69 : vector<1x64xf32> to vector<1x64xf32>
    %77 = vector.broadcast %76 : vector<1x64xf32> to vector<8x64xf32>
    %cst_83 = arith.constant 0.000000e+00 : f32
    %78 = vector.broadcast %cst_83 : f32 to vector<8x64xf32>
    %79 = arith.select %75, %77, %78 : vector<8x64xi1>, vector<8x64xf32>
    %c0_84 = arith.constant 0 : index
    %c0_85 = arith.constant 0 : index
    %80 = vector.load %arg4[%c0_84, %c0_85] : memref<8x64xf32, #tpu.memory_space<vmem>>, vector<8x64xf32>
    tpu.vector_store %arg4[%c0_84, %c0_85], %79 {strides = array<i32>} : memref<8x64xf32, #tpu.memory_space<vmem>>, vector<8x64xf32>,
    %c0_i32_86 = arith.constant 0 : i32
    %81 = vector.broadcast %c0_i32_86 : i32 to vector<8x64xi32>
    %82 = arith.cmpi eq, %73, %81 : vector<8x64xi32>
    %83 = vector.shape_cast %72 : vector<1x64xf32> to vector<1x64xf32>
    %84 = vector.broadcast %83 : vector<1x64xf32> to vector<8x64xf32>
    %cst_87 = arith.constant 0.000000e+00 : f32
    %85 = vector.broadcast %cst_87 : f32 to vector<8x64xf32>
    %86 = arith.select %82, %84, %85 : vector<8x64xi1>, vector<8x64xf32>
    %c0_88 = arith.constant 0 : index
    %c0_89 = arith.constant 0 : index
    %87 = vector.load %arg5[%c0_88, %c0_89] : memref<8x64xf32, #tpu.memory_space<vmem>>, vector<8x64xf32>
    tpu.vector_store %arg5[%c0_88, %c0_89], %86 {strides = array<i32>} : memref<8x64xf32, #tpu.memory_space<vmem>>, vector<8x64xf32>,
    return
  }
  func.func @transform_0(%arg0: i32) -> (i32, i32, i32, i32) {
    %c0_i32 = arith.constant 0 : i32
    %c0_i32_0 = arith.constant 0 : i32
    %c0_i32_1 = arith.constant 0 : i32
    %c0_i32_2 = arith.constant 0 : i32
    return %arg0, %c0_i32, %c0_i32_0, %c0_i32_1 : i32, i32, i32, i32
  }
  func.func @transform_1(%arg0: i32) -> (i32, i32, i32, i32) {
    %c0_i32 = arith.constant 0 : i32
    %c0_i32_0 = arith.constant 0 : i32
    %c0_i32_1 = arith.constant 0 : i32
    %c0_i32_2 = arith.constant 0 : i32
    %c0_i32_3 = arith.constant 0 : i32
    return %c0_i32, %c0_i32_0, %c0_i32_1, %c0_i32_2 : i32, i32, i32, i32
  }
  func.func @transform_2(%arg0: i32) -> (i32, i32, i32) {
    %c0_i32 = arith.constant 0 : i32
    %c0_i32_0 = arith.constant 0 : i32
    %c0_i32_1 = arith.constant 0 : i32
    return %arg0, %c0_i32, %c0_i32_0 : i32, i32, i32
  }
  func.func @transform_3(%arg0: i32) -> (i32, i32) {
    %c0_i32 = arith.constant 0 : i32
    %c0_i32_0 = arith.constant 0 : i32
    return %arg0, %c0_i32 : i32, i32
  }
  func.func @transform_4(%arg0: i32) -> (i32, i32) {
    %c0_i32 = arith.constant 0 : i32
    %c0_i32_0 = arith.constant 0 : i32
    return %arg0, %c0_i32 : i32, i32
  }
}

module attributes {stable_mosaic.version = 11 : i64} {
  func.func @_gemm_affine_bn_kernel(%arg0: i32, %arg1: i32, %arg2: i32, %arg3: memref<256x64xbf16, #tpu.memory_space<vmem>>, %arg4: memref<1x64xf32, #tpu.memory_space<vmem>>, %arg5: memref<1x64xf32, #tpu.memory_space<vmem>>, %arg6: memref<64x256xbf16, #tpu.memory_space<vmem>>, %arg7: memref<256x256xbf16, #tpu.memory_space<vmem>>, %arg8: memref<8x256xf32, #tpu.memory_space<vmem>>, %arg9: memref<8x256xf32, #tpu.memory_space<vmem>>, %arg10: memref<256x256xf32, #tpu.memory_space<vmem>>) attributes {dimension_semantics = [#tpu.dimension_semantics<parallel>, #tpu.dimension_semantics<parallel>, #tpu.dimension_semantics<arbitrary>], iteration_bounds = array<i64: 2, 1, 1>, scalar_prefetch = 0 : i64, scratch_operands = 1 : i64, tpu.core_type = #tpu.core_type<tc>, window_params = [{transform_indices = @transform_0, window_bounds = array<i64: 256, 64>}, {transform_indices = @transform_1, window_bounds = array<i64: 1, 64>}, {transform_indices = @transform_2, window_bounds = array<i64: 1, 64>}, {transform_indices = @transform_3, window_bounds = array<i64: 64, 256>}, {transform_indices = @transform_4, window_bounds = array<i64: 256, 256>}, {transform_indices = @transform_5, window_bounds = array<i64: 8, 256>}, {transform_indices = @transform_6, window_bounds = array<i64: 8, 256>}]} {
    %c0 = arith.constant 0 : index
    %c0_0 = arith.constant 0 : index
    %0 = vector.load %arg3[%c0, %c0_0] : memref<256x64xbf16, #tpu.memory_space<vmem>>, vector<256x64xbf16>
    %1 = arith.extf %0 : vector<256x64xbf16> to vector<256x64xf32>
    %c0_1 = arith.constant 0 : index
    %c0_2 = arith.constant 0 : index
    %2 = vector.load %arg4[%c0_1, %c0_2] : memref<1x64xf32, #tpu.memory_space<vmem>>, vector<1x64xf32>
    %3 = vector.broadcast %2 : vector<1x64xf32> to vector<256x64xf32>
    %4 = arith.mulf %1, %3 : vector<256x64xf32>
    %c0_3 = arith.constant 0 : index
    %c0_4 = arith.constant 0 : index
    %5 = vector.load %arg5[%c0_3, %c0_4] : memref<1x64xf32, #tpu.memory_space<vmem>>, vector<1x64xf32>
    %6 = vector.broadcast %5 : vector<1x64xf32> to vector<256x64xf32>
    %7 = arith.addf %4, %6 : vector<256x64xf32>
    %cst = arith.constant 0.000000e+00 : f32
    %8 = vector.broadcast %cst : f32 to vector<256x64xf32>
    %9 = arith.maximumf %7, %8 : vector<256x64xf32>
    %10 = arith.truncf %9 : vector<256x64xf32> to vector<256x64xbf16>
    %c0_5 = arith.constant 0 : index
    %c0_6 = arith.constant 0 : index
    %11 = vector.load %arg6[%c0_5, %c0_6] : memref<64x256xbf16, #tpu.memory_space<vmem>>, vector<64x256xbf16>
    %cst_7 = arith.constant dense<0.000000e+00> : vector<256x256xf32>
    %12 = tpu.matmul %10, %11, %cst_7 {dimension_numbers = #tpu.dot_dimension_numbers<[1], [0], [0], [1], [0, 0, 1, 1], [], []>} : vector<256x64xbf16>, vector<64x256xbf16>, vector<256x256xf32> -> vector<256x256xf32>
    %13 = arith.truncf %12 : vector<256x256xf32> to vector<256x256xbf16>
    %c0_8 = arith.constant 0 : index
    %c0_9 = arith.constant 0 : index
    %14 = vector.load %arg7[%c0_8, %c0_9] : memref<256x256xbf16, #tpu.memory_space<vmem>>, vector<256x256xbf16>
    tpu.vector_store %arg7[%c0_8, %c0_9], %13 {strides = array<i32>} : memref<256x256xbf16, #tpu.memory_space<vmem>>, vector<256x256xbf16>,
    %cst_10 = arith.constant dense<0.000000e+00> : vector<256xf32>
    %15 = vector.multi_reduction <add>, %12, %cst_10 [0] : vector<256x256xf32> to vector<256xf32>
    %16 = vector.shape_cast %15 : vector<256xf32> to vector<1x256xf32>
    %17 = arith.mulf %12, %12 : vector<256x256xf32>
    %cst_11 = arith.constant dense<0.000000e+00> : vector<256xf32>
    %18 = vector.multi_reduction <add>, %17, %cst_11 [0] : vector<256x256xf32> to vector<256xf32>
    %19 = vector.shape_cast %18 : vector<256xf32> to vector<1x256xf32>
    %20 = tpu.iota {dimensions = array<i32: 0>} : vector<8x256xi32>
    %c0_i32 = arith.constant 0 : i32
    %21 = vector.broadcast %c0_i32 : i32 to vector<8x256xi32>
    %22 = arith.cmpi eq, %20, %21 : vector<8x256xi32>
    %23 = vector.shape_cast %16 : vector<1x256xf32> to vector<1x256xf32>
    %24 = vector.broadcast %23 : vector<1x256xf32> to vector<8x256xf32>
    %cst_12 = arith.constant 0.000000e+00 : f32
    %25 = vector.broadcast %cst_12 : f32 to vector<8x256xf32>
    %26 = arith.select %22, %24, %25 : vector<8x256xi1>, vector<8x256xf32>
    %c0_13 = arith.constant 0 : index
    %c0_14 = arith.constant 0 : index
    %27 = vector.load %arg8[%c0_13, %c0_14] : memref<8x256xf32, #tpu.memory_space<vmem>>, vector<8x256xf32>
    tpu.vector_store %arg8[%c0_13, %c0_14], %26 {strides = array<i32>} : memref<8x256xf32, #tpu.memory_space<vmem>>, vector<8x256xf32>,
    %c0_i32_15 = arith.constant 0 : i32
    %28 = vector.broadcast %c0_i32_15 : i32 to vector<8x256xi32>
    %29 = arith.cmpi eq, %20, %28 : vector<8x256xi32>
    %30 = vector.shape_cast %19 : vector<1x256xf32> to vector<1x256xf32>
    %31 = vector.broadcast %30 : vector<1x256xf32> to vector<8x256xf32>
    %cst_16 = arith.constant 0.000000e+00 : f32
    %32 = vector.broadcast %cst_16 : f32 to vector<8x256xf32>
    %33 = arith.select %29, %31, %32 : vector<8x256xi1>, vector<8x256xf32>
    %c0_17 = arith.constant 0 : index
    %c0_18 = arith.constant 0 : index
    %34 = vector.load %arg9[%c0_17, %c0_18] : memref<8x256xf32, #tpu.memory_space<vmem>>, vector<8x256xf32>
    tpu.vector_store %arg9[%c0_17, %c0_18], %33 {strides = array<i32>} : memref<8x256xf32, #tpu.memory_space<vmem>>, vector<8x256xf32>,
    return
  }
  func.func @transform_0(%arg0: i32, %arg1: i32, %arg2: i32) -> (i32, i32) {
    %c0_i32 = arith.constant 0 : i32
    return %arg0, %arg2 : i32, i32
  }
  func.func @transform_1(%arg0: i32, %arg1: i32, %arg2: i32) -> (i32, i32) {
    %c0_i32 = arith.constant 0 : i32
    %c0_i32_0 = arith.constant 0 : i32
    return %c0_i32, %arg2 : i32, i32
  }
  func.func @transform_2(%arg0: i32, %arg1: i32, %arg2: i32) -> (i32, i32) {
    %c0_i32 = arith.constant 0 : i32
    %c0_i32_0 = arith.constant 0 : i32
    return %c0_i32, %arg2 : i32, i32
  }
  func.func @transform_3(%arg0: i32, %arg1: i32, %arg2: i32) -> (i32, i32) {
    %c0_i32 = arith.constant 0 : i32
    return %arg2, %arg1 : i32, i32
  }
  func.func @transform_4(%arg0: i32, %arg1: i32, %arg2: i32) -> (i32, i32) {
    %c0_i32 = arith.constant 0 : i32
    return %arg0, %arg1 : i32, i32
  }
  func.func @transform_5(%arg0: i32, %arg1: i32, %arg2: i32) -> (i32, i32) {
    %c0_i32 = arith.constant 0 : i32
    return %arg0, %arg1 : i32, i32
  }
  func.func @transform_6(%arg0: i32, %arg1: i32, %arg2: i32) -> (i32, i32) {
    %c0_i32 = arith.constant 0 : i32
    return %arg0, %arg1 : i32, i32
  }
}

module attributes {stable_mosaic.version = 11 : i64} {
  func.func @_bn_affine_res_kernel(%arg0: i32, %arg1: memref<256x256xbf16, #tpu.memory_space<vmem>>, %arg2: memref<1x256xf32, #tpu.memory_space<vmem>>, %arg3: memref<1x256xf32, #tpu.memory_space<vmem>>, %arg4: memref<256x256xbf16, #tpu.memory_space<vmem>>, %arg5: memref<256x256xf32, #tpu.memory_space<vmem>>) attributes {dimension_semantics = [#tpu.dimension_semantics<parallel>], iteration_bounds = array<i64: 2>, scalar_prefetch = 0 : i64, scratch_operands = 0 : i64, tpu.core_type = #tpu.core_type<tc>, window_params = [{transform_indices = @transform_0, window_bounds = array<i64: 256, 256>}, {pipeline_mode = #tpu.pipeline_mode<synchronous>, transform_indices = @transform_1, window_bounds = array<i64: 1, 256>}, {pipeline_mode = #tpu.pipeline_mode<synchronous>, transform_indices = @transform_2, window_bounds = array<i64: 1, 256>}, {transform_indices = @transform_3, window_bounds = array<i64: 256, 256>}, {transform_indices = @transform_4, window_bounds = array<i64: 256, 256>}]} {
    %c0 = arith.constant 0 : index
    %c0_0 = arith.constant 0 : index
    %0 = vector.load %arg1[%c0, %c0_0] : memref<256x256xbf16, #tpu.memory_space<vmem>>, vector<256x256xbf16>
    %1 = arith.extf %0 : vector<256x256xbf16> to vector<256x256xf32>
    %c0_1 = arith.constant 0 : index
    %c0_2 = arith.constant 0 : index
    %2 = vector.load %arg2[%c0_1, %c0_2] : memref<1x256xf32, #tpu.memory_space<vmem>>, vector<1x256xf32>
    %3 = vector.broadcast %2 : vector<1x256xf32> to vector<256x256xf32>
    %4 = arith.mulf %1, %3 : vector<256x256xf32>
    %c0_3 = arith.constant 0 : index
    %c0_4 = arith.constant 0 : index
    %5 = vector.load %arg3[%c0_3, %c0_4] : memref<1x256xf32, #tpu.memory_space<vmem>>, vector<1x256xf32>
    %6 = vector.broadcast %5 : vector<1x256xf32> to vector<256x256xf32>
    %7 = arith.addf %4, %6 : vector<256x256xf32>
    %c0_5 = arith.constant 0 : index
    %c0_6 = arith.constant 0 : index
    %8 = vector.load %arg4[%c0_5, %c0_6] : memref<256x256xbf16, #tpu.memory_space<vmem>>, vector<256x256xbf16>
    %9 = arith.extf %8 : vector<256x256xbf16> to vector<256x256xf32>
    %10 = arith.addf %7, %9 : vector<256x256xf32>
    %cst = arith.constant 0.000000e+00 : f32
    %11 = vector.broadcast %cst : f32 to vector<256x256xf32>
    %12 = arith.maximumf %10, %11 : vector<256x256xf32>
    %c0_7 = arith.constant 0 : index
    %c0_8 = arith.constant 0 : index
    %13 = vector.load %arg5[%c0_7, %c0_8] : memref<256x256xf32, #tpu.memory_space<vmem>>, vector<256x256xf32>
    tpu.vector_store %arg5[%c0_7, %c0_8], %12 {strides = array<i32>} : memref<256x256xf32, #tpu.memory_space<vmem>>, vector<256x256xf32>,
    return
  }
  func.func @transform_0(%arg0: i32) -> (i32, i32) {
    %c0_i32 = arith.constant 0 : i32
    %c0_i32_0 = arith.constant 0 : i32
    return %arg0, %c0_i32 : i32, i32
  }
  func.func @transform_1(%arg0: i32) -> (i32, i32) {
    %c0_i32 = arith.constant 0 : i32
    %c0_i32_0 = arith.constant 0 : i32
    %c0_i32_1 = arith.constant 0 : i32
    return %c0_i32, %c0_i32_0 : i32, i32
  }
  func.func @transform_2(%arg0: i32) -> (i32, i32) {
    %c0_i32 = arith.constant 0 : i32
    %c0_i32_0 = arith.constant 0 : i32
    %c0_i32_1 = arith.constant 0 : i32
    return %c0_i32, %c0_i32_0 : i32, i32
  }
  func.func @transform_3(%arg0: i32) -> (i32, i32) {
    %c0_i32 = arith.constant 0 : i32
    %c0_i32_0 = arith.constant 0 : i32
    return %arg0, %c0_i32 : i32, i32
  }
  func.func @transform_4(%arg0: i32) -> (i32, i32) {
    %c0_i32 = arith.constant 0 : i32
    %c0_i32_0 = arith.constant 0 : i32
    return %arg0, %c0_i32 : i32, i32
  }
}

</mosaic_0001>

<llo_original>
// kernel: resnetblock4_forward.6
$region0: #{resnetblock4_forward.6}
  #allocation0 [shape = 'u32[]', space=smem, size = 0x4, offset = 0x4, fixed_abs, tag = 'smem constant byte address 0x4 - core index']
  #allocation1 [shape = 'u32[144,128]{1,0:T(1,128)}', space=vmem, size = 0x12000, scoped, tag = 'internal scratch']
  %s0 = inlined_call_operand.vmem [shape: bf16[256,128], index: 0, kind: input, shape index: {}]
  %s1 = inlined_call_operand.vmem [shape: f32[1,128], index: 1, kind: input, shape index: {}]
  %s2 = inlined_call_operand.vmem [shape: f32[1,128], index: 2, kind: input, shape index: {}]
  %s3 = inlined_call_operand.vmem [shape: bf16[256,128], index: 3, kind: output, shape index: {}]
  %s4 = sld [smem:[#allocation0]]
  $region45: #{resnetblock4_forward.6} parent=0
    _
  %s6 = ssub.s32 1, %s4
  %s7 = scalar_select 0, %s6, %s4
  loop: start=0, step=1, limit=4
  $region2: #{resnetblock4_forward.6} parent=0 // loop_pre_header
    _
  $region3: #{resnetblock4_forward.6} parent=0 // loop_header
    %s9 = sphi 0, %s13
    %p10 = scmp.ge.s32.totalorder %s9, 4
    %s19 = sphi 0, %s21
    %s22 = sphi 0, %s19
    %s23 = sphi 0, %s22
    %s39 = sphi 0, %s23
    %s43 = sphi 0, %s43
    %s45 = sphi 0, %s43
    %s46 = sphi 0, %s45
    %s60 = sphi 0, %s46
    %s64 = sphi 0, %s64
    %s66 = sphi 0, %s64
    %s67 = sphi 0, %s66
    %s81 = sphi 0, %s67
    %s87 = sphi 0, %s89
    %s90 = sphi 0, %s87
    %s91 = sphi 0, %s90
    %s107 = sphi 0, %s91
  $region4: #{resnetblock4_forward.6} parent=0 // loop_header_branch
    %12 = sbr.rel (%p10) target = $region8
  $region5: #{resnetblock4_forward.6} parent=0 // loop_body
    %s14 = ssub.s32 %s9, 1
    %s15 = ssub.s32 %s9, 2
    %s16 = sadd.s32 %s9, 1
    %s17 = ssub.s32 %s9, %s16
    %p18 = scmp.eq.s32.totalorder %s17, 0
    %s20 = sadd.s32 %s19, 1
    %s21 = scalar_select %p18, %s19, %s20
    %p24 = pneg %p18
    %p25 = scmp.eq.s32.totalorder %s9, 1
    %p26 = por %p24, %p25
    %p27 = scmp.ne.s32.totalorder %s19, %s22
    %p28 = scmp.eq.s32.totalorder %s9, 0
    %p29 = por %p27, %p28
    %p30 = scmp.ne.s32.totalorder %s19, %s22
    %p31 = scmp.eq.s32.totalorder %s14, 1
    %p32 = por %p30, %p31
    %p33 = scmp.ne.s32.totalorder %s22, %s23
    %p34 = scmp.eq.s32.totalorder %s14, 0
    %p35 = por %p33, %p34
    %p36 = scmp.ne.s32.totalorder %s22, %s23
    %p37 = scmp.eq.s32.totalorder %s15, 1
    %p38 = por %p36, %p37
    %p40 = scmp.ne.s32.totalorder %s23, %s39
    %p41 = scmp.eq.s32.totalorder %s15, 0
    %p42 = por %p40, %p41
    %s44 = sadd.s32 %s43, 1
    %p47 = scmp.eq.s32.totalorder %s9, 1
    %p48 = scmp.ne.s32.totalorder %s43, %s45
    %p49 = scmp.eq.s32.totalorder %s9, 0
    %p50 = por %p48, %p49
    %p51 = scmp.ne.s32.totalorder %s43, %s45
    %p52 = scmp.eq.s32.totalorder %s14, 1
    %p53 = por %p51, %p52
    %p54 = scmp.ne.s32.totalorder %s45, %s46
    %p55 = scmp.eq.s32.totalorder %s14, 0
    %p56 = por %p54, %p55
    %p57 = scmp.ne.s32.totalorder %s45, %s46
    %p58 = scmp.eq.s32.totalorder %s15, 1
    %p59 = por %p57, %p58
    %p61 = scmp.ne.s32.totalorder %s46, %s60
    %p62 = scmp.eq.s32.totalorder %s15, 0
    %p63 = por %p61, %p62
    %s65 = sadd.s32 %s64, 1
    %p68 = scmp.eq.s32.totalorder %s9, 1
    %p69 = scmp.ne.s32.totalorder %s64, %s66
    %p70 = scmp.eq.s32.totalorder %s9, 0
    %p71 = por %p69, %p70
    %p72 = scmp.ne.s32.totalorder %s64, %s66
    %p73 = scmp.eq.s32.totalorder %s14, 1
    %p74 = por %p72, %p73
    %p75 = scmp.ne.s32.totalorder %s66, %s67
    %p76 = scmp.eq.s32.totalorder %s14, 0
    %p77 = por %p75, %p76
    %p78 = scmp.ne.s32.totalorder %s66, %s67
    %p79 = scmp.eq.s32.totalorder %s15, 1
    %p80 = por %p78, %p79
    %p82 = scmp.ne.s32.totalorder %s67, %s81
    %p83 = scmp.eq.s32.totalorder %s15, 0
    %p84 = por %p82, %p83
    %s85 = ssub.s32 %s9, %s16
    %p86 = scmp.eq.s32.totalorder %s85, 0
    %s88 = sadd.s32 %s87, 1
    %s89 = scalar_select %p86, %s87, %s88
    %p92 = pneg %p86
    %p93 = scmp.eq.s32.totalorder %s9, 1
    %p94 = por %p92, %p93
    %p95 = scmp.ne.s32.totalorder %s87, %s90
    %p96 = scmp.eq.s32.totalorder %s9, 0
    %p97 = por %p95, %p96
    %p98 = scmp.ne.s32.totalorder %s87, %s90
    %p99 = scmp.eq.s32.totalorder %s14, 1
    %p100 = por %p98, %p99
    %p101 = scmp.ne.s32.totalorder %s90, %s91
    %p102 = scmp.eq.s32.totalorder %s14, 0
    %p103 = por %p101, %p102
    %p104 = scmp.ne.s32.totalorder %s90, %s91
    %p105 = scmp.eq.s32.totalorder %s15, 1
    %p106 = por %p104, %p105
    %p108 = scmp.ne.s32.totalorder %s91, %s107
    %p109 = scmp.eq.s32.totalorder %s15, 0
    %p110 = por %p108, %p109
    %p111 = scmp.le.s32.totalorder 1, %s9
    %p112 = scmp.lt.s32.totalorder %s9, 3
    %p113 = pnand %p111, %p112
    %p114 = pneg %p113
    // Predicated region
    $region9: #{resnetblock4_forward.6} parent=5 // pred_check
      _
    $region10: #{resnetblock4_forward.6} parent=5 // pred_check_branch
      %116 = sbr.rel (%p113) target = $region12
    $region11: #{resnetblock4_forward.6} parent=5 // pred_region
      %s117 = ssub.s32 %s9, 1
      // Predicated region
      $region13: #{resnetblock4_forward.6} parent=11 // pred_check
        %p118 = pneg %p56
      $region14: #{resnetblock4_forward.6} parent=11 // pred_check_branch
        %120 = sbr.rel (%p118) target = $region16
      $region15: #{resnetblock4_forward.6} parent=11 // pred_region
        _
      $region16: #{resnetblock4_forward.6} parent=11 // pred_fallthru
        _
      // Predicated region
      $region17: #{resnetblock4_forward.6} parent=11 // pred_check
        %p121 = pneg %p77
      $region18: #{resnetblock4_forward.6} parent=11 // pred_check_branch
        %123 = sbr.rel (%p121) target = $region20
      $region19: #{resnetblock4_forward.6} parent=11 // pred_region
        _
      $region20: #{resnetblock4_forward.6} parent=11 // pred_fallthru
        _
    $region12: #{resnetblock4_forward.6} parent=5 // pred_fallthru
      _
    %p124 = scmp.lt.s32.totalorder %s9, 2
    // Predicated region
    $region21: #{resnetblock4_forward.6} parent=5 // pred_check
      %p125 = pneg %p124
    $region22: #{resnetblock4_forward.6} parent=5 // pred_check_branch
      %127 = sbr.rel (%p125) target = $region24
    $region23: #{resnetblock4_forward.6} parent=5 // pred_region
      // Predicated region
      $region25: #{resnetblock4_forward.6} parent=23 // pred_check
        %p128 = pneg %p29
      $region26: #{resnetblock4_forward.6} parent=23 // pred_check_branch
        %130 = sbr.rel (%p128) target = $region28
      $region27: #{resnetblock4_forward.6} parent=23 // pred_region
        %s131 = smul.u32 16, %s9
        %p132 = scmp.lt.s32.totalorder %s131, 31
        %s133 = scalar_select %p132, %s131, 31
        %s134 = smul.addr %s133, 4
        %s135 = scalar_lea.vmem %s0, %s134
        %s136 = smul.u32 16, %s9
      $region28: #{resnetblock4_forward.6} parent=23 // pred_fallthru
        _
    $region24: #{resnetblock4_forward.6} parent=5 // pred_fallthru
      _
    %p137 = scmp.le.s32.totalorder 1, %s9
    %p138 = scmp.lt.s32.totalorder %s9, 3
    %p139 = pnand %p137, %p138
    %p140 = pneg %p139
    // Predicated region
    $region29: #{resnetblock4_forward.6} parent=5 // pred_check
      _
    $region30: #{resnetblock4_forward.6} parent=5 // pred_check_branch
      %142 = sbr.rel (%p139) target = $region32
    $region31: #{resnetblock4_forward.6} parent=5 // pred_region
      %s143 = ssub.s32 %s9, 1
      %s144 = smul.u32 16, %s14
      %p145 = scmp.lt.s32.totalorder %s144, 31
      %s146 = scalar_select %p145, %s144, 31
      %s147 = smul.addr %s146, 4
      %s148 = scalar_lea.vmem %s0, %s147
      %p149 = pneg %p35
      %p150 = pneg %p32
      %p151 = pneg %p56
      %p152 = pneg %p53
      %p153 = pneg %p77
      %p154 = pneg %p74
      %p155 = pneg %p103
      %p156 = pneg %p100
      %s157 = smul.u32 16, %s14
      %p158 = scmp.lt.s32.totalorder %s157, 31
      %s159 = scalar_select %p158, %s157, 31
      %s160 = smul.addr %s159, 4
      %s161 = scalar_lea.vmem %s3, %s160
      %s162 = smul.u32 16, %s14
      %p163 = scmp.lt.s32.totalorder %s162, 31
      %s164 = scalar_select %p163, %s162, 31
      %s165 = smul.addr %s164, 4
      %s166 = scalar_lea.vmem %s0, %s165
      %s167 = smul.u32 16, %s14
      %s168 = smul.u32 16, %s14
      %p169 = scmp.lt.s32.totalorder %s168, 31
      %s170 = scalar_select %p169, %s168, 31
      %s171 = smul.addr %s170, 4
      %s172 = scalar_lea.vmem %s3, %s171
      %s173 = smul.u32 16, %s14
      %v174 = vld [vmem:[%s166] sm:$0xf]
      %v175 = vld [vmem:[%s166 + $0x4] sm:$0xf]
      %v176 = vld [vmem:[%s166 + $0x8] sm:$0xf]
      %v177 = vld [vmem:[%s166 + $0xc] sm:$0xf]
      %v178 = vld [vmem:[%s166 + $0x10] sm:$0xf]
      %v179 = vld [vmem:[%s166 + $0x14] sm:$0xf]
      %v180 = vld [vmem:[%s166 + $0x18] sm:$0xf]
      %v181 = vld [vmem:[%s166 + $0x1c] sm:$0xf]
      %v182 = vld [vmem:[%s166 + $0x20] sm:$0xf]
      %v183 = vld [vmem:[%s166 + $0x24] sm:$0xf]
      %v184 = vld [vmem:[%s166 + $0x28] sm:$0xf]
      %v185 = vld [vmem:[%s166 + $0x2c] sm:$0xf]
      %v186 = vld [vmem:[%s166 + $0x30] sm:$0xf]
      %v187 = vld [vmem:[%s166 + $0x34] sm:$0xf]
      %v188 = vld [vmem:[%s166 + $0x38] sm:$0xf]
      %v189 = vld [vmem:[%s166 + $0x3c] sm:$0xf]
      %v190 = vunpack.c.l.bf16 %v174
      %v191 = vunpack.c.l.bf16 %v175
      %v192 = vunpack.c.l.bf16 %v176
      %v193 = vunpack.c.l.bf16 %v177
      %v194 = vunpack.c.l.bf16 %v178
      %v195 = vunpack.c.l.bf16 %v179
      %v196 = vunpack.c.l.bf16 %v180
      %v197 = vunpack.c.l.bf16 %v181
      %v198 = vunpack.c.l.bf16 %v182
      %v199 = vunpack.c.l.bf16 %v183
      %v200 = vunpack.c.l.bf16 %v184
      %v201 = vunpack.c.l.bf16 %v185
      %v202 = vunpack.c.l.bf16 %v186
      %v203 = vunpack.c.l.bf16 %v187
      %v204 = vunpack.c.l.bf16 %v188
      %v205 = vunpack.c.l.bf16 %v189
      %v206 = vld [vmem:[%s1] sm:$0x1]
      %v208 = vlaneseq
      %v209 = vshrl.u32 %v208, 7
      %v210 = vsub.s32 0, %v209
      %v211 = vrot.slane %v206, %v210
      %v213 = vmul.f32 %v190, %v211
      %v214 = vmul.f32 %v191, %v211
      %v215 = vmul.f32 %v192, %v211
      %v216 = vmul.f32 %v193, %v211
      %v217 = vmul.f32 %v194, %v211
      %v218 = vmul.f32 %v195, %v211
      %v219 = vmul.f32 %v196, %v211
      %v220 = vmul.f32 %v197, %v211
      %v221 = vmul.f32 %v198, %v211
      %v222 = vmul.f32 %v199, %v211
      %v223 = vmul.f32 %v200, %v211
      %v224 = vmul.f32 %v201, %v211
      %v225 = vmul.f32 %v202, %v211
      %v226 = vmul.f32 %v203, %v211
      %v227 = vmul.f32 %v204, %v211
      %v228 = vmul.f32 %v205, %v211
      %v229 = vld [vmem:[%s2] sm:$0x1]
      %v231 = vlaneseq
      %v232 = vshrl.u32 %v231, 7
      %v233 = vsub.s32 0, %v232
      %v234 = vrot.slane %v229, %v233
      %v236 = vadd.f32 %v213, %v234
      %v237 = vadd.f32 %v214, %v234
      %v238 = vadd.f32 %v215, %v234
      %v239 = vadd.f32 %v216, %v234
      %v240 = vadd.f32 %v217, %v234
      %v241 = vadd.f32 %v218, %v234
      %v242 = vadd.f32 %v219, %v234
      %v243 = vadd.f32 %v220, %v234
      %v244 = vadd.f32 %v221, %v234
      %v245 = vadd.f32 %v222, %v234
      %v246 = vadd.f32 %v223, %v234
      %v247 = vadd.f32 %v224, %v234
      %v248 = vadd.f32 %v225, %v234
      %v249 = vadd.f32 %v226, %v234
      %v250 = vadd.f32 %v227, %v234
      %v251 = vadd.f32 %v228, %v234
      %v252 = vmax.f32 %v236, 0.0
      %v253 = vmax.f32 %v237, 0.0
      %v254 = vmax.f32 %v238, 0.0
      %v255 = vmax.f32 %v239, 0.0
      %v256 = vmax.f32 %v240, 0.0
      %v257 = vmax.f32 %v241, 0.0
      %v258 = vmax.f32 %v242, 0.0
      %v259 = vmax.f32 %v243, 0.0
      %v260 = vmax.f32 %v244, 0.0
      %v261 = vmax.f32 %v245, 0.0
      %v262 = vmax.f32 %v246, 0.0
      %v263 = vmax.f32 %v247, 0.0
      %v264 = vmax.f32 %v248, 0.0
      %v265 = vmax.f32 %v249, 0.0
      %v266 = vmax.f32 %v250, 0.0
      %v267 = vmax.f32 %v251, 0.0
      %v268 = vpack.c.bf16 %v253, %v252
      %v269 = vpack.c.bf16 %v255, %v254
      %v270 = vpack.c.bf16 %v257, %v256
      %v271 = vpack.c.bf16 %v259, %v258
      %v272 = vpack.c.bf16 %v261, %v260
      %v273 = vpack.c.bf16 %v263, %v262
      %v274 = vpack.c.bf16 %v265, %v264
      %v275 = vpack.c.bf16 %v267, %v266
      %v284 = vunpack.c.l.b16 %v268
      %v285 = vunpack.c.h.b16 %v268
      %v286 = vunpack.c.l.b16 %v269
      %v287 = vunpack.c.h.b16 %v269
      %v288 = vunpack.c.l.b16 %v270
      %v289 = vunpack.c.h.b16 %v270
      %v290 = vunpack.c.l.b16 %v271
      %v291 = vunpack.c.h.b16 %v271
      %v292 = vunpack.c.l.b16 %v272
      %v293 = vunpack.c.h.b16 %v272
      %v294 = vunpack.c.l.b16 %v273
      %v295 = vunpack.c.h.b16 %v273
      %v296 = vunpack.c.l.b16 %v274
      %v297 = vunpack.c.h.b16 %v274
      %v298 = vunpack.c.l.b16 %v275
      %v299 = vunpack.c.h.b16 %v275
      %v300 = vpack.c.b16 %v284, %v284
      %v301 = vpack.c.b16 %v285, %v285
      %v302 = vpack.c.b16 %v286, %v286
      %v303 = vpack.c.b16 %v287, %v287
      %v304 = vpack.c.b16 %v288, %v288
      %v305 = vpack.c.b16 %v289, %v289
      %v306 = vpack.c.b16 %v290, %v290
      %v307 = vpack.c.b16 %v291, %v291
      %v308 = vpack.c.b16 %v292, %v292
      %v309 = vpack.c.b16 %v293, %v293
      %v310 = vpack.c.b16 %v294, %v294
      %v311 = vpack.c.b16 %v295, %v295
      %v312 = vpack.c.b16 %v296, %v296
      %v313 = vpack.c.b16 %v297, %v297
      %v314 = vpack.c.b16 %v298, %v298
      %v315 = vpack.c.b16 %v299, %v299
      %332 = vst [vmem:[%s172] sm:$0xf] %v300
      %333 = vst [vmem:[%s172 + $0x4] sm:$0xf] %v301
      %334 = vst [vmem:[%s172 + $0x8] sm:$0xf] %v302
      %335 = vst [vmem:[%s172 + $0xc] sm:$0xf] %v303
      %336 = vst [vmem:[%s172 + $0x10] sm:$0xf] %v304
      %337 = vst [vmem:[%s172 + $0x14] sm:$0xf] %v305
      %338 = vst [vmem:[%s172 + $0x18] sm:$0xf] %v306
      %339 = vst [vmem:[%s172 + $0x1c] sm:$0xf] %v307
      %340 = vst [vmem:[%s172 + $0x20] sm:$0xf] %v308
      %341 = vst [vmem:[%s172 + $0x24] sm:$0xf] %v309
      %342 = vst [vmem:[%s172 + $0x28] sm:$0xf] %v310
      %343 = vst [vmem:[%s172 + $0x2c] sm:$0xf] %v311
      %344 = vst [vmem:[%s172 + $0x30] sm:$0xf] %v312
      %345 = vst [vmem:[%s172 + $0x34] sm:$0xf] %v313
      %346 = vst [vmem:[%s172 + $0x38] sm:$0xf] %v314
      %347 = vst [vmem:[%s172 + $0x3c] sm:$0xf] %v315
      %s348 = smul.u32 16, %s14
      %p349 = scmp.lt.s32.totalorder %s348, 31
      %s350 = scalar_select %p349, %s348, 31
      %s351 = smul.addr %s350, 4
      %s352 = scalar_lea.vmem %s3, %s351
      // Predicated region
      $region33: #{resnetblock4_forward.6} parent=31 // pred_check
        %p353 = pneg %p100
      $region34: #{resnetblock4_forward.6} parent=31 // pred_check_branch
        %355 = sbr.rel (%p353) target = $region36
      $region35: #{resnetblock4_forward.6} parent=31 // pred_region
        %s356 = smul.u32 16, %s14
      $region36: #{resnetblock4_forward.6} parent=31 // pred_fallthru
        _
    $region32: #{resnetblock4_forward.6} parent=5 // pred_fallthru
      _
    %p357 = scmp.le.s32.totalorder 2, %s9
    // Predicated region
    $region37: #{resnetblock4_forward.6} parent=5 // pred_check
      %p358 = pneg %p357
    $region38: #{resnetblock4_forward.6} parent=5 // pred_check_branch
      %360 = sbr.rel (%p358) target = $region40
    $region39: #{resnetblock4_forward.6} parent=5 // pred_region
      %s361 = ssub.s32 %s9, 2
      // Predicated region
      $region41: #{resnetblock4_forward.6} parent=39 // pred_check
        %p362 = pneg %p106
      $region42: #{resnetblock4_forward.6} parent=39 // pred_check_branch
        %364 = sbr.rel (%p362) target = $region44
      $region43: #{resnetblock4_forward.6} parent=39 // pred_region
        %s365 = smul.u32 16, %s15
        %p366 = scmp.lt.s32.totalorder %s365, 31
        %s367 = scalar_select %p366, %s365, 31
        %s368 = smul.addr %s367, 4
        %s369 = scalar_lea.vmem %s3, %s368
      $region44: #{resnetblock4_forward.6} parent=39 // pred_fallthru
        _
    $region40: #{resnetblock4_forward.6} parent=5 // pred_fallthru
      _
  $region6: #{resnetblock4_forward.6} parent=0 // loop_footer
    %s13 = sadd.s32 1, %s9
  $region7: #{resnetblock4_forward.6} parent=0 // loop_footer_branch
    %8 = sbr.rel target = $region3
  $region8: #{resnetblock4_forward.6} parent=0 // loop_exit
    _

// kernel: resnetblock4_forward.5
$region0: #{resnetblock4_forward.5}
  #allocation0 [shape = 'u32[]', space=smem, size = 0x4, offset = 0x4, fixed_abs, tag = 'smem constant byte address 0x4 - core index']
  #allocation1 [shape = 'u32[144,128]{1,0:T(1,128)}', space=vmem, size = 0x12000, scoped, tag = 'internal scratch']
  #allocation2 [shape = 'f32[256,64]{1,0:T(8,128)}', space=vmem, size = 0x20000, scoped, tag = 'scratch operand']
  %s0 = inlined_call_operand.vmem [shape: bf16[512,256], index: 0, kind: input, shape index: {}]
  %s1 = inlined_call_operand.vmem [shape: bf16[256,64], index: 1, kind: input, shape index: {}]
  %s2 = inlined_call_operand.vmem [shape: bf16[512,64], index: 2, kind: output, shape index: {0}]
  %s3 = inlined_call_operand.vmem [shape: f32[16,64], index: 3, kind: output, shape index: {1}]
  %s4 = inlined_call_operand.vmem [shape: f32[16,64], index: 4, kind: output, shape index: {2}]
  %5 = xla_tuple %s2, %s3, %s4
  %s6 = sld [smem:[#allocation0]]
  $region57: #{resnetblock4_forward.5} parent=0
    _
  %s8 = ssub.s32 1, %s6
  %s9 = scalar_select 0, %s8, %s6
  loop: start=0, step=1, limit=4
  $region2: #{resnetblock4_forward.5} parent=0 // loop_pre_header
    _
  $region3: #{resnetblock4_forward.5} parent=0 // loop_header
    %s11 = sphi 0, %s15
    %p12 = scmp.ge.s32.totalorder %s11, 4
    %s18 = sphi 0, %s37
    %s19 = sphi 0, %s33
    %s20 = sphi 0, %s29
    %s21 = sphi 0, %s18
    %s22 = sphi 0, %s19
    %s23 = sphi 0, %s20
    %s24 = sphi 0, %s21
    %s25 = sphi 0, %s22
    %s26 = sphi 0, %s23
    %s42 = sphi 0, %s44
    %s45 = sphi 0, %s42
    %s46 = sphi 0, %s45
    %s62 = sphi 0, %s46
    %s70 = sphi 0, %s72
    %s73 = sphi 0, %s70
    %s74 = sphi 0, %s73
    %s90 = sphi 0, %s74
    %s98 = sphi 0, %s100
    %s101 = sphi 0, %s98
    %s102 = sphi 0, %s101
    %s118 = sphi 0, %s102
    %s126 = sphi 0, %s128
    %s129 = sphi 0, %s126
    %s130 = sphi 0, %s129
    %s146 = sphi 0, %s130
    %s154 = sphi 0, %s156
    %s157 = sphi 0, %s154
    %s158 = sphi 0, %s157
    %s174 = sphi 0, %s158
  $region4: #{resnetblock4_forward.5} parent=0 // loop_header_branch
    %14 = sbr.rel (%p12) target = $region8
  $region5: #{resnetblock4_forward.5} parent=0 // loop_body
    %s16 = ssub.s32 %s11, 1
    %s17 = ssub.s32 %s11, 2
    %s27 = sadd.s32 1, %s20
    %p28 = scmp.ge.s32.totalorder %s27, 1
    %s29 = scalar_select %p28, 0, %s27
    %s30 = sadd.s32 1, %s19
    %s31 = scalar_select %p28, %s30, %s19
    %p32 = scmp.ge.s32.totalorder %s31, 1
    %s33 = scalar_select %p32, 0, %s31
    %s34 = sadd.s32 1, %s18
    %s35 = scalar_select %p32, %s34, %s18
    %p36 = scmp.ge.s32.totalorder %s35, 2
    %s37 = scalar_select %p36, 0, %s35
    %s38 = ssub.s32 %s18, %s37
    %s39 = ssub.s32 %s20, %s29
    %s40 = sor.u32 %s38, %s39
    %p41 = scmp.eq.s32.totalorder %s40, 0
    %s43 = sadd.s32 %s42, 1
    %s44 = scalar_select %p41, %s42, %s43
    %p47 = pneg %p41
    %p48 = scmp.eq.s32.totalorder %s11, 1
    %p49 = por %p47, %p48
    %p50 = scmp.ne.s32.totalorder %s42, %s45
    %p51 = scmp.eq.s32.totalorder %s11, 0
    %p52 = por %p50, %p51
    %p53 = scmp.ne.s32.totalorder %s42, %s45
    %p54 = scmp.eq.s32.totalorder %s16, 1
    %p55 = por %p53, %p54
    %p56 = scmp.ne.s32.totalorder %s45, %s46
    %p57 = scmp.eq.s32.totalorder %s16, 0
    %p58 = por %p56, %p57
    %p59 = scmp.ne.s32.totalorder %s45, %s46
    %p60 = scmp.eq.s32.totalorder %s17, 1
    %p61 = por %p59, %p60
    %p63 = scmp.ne.s32.totalorder %s46, %s62
    %p64 = scmp.eq.s32.totalorder %s17, 0
    %p65 = por %p63, %p64
    %s66 = ssub.s32 %s20, %s29
    %s67 = ssub.s32 %s19, %s33
    %s68 = sor.u32 %s66, %s67
    %p69 = scmp.eq.s32.totalorder %s68, 0
    %s71 = sadd.s32 %s70, 1
    %s72 = scalar_select %p69, %s70, %s71
    %p75 = pneg %p69
    %p76 = scmp.eq.s32.totalorder %s11, 1
    %p77 = por %p75, %p76
    %p78 = scmp.ne.s32.totalorder %s70, %s73
    %p79 = scmp.eq.s32.totalorder %s11, 0
    %p80 = por %p78, %p79
    %p81 = scmp.ne.s32.totalorder %s70, %s73
    %p82 = scmp.eq.s32.totalorder %s16, 1
    %p83 = por %p81, %p82
    %p84 = scmp.ne.s32.totalorder %s73, %s74
    %p85 = scmp.eq.s32.totalorder %s16, 0
    %p86 = por %p84, %p85
    %p87 = scmp.ne.s32.totalorder %s73, %s74
    %p88 = scmp.eq.s32.totalorder %s17, 1
    %p89 = por %p87, %p88
    %p91 = scmp.ne.s32.totalorder %s74, %s90
    %p92 = scmp.eq.s32.totalorder %s17, 0
    %p93 = por %p91, %p92
    %s94 = ssub.s32 %s18, %s37
    %s95 = ssub.s32 %s19, %s33
    %s96 = sor.u32 %s94, %s95
    %p97 = scmp.eq.s32.totalorder %s96, 0
    %s99 = sadd.s32 %s98, 1
    %s100 = scalar_select %p97, %s98, %s99
    %p103 = pneg %p97
    %p104 = scmp.eq.s32.totalorder %s11, 1
    %p105 = por %p103, %p104
    %p106 = scmp.ne.s32.totalorder %s98, %s101
    %p107 = scmp.eq.s32.totalorder %s11, 0
    %p108 = por %p106, %p107
    %p109 = scmp.ne.s32.totalorder %s98, %s101
    %p110 = scmp.eq.s32.totalorder %s16, 1
    %p111 = por %p109, %p110
    %p112 = scmp.ne.s32.totalorder %s101, %s102
    %p113 = scmp.eq.s32.totalorder %s16, 0
    %p114 = por %p112, %p113
    %p115 = scmp.ne.s32.totalorder %s101, %s102
    %p116 = scmp.eq.s32.totalorder %s17, 1
    %p117 = por %p115, %p116
    %p119 = scmp.ne.s32.totalorder %s102, %s118
    %p120 = scmp.eq.s32.totalorder %s17, 0
    %p121 = por %p119, %p120
    %s122 = ssub.s32 %s18, %s37
    %s123 = ssub.s32 %s19, %s33
    %s124 = sor.u32 %s122, %s123
    %p125 = scmp.eq.s32.totalorder %s124, 0
    %s127 = sadd.s32 %s126, 1
    %s128 = scalar_select %p125, %s126, %s127
    %p131 = pneg %p125
    %p132 = scmp.eq.s32.totalorder %s11, 1
    %p133 = por %p131, %p132
    %p134 = scmp.ne.s32.totalorder %s126, %s129
    %p135 = scmp.eq.s32.totalorder %s11, 0
    %p136 = por %p134, %p135
    %p137 = scmp.ne.s32.totalorder %s126, %s129
    %p138 = scmp.eq.s32.totalorder %s16, 1
    %p139 = por %p137, %p138
    %p140 = scmp.ne.s32.totalorder %s129, %s130
    %p141 = scmp.eq.s32.totalorder %s16, 0
    %p142 = por %p140, %p141
    %p143 = scmp.ne.s32.totalorder %s129, %s130
    %p144 = scmp.eq.s32.totalorder %s17, 1
    %p145 = por %p143, %p144
    %p147 = scmp.ne.s32.totalorder %s130, %s146
    %p148 = scmp.eq.s32.totalorder %s17, 0
    %p149 = por %p147, %p148
    %s150 = ssub.s32 %s18, %s37
    %s151 = ssub.s32 %s19, %s33
    %s152 = sor.u32 %s150, %s151
    %p153 = scmp.eq.s32.totalorder %s152, 0
    %s155 = sadd.s32 %s154, 1
    %s156 = scalar_select %p153, %s154, %s155
    %p159 = pneg %p153
    %p160 = scmp.eq.s32.totalorder %s11, 1
    %p161 = por %p159, %p160
    %p162 = scmp.ne.s32.totalorder %s154, %s157
    %p163 = scmp.eq.s32.totalorder %s11, 0
    %p164 = por %p162, %p163
    %p165 = scmp.ne.s32.totalorder %s154, %s157
    %p166 = scmp.eq.s32.totalorder %s16, 1
    %p167 = por %p165, %p166
    %p168 = scmp.ne.s32.totalorder %s157, %s158
    %p169 = scmp.eq.s32.totalorder %s16, 0
    %p170 = por %p168, %p169
    %p171 = scmp.ne.s32.totalorder %s157, %s158
    %p172 = scmp.eq.s32.totalorder %s17, 1
    %p173 = por %p171, %p172
    %p175 = scmp.ne.s32.totalorder %s158, %s174
    %p176 = scmp.eq.s32.totalorder %s17, 0
    %p177 = por %p175, %p176
    %p178 = scmp.le.s32.totalorder 1, %s11
    %p179 = scmp.lt.s32.totalorder %s11, 3
    %p180 = pnand %p178, %p179
    %p181 = pneg %p180
    // Predicated region
    $region9: #{resnetblock4_forward.5} parent=5 // pred_check
      _
    $region10: #{resnetblock4_forward.5} parent=5 // pred_check_branch
      %183 = sbr.rel (%p180) target = $region12
    $region11: #{resnetblock4_forward.5} parent=5 // pred_region
      %s184 = ssub.s32 %s11, 1
      // Predicated region
      $region13: #{resnetblock4_forward.5} parent=11 // pred_check
        %p185 = pneg %p86
      $region14: #{resnetblock4_forward.5} parent=11 // pred_check_branch
        %187 = sbr.rel (%p185) target = $region16
      $region15: #{resnetblock4_forward.5} parent=11 // pred_region
        %s188 = smul.u32 32, %s23
        %p189 = scmp.lt.s32.totalorder %s188, 31
        %s190 = scalar_select %p189, %s188, 31
        %p191 = scmp.lt.s32.totalorder %s22, 0
        %s192 = scalar_select %p191, %s22, 0
        %s193 = sadd.s32 %s192, %s190
        %s194 = smul.addr %s193, 4
        %s195 = scalar_lea.vmem %s1, %s194
        %s196 = smul.u32 32, %s23
      $region16: #{resnetblock4_forward.5} parent=11 // pred_fallthru
        _
    $region12: #{resnetblock4_forward.5} parent=5 // pred_fallthru
      _
    %p197 = scmp.lt.s32.totalorder %s11, 2
    // Predicated region
    $region17: #{resnetblock4_forward.5} parent=5 // pred_check
      %p198 = pneg %p197
    $region18: #{resnetblock4_forward.5} parent=5 // pred_check_branch
      %200 = sbr.rel (%p198) target = $region20
    $region19: #{resnetblock4_forward.5} parent=5 // pred_region
      // Predicated region
      $region21: #{resnetblock4_forward.5} parent=19 // pred_check
        %p201 = pneg %p52
      $region22: #{resnetblock4_forward.5} parent=19 // pred_check_branch
        %203 = sbr.rel (%p201) target = $region24
      $region23: #{resnetblock4_forward.5} parent=19 // pred_region
        %s204 = smul.u32 32, %s18
        %s205 = smul.u32 2, %s20
        %p206 = scmp.lt.s32.totalorder %s204, 63
        %s207 = scalar_select %p206, %s204, 63
        %p208 = scmp.lt.s32.totalorder %s205, 1
        %s209 = scalar_select %p208, %s205, 1
        %s210 = smul.addr %s207, 2
        %s211 = sadd.s32 %s209, %s210
        %s212 = smul.addr %s211, 4
        %s213 = scalar_lea.vmem %s0, %s212
        %s214 = smul.u32 32, %s18
        %s215 = smul.u32 2, %s20
      $region24: #{resnetblock4_forward.5} parent=19 // pred_fallthru
        _
    $region20: #{resnetblock4_forward.5} parent=5 // pred_fallthru
      _
    %p216 = scmp.le.s32.totalorder 1, %s11
    %p217 = scmp.lt.s32.totalorder %s11, 3
    %p218 = pnand %p216, %p217
    %p219 = pneg %p218
    // Predicated region
    $region25: #{resnetblock4_forward.5} parent=5 // pred_check
      _
    $region26: #{resnetblock4_forward.5} parent=5 // pred_check_branch
      %221 = sbr.rel (%p218) target = $region28
    $region27: #{resnetblock4_forward.5} parent=5 // pred_region
      %s222 = ssub.s32 %s11, 1
      %s223 = smul.u32 32, %s21
      %s224 = smul.u32 2, %s23
      %p225 = scmp.lt.s32.totalorder %s223, 63
      %s226 = scalar_select %p225, %s223, 63
      %p227 = scmp.lt.s32.totalorder %s224, 1
      %s228 = scalar_select %p227, %s224, 1
      %s229 = smul.addr %s226, 2
      %s230 = sadd.s32 %s228, %s229
      %s231 = smul.addr %s230, 4
      %s232 = scalar_lea.vmem %s0, %s231
      %p233 = pneg %p58
      %p234 = pneg %p55
      %s235 = smul.u32 32, %s23
      %p236 = scmp.lt.s32.totalorder %s235, 31
      %s237 = scalar_select %p236, %s235, 31
      %p238 = scmp.lt.s32.totalorder %s22, 0
      %s239 = scalar_select %p238, %s22, 0
      %s240 = sadd.s32 %s239, %s237
      %s241 = smul.addr %s240, 4
      %s242 = scalar_lea.vmem %s1, %s241
      %p243 = pneg %p86
      %p244 = pneg %p83
      %p245 = pneg %p114
      %p246 = pneg %p111
      %s247 = smul.u32 32, %s21
      %p248 = scmp.lt.s32.totalorder %s247, 63
      %s249 = scalar_select %p248, %s247, 63
      %p250 = scmp.lt.s32.totalorder %s22, 0
      %s251 = scalar_select %p250, %s22, 0
      %s252 = sadd.s32 %s251, %s249
      %s253 = smul.addr %s252, 4
      %s254 = scalar_lea.vmem %s2, %s253
      %p255 = pneg %p142
      %p256 = pneg %p139
      %p257 = scmp.lt.s32.totalorder %s21, 1
      %s258 = scalar_select %p257, %s21, 1
      %p259 = scmp.lt.s32.totalorder %s22, 0
      %s260 = scalar_select %p259, %s22, 0
      %s261 = sadd.s32 %s260, %s258
      %s262 = smul.addr %s261, 8
      %s263 = scalar_lea.vmem %s3, %s262
      %p264 = pneg %p170
      %p265 = pneg %p167
      %p266 = scmp.lt.s32.totalorder %s21, 1
      %s267 = scalar_select %p266, %s21, 1
      %p268 = scmp.lt.s32.totalorder %s22, 0
      %s269 = scalar_select %p268, %s22, 0
      %s270 = sadd.s32 %s269, %s267
      %s271 = smul.addr %s270, 8
      %s272 = scalar_lea.vmem %s4, %s271
      %s273 = smul.u32 32, %s21
      %s274 = smul.u32 2, %s23
      %p275 = scmp.lt.s32.totalorder %s273, 63
      %s276 = scalar_select %p275, %s273, 63
      %p277 = scmp.lt.s32.totalorder %s274, 1
      %s278 = scalar_select %p277, %s274, 1
      %s279 = smul.addr %s276, 2
      %s280 = sadd.s32 %s278, %s279
      %s281 = smul.addr %s280, 4
      %s282 = scalar_lea.vmem %s0, %s281
      %s283 = smul.u32 32, %s21
      %s284 = smul.u32 2, %s23
      %s285 = smul.u32 32, %s23
      %p286 = scmp.lt.s32.totalorder %s285, 31
      %s287 = scalar_select %p286, %s285, 31
      %p288 = scmp.lt.s32.totalorder %s22, 0
      %s289 = scalar_select %p288, %s22, 0
      %s290 = sadd.s32 %s289, %s287
      %s291 = smul.addr %s290, 4
      %s292 = scalar_lea.vmem %s1, %s291
      %s293 = smul.u32 32, %s23
      %s294 = smul.u32 32, %s21
      %p295 = scmp.lt.s32.totalorder %s294, 63
      %s296 = scalar_select %p295, %s294, 63
      %p297 = scmp.lt.s32.totalorder %s22, 0
      %s298 = scalar_select %p297, %s22, 0
      %s299 = sadd.s32 %s298, %s296
      %s300 = smul.addr %s299, 4
      %s301 = scalar_lea.vmem %s2, %s300
      %s302 = smul.u32 32, %s21
      %p303 = scmp.lt.s32.totalorder %s21, 1
      %s304 = scalar_select %p303, %s21, 1
      %p305 = scmp.lt.s32.totalorder %s22, 0
      %s306 = scalar_select %p305, %s22, 0
      %s307 = sadd.s32 %s306, %s304
      %s308 = smul.addr %s307, 8
      %s309 = scalar_lea.vmem %s3, %s308
      %p310 = scmp.lt.s32.totalorder %s21, 1
      %s311 = scalar_select %p310, %s21, 1
      %p312 = scmp.lt.s32.totalorder %s22, 0
      %s313 = scalar_select %p312, %s22, 0
      %s314 = sadd.s32 %s313, %s311
      %s315 = smul.addr %s314, 8
      %s316 = scalar_lea.vmem %s4, %s315
      %v318 = vld [vmem:[%s282] sm:$0xff]
      %v319 = vld [vmem:[%s282 + $0x8] sm:$0xff]
      %v320 = vld [vmem:[%s282 + $0x10] sm:$0xff]
      %v321 = vld [vmem:[%s282 + $0x18] sm:$0xff]
      %v322 = vld [vmem:[%s282 + $0x20] sm:$0xff]
      %v323 = vld [vmem:[%s282 + $0x28] sm:$0xff]
      %v324 = vld [vmem:[%s282 + $0x30] sm:$0xff]
      %v325 = vld [vmem:[%s282 + $0x38] sm:$0xff]
      %v326 = vld [vmem:[%s282 + $0x40] sm:$0xff]
      %v327 = vld [vmem:[%s282 + $0x48] sm:$0xff]
      %v328 = vld [vmem:[%s282 + $0x50] sm:$0xff]
      %v329 = vld [vmem:[%s282 + $0x58] sm:$0xff]
      %v330 = vld [vmem:[%s282 + $0x60] sm:$0xff]
      %v331 = vld [vmem:[%s282 + $0x68] sm:$0xff]
      %v332 = vld [vmem:[%s282 + $0x70] sm:$0xff]
      %v333 = vld [vmem:[%s282 + $0x78] sm:$0xff]
      %v334 = vld [vmem:[%s282 + $0x80] sm:$0xff]
      %v335 = vld [vmem:[%s282 + $0x88] sm:$0xff]
      %v336 = vld [vmem:[%s282 + $0x90] sm:$0xff]
      %v337 = vld [vmem:[%s282 + $0x98] sm:$0xff]
      %v338 = vld [vmem:[%s282 + $0xa0] sm:$0xff]
      %v339 = vld [vmem:[%s282 + $0xa8] sm:$0xff]
      %v340 = vld [vmem:[%s282 + $0xb0] sm:$0xff]
      %v341 = vld [vmem:[%s282 + $0xb8] sm:$0xff]
      %v342 = vld [vmem:[%s282 + $0xc0] sm:$0xff]
      %v343 = vld [vmem:[%s282 + $0xc8] sm:$0xff]
      %v344 = vld [vmem:[%s282 + $0xd0] sm:$0xff]
      %v345 = vld [vmem:[%s282 + $0xd8] sm:$0xff]
      %v346 = vld [vmem:[%s282 + $0xe0] sm:$0xff]
      %v347 = vld [vmem:[%s282 + $0xe8] sm:$0xff]
      %v348 = vld [vmem:[%s282 + $0xf0] sm:$0xff]
      %v349 = vld [vmem:[%s282 + $0xf8] sm:$0xff]
      %v350 = vld [vmem:[%s292] sm:$0xf]
      %v351 = vld [vmem:[%s292 + $0x4] sm:$0xf]
      %v352 = vld [vmem:[%s292 + $0x8] sm:$0xf]
      %v353 = vld [vmem:[%s292 + $0xc] sm:$0xf]
      %v354 = vld [vmem:[%s292 + $0x10] sm:$0xf]
      %v355 = vld [vmem:[%s292 + $0x14] sm:$0xf]
      %v356 = vld [vmem:[%s292 + $0x18] sm:$0xf]
      %v357 = vld [vmem:[%s292 + $0x1c] sm:$0xf]
      %v358 = vld [vmem:[%s292 + $0x20] sm:$0xf]
      %v359 = vld [vmem:[%s292 + $0x24] sm:$0xf]
      %v360 = vld [vmem:[%s292 + $0x28] sm:$0xf]
      %v361 = vld [vmem:[%s292 + $0x2c] sm:$0xf]
      %v362 = vld [vmem:[%s292 + $0x30] sm:$0xf]
      %v363 = vld [vmem:[%s292 + $0x34] sm:$0xf]
      %v364 = vld [vmem:[%s292 + $0x38] sm:$0xf]
      %v365 = vld [vmem:[%s292 + $0x3c] sm:$0xf]
      %v366 = vld [vmem:[%s292 + $0x40] sm:$0xf]
      %v367 = vld [vmem:[%s292 + $0x44] sm:$0xf]
      %v368 = vld [vmem:[%s292 + $0x48] sm:$0xf]
      %v369 = vld [vmem:[%s292 + $0x4c] sm:$0xf]
      %v370 = vld [vmem:[%s292 + $0x50] sm:$0xf]
      %v371 = vld [vmem:[%s292 + $0x54] sm:$0xf]
      %v372 = vld [vmem:[%s292 + $0x58] sm:$0xf]
      %v373 = vld [vmem:[%s292 + $0x5c] sm:$0xf]
      %v374 = vld [vmem:[%s292 + $0x60] sm:$0xf]
      %v375 = vld [vmem:[%s292 + $0x64] sm:$0xf]
      %v376 = vld [vmem:[%s292 + $0x68] sm:$0xf]
      %v377 = vld [vmem:[%s292 + $0x6c] sm:$0xf]
      %v378 = vld [vmem:[%s292 + $0x70] sm:$0xf]
      %v379 = vld [vmem:[%s292 + $0x74] sm:$0xf]
      %v380 = vld [vmem:[%s292 + $0x78] sm:$0xf]
      %v381 = vld [vmem:[%s292 + $0x7c] sm:$0xf]
      %v414 = vunpack.c.l.b16 %v318
      %v415 = vunpack.c.h.b16 %v318
      %v416 = vunpack.c.l.b16 %v319
      %v417 = vunpack.c.h.b16 %v319
      %v418 = vunpack.c.l.b16 %v320
      %v419 = vunpack.c.h.b16 %v320
      %v420 = vunpack.c.l.b16 %v321
      %v421 = vunpack.c.h.b16 %v321
      %v422 = vunpack.c.l.b16 %v322
      %v423 = vunpack.c.h.b16 %v322
      %v424 = vunpack.c.l.b16 %v323
      %v425 = vunpack.c.h.b16 %v323
      %v426 = vunpack.c.l.b16 %v324
      %v427 = vunpack.c.h.b16 %v324
      %v428 = vunpack.c.l.b16 %v325
      %v429 = vunpack.c.h.b16 %v325
      %v430 = vunpack.c.l.b16 %v326
      %v431 = vunpack.c.h.b16 %v326
      %v432 = vunpack.c.l.b16 %v327
      %v433 = vunpack.c.h.b16 %v327
      %v434 = vunpack.c.l.b16 %v328
      %v435 = vunpack.c.h.b16 %v328
      %v436 = vunpack.c.l.b16 %v329
      %v437 = vunpack.c.h.b16 %v329
      %v438 = vunpack.c.l.b16 %v330
      %v439 = vunpack.c.h.b16 %v330
      %v440 = vunpack.c.l.b16 %v331
      %v441 = vunpack.c.h.b16 %v331
      %v442 = vunpack.c.l.b16 %v332
      %v443 = vunpack.c.h.b16 %v332
      %v444 = vunpack.c.l.b16 %v333
      %v445 = vunpack.c.h.b16 %v333
      %v446 = vunpack.c.l.b16 %v334
      %v447 = vunpack.c.h.b16 %v334
      %v448 = vunpack.c.l.b16 %v335
      %v449 = vunpack.c.h.b16 %v335
      %v450 = vunpack.c.l.b16 %v336
      %v451 = vunpack.c.h.b16 %v336
      %v452 = vunpack.c.l.b16 %v337
      %v453 = vunpack.c.h.b16 %v337
      %v454 = vunpack.c.l.b16 %v338
      %v455 = vunpack.c.h.b16 %v338
      %v456 = vunpack.c.l.b16 %v339
      %v457 = vunpack.c.h.b16 %v339
      %v458 = vunpack.c.l.b16 %v340
      %v459 = vunpack.c.h.b16 %v340
      %v460 = vunpack.c.l.b16 %v341
      %v461 = vunpack.c.h.b16 %v341
      %v462 = vunpack.c.l.b16 %v342
      %v463 = vunpack.c.h.b16 %v342
      %v464 = vunpack.c.l.b16 %v343
      %v465 = vunpack.c.h.b16 %v343
      %v466 = vunpack.c.l.b16 %v344
      %v467 = vunpack.c.h.b16 %v344
      %v468 = vunpack.c.l.b16 %v345
      %v469 = vunpack.c.h.b16 %v345
      %v470 = vunpack.c.l.b16 %v346
      %v471 = vunpack.c.h.b16 %v346
      %v472 = vunpack.c.l.b16 %v347
      %v473 = vunpack.c.h.b16 %v347
      %v474 = vunpack.c.l.b16 %v348
      %v475 = vunpack.c.h.b16 %v348
      %v476 = vunpack.c.l.b16 %v349
      %v477 = vunpack.c.h.b16 %v349
      %v478 = vpack.c.b16 %v416, %v414
      %v479 = vpack.c.b16 %v417, %v415
      %v480 = vpack.c.b16 %v420, %v418
      %v481 = vpack.c.b16 %v421, %v419
      %v482 = vpack.c.b16 %v424, %v422
      %v483 = vpack.c.b16 %v425, %v423
      %v484 = vpack.c.b16 %v428, %v426
      %v485 = vpack.c.b16 %v429, %v427
      %v486 = vpack.c.b16 %v432, %v430
      %v487 = vpack.c.b16 %v433, %v431
      %v488 = vpack.c.b16 %v436, %v434
      %v489 = vpack.c.b16 %v437, %v435
      %v490 = vpack.c.b16 %v440, %v438
      %v491 = vpack.c.b16 %v441, %v439
      %v492 = vpack.c.b16 %v444, %v442
      %v493 = vpack.c.b16 %v445, %v443
      %v494 = vpack.c.b16 %v448, %v446
      %v495 = vpack.c.b16 %v449, %v447
      %v496 = vpack.c.b16 %v452, %v450
      %v497 = vpack.c.b16 %v453, %v451
      %v498 = vpack.c.b16 %v456, %v454
      %v499 = vpack.c.b16 %v457, %v455
      %v500 = vpack.c.b16 %v460, %v458
      %v501 = vpack.c.b16 %v461, %v459
      %v502 = vpack.c.b16 %v464, %v462
      %v503 = vpack.c.b16 %v465, %v463
      %v504 = vpack.c.b16 %v468, %v466
      %v505 = vpack.c.b16 %v469, %v467
      %v506 = vpack.c.b16 %v472, %v470
      %v507 = vpack.c.b16 %v473, %v471
      %v508 = vpack.c.b16 %v476, %v474
      %v509 = vpack.c.b16 %v477, %v475
      %v574 = vunpack.c.l.b16 %v350
      %v575 = vunpack.c.l.b16 %v351
      %v576 = vunpack.c.l.b16 %v352
      %v577 = vunpack.c.l.b16 %v353
      %v578 = vunpack.c.l.b16 %v354
      %v579 = vunpack.c.l.b16 %v355
      %v580 = vunpack.c.l.b16 %v356
      %v581 = vunpack.c.l.b16 %v357
      %v582 = vunpack.c.l.b16 %v358
      %v583 = vunpack.c.l.b16 %v359
      %v584 = vunpack.c.l.b16 %v360
      %v585 = vunpack.c.l.b16 %v361
      %v586 = vunpack.c.l.b16 %v362
      %v587 = vunpack.c.l.b16 %v363
      %v588 = vunpack.c.l.b16 %v364
      %v589 = vunpack.c.l.b16 %v365
      %v590 = vunpack.c.l.b16 %v366
      %v591 = vunpack.c.l.b16 %v367
      %v592 = vunpack.c.l.b16 %v368
      %v593 = vunpack.c.l.b16 %v369
      %v594 = vunpack.c.l.b16 %v370
      %v595 = vunpack.c.l.b16 %v371
      %v596 = vunpack.c.l.b16 %v372
      %v597 = vunpack.c.l.b16 %v373
      %v598 = vunpack.c.l.b16 %v374
      %v599 = vunpack.c.l.b16 %v375
      %v600 = vunpack.c.l.b16 %v376
      %v601 = vunpack.c.l.b16 %v377
      %v602 = vunpack.c.l.b16 %v378
      %v603 = vunpack.c.l.b16 %v379
      %v604 = vunpack.c.l.b16 %v380
      %v605 = vunpack.c.l.b16 %v381
      %v606 = vpack.c.b16 %v575, %v574
      %v607 = vpack.c.b16 %v577, %v576
      %v608 = vpack.c.b16 %v579, %v578
      %v609 = vpack.c.b16 %v581, %v580
      %v610 = vpack.c.b16 %v583, %v582
      %v611 = vpack.c.b16 %v585, %v584
      %v612 = vpack.c.b16 %v587, %v586
      %v613 = vpack.c.b16 %v589, %v588
      %v614 = vpack.c.b16 %v591, %v590
      %v615 = vpack.c.b16 %v593, %v592
      %v616 = vpack.c.b16 %v595, %v594
      %v617 = vpack.c.b16 %v597, %v596
      %v618 = vpack.c.b16 %v599, %v598
      %v619 = vpack.c.b16 %v601, %v600
      %v620 = vpack.c.b16 %v603, %v602
      %v621 = vpack.c.b16 %v605, %v604
      %638 = vmatprep.subr.bf16.mxu0 0
      %639 = vmatpush1.bf16.msra.mxu0 %v606
      %640 = vmatprep.subr.bf16.mxu0 0
      %641 = vmatpush1.bf16.msra.mxu0 %v607
      %642 = vmatprep.subr.bf16.mxu0 0
      %643 = vmatpush1.bf16.msra.mxu0 %v608
      %644 = vmatprep.subr.bf16.mxu0 0
      %645 = vmatpush1.bf16.msra.mxu0 %v609
      %646 = vmatprep.subr.bf16.mxu0 0
      %647 = vmatpush1.bf16.msra.mxu0 %v610
      %648 = vmatprep.subr.bf16.mxu0 0
      %649 = vmatpush1.bf16.msra.mxu0 %v611
      %650 = vmatprep.subr.bf16.mxu0 0
      %651 = vmatpush1.bf16.msra.mxu0 %v612
      %652 = vmatprep.subr.bf16.mxu0 0
      %653 = vmatpush1.bf16.msra.mxu0 %v613
      %654 = vmatprep.subr.bf16.mxu0 0
      %655 = vmatpush1.bf16.msra.mxu0 %v614
      %656 = vmatprep.subr.bf16.mxu0 0
      %657 = vmatpush1.bf16.msra.mxu0 %v615
      %658 = vmatprep.subr.bf16.mxu0 0
      %659 = vmatpush1.bf16.msra.mxu0 %v616
      %660 = vmatprep.subr.bf16.mxu0 0
      %661 = vmatpush1.bf16.msra.mxu0 %v617
      %662 = vmatprep.subr.bf16.mxu0 0
      %663 = vmatpush1.bf16.msra.mxu0 %v618
      %664 = vmatprep.subr.bf16.mxu0 0
      %665 = vmatpush1.bf16.msra.mxu0 %v619
      %666 = vmatprep.subr.bf16.mxu0 0
      %667 = vmatpush1.bf16.msra.mxu0 %v620
      %668 = vmatprep.subr.bf16.mxu0 0
      %669 = vmatpush1.bf16.msra.mxu0 %v621
      %670 = vmatprep.mubr.bf16.mxu0 %v479
      %671 = vmatmul.mubr.bf16.gmra.mrb[0].mxu0 %v478
      %v672 = vpop.f32.mrb[0].mxu0
      %v673 = vadd.f32 0.0, %v672
      %v674 = vpop.f32.mrb[0].mxu0
      %v675 = vpop.f32.mrb[0].mxu0
      %v676 = vadd.f32 0.0, %v675
      %v677 = vpop.f32.mrb[0].mxu0
      %678 = vmatprep.mubr.bf16.mxu0 %v481
      %679 = vmatmul.mubr.bf16.gmra.mrb[0].mxu0 %v480
      %v680 = vpop.f32.mrb[0].mxu0
      %v681 = vadd.f32 0.0, %v680
      %v682 = vpop.f32.mrb[0].mxu0
      %v683 = vpop.f32.mrb[0].mxu0
      %v684 = vadd.f32 0.0, %v683
      %v685 = vpop.f32.mrb[0].mxu0
      %686 = vmatprep.mubr.bf16.mxu0 %v483
      %687 = vmatmul.mubr.bf16.gmra.mrb[0].mxu0 %v482
      %v688 = vpop.f32.mrb[0].mxu0
      %v689 = vadd.f32 0.0, %v688
      %v690 = vpop.f32.mrb[0].mxu0
      %v691 = vpop.f32.mrb[0].mxu0
      %v692 = vadd.f32 0.0, %v691
      %v693 = vpop.f32.mrb[0].mxu0
      %694 = vmatprep.mubr.bf16.mxu0 %v485
      %695 = vmatmul.mubr.bf16.gmra.mrb[0].mxu0 %v484
      %v696 = vpop.f32.mrb[0].mxu0
      %v697 = vadd.f32 0.0, %v696
      %v698 = vpop.f32.mrb[0].mxu0
      %v699 = vpop.f32.mrb[0].mxu0
      %v700 = vadd.f32 0.0, %v699
      %v701 = vpop.f32.mrb[0].mxu0
      %702 = vmatprep.mubr.bf16.mxu0 %v487
      %703 = vmatmul.mubr.bf16.gmra.mrb[0].mxu0 %v486
      %v704 = vpop.f32.mrb[0].mxu0
      %v705 = vadd.f32 0.0, %v704
      %v706 = vpop.f32.mrb[0].mxu0
      %v707 = vpop.f32.mrb[0].mxu0
      %v708 = vadd.f32 0.0, %v707
      %v709 = vpop.f32.mrb[0].mxu0
      %710 = vmatprep.mubr.bf16.mxu0 %v489
      %711 = vmatmul.mubr.bf16.gmra.mrb[0].mxu0 %v488
      %v712 = vpop.f32.mrb[0].mxu0
      %v713 = vadd.f32 0.0, %v712
      %v714 = vpop.f32.mrb[0].mxu0
      %v715 = vpop.f32.mrb[0].mxu0
      %v716 = vadd.f32 0.0, %v715
      %v717 = vpop.f32.mrb[0].mxu0
      %718 = vmatprep.mubr.bf16.mxu0 %v491
      %719 = vmatmul.mubr.bf16.gmra.mrb[0].mxu0 %v490
      %v720 = vpop.f32.mrb[0].mxu0
      %v721 = vadd.f32 0.0, %v720
      %v722 = vpop.f32.mrb[0].mxu0
      %v723 = vpop.f32.mrb[0].mxu0
      %v724 = vadd.f32 0.0, %v723
      %v725 = vpop.f32.mrb[0].mxu0
      %726 = vmatprep.mubr.bf16.mxu0 %v493
      %727 = vmatmul.mubr.bf16.gmra.mrb[0].mxu0 %v492
      %v728 = vpop.f32.mrb[0].mxu0
      %v729 = vadd.f32 0.0, %v728
      %v730 = vpop.f32.mrb[0].mxu0
      %v731 = vpop.f32.mrb[0].mxu0
      %v732 = vadd.f32 0.0, %v731
      %v733 = vpop.f32.mrb[0].mxu0
      %734 = vmatprep.mubr.bf16.mxu0 %v495
      %735 = vmatmul.mubr.bf16.gmra.mrb[0].mxu0 %v494
      %v736 = vpop.f32.mrb[0].mxu0
      %v737 = vadd.f32 0.0, %v736
      %v738 = vpop.f32.mrb[0].mxu0
      %v739 = vpop.f32.mrb[0].mxu0
      %v740 = vadd.f32 0.0, %v739
      %v741 = vpop.f32.mrb[0].mxu0
      %742 = vmatprep.mubr.bf16.mxu0 %v497
      %743 = vmatmul.mubr.bf16.gmra.mrb[0].mxu0 %v496
      %v744 = vpop.f32.mrb[0].mxu0
      %v745 = vadd.f32 0.0, %v744
      %v746 = vpop.f32.mrb[0].mxu0
      %v747 = vpop.f32.mrb[0].mxu0
      %v748 = vadd.f32 0.0, %v747
      %v749 = vpop.f32.mrb[0].mxu0
      %750 = vmatprep.mubr.bf16.mxu0 %v499
      %751 = vmatmul.mubr.bf16.gmra.mrb[0].mxu0 %v498
      %v752 = vpop.f32.mrb[0].mxu0
      %v753 = vadd.f32 0.0, %v752
      %v754 = vpop.f32.mrb[0].mxu0
      %v755 = vpop.f32.mrb[0].mxu0
      %v756 = vadd.f32 0.0, %v755
      %v757 = vpop.f32.mrb[0].mxu0
      %758 = vmatprep.mubr.bf16.mxu0 %v501
      %759 = vmatmul.mubr.bf16.gmra.mrb[0].mxu0 %v500
      %v760 = vpop.f32.mrb[0].mxu0
      %v761 = vadd.f32 0.0, %v760
      %v762 = vpop.f32.mrb[0].mxu0
      %v763 = vpop.f32.mrb[0].mxu0
      %v764 = vadd.f32 0.0, %v763
      %v765 = vpop.f32.mrb[0].mxu0
      %766 = vmatprep.mubr.bf16.mxu0 %v503
      %767 = vmatmul.mubr.bf16.gmra.mrb[0].mxu0 %v502
      %v768 = vpop.f32.mrb[0].mxu0
      %v769 = vadd.f32 0.0, %v768
      %v770 = vpop.f32.mrb[0].mxu0
      %v771 = vpop.f32.mrb[0].mxu0
      %v772 = vadd.f32 0.0, %v771
      %v773 = vpop.f32.mrb[0].mxu0
      %774 = vmatprep.mubr.bf16.mxu0 %v505
      %775 = vmatmul.mubr.bf16.gmra.mrb[0].mxu0 %v504
      %v776 = vpop.f32.mrb[0].mxu0
      %v777 = vadd.f32 0.0, %v776
      %v778 = vpop.f32.mrb[0].mxu0
      %v779 = vpop.f32.mrb[0].mxu0
      %v780 = vadd.f32 0.0, %v779
      %v781 = vpop.f32.mrb[0].mxu0
      %782 = vmatprep.mubr.bf16.mxu0 %v507
      %783 = vmatmul.mubr.bf16.gmra.mrb[0].mxu0 %v506
      %v784 = vpop.f32.mrb[0].mxu0
      %v785 = vadd.f32 0.0, %v784
      %v786 = vpop.f32.mrb[0].mxu0
      %v787 = vpop.f32.mrb[0].mxu0
      %v788 = vadd.f32 0.0, %v787
      %v789 = vpop.f32.mrb[0].mxu0
      %790 = vmatprep.mubr.bf16.mxu0 %v509
      %791 = vmatmul.mubr.bf16.gmra.mrb[0].mxu0 %v508
      %v792 = vpop.f32.mrb[0].mxu0
      %v793 = vadd.f32 0.0, %v792
      %v794 = vpop.f32.mrb[0].mxu0
      %v795 = vpop.f32.mrb[0].mxu0
      %v796 = vadd.f32 0.0, %v795
      %v797 = vpop.f32.mrb[0].mxu0
      %798 = vdwg.mxu0
      %v799 = vpack.c.bf16 %v676, %v673
      %v800 = vpack.c.bf16 %v684, %v681
      %v801 = vpack.c.bf16 %v692, %v689
      %v802 = vpack.c.bf16 %v700, %v697
      %v803 = vpack.c.bf16 %v708, %v705
      %v804 = vpack.c.bf16 %v716, %v713
      %v805 = vpack.c.bf16 %v724, %v721
      %v806 = vpack.c.bf16 %v732, %v729
      %v807 = vpack.c.bf16 %v740, %v737
      %v808 = vpack.c.bf16 %v748, %v745
      %v809 = vpack.c.bf16 %v756, %v753
      %v810 = vpack.c.bf16 %v764, %v761
      %v811 = vpack.c.bf16 %v772, %v769
      %v812 = vpack.c.bf16 %v780, %v777
      %v813 = vpack.c.bf16 %v788, %v785
      %v814 = vpack.c.bf16 %v796, %v793
      %v831 = vunpack.c.l.b16 %v799
      %v832 = vunpack.c.h.b16 %v799
      %v833 = vunpack.c.l.b16 %v800
      %v834 = vunpack.c.h.b16 %v800
      %v835 = vunpack.c.l.b16 %v801
      %v836 = vunpack.c.h.b16 %v801
      %v837 = vunpack.c.l.b16 %v802
      %v838 = vunpack.c.h.b16 %v802
      %v839 = vunpack.c.l.b16 %v803
      %v840 = vunpack.c.h.b16 %v803
      %v841 = vunpack.c.l.b16 %v804
      %v842 = vunpack.c.h.b16 %v804
      %v843 = vunpack.c.l.b16 %v805
      %v844 = vunpack.c.h.b16 %v805
      %v845 = vunpack.c.l.b16 %v806
      %v846 = vunpack.c.h.b16 %v806
      %v847 = vunpack.c.l.b16 %v807
      %v848 = vunpack.c.h.b16 %v807
      %v849 = vunpack.c.l.b16 %v808
      %v850 = vunpack.c.h.b16 %v808
      %v851 = vunpack.c.l.b16 %v809
      %v852 = vunpack.c.h.b16 %v809
      %v853 = vunpack.c.l.b16 %v810
      %v854 = vunpack.c.h.b16 %v810
      %v855 = vunpack.c.l.b16 %v811
      %v856 = vunpack.c.h.b16 %v811
      %v857 = vunpack.c.l.b16 %v812
      %v858 = vunpack.c.h.b16 %v812
      %v859 = vunpack.c.l.b16 %v813
      %v860 = vunpack.c.h.b16 %v813
      %v861 = vunpack.c.l.b16 %v814
      %v862 = vunpack.c.h.b16 %v814
      %v863 = vpack.c.b16 %v831, %v831
      %v864 = vpack.c.b16 %v832, %v832
      %v865 = vpack.c.b16 %v833, %v833
      %v866 = vpack.c.b16 %v834, %v834
      %v867 = vpack.c.b16 %v835, %v835
      %v868 = vpack.c.b16 %v836, %v836
      %v869 = vpack.c.b16 %v837, %v837
      %v870 = vpack.c.b16 %v838, %v838
      %v871 = vpack.c.b16 %v839, %v839
      %v872 = vpack.c.b16 %v840, %v840
      %v873 = vpack.c.b16 %v841, %v841
      %v874 = vpack.c.b16 %v842, %v842
      %v875 = vpack.c.b16 %v843, %v843
      %v876 = vpack.c.b16 %v844, %v844
      %v877 = vpack.c.b16 %v845, %v845
      %v878 = vpack.c.b16 %v846, %v846
      %v879 = vpack.c.b16 %v847, %v847
      %v880 = vpack.c.b16 %v848, %v848
      %v881 = vpack.c.b16 %v849, %v849
      %v882 = vpack.c.b16 %v850, %v850
      %v883 = vpack.c.b16 %v851, %v851
      %v884 = vpack.c.b16 %v852, %v852
      %v885 = vpack.c.b16 %v853, %v853
      %v886 = vpack.c.b16 %v854, %v854
      %v887 = vpack.c.b16 %v855, %v855
      %v888 = vpack.c.b16 %v856, %v856
      %v889 = vpack.c.b16 %v857, %v857
      %v890 = vpack.c.b16 %v858, %v858
      %v891 = vpack.c.b16 %v859, %v859
      %v892 = vpack.c.b16 %v860, %v860
      %v893 = vpack.c.b16 %v861, %v861
      %v894 = vpack.c.b16 %v862, %v862
      %vm927 = vcmask 519168
      %928 = vst.msk [vmem:[%s301] sm:$0xf] %vm927, %v863
      %929 = vst.msk [vmem:[%s301 + $0x4] sm:$0xf] %vm927, %v864
      %930 = vst.msk [vmem:[%s301 + $0x8] sm:$0xf] %vm927, %v865
      %931 = vst.msk [vmem:[%s301 + $0xc] sm:$0xf] %vm927, %v866
      %932 = vst.msk [vmem:[%s301 + $0x10] sm:$0xf] %vm927, %v867
      %933 = vst.msk [vmem:[%s301 + $0x14] sm:$0xf] %vm927, %v868
      %934 = vst.msk [vmem:[%s301 + $0x18] sm:$0xf] %vm927, %v869
      %935 = vst.msk [vmem:[%s301 + $0x1c] sm:$0xf] %vm927, %v870
      %936 = vst.msk [vmem:[%s301 + $0x20] sm:$0xf] %vm927, %v871
      %937 = vst.msk [vmem:[%s301 + $0x24] sm:$0xf] %vm927, %v872
      %938 = vst.msk [vmem:[%s301 + $0x28] sm:$0xf] %vm927, %v873
      %939 = vst.msk [vmem:[%s301 + $0x2c] sm:$0xf] %vm927, %v874
      %940 = vst.msk [vmem:[%s301 + $0x30] sm:$0xf] %vm927, %v875
      %941 = vst.msk [vmem:[%s301 + $0x34] sm:$0xf] %vm927, %v876
      %942 = vst.msk [vmem:[%s301 + $0x38] sm:$0xf] %vm927, %v877
      %943 = vst.msk [vmem:[%s301 + $0x3c] sm:$0xf] %vm927, %v878
      %944 = vst.msk [vmem:[%s301 + $0x40] sm:$0xf] %vm927, %v879
      %945 = vst.msk [vmem:[%s301 + $0x44] sm:$0xf] %vm927, %v880
      %946 = vst.msk [vmem:[%s301 + $0x48] sm:$0xf] %vm927, %v881
      %947 = vst.msk [vmem:[%s301 + $0x4c] sm:$0xf] %vm927, %v882
      %948 = vst.msk [vmem:[%s301 + $0x50] sm:$0xf] %vm927, %v883
      %949 = vst.msk [vmem:[%s301 + $0x54] sm:$0xf] %vm927, %v884
      %950 = vst.msk [vmem:[%s301 + $0x58] sm:$0xf] %vm927, %v885
      %951 = vst.msk [vmem:[%s301 + $0x5c] sm:$0xf] %vm927, %v886
      %952 = vst.msk [vmem:[%s301 + $0x60] sm:$0xf] %vm927, %v887
      %953 = vst.msk [vmem:[%s301 + $0x64] sm:$0xf] %vm927, %v888
      %954 = vst.msk [vmem:[%s301 + $0x68] sm:$0xf] %vm927, %v889
      %955 = vst.msk [vmem:[%s301 + $0x6c] sm:$0xf] %vm927, %v890
      %956 = vst.msk [vmem:[%s301 + $0x70] sm:$0xf] %vm927, %v891
      %957 = vst.msk [vmem:[%s301 + $0x74] sm:$0xf] %vm927, %v892
      %958 = vst.msk [vmem:[%s301 + $0x78] sm:$0xf] %vm927, %v893
      %959 = vst.msk [vmem:[%s301 + $0x7c] sm:$0xf] %vm927, %v894
      %vm960 = vcmask 523264
      %v961 = vsel %vm960, %v673, 0.0
      %v962 = vsel %vm960, %v676, 0.0
      %v963 = vadd.f32 %v961, %v962
      %v964 = vsel %vm960, %v681, 0.0
      %v965 = vadd.f32 %v963, %v964
      %v966 = vsel %vm960, %v684, 0.0
      %v967 = vadd.f32 %v965, %v966
      %v968 = vsel %vm960, %v689, 0.0
      %v969 = vadd.f32 %v967, %v968
      %v970 = vsel %vm960, %v692, 0.0
      %v971 = vadd.f32 %v969, %v970
      %v972 = vsel %vm960, %v697, 0.0
      %v973 = vadd.f32 %v971, %v972
      %v974 = vsel %vm960, %v700, 0.0
      %v975 = vadd.f32 %v973, %v974
      %v976 = vsel %vm960, %v705, 0.0
      %v977 = vadd.f32 %v975, %v976
      %v978 = vsel %vm960, %v708, 0.0
      %v979 = vadd.f32 %v977, %v978
      %v980 = vsel %vm960, %v713, 0.0
      %v981 = vadd.f32 %v979, %v980
      %v982 = vsel %vm960, %v716, 0.0
      %v983 = vadd.f32 %v981, %v982
      %v984 = vsel %vm960, %v721, 0.0
      %v985 = vadd.f32 %v983, %v984
      %v986 = vsel %vm960, %v724, 0.0
      %v987 = vadd.f32 %v985, %v986
      %v988 = vsel %vm960, %v729, 0.0
      %v989 = vadd.f32 %v987, %v988
      %v990 = vsel %vm960, %v732, 0.0
      %v991 = vadd.f32 %v989, %v990
      %v992 = vsel %vm960, %v737, 0.0
      %v993 = vadd.f32 %v991, %v992
      %v994 = vsel %vm960, %v740, 0.0
      %v995 = vadd.f32 %v993, %v994
      %v996 = vsel %vm960, %v745, 0.0
      %v997 = vadd.f32 %v995, %v996
      %v998 = vsel %vm960, %v748, 0.0
      %v999 = vadd.f32 %v997, %v998
      %v1000 = vsel %vm960, %v753, 0.0
      %v1001 = vadd.f32 %v999, %v1000
      %v1002 = vsel %vm960, %v756, 0.0
      %v1003 = vadd.f32 %v1001, %v1002
      %v1004 = vsel %vm960, %v761, 0.0
      %v1005 = vadd.f32 %v1003, %v1004
      %v1006 = vsel %vm960, %v764, 0.0
      %v1007 = vadd.f32 %v1005, %v1006
      %v1008 = vsel %vm960, %v769, 0.0
      %v1009 = vadd.f32 %v1007, %v1008
      %v1010 = vsel %vm960, %v772, 0.0
      %v1011 = vadd.f32 %v1009, %v1010
      %v1012 = vsel %vm960, %v777, 0.0
      %v1013 = vadd.f32 %v1011, %v1012
      %v1014 = vsel %vm960, %v780, 0.0
      %v1015 = vadd.f32 %v1013, %v1014
      %v1016 = vsel %vm960, %v785, 0.0
      %v1017 = vadd.f32 %v1015, %v1016
      %v1018 = vsel %vm960, %v788, 0.0
      %v1019 = vadd.f32 %v1017, %v1018
      %v1020 = vsel %vm960, %v793, 0.0
      %v1021 = vadd.f32 %v1019, %v1020
      %v1022 = vsel %vm960, %v796, 0.0
      %v1023 = vadd.f32 %v1021, %v1022
      %v1024 = vrot.slane %v1023, 4
      %v1025 = vadd.f32 %v1023, %v1024
      %v1026 = vrot.slane %v1025, 2
      %v1027 = vadd.f32 %v1025, %v1026
      %v1028 = vrot.slane %v1027, 1
      %v1029 = vadd.f32 %v1027, %v1028
      %v1030 = vmul.f32 %v673, %v673
      %v1031 = vmul.f32 %v676, %v676
      %v1032 = vmul.f32 %v681, %v681
      %v1033 = vmul.f32 %v684, %v684
      %v1034 = vmul.f32 %v689, %v689
      %v1035 = vmul.f32 %v692, %v692
      %v1036 = vmul.f32 %v697, %v697
      %v1037 = vmul.f32 %v700, %v700
      %v1038 = vmul.f32 %v705, %v705
      %v1039 = vmul.f32 %v708, %v708
      %v1040 = vmul.f32 %v713, %v713
      %v1041 = vmul.f32 %v716, %v716
      %v1042 = vmul.f32 %v721, %v721
      %v1043 = vmul.f32 %v724, %v724
      %v1044 = vmul.f32 %v729, %v729
      %v1045 = vmul.f32 %v732, %v732
      %v1046 = vmul.f32 %v737, %v737
      %v1047 = vmul.f32 %v740, %v740
      %v1048 = vmul.f32 %v745, %v745
      %v1049 = vmul.f32 %v748, %v748
      %v1050 = vmul.f32 %v753, %v753
      %v1051 = vmul.f32 %v756, %v756
      %v1052 = vmul.f32 %v761, %v761
      %v1053 = vmul.f32 %v764, %v764
      %v1054 = vmul.f32 %v769, %v769
      %v1055 = vmul.f32 %v772, %v772
      %v1056 = vmul.f32 %v777, %v777
      %v1057 = vmul.f32 %v780, %v780
      %v1058 = vmul.f32 %v785, %v785
      %v1059 = vmul.f32 %v788, %v788
      %v1060 = vmul.f32 %v793, %v793
      %v1061 = vmul.f32 %v796, %v796
      %v1062 = vsel %vm960, %v1030, 0.0
      %v1063 = vsel %vm960, %v1031, 0.0
      %v1064 = vadd.f32 %v1062, %v1063
      %v1065 = vsel %vm960, %v1032, 0.0
      %v1066 = vadd.f32 %v1064, %v1065
      %v1067 = vsel %vm960, %v1033, 0.0
      %v1068 = vadd.f32 %v1066, %v1067
      %v1069 = vsel %vm960, %v1034, 0.0
      %v1070 = vadd.f32 %v1068, %v1069
      %v1071 = vsel %vm960, %v1035, 0.0
      %v1072 = vadd.f32 %v1070, %v1071
      %v1073 = vsel %vm960, %v1036, 0.0
      %v1074 = vadd.f32 %v1072, %v1073
      %v1075 = vsel %vm960, %v1037, 0.0
      %v1076 = vadd.f32 %v1074, %v1075
      %v1077 = vsel %vm960, %v1038, 0.0
      %v1078 = vadd.f32 %v1076, %v1077
      %v1079 = vsel %vm960, %v1039, 0.0
      %v1080 = vadd.f32 %v1078, %v1079
      %v1081 = vsel %vm960, %v1040, 0.0
      %v1082 = vadd.f32 %v1080, %v1081
      %v1083 = vsel %vm960, %v1041, 0.0
      %v1084 = vadd.f32 %v1082, %v1083
      %v1085 = vsel %vm960, %v1042, 0.0
      %v1086 = vadd.f32 %v1084, %v1085
      %v1087 = vsel %vm960, %v1043, 0.0
      %v1088 = vadd.f32 %v1086, %v1087
      %v1089 = vsel %vm960, %v1044, 0.0
      %v1090 = vadd.f32 %v1088, %v1089
      %v1091 = vsel %vm960, %v1045, 0.0
      %v1092 = vadd.f32 %v1090, %v1091
      %v1093 = vsel %vm960, %v1046, 0.0
      %v1094 = vadd.f32 %v1092, %v1093
      %v1095 = vsel %vm960, %v1047, 0.0
      %v1096 = vadd.f32 %v1094, %v1095
      %v1097 = vsel %vm960, %v1048, 0.0
      %v1098 = vadd.f32 %v1096, %v1097
      %v1099 = vsel %vm960, %v1049, 0.0
      %v1100 = vadd.f32 %v1098, %v1099
      %v1101 = vsel %vm960, %v1050, 0.0
      %v1102 = vadd.f32 %v1100, %v1101
      %v1103 = vsel %vm960, %v1051, 0.0
      %v1104 = vadd.f32 %v1102, %v1103
      %v1105 = vsel %vm960, %v1052, 0.0
      %v1106 = vadd.f32 %v1104, %v1105
      %v1107 = vsel %vm960, %v1053, 0.0
      %v1108 = vadd.f32 %v1106, %v1107
      %v1109 = vsel %vm960, %v1054, 0.0
      %v1110 = vadd.f32 %v1108, %v1109
      %v1111 = vsel %vm960, %v1055, 0.0
      %v1112 = vadd.f32 %v1110, %v1111
      %v1113 = vsel %vm960, %v1056, 0.0
      %v1114 = vadd.f32 %v1112, %v1113
      %v1115 = vsel %vm960, %v1057, 0.0
      %v1116 = vadd.f32 %v1114, %v1115
      %v1117 = vsel %vm960, %v1058, 0.0
      %v1118 = vadd.f32 %v1116, %v1117
      %v1119 = vsel %vm960, %v1059, 0.0
      %v1120 = vadd.f32 %v1118, %v1119
      %v1121 = vsel %vm960, %v1060, 0.0
      %v1122 = vadd.f32 %v1120, %v1121
      %v1123 = vsel %vm960, %v1061, 0.0
      %v1124 = vadd.f32 %v1122, %v1123
      %v1125 = vrot.slane %v1124, 4
      %v1126 = vadd.f32 %v1124, %v1125
      %v1127 = vrot.slane %v1126, 2
      %v1128 = vadd.f32 %v1126, %v1127
      %v1129 = vrot.slane %v1128, 1
      %v1130 = vadd.f32 %v1128, %v1129
      %v1131 = vlaneseq
      %v1132 = vshrl.u32 %v1131, 7
      %vm1133 = vcmp.eq.s32.totalorder %v1132, 0
      %v1134 = vsel %vm1133, %v1029, 0.0
      %1135 = vst.msk [vmem:[%s309] sm:$0xff] %vm960, %v1134
      %v1136 = vsel %vm1133, %v1130, 0.0
      %1137 = vst.msk [vmem:[%s316] sm:$0xff] %vm960, %v1136
      %s1138 = smul.u32 32, %s21
      %p1139 = scmp.lt.s32.totalorder %s1138, 63
      %s1140 = scalar_select %p1139, %s1138, 63
      %p1141 = scmp.lt.s32.totalorder %s22, 0
      %s1142 = scalar_select %p1141, %s22, 0
      %s1143 = sadd.s32 %s1142, %s1140
      %s1144 = smul.addr %s1143, 4
      %s1145 = scalar_lea.vmem %s2, %s1144
      %p1146 = scmp.lt.s32.totalorder %s21, 1
      %s1147 = scalar_select %p1146, %s21, 1
      %p1148 = scmp.lt.s32.totalorder %s22, 0
      %s1149 = scalar_select %p1148, %s22, 0
      %s1150 = sadd.s32 %s1149, %s1147
      %s1151 = smul.addr %s1150, 8
      %s1152 = scalar_lea.vmem %s3, %s1151
      %p1153 = scmp.lt.s32.totalorder %s21, 1
      %s1154 = scalar_select %p1153, %s21, 1
      %p1155 = scmp.lt.s32.totalorder %s22, 0
      %s1156 = scalar_select %p1155, %s22, 0
      %s1157 = sadd.s32 %s1156, %s1154
      %s1158 = smul.addr %s1157, 8
      %s1159 = scalar_lea.vmem %s4, %s1158
      // Predicated region
      $region29: #{resnetblock4_forward.5} parent=27 // pred_check
        %p1160 = pneg %p111
      $region30: #{resnetblock4_forward.5} parent=27 // pred_check_branch
        %1162 = sbr.rel (%p1160) target = $region32
      $region31: #{resnetblock4_forward.5} parent=27 // pred_region
        %s1163 = smul.u32 32, %s21
      $region32: #{resnetblock4_forward.5} parent=27 // pred_fallthru
        _
      // Predicated region
      $region33: #{resnetblock4_forward.5} parent=27 // pred_check
        %p1164 = pneg %p139
      $region34: #{resnetblock4_forward.5} parent=27 // pred_check_branch
        %1166 = sbr.rel (%p1164) target = $region36
      $region35: #{resnetblock4_forward.5} parent=27 // pred_region
        _
      $region36: #{resnetblock4_forward.5} parent=27 // pred_fallthru
        _
      // Predicated region
      $region37: #{resnetblock4_forward.5} parent=27 // pred_check
        %p1167 = pneg %p167
      $region38: #{resnetblock4_forward.5} parent=27 // pred_check_branch
        %1169 = sbr.rel (%p1167) target = $region40
      $region39: #{resnetblock4_forward.5} parent=27 // pred_region
        _
      $region40: #{resnetblock4_forward.5} parent=27 // pred_fallthru
        _
    $region28: #{resnetblock4_forward.5} parent=5 // pred_fallthru
      _
    %p1170 = scmp.le.s32.totalorder 2, %s11
    // Predicated region
    $region41: #{resnetblock4_forward.5} parent=5 // pred_check
      %p1171 = pneg %p1170
    $region42: #{resnetblock4_forward.5} parent=5 // pred_check_branch
      %1173 = sbr.rel (%p1171) target = $region44
    $region43: #{resnetblock4_forward.5} parent=5 // pred_region
      %s1174 = ssub.s32 %s11, 2
      // Predicated region
      $region45: #{resnetblock4_forward.5} parent=43 // pred_check
        %p1175 = pneg %p117
      $region46: #{resnetblock4_forward.5} parent=43 // pred_check_branch
        %1177 = sbr.rel (%p1175) target = $region48
      $region47: #{resnetblock4_forward.5} parent=43 // pred_region
        %s1178 = smul.u32 32, %s24
        %p1179 = scmp.lt.s32.totalorder %s1178, 63
        %s1180 = scalar_select %p1179, %s1178, 63
        %p1181 = scmp.lt.s32.totalorder %s25, 0
        %s1182 = scalar_select %p1181, %s25, 0
        %s1183 = sadd.s32 %s1182, %s1180
        %s1184 = smul.addr %s1183, 4
        %s1185 = scalar_lea.vmem %s2, %s1184
      $region48: #{resnetblock4_forward.5} parent=43 // pred_fallthru
        _
      // Predicated region
      $region49: #{resnetblock4_forward.5} parent=43 // pred_check
        %p1186 = pneg %p145
      $region50: #{resnetblock4_forward.5} parent=43 // pred_check_branch
        %1188 = sbr.rel (%p1186) target = $region52
      $region51: #{resnetblock4_forward.5} parent=43 // pred_region
        %p1189 = scmp.lt.s32.totalorder %s24, 1
        %s1190 = scalar_select %p1189, %s24, 1
        %p1191 = scmp.lt.s32.totalorder %s25, 0
        %s1192 = scalar_select %p1191, %s25, 0
        %s1193 = sadd.s32 %s1192, %s1190
        %s1194 = smul.addr %s1193, 8
        %s1195 = scalar_lea.vmem %s3, %s1194
      $region52: #{resnetblock4_forward.5} parent=43 // pred_fallthru
        _
      // Predicated region
      $region53: #{resnetblock4_forward.5} parent=43 // pred_check
        %p1196 = pneg %p173
      $region54: #{resnetblock4_forward.5} parent=43 // pred_check_branch
        %1198 = sbr.rel (%p1196) target = $region56
      $region55: #{resnetblock4_forward.5} parent=43 // pred_region
        %p1199 = scmp.lt.s32.totalorder %s24, 1
        %s1200 = scalar_select %p1199, %s24, 1
        %p1201 = scmp.lt.s32.totalorder %s25, 0
        %s1202 = scalar_select %p1201, %s25, 0
        %s1203 = sadd.s32 %s1202, %s1200
        %s1204 = smul.addr %s1203, 8
        %s1205 = scalar_lea.vmem %s4, %s1204
      $region56: #{resnetblock4_forward.5} parent=43 // pred_fallthru
        _
    $region44: #{resnetblock4_forward.5} parent=5 // pred_fallthru
      _
  $region6: #{resnetblock4_forward.5} parent=0 // loop_footer
    %s15 = sadd.s32 1, %s11
  $region7: #{resnetblock4_forward.5} parent=0 // loop_footer_branch
    %10 = sbr.rel target = $region3
  $region8: #{resnetblock4_forward.5} parent=0 // loop_exit
    _

// kernel: resnetblock4_forward.9
$region0: #{resnetblock4_forward.9}
  #allocation0 [shape = 'u32[]', space=smem, size = 0x4, offset = 0x4, fixed_abs, tag = 'smem constant byte address 0x4 - core index']
  #allocation1 [shape = 'u32[144,128]{1,0:T(1,128)}', space=vmem, size = 0x12000, scoped, tag = 'internal scratch']
  %s0 = inlined_call_operand.vmem [shape: bf16[512,256], index: 0, kind: input, shape index: {}]
  %s1 = inlined_call_operand.vmem [shape: f32[1,256], index: 1, kind: input, shape index: {}]
  %s2 = inlined_call_operand.vmem [shape: f32[1,256], index: 2, kind: input, shape index: {}]
  %s3 = inlined_call_operand.vmem [shape: bf16[512,256], index: 3, kind: input, shape index: {}]
  %s4 = inlined_call_operand.hbm [shape: f32[512,256], index: 4, kind: output, shape index: {}]
  %s5 = sld [smem:[#allocation0]]
  $region49: #{resnetblock4_forward.9} parent=0
    _
  %s7 = ssub.s32 1, %s5
  %s8 = scalar_select 0, %s7, %s5
  $region1: #{resnetblock4_forward.9} parent=0
    #allocation2 [shape = 'u8[524288]{0}', space=vmem, size = 0x80000, scoped, tag = 'output window, operand 0']
    #allocation3 [shape = 's32[2]{0}', space=sflag, size = 0x8, scoped, tag = 'scoped memory for resnetblock4_forward.9']
    %9 = vsyncpa [#allocation3], 0
    %s10 = scalar_lea.sflag [#allocation3], 1
    %11 = vsyncpa %s10, 0
    loop: start=0, step=1, limit=4
    $region2: #{resnetblock4_forward.9} parent=1 // loop_pre_header
      _
    $region3: #{resnetblock4_forward.9} parent=1 // loop_header
      %s13 = sphi 0, %s17
      %p14 = scmp.ge.s32.totalorder %s13, 4
      %s23 = sphi 0, %s25
      %s26 = sphi 0, %s23
      %s27 = sphi 0, %s26
      %s43 = sphi 0, %s27
      %s47 = sphi 0, %s47
      %s49 = sphi 0, %s47
      %s50 = sphi 0, %s49
      %s64 = sphi 0, %s50
      %s68 = sphi 0, %s68
      %s70 = sphi 0, %s68
      %s71 = sphi 0, %s70
      %s85 = sphi 0, %s71
      %s91 = sphi 0, %s93
      %s94 = sphi 0, %s91
      %s95 = sphi 0, %s94
      %s111 = sphi 0, %s95
      %s117 = sphi 0, %s119
      %s120 = sphi 0, %s117
      %s121 = sphi 0, %s120
      %s137 = sphi 0, %s121
    $region4: #{resnetblock4_forward.9} parent=1 // loop_header_branch
      %16 = sbr.rel (%p14) target = $region8
    $region5: #{resnetblock4_forward.9} parent=1 // loop_body
      %s18 = ssub.s32 %s13, 1
      %s19 = ssub.s32 %s13, 2
      %s20 = sadd.s32 %s13, 1
      %s21 = ssub.s32 %s13, %s20
      %p22 = scmp.eq.s32.totalorder %s21, 0
      %s24 = sadd.s32 %s23, 1
      %s25 = scalar_select %p22, %s23, %s24
      %p28 = pneg %p22
      %p29 = scmp.eq.s32.totalorder %s13, 1
      %p30 = por %p28, %p29
      %p31 = scmp.ne.s32.totalorder %s23, %s26
      %p32 = scmp.eq.s32.totalorder %s13, 0
      %p33 = por %p31, %p32
      %p34 = scmp.ne.s32.totalorder %s23, %s26
      %p35 = scmp.eq.s32.totalorder %s18, 1
      %p36 = por %p34, %p35
      %p37 = scmp.ne.s32.totalorder %s26, %s27
      %p38 = scmp.eq.s32.totalorder %s18, 0
      %p39 = por %p37, %p38
      %p40 = scmp.ne.s32.totalorder %s26, %s27
      %p41 = scmp.eq.s32.totalorder %s19, 1
      %p42 = por %p40, %p41
      %p44 = scmp.ne.s32.totalorder %s27, %s43
      %p45 = scmp.eq.s32.totalorder %s19, 0
      %p46 = por %p44, %p45
      %s48 = sadd.s32 %s47, 1
      %p51 = scmp.eq.s32.totalorder %s13, 1
      %p52 = scmp.ne.s32.totalorder %s47, %s49
      %p53 = scmp.eq.s32.totalorder %s13, 0
      %p54 = por %p52, %p53
      %p55 = scmp.ne.s32.totalorder %s47, %s49
      %p56 = scmp.eq.s32.totalorder %s18, 1
      %p57 = por %p55, %p56
      %p58 = scmp.ne.s32.totalorder %s49, %s50
      %p59 = scmp.eq.s32.totalorder %s18, 0
      %p60 = por %p58, %p59
      %p61 = scmp.ne.s32.totalorder %s49, %s50
      %p62 = scmp.eq.s32.totalorder %s19, 1
      %p63 = por %p61, %p62
      %p65 = scmp.ne.s32.totalorder %s50, %s64
      %p66 = scmp.eq.s32.totalorder %s19, 0
      %p67 = por %p65, %p66
      %s69 = sadd.s32 %s68, 1
      %p72 = scmp.eq.s32.totalorder %s13, 1
      %p73 = scmp.ne.s32.totalorder %s68, %s70
      %p74 = scmp.eq.s32.totalorder %s13, 0
      %p75 = por %p73, %p74
      %p76 = scmp.ne.s32.totalorder %s68, %s70
      %p77 = scmp.eq.s32.totalorder %s18, 1
      %p78 = por %p76, %p77
      %p79 = scmp.ne.s32.totalorder %s70, %s71
      %p80 = scmp.eq.s32.totalorder %s18, 0
      %p81 = por %p79, %p80
      %p82 = scmp.ne.s32.totalorder %s70, %s71
      %p83 = scmp.eq.s32.totalorder %s19, 1
      %p84 = por %p82, %p83
      %p86 = scmp.ne.s32.totalorder %s71, %s85
      %p87 = scmp.eq.s32.totalorder %s19, 0
      %p88 = por %p86, %p87
      %s89 = ssub.s32 %s13, %s20
      %p90 = scmp.eq.s32.totalorder %s89, 0
      %s92 = sadd.s32 %s91, 1
      %s93 = scalar_select %p90, %s91, %s92
      %p96 = pneg %p90
      %p97 = scmp.eq.s32.totalorder %s13, 1
      %p98 = por %p96, %p97
      %p99 = scmp.ne.s32.totalorder %s91, %s94
      %p100 = scmp.eq.s32.totalorder %s13, 0
      %p101 = por %p99, %p100
      %p102 = scmp.ne.s32.totalorder %s91, %s94
      %p103 = scmp.eq.s32.totalorder %s18, 1
      %p104 = por %p102, %p103
      %p105 = scmp.ne.s32.totalorder %s94, %s95
      %p106 = scmp.eq.s32.totalorder %s18, 0
      %p107 = por %p105, %p106
      %p108 = scmp.ne.s32.totalorder %s94, %s95
      %p109 = scmp.eq.s32.totalorder %s19, 1
      %p110 = por %p108, %p109
      %p112 = scmp.ne.s32.totalorder %s95, %s111
      %p113 = scmp.eq.s32.totalorder %s19, 0
      %p114 = por %p112, %p113
      %s115 = ssub.s32 %s13, %s20
      %p116 = scmp.eq.s32.totalorder %s115, 0
      %s118 = sadd.s32 %s117, 1
      %s119 = scalar_select %p116, %s117, %s118
      %p122 = pneg %p116
      %p123 = scmp.eq.s32.totalorder %s13, 1
      %p124 = por %p122, %p123
      %p125 = scmp.ne.s32.totalorder %s117, %s120
      %p126 = scmp.eq.s32.totalorder %s13, 0
      %p127 = por %p125, %p126
      %p128 = scmp.ne.s32.totalorder %s117, %s120
      %p129 = scmp.eq.s32.totalorder %s18, 1
      %p130 = por %p128, %p129
      %p131 = scmp.ne.s32.totalorder %s120, %s121
      %p132 = scmp.eq.s32.totalorder %s18, 0
      %p133 = por %p131, %p132
      %p134 = scmp.ne.s32.totalorder %s120, %s121
      %p135 = scmp.eq.s32.totalorder %s19, 1
      %p136 = por %p134, %p135
      %p138 = scmp.ne.s32.totalorder %s121, %s137
      %p139 = scmp.eq.s32.totalorder %s19, 0
      %p140 = por %p138, %p139
      %p141 = scmp.le.s32.totalorder 1, %s13
      %p142 = scmp.lt.s32.totalorder %s13, 3
      %p143 = pnand %p141, %p142
      %p144 = pneg %p143
      // Predicated region
      $region9: #{resnetblock4_forward.9} parent=5 // pred_check
        _
      $region10: #{resnetblock4_forward.9} parent=5 // pred_check_branch
        %146 = sbr.rel (%p143) target = $region12
      $region11: #{resnetblock4_forward.9} parent=5 // pred_region
        %s147 = ssub.s32 %s13, 1
        // Predicated region
        $region13: #{resnetblock4_forward.9} parent=11 // pred_check
          %p148 = pneg %p60
        $region14: #{resnetblock4_forward.9} parent=11 // pred_check_branch
          %150 = sbr.rel (%p148) target = $region16
        $region15: #{resnetblock4_forward.9} parent=11 // pred_region
          _
        $region16: #{resnetblock4_forward.9} parent=11 // pred_fallthru
          _
        // Predicated region
        $region17: #{resnetblock4_forward.9} parent=11 // pred_check
          %p151 = pneg %p81
        $region18: #{resnetblock4_forward.9} parent=11 // pred_check_branch
          %153 = sbr.rel (%p151) target = $region20
        $region19: #{resnetblock4_forward.9} parent=11 // pred_region
          _
        $region20: #{resnetblock4_forward.9} parent=11 // pred_fallthru
          _
      $region12: #{resnetblock4_forward.9} parent=5 // pred_fallthru
        _
      %p154 = scmp.lt.s32.totalorder %s13, 2
      // Predicated region
      $region21: #{resnetblock4_forward.9} parent=5 // pred_check
        %p155 = pneg %p154
      $region22: #{resnetblock4_forward.9} parent=5 // pred_check_branch
        %157 = sbr.rel (%p155) target = $region24
      $region23: #{resnetblock4_forward.9} parent=5 // pred_region
        // Predicated region
        $region25: #{resnetblock4_forward.9} parent=23 // pred_check
          %p158 = pneg %p33
        $region26: #{resnetblock4_forward.9} parent=23 // pred_check_branch
          %160 = sbr.rel (%p158) target = $region28
        $region27: #{resnetblock4_forward.9} parent=23 // pred_region
          %s161 = smul.u32 32, %s13
          %p162 = scmp.lt.s32.totalorder %s161, 63
          %s163 = scalar_select %p162, %s161, 63
          %s164 = smul.addr %s163, 2
          %s165 = smul.addr %s164, 4
          %s166 = scalar_lea.vmem %s0, %s165
          %s167 = smul.u32 32, %s13
        $region28: #{resnetblock4_forward.9} parent=23 // pred_fallthru
          _
        // Predicated region
        $region29: #{resnetblock4_forward.9} parent=23 // pred_check
          %p168 = pneg %p101
        $region30: #{resnetblock4_forward.9} parent=23 // pred_check_branch
          %170 = sbr.rel (%p168) target = $region32
        $region31: #{resnetblock4_forward.9} parent=23 // pred_region
          %s171 = smul.u32 32, %s13
          %p172 = scmp.lt.s32.totalorder %s171, 63
          %s173 = scalar_select %p172, %s171, 63
          %s174 = smul.addr %s173, 2
          %s175 = smul.addr %s174, 4
          %s176 = scalar_lea.vmem %s3, %s175
          %s177 = smul.u32 32, %s13
        $region32: #{resnetblock4_forward.9} parent=23 // pred_fallthru
          _
      $region24: #{resnetblock4_forward.9} parent=5 // pred_fallthru
        _
      %p178 = scmp.le.s32.totalorder 1, %s13
      %p179 = scmp.lt.s32.totalorder %s13, 3
      %p180 = pnand %p178, %p179
      %p181 = pneg %p180
      // Predicated region
      $region33: #{resnetblock4_forward.9} parent=5 // pred_check
        _
      $region34: #{resnetblock4_forward.9} parent=5 // pred_check_branch
        %183 = sbr.rel (%p180) target = $region36
      $region35: #{resnetblock4_forward.9} parent=5 // pred_region
        %s184 = ssub.s32 %s13, 1
        %s185 = smul.u32 32, %s18
        %p186 = scmp.lt.s32.totalorder %s185, 63
        %s187 = scalar_select %p186, %s185, 63
        %s188 = smul.addr %s187, 2
        %s189 = smul.addr %s188, 4
        %s190 = scalar_lea.vmem %s0, %s189
        %p191 = pneg %p39
        %p192 = pneg %p36
        %p193 = pneg %p60
        %p194 = pneg %p57
        %p195 = pneg %p81
        %p196 = pneg %p78
        %s197 = smul.u32 32, %s18
        %p198 = scmp.lt.s32.totalorder %s197, 63
        %s199 = scalar_select %p198, %s197, 63
        %s200 = smul.addr %s199, 2
        %s201 = smul.addr %s200, 4
        %s202 = scalar_lea.vmem %s3, %s201
        %p203 = pneg %p107
        %p204 = pneg %p104
        %p205 = pneg %p133
        %p206 = pneg %p130
        %s207 = sand.u32 %s120, 1
        %s208 = scalar_lea.sflag [#allocation3], %s207
        %s209 = sand.u32 %s120, 1
        %s210 = smul.addr %s209, 512
        %s211 = scalar_lea.vmem [#allocation2], %s210
        %s212 = smul.u32 32, %s18
        %p213 = scmp.lt.s32.totalorder %s212, 63
        %s214 = scalar_select %p213, %s212, 63
        %s215 = smul.addr %s214, 2
        %s216 = smul.addr %s215, 4
        %s217 = scalar_lea.vmem %s0, %s216
        %s218 = smul.u32 32, %s18
        %s219 = smul.u32 32, %s18
        %p220 = scmp.lt.s32.totalorder %s219, 63
        %s221 = scalar_select %p220, %s219, 63
        %s222 = smul.addr %s221, 2
        %s223 = smul.addr %s222, 4
        %s224 = scalar_lea.vmem %s3, %s223
        %s225 = smul.u32 32, %s18
        %s226 = smul.u32 32, %s18
        %v227 = vld [vmem:[%s217] sm:$0xff]
        %v228 = vld [vmem:[%s217 + $0x8] sm:$0xff]
        %v229 = vld [vmem:[%s217 + $0x10] sm:$0xff]
        %v230 = vld [vmem:[%s217 + $0x18] sm:$0xff]
        %v231 = vld [vmem:[%s217 + $0x20] sm:$0xff]
        %v232 = vld [vmem:[%s217 + $0x28] sm:$0xff]
        %v233 = vld [vmem:[%s217 + $0x30] sm:$0xff]
        %v234 = vld [vmem:[%s217 + $0x38] sm:$0xff]
        %v235 = vld [vmem:[%s217 + $0x40] sm:$0xff]
        %v236 = vld [vmem:[%s217 + $0x48] sm:$0xff]
        %v237 = vld [vmem:[%s217 + $0x50] sm:$0xff]
        %v238 = vld [vmem:[%s217 + $0x58] sm:$0xff]
        %v239 = vld [vmem:[%s217 + $0x60] sm:$0xff]
        %v240 = vld [vmem:[%s217 + $0x68] sm:$0xff]
        %v241 = vld [vmem:[%s217 + $0x70] sm:$0xff]
        %v242 = vld [vmem:[%s217 + $0x78] sm:$0xff]
        %v243 = vld [vmem:[%s217 + $0x80] sm:$0xff]
        %v244 = vld [vmem:[%s217 + $0x88] sm:$0xff]
        %v245 = vld [vmem:[%s217 + $0x90] sm:$0xff]
        %v246 = vld [vmem:[%s217 + $0x98] sm:$0xff]
        %v247 = vld [vmem:[%s217 + $0xa0] sm:$0xff]
        %v248 = vld [vmem:[%s217 + $0xa8] sm:$0xff]
        %v249 = vld [vmem:[%s217 + $0xb0] sm:$0xff]
        %v250 = vld [vmem:[%s217 + $0xb8] sm:$0xff]
        %v251 = vld [vmem:[%s217 + $0xc0] sm:$0xff]
        %v252 = vld [vmem:[%s217 + $0xc8] sm:$0xff]
        %v253 = vld [vmem:[%s217 + $0xd0] sm:$0xff]
        %v254 = vld [vmem:[%s217 + $0xd8] sm:$0xff]
        %v255 = vld [vmem:[%s217 + $0xe0] sm:$0xff]
        %v256 = vld [vmem:[%s217 + $0xe8] sm:$0xff]
        %v257 = vld [vmem:[%s217 + $0xf0] sm:$0xff]
        %v258 = vld [vmem:[%s217 + $0xf8] sm:$0xff]
        %v259 = vunpack.c.l.bf16 %v227
        %v260 = vunpack.c.h.bf16 %v227
        %v261 = vunpack.c.l.bf16 %v228
        %v262 = vunpack.c.h.bf16 %v228
        %v263 = vunpack.c.l.bf16 %v229
        %v264 = vunpack.c.h.bf16 %v229
        %v265 = vunpack.c.l.bf16 %v230
        %v266 = vunpack.c.h.bf16 %v230
        %v267 = vunpack.c.l.bf16 %v231
        %v268 = vunpack.c.h.bf16 %v231
        %v269 = vunpack.c.l.bf16 %v232
        %v270 = vunpack.c.h.bf16 %v232
        %v271 = vunpack.c.l.bf16 %v233
        %v272 = vunpack.c.h.bf16 %v233
        %v273 = vunpack.c.l.bf16 %v234
        %v274 = vunpack.c.h.bf16 %v234
        %v275 = vunpack.c.l.bf16 %v235
        %v276 = vunpack.c.h.bf16 %v235
        %v277 = vunpack.c.l.bf16 %v236
        %v278 = vunpack.c.h.bf16 %v236
        %v279 = vunpack.c.l.bf16 %v237
        %v280 = vunpack.c.h.bf16 %v237
        %v281 = vunpack.c.l.bf16 %v238
        %v282 = vunpack.c.h.bf16 %v238
        %v283 = vunpack.c.l.bf16 %v239
        %v284 = vunpack.c.h.bf16 %v239
        %v285 = vunpack.c.l.bf16 %v240
        %v286 = vunpack.c.h.bf16 %v240
        %v287 = vunpack.c.l.bf16 %v241
        %v288 = vunpack.c.h.bf16 %v241
        %v289 = vunpack.c.l.bf16 %v242
        %v290 = vunpack.c.h.bf16 %v242
        %v291 = vunpack.c.l.bf16 %v243
        %v292 = vunpack.c.h.bf16 %v243
        %v293 = vunpack.c.l.bf16 %v244
        %v294 = vunpack.c.h.bf16 %v244
        %v295 = vunpack.c.l.bf16 %v245
        %v296 = vunpack.c.h.bf16 %v245
        %v297 = vunpack.c.l.bf16 %v246
        %v298 = vunpack.c.h.bf16 %v246
        %v299 = vunpack.c.l.bf16 %v247
        %v300 = vunpack.c.h.bf16 %v247
        %v301 = vunpack.c.l.bf16 %v248
        %v302 = vunpack.c.h.bf16 %v248
        %v303 = vunpack.c.l.bf16 %v249
        %v304 = vunpack.c.h.bf16 %v249
        %v305 = vunpack.c.l.bf16 %v250
        %v306 = vunpack.c.h.bf16 %v250
        %v307 = vunpack.c.l.bf16 %v251
        %v308 = vunpack.c.h.bf16 %v251
        %v309 = vunpack.c.l.bf16 %v252
        %v310 = vunpack.c.h.bf16 %v252
        %v311 = vunpack.c.l.bf16 %v253
        %v312 = vunpack.c.h.bf16 %v253
        %v313 = vunpack.c.l.bf16 %v254
        %v314 = vunpack.c.h.bf16 %v254
        %v315 = vunpack.c.l.bf16 %v255
        %v316 = vunpack.c.h.bf16 %v255
        %v317 = vunpack.c.l.bf16 %v256
        %v318 = vunpack.c.h.bf16 %v256
        %v319 = vunpack.c.l.bf16 %v257
        %v320 = vunpack.c.h.bf16 %v257
        %v321 = vunpack.c.l.bf16 %v258
        %v322 = vunpack.c.h.bf16 %v258
        %v323 = vld [vmem:[%s1] sm:$0x3]
        %v325 = vlaneseq
        %v326 = vshrl.u32 %v325, 7
        %v327 = vsub.s32 0, %v326
        %v328 = vrot.slane %v323, %v327
        %v329 = vlaneseq
        %v330 = vshrl.u32 %v329, 7
        %v331 = vsub.s32 1, %v330
        %v332 = vrot.slane %v323, %v331
        %v335 = vmul.f32 %v259, %v328
        %v336 = vmul.f32 %v260, %v332
        %v337 = vmul.f32 %v261, %v328
        %v338 = vmul.f32 %v262, %v332
        %v339 = vmul.f32 %v263, %v328
        %v340 = vmul.f32 %v264, %v332
        %v341 = vmul.f32 %v265, %v328
        %v342 = vmul.f32 %v266, %v332
        %v343 = vmul.f32 %v267, %v328
        %v344 = vmul.f32 %v268, %v332
        %v345 = vmul.f32 %v269, %v328
        %v346 = vmul.f32 %v270, %v332
        %v347 = vmul.f32 %v271, %v328
        %v348 = vmul.f32 %v272, %v332
        %v349 = vmul.f32 %v273, %v328
        %v350 = vmul.f32 %v274, %v332
        %v351 = vmul.f32 %v275, %v328
        %v352 = vmul.f32 %v276, %v332
        %v353 = vmul.f32 %v277, %v328
        %v354 = vmul.f32 %v278, %v332
        %v355 = vmul.f32 %v279, %v328
        %v356 = vmul.f32 %v280, %v332
        %v357 = vmul.f32 %v281, %v328
        %v358 = vmul.f32 %v282, %v332
        %v359 = vmul.f32 %v283, %v328
        %v360 = vmul.f32 %v284, %v332
        %v361 = vmul.f32 %v285, %v328
        %v362 = vmul.f32 %v286, %v332
        %v363 = vmul.f32 %v287, %v328
        %v364 = vmul.f32 %v288, %v332
        %v365 = vmul.f32 %v289, %v328
        %v366 = vmul.f32 %v290, %v332
        %v367 = vmul.f32 %v291, %v328
        %v368 = vmul.f32 %v292, %v332
        %v369 = vmul.f32 %v293, %v328
        %v370 = vmul.f32 %v294, %v332
        %v371 = vmul.f32 %v295, %v328
        %v372 = vmul.f32 %v296, %v332
        %v373 = vmul.f32 %v297, %v328
        %v374 = vmul.f32 %v298, %v332
        %v375 = vmul.f32 %v299, %v328
        %v376 = vmul.f32 %v300, %v332
        %v377 = vmul.f32 %v301, %v328
        %v378 = vmul.f32 %v302, %v332
        %v379 = vmul.f32 %v303, %v328
        %v380 = vmul.f32 %v304, %v332
        %v381 = vmul.f32 %v305, %v328
        %v382 = vmul.f32 %v306, %v332
        %v383 = vmul.f32 %v307, %v328
        %v384 = vmul.f32 %v308, %v332
        %v385 = vmul.f32 %v309, %v328
        %v386 = vmul.f32 %v310, %v332
        %v387 = vmul.f32 %v311, %v328
        %v388 = vmul.f32 %v312, %v332
        %v389 = vmul.f32 %v313, %v328
        %v390 = vmul.f32 %v314, %v332
        %v391 = vmul.f32 %v315, %v328
        %v392 = vmul.f32 %v316, %v332
        %v393 = vmul.f32 %v317, %v328
        %v394 = vmul.f32 %v318, %v332
        %v395 = vmul.f32 %v319, %v328
        %v396 = vmul.f32 %v320, %v332
        %v397 = vmul.f32 %v321, %v328
        %v398 = vmul.f32 %v322, %v332
        %v399 = vld [vmem:[%s2] sm:$0x3]
        %v401 = vlaneseq
        %v402 = vshrl.u32 %v401, 7
        %v403 = vsub.s32 0, %v402
        %v404 = vrot.slane %v399, %v403
        %v405 = vlaneseq
        %v406 = vshrl.u32 %v405, 7
        %v407 = vsub.s32 1, %v406
        %v408 = vrot.slane %v399, %v407
        %v411 = vadd.f32 %v335, %v404
        %v412 = vadd.f32 %v336, %v408
        %v413 = vadd.f32 %v337, %v404
        %v414 = vadd.f32 %v338, %v408
        %v415 = vadd.f32 %v339, %v404
        %v416 = vadd.f32 %v340, %v408
        %v417 = vadd.f32 %v341, %v404
        %v418 = vadd.f32 %v342, %v408
        %v419 = vadd.f32 %v343, %v404
        %v420 = vadd.f32 %v344, %v408
        %v421 = vadd.f32 %v345, %v404
        %v422 = vadd.f32 %v346, %v408
        %v423 = vadd.f32 %v347, %v404
        %v424 = vadd.f32 %v348, %v408
        %v425 = vadd.f32 %v349, %v404
        %v426 = vadd.f32 %v350, %v408
        %v427 = vadd.f32 %v351, %v404
        %v428 = vadd.f32 %v352, %v408
        %v429 = vadd.f32 %v353, %v404
        %v430 = vadd.f32 %v354, %v408
        %v431 = vadd.f32 %v355, %v404
        %v432 = vadd.f32 %v356, %v408
        %v433 = vadd.f32 %v357, %v404
        %v434 = vadd.f32 %v358, %v408
        %v435 = vadd.f32 %v359, %v404
        %v436 = vadd.f32 %v360, %v408
        %v437 = vadd.f32 %v361, %v404
        %v438 = vadd.f32 %v362, %v408
        %v439 = vadd.f32 %v363, %v404
        %v440 = vadd.f32 %v364, %v408
        %v441 = vadd.f32 %v365, %v404
        %v442 = vadd.f32 %v366, %v408
        %v443 = vadd.f32 %v367, %v404
        %v444 = vadd.f32 %v368, %v408
        %v445 = vadd.f32 %v369, %v404
        %v446 = vadd.f32 %v370, %v408
        %v447 = vadd.f32 %v371, %v404
        %v448 = vadd.f32 %v372, %v408
        %v449 = vadd.f32 %v373, %v404
        %v450 = vadd.f32 %v374, %v408
        %v451 = vadd.f32 %v375, %v404
        %v452 = vadd.f32 %v376, %v408
        %v453 = vadd.f32 %v377, %v404
        %v454 = vadd.f32 %v378, %v408
        %v455 = vadd.f32 %v379, %v404
        %v456 = vadd.f32 %v380, %v408
        %v457 = vadd.f32 %v381, %v404
        %v458 = vadd.f32 %v382, %v408
        %v459 = vadd.f32 %v383, %v404
        %v460 = vadd.f32 %v384, %v408
        %v461 = vadd.f32 %v385, %v404
        %v462 = vadd.f32 %v386, %v408
        %v463 = vadd.f32 %v387, %v404
        %v464 = vadd.f32 %v388, %v408
        %v465 = vadd.f32 %v389, %v404
        %v466 = vadd.f32 %v390, %v408
        %v467 = vadd.f32 %v391, %v404
        %v468 = vadd.f32 %v392, %v408
        %v469 = vadd.f32 %v393, %v404
        %v470 = vadd.f32 %v394, %v408
        %v471 = vadd.f32 %v395, %v404
        %v472 = vadd.f32 %v396, %v408
        %v473 = vadd.f32 %v397, %v404
        %v474 = vadd.f32 %v398, %v408
        %v475 = vld [vmem:[%s224] sm:$0xff]
        %v476 = vld [vmem:[%s224 + $0x8] sm:$0xff]
        %v477 = vld [vmem:[%s224 + $0x10] sm:$0xff]
        %v478 = vld [vmem:[%s224 + $0x18] sm:$0xff]
        %v479 = vld [vmem:[%s224 + $0x20] sm:$0xff]
        %v480 = vld [vmem:[%s224 + $0x28] sm:$0xff]
        %v481 = vld [vmem:[%s224 + $0x30] sm:$0xff]
        %v482 = vld [vmem:[%s224 + $0x38] sm:$0xff]
        %v483 = vld [vmem:[%s224 + $0x40] sm:$0xff]
        %v484 = vld [vmem:[%s224 + $0x48] sm:$0xff]
        %v485 = vld [vmem:[%s224 + $0x50] sm:$0xff]
        %v486 = vld [vmem:[%s224 + $0x58] sm:$0xff]
        %v487 = vld [vmem:[%s224 + $0x60] sm:$0xff]
        %v488 = vld [vmem:[%s224 + $0x68] sm:$0xff]
        %v489 = vld [vmem:[%s224 + $0x70] sm:$0xff]
        %v490 = vld [vmem:[%s224 + $0x78] sm:$0xff]
        %v491 = vld [vmem:[%s224 + $0x80] sm:$0xff]
        %v492 = vld [vmem:[%s224 + $0x88] sm:$0xff]
        %v493 = vld [vmem:[%s224 + $0x90] sm:$0xff]
        %v494 = vld [vmem:[%s224 + $0x98] sm:$0xff]
        %v495 = vld [vmem:[%s224 + $0xa0] sm:$0xff]
        %v496 = vld [vmem:[%s224 + $0xa8] sm:$0xff]
        %v497 = vld [vmem:[%s224 + $0xb0] sm:$0xff]
        %v498 = vld [vmem:[%s224 + $0xb8] sm:$0xff]
        %v499 = vld [vmem:[%s224 + $0xc0] sm:$0xff]
        %v500 = vld [vmem:[%s224 + $0xc8] sm:$0xff]
        %v501 = vld [vmem:[%s224 + $0xd0] sm:$0xff]
        %v502 = vld [vmem:[%s224 + $0xd8] sm:$0xff]
        %v503 = vld [vmem:[%s224 + $0xe0] sm:$0xff]
        %v504 = vld [vmem:[%s224 + $0xe8] sm:$0xff]
        %v505 = vld [vmem:[%s224 + $0xf0] sm:$0xff]
        %v506 = vld [vmem:[%s224 + $0xf8] sm:$0xff]
        %v507 = vunpack.c.l.bf16 %v475
        %v508 = vunpack.c.h.bf16 %v475
        %v509 = vunpack.c.l.bf16 %v476
        %v510 = vunpack.c.h.bf16 %v476
        %v511 = vunpack.c.l.bf16 %v477
        %v512 = vunpack.c.h.bf16 %v477
        %v513 = vunpack.c.l.bf16 %v478
        %v514 = vunpack.c.h.bf16 %v478
        %v515 = vunpack.c.l.bf16 %v479
        %v516 = vunpack.c.h.bf16 %v479
        %v517 = vunpack.c.l.bf16 %v480
        %v518 = vunpack.c.h.bf16 %v480
        %v519 = vunpack.c.l.bf16 %v481
        %v520 = vunpack.c.h.bf16 %v481
        %v521 = vunpack.c.l.bf16 %v482
        %v522 = vunpack.c.h.bf16 %v482
        %v523 = vunpack.c.l.bf16 %v483
        %v524 = vunpack.c.h.bf16 %v483
        %v525 = vunpack.c.l.bf16 %v484
        %v526 = vunpack.c.h.bf16 %v484
        %v527 = vunpack.c.l.bf16 %v485
        %v528 = vunpack.c.h.bf16 %v485
        %v529 = vunpack.c.l.bf16 %v486
        %v530 = vunpack.c.h.bf16 %v486
        %v531 = vunpack.c.l.bf16 %v487
        %v532 = vunpack.c.h.bf16 %v487
        %v533 = vunpack.c.l.bf16 %v488
        %v534 = vunpack.c.h.bf16 %v488
        %v535 = vunpack.c.l.bf16 %v489
        %v536 = vunpack.c.h.bf16 %v489
        %v537 = vunpack.c.l.bf16 %v490
        %v538 = vunpack.c.h.bf16 %v490
        %v539 = vunpack.c.l.bf16 %v491
        %v540 = vunpack.c.h.bf16 %v491
        %v541 = vunpack.c.l.bf16 %v492
        %v542 = vunpack.c.h.bf16 %v492
        %v543 = vunpack.c.l.bf16 %v493
        %v544 = vunpack.c.h.bf16 %v493
        %v545 = vunpack.c.l.bf16 %v494
        %v546 = vunpack.c.h.bf16 %v494
        %v547 = vunpack.c.l.bf16 %v495
        %v548 = vunpack.c.h.bf16 %v495
        %v549 = vunpack.c.l.bf16 %v496
        %v550 = vunpack.c.h.bf16 %v496
        %v551 = vunpack.c.l.bf16 %v497
        %v552 = vunpack.c.h.bf16 %v497
        %v553 = vunpack.c.l.bf16 %v498
        %v554 = vunpack.c.h.bf16 %v498
        %v555 = vunpack.c.l.bf16 %v499
        %v556 = vunpack.c.h.bf16 %v499
        %v557 = vunpack.c.l.bf16 %v500
        %v558 = vunpack.c.h.bf16 %v500
        %v559 = vunpack.c.l.bf16 %v501
        %v560 = vunpack.c.h.bf16 %v501
        %v561 = vunpack.c.l.bf16 %v502
        %v562 = vunpack.c.h.bf16 %v502
        %v563 = vunpack.c.l.bf16 %v503
        %v564 = vunpack.c.h.bf16 %v503
        %v565 = vunpack.c.l.bf16 %v504
        %v566 = vunpack.c.h.bf16 %v504
        %v567 = vunpack.c.l.bf16 %v505
        %v568 = vunpack.c.h.bf16 %v505
        %v569 = vunpack.c.l.bf16 %v506
        %v570 = vunpack.c.h.bf16 %v506
        %v571 = vadd.f32 %v411, %v507
        %v572 = vadd.f32 %v412, %v508
        %v573 = vadd.f32 %v413, %v509
        %v574 = vadd.f32 %v414, %v510
        %v575 = vadd.f32 %v415, %v511
        %v576 = vadd.f32 %v416, %v512
        %v577 = vadd.f32 %v417, %v513
        %v578 = vadd.f32 %v418, %v514
        %v579 = vadd.f32 %v419, %v515
        %v580 = vadd.f32 %v420, %v516
        %v581 = vadd.f32 %v421, %v517
        %v582 = vadd.f32 %v422, %v518
        %v583 = vadd.f32 %v423, %v519
        %v584 = vadd.f32 %v424, %v520
        %v585 = vadd.f32 %v425, %v521
        %v586 = vadd.f32 %v426, %v522
        %v587 = vadd.f32 %v427, %v523
        %v588 = vadd.f32 %v428, %v524
        %v589 = vadd.f32 %v429, %v525
        %v590 = vadd.f32 %v430, %v526
        %v591 = vadd.f32 %v431, %v527
        %v592 = vadd.f32 %v432, %v528
        %v593 = vadd.f32 %v433, %v529
        %v594 = vadd.f32 %v434, %v530
        %v595 = vadd.f32 %v435, %v531
        %v596 = vadd.f32 %v436, %v532
        %v597 = vadd.f32 %v437, %v533
        %v598 = vadd.f32 %v438, %v534
        %v599 = vadd.f32 %v439, %v535
        %v600 = vadd.f32 %v440, %v536
        %v601 = vadd.f32 %v441, %v537
        %v602 = vadd.f32 %v442, %v538
        %v603 = vadd.f32 %v443, %v539
        %v604 = vadd.f32 %v444, %v540
        %v605 = vadd.f32 %v445, %v541
        %v606 = vadd.f32 %v446, %v542
        %v607 = vadd.f32 %v447, %v543
        %v608 = vadd.f32 %v448, %v544
        %v609 = vadd.f32 %v449, %v545
        %v610 = vadd.f32 %v450, %v546
        %v611 = vadd.f32 %v451, %v547
        %v612 = vadd.f32 %v452, %v548
        %v613 = vadd.f32 %v453, %v549
        %v614 = vadd.f32 %v454, %v550
        %v615 = vadd.f32 %v455, %v551
        %v616 = vadd.f32 %v456, %v552
        %v617 = vadd.f32 %v457, %v553
        %v618 = vadd.f32 %v458, %v554
        %v619 = vadd.f32 %v459, %v555
        %v620 = vadd.f32 %v460, %v556
        %v621 = vadd.f32 %v461, %v557
        %v622 = vadd.f32 %v462, %v558
        %v623 = vadd.f32 %v463, %v559
        %v624 = vadd.f32 %v464, %v560
        %v625 = vadd.f32 %v465, %v561
        %v626 = vadd.f32 %v466, %v562
        %v627 = vadd.f32 %v467, %v563
        %v628 = vadd.f32 %v468, %v564
        %v629 = vadd.f32 %v469, %v565
        %v630 = vadd.f32 %v470, %v566
        %v631 = vadd.f32 %v471, %v567
        %v632 = vadd.f32 %v472, %v568
        %v633 = vadd.f32 %v473, %v569
        %v634 = vadd.f32 %v474, %v570
        %v635 = vmax.f32 %v571, 0.0
        %v636 = vmax.f32 %v572, 0.0
        %v637 = vmax.f32 %v573, 0.0
        %v638 = vmax.f32 %v574, 0.0
        %v639 = vmax.f32 %v575, 0.0
        %v640 = vmax.f32 %v576, 0.0
        %v641 = vmax.f32 %v577, 0.0
        %v642 = vmax.f32 %v578, 0.0
        %v643 = vmax.f32 %v579, 0.0
        %v644 = vmax.f32 %v580, 0.0
        %v645 = vmax.f32 %v581, 0.0
        %v646 = vmax.f32 %v582, 0.0
        %v647 = vmax.f32 %v583, 0.0
        %v648 = vmax.f32 %v584, 0.0
        %v649 = vmax.f32 %v585, 0.0
        %v650 = vmax.f32 %v586, 0.0
        %v651 = vmax.f32 %v587, 0.0
        %v652 = vmax.f32 %v588, 0.0
        %v653 = vmax.f32 %v589, 0.0
        %v654 = vmax.f32 %v590, 0.0
        %v655 = vmax.f32 %v591, 0.0
        %v656 = vmax.f32 %v592, 0.0
        %v657 = vmax.f32 %v593, 0.0
        %v658 = vmax.f32 %v594, 0.0
        %v659 = vmax.f32 %v595, 0.0
        %v660 = vmax.f32 %v596, 0.0
        %v661 = vmax.f32 %v597, 0.0
        %v662 = vmax.f32 %v598, 0.0
        %v663 = vmax.f32 %v599, 0.0
        %v664 = vmax.f32 %v600, 0.0
        %v665 = vmax.f32 %v601, 0.0
        %v666 = vmax.f32 %v602, 0.0
        %v667 = vmax.f32 %v603, 0.0
        %v668 = vmax.f32 %v604, 0.0
        %v669 = vmax.f32 %v605, 0.0
        %v670 = vmax.f32 %v606, 0.0
        %v671 = vmax.f32 %v607, 0.0
        %v672 = vmax.f32 %v608, 0.0
        %v673 = vmax.f32 %v609, 0.0
        %v674 = vmax.f32 %v610, 0.0
        %v675 = vmax.f32 %v611, 0.0
        %v676 = vmax.f32 %v612, 0.0
        %v677 = vmax.f32 %v613, 0.0
        %v678 = vmax.f32 %v614, 0.0
        %v679 = vmax.f32 %v615, 0.0
        %v680 = vmax.f32 %v616, 0.0
        %v681 = vmax.f32 %v617, 0.0
        %v682 = vmax.f32 %v618, 0.0
        %v683 = vmax.f32 %v619, 0.0
        %v684 = vmax.f32 %v620, 0.0
        %v685 = vmax.f32 %v621, 0.0
        %v686 = vmax.f32 %v622, 0.0
        %v687 = vmax.f32 %v623, 0.0
        %v688 = vmax.f32 %v624, 0.0
        %v689 = vmax.f32 %v625, 0.0
        %v690 = vmax.f32 %v626, 0.0
        %v691 = vmax.f32 %v627, 0.0
        %v692 = vmax.f32 %v628, 0.0
        %v693 = vmax.f32 %v629, 0.0
        %v694 = vmax.f32 %v630, 0.0
        %v695 = vmax.f32 %v631, 0.0
        %v696 = vmax.f32 %v632, 0.0
        %v697 = vmax.f32 %v633, 0.0
        %v698 = vmax.f32 %v634, 0.0
        %699 = vst [vmem:[%s211] sm:$0xff] %v635
        %700 = vst [vmem:[%s211 + $0x8] sm:$0xff] %v636
        %701 = vst [vmem:[%s211 + $0x10] sm:$0xff] %v637
        %702 = vst [vmem:[%s211 + $0x18] sm:$0xff] %v638
        %703 = vst [vmem:[%s211 + $0x20] sm:$0xff] %v639
        %704 = vst [vmem:[%s211 + $0x28] sm:$0xff] %v640
        %705 = vst [vmem:[%s211 + $0x30] sm:$0xff] %v641
        %706 = vst [vmem:[%s211 + $0x38] sm:$0xff] %v642
        %707 = vst [vmem:[%s211 + $0x40] sm:$0xff] %v643
        %708 = vst [vmem:[%s211 + $0x48] sm:$0xff] %v644
        %709 = vst [vmem:[%s211 + $0x50] sm:$0xff] %v645
        %710 = vst [vmem:[%s211 + $0x58] sm:$0xff] %v646
        %711 = vst [vmem:[%s211 + $0x60] sm:$0xff] %v647
        %712 = vst [vmem:[%s211 + $0x68] sm:$0xff] %v648
        %713 = vst [vmem:[%s211 + $0x70] sm:$0xff] %v649
        %714 = vst [vmem:[%s211 + $0x78] sm:$0xff] %v650
        %715 = vst [vmem:[%s211 + $0x80] sm:$0xff] %v651
        %716 = vst [vmem:[%s211 + $0x88] sm:$0xff] %v652
        %717 = vst [vmem:[%s211 + $0x90] sm:$0xff] %v653
        %718 = vst [vmem:[%s211 + $0x98] sm:$0xff] %v654
        %719 = vst [vmem:[%s211 + $0xa0] sm:$0xff] %v655
        %720 = vst [vmem:[%s211 + $0xa8] sm:$0xff] %v656
        %721 = vst [vmem:[%s211 + $0xb0] sm:$0xff] %v657
        %722 = vst [vmem:[%s211 + $0xb8] sm:$0xff] %v658
        %723 = vst [vmem:[%s211 + $0xc0] sm:$0xff] %v659
        %724 = vst [vmem:[%s211 + $0xc8] sm:$0xff] %v660
        %725 = vst [vmem:[%s211 + $0xd0] sm:$0xff] %v661
        %726 = vst [vmem:[%s211 + $0xd8] sm:$0xff] %v662
        %727 = vst [vmem:[%s211 + $0xe0] sm:$0xff] %v663
        %728 = vst [vmem:[%s211 + $0xe8] sm:$0xff] %v664
        %729 = vst [vmem:[%s211 + $0xf0] sm:$0xff] %v665
        %730 = vst [vmem:[%s211 + $0xf8] sm:$0xff] %v666
        %731 = vst [vmem:[%s211 + $0x100] sm:$0xff] %v667
        %732 = vst [vmem:[%s211 + $0x108] sm:$0xff] %v668
        %733 = vst [vmem:[%s211 + $0x110] sm:$0xff] %v669
        %734 = vst [vmem:[%s211 + $0x118] sm:$0xff] %v670
        %735 = vst [vmem:[%s211 + $0x120] sm:$0xff] %v671
        %736 = vst [vmem:[%s211 + $0x128] sm:$0xff] %v672
        %737 = vst [vmem:[%s211 + $0x130] sm:$0xff] %v673
        %738 = vst [vmem:[%s211 + $0x138] sm:$0xff] %v674
        %739 = vst [vmem:[%s211 + $0x140] sm:$0xff] %v675
        %740 = vst [vmem:[%s211 + $0x148] sm:$0xff] %v676
        %741 = vst [vmem:[%s211 + $0x150] sm:$0xff] %v677
        %742 = vst [vmem:[%s211 + $0x158] sm:$0xff] %v678
        %743 = vst [vmem:[%s211 + $0x160] sm:$0xff] %v679
        %744 = vst [vmem:[%s211 + $0x168] sm:$0xff] %v680
        %745 = vst [vmem:[%s211 + $0x170] sm:$0xff] %v681
        %746 = vst [vmem:[%s211 + $0x178] sm:$0xff] %v682
        %747 = vst [vmem:[%s211 + $0x180] sm:$0xff] %v683
        %748 = vst [vmem:[%s211 + $0x188] sm:$0xff] %v684
        %749 = vst [vmem:[%s211 + $0x190] sm:$0xff] %v685
        %750 = vst [vmem:[%s211 + $0x198] sm:$0xff] %v686
        %751 = vst [vmem:[%s211 + $0x1a0] sm:$0xff] %v687
        %752 = vst [vmem:[%s211 + $0x1a8] sm:$0xff] %v688
        %753 = vst [vmem:[%s211 + $0x1b0] sm:$0xff] %v689
        %754 = vst [vmem:[%s211 + $0x1b8] sm:$0xff] %v690
        %755 = vst [vmem:[%s211 + $0x1c0] sm:$0xff] %v691
        %756 = vst [vmem:[%s211 + $0x1c8] sm:$0xff] %v692
        %757 = vst [vmem:[%s211 + $0x1d0] sm:$0xff] %v693
        %758 = vst [vmem:[%s211 + $0x1d8] sm:$0xff] %v694
        %759 = vst [vmem:[%s211 + $0x1e0] sm:$0xff] %v695
        %760 = vst [vmem:[%s211 + $0x1e8] sm:$0xff] %v696
        %761 = vst [vmem:[%s211 + $0x1f0] sm:$0xff] %v697
        %762 = vst [vmem:[%s211 + $0x1f8] sm:$0xff] %v698
        %s763 = sand.u32 %s120, 1
        %s764 = scalar_lea.sflag [#allocation3], %s763
        %s765 = sand.u32 %s120, 1
        %s766 = smul.addr %s765, 512
        %s767 = scalar_lea.vmem [#allocation2], %s766
        // Predicated region
        $region37: #{resnetblock4_forward.9} parent=35 // pred_check
          %p768 = pneg %p130
        $region38: #{resnetblock4_forward.9} parent=35 // pred_check_branch
          %770 = sbr.rel (%p768) target = $region40
        $region39: #{resnetblock4_forward.9} parent=35 // pred_region
          %s771 = smul.u32 32, %s18
          %s773 = ssub.s32 8192, 8192
          %774 = vsyncadd %s764, %s773
          %s775 = smul.addr %s771, 2
          %s776 = smul.addr %s775, 128
          %s777 = scalar_lea.hbm %s4, %s776
          %s778 = sshll.u32 %s767, 4
          %s779 = int_to_ptr.vmem [resolvable:$true] %s778
          %784 = dma.vmem_to_hbm [thread:$0]  %s779, 8192, %s777, %s764, 256, 256, 16
        $region40: #{resnetblock4_forward.9} parent=35 // pred_fallthru
          _
      $region36: #{resnetblock4_forward.9} parent=5 // pred_fallthru
        _
      %p785 = scmp.le.s32.totalorder 2, %s13
      // Predicated region
      $region41: #{resnetblock4_forward.9} parent=5 // pred_check
        %p786 = pneg %p785
      $region42: #{resnetblock4_forward.9} parent=5 // pred_check_branch
        %788 = sbr.rel (%p786) target = $region44
      $region43: #{resnetblock4_forward.9} parent=5 // pred_region
        %s789 = ssub.s32 %s13, 2
        // Predicated region
        $region45: #{resnetblock4_forward.9} parent=43 // pred_check
          %p790 = pneg %p136
        $region46: #{resnetblock4_forward.9} parent=43 // pred_check_branch
          %792 = sbr.rel (%p790) target = $region48
        $region47: #{resnetblock4_forward.9} parent=43 // pred_region
          %s793 = sand.u32 %s121, 1
          %s794 = scalar_lea.sflag [#allocation3], %s793
          %s795 = sand.u32 %s121, 1
          %s796 = smul.addr %s795, 512
          %s797 = scalar_lea.vmem [#allocation2], %s796
          %798 = dma.done %s794, 8192
        $region48: #{resnetblock4_forward.9} parent=43 // pred_fallthru
          _
      $region44: #{resnetblock4_forward.9} parent=5 // pred_fallthru
        _
    $region6: #{resnetblock4_forward.9} parent=1 // loop_footer
      %s17 = sadd.s32 1, %s13
    $region7: #{resnetblock4_forward.9} parent=1 // loop_footer_branch
      %12 = sbr.rel target = $region3
    $region8: #{resnetblock4_forward.9} parent=1 // loop_exit
      _
    %799 = vsyncpa [#allocation3], 1
    %s800 = scalar_lea.sflag [#allocation3], 1
    %801 = vsyncpa %s800, 1

// kernel: resnetblock4_forward.8
$region0: #{resnetblock4_forward.8}
  #allocation0 [shape = 'u32[]', space=smem, size = 0x4, offset = 0x4, fixed_abs, tag = 'smem constant byte address 0x4 - core index']
  #allocation1 [shape = 'u32[144,128]{1,0:T(1,128)}', space=vmem, size = 0x12000, scoped, tag = 'internal scratch']
  #allocation2 [shape = 'f32[256,256]{1,0:T(8,128)}', space=vmem, size = 0x40000, scoped, tag = 'scratch operand']
  %s0 = inlined_call_operand.vmem [shape: bf16[512,64], index: 0, kind: input, shape index: {}]
  %s1 = inlined_call_operand.vmem [shape: f32[1,64], index: 1, kind: input, shape index: {}]
  %s2 = inlined_call_operand.vmem [shape: f32[1,64], index: 2, kind: input, shape index: {}]
  %s3 = inlined_call_operand.vmem [shape: bf16[64,256], index: 3, kind: input, shape index: {}]
  %s4 = inlined_call_operand.vmem [shape: bf16[512,256], index: 4, kind: output, shape index: {0}]
  %s5 = inlined_call_operand.vmem [shape: f32[16,256], index: 5, kind: output, shape index: {1}]
  %s6 = inlined_call_operand.vmem [shape: f32[16,256], index: 6, kind: output, shape index: {2}]
  %7 = xla_tuple %s4, %s5, %s6
  %s8 = sld [smem:[#allocation0]]
  $region65: #{resnetblock4_forward.8} parent=0
    _
  %s10 = ssub.s32 1, %s8
  %s11 = scalar_select 0, %s10, %s8
  loop: start=0, step=1, limit=4
  $region2: #{resnetblock4_forward.8} parent=0 // loop_pre_header
    _
  $region3: #{resnetblock4_forward.8} parent=0 // loop_header
    %s13 = sphi 0, %s17
    %p14 = scmp.ge.s32.totalorder %s13, 4
    %s20 = sphi 0, %s39
    %s21 = sphi 0, %s35
    %s22 = sphi 0, %s31
    %s23 = sphi 0, %s20
    %s24 = sphi 0, %s21
    %s25 = sphi 0, %s22
    %s26 = sphi 0, %s23
    %s27 = sphi 0, %s24
    %s28 = sphi 0, %s25
    %s44 = sphi 0, %s46
    %s47 = sphi 0, %s44
    %s48 = sphi 0, %s47
    %s64 = sphi 0, %s48
    %s70 = sphi 0, %s72
    %s73 = sphi 0, %s70
    %s74 = sphi 0, %s73
    %s90 = sphi 0, %s74
    %s96 = sphi 0, %s98
    %s99 = sphi 0, %s96
    %s100 = sphi 0, %s99
    %s116 = sphi 0, %s100
    %s124 = sphi 0, %s126
    %s127 = sphi 0, %s124
    %s128 = sphi 0, %s127
    %s144 = sphi 0, %s128
    %s152 = sphi 0, %s154
    %s155 = sphi 0, %s152
    %s156 = sphi 0, %s155
    %s172 = sphi 0, %s156
    %s180 = sphi 0, %s182
    %s183 = sphi 0, %s180
    %s184 = sphi 0, %s183
    %s200 = sphi 0, %s184
    %s208 = sphi 0, %s210
    %s211 = sphi 0, %s208
    %s212 = sphi 0, %s211
    %s228 = sphi 0, %s212
  $region4: #{resnetblock4_forward.8} parent=0 // loop_header_branch
    %16 = sbr.rel (%p14) target = $region8
  $region5: #{resnetblock4_forward.8} parent=0 // loop_body
    %s18 = ssub.s32 %s13, 1
    %s19 = ssub.s32 %s13, 2
    %s29 = sadd.s32 1, %s22
    %p30 = scmp.ge.s32.totalorder %s29, 1
    %s31 = scalar_select %p30, 0, %s29
    %s32 = sadd.s32 1, %s21
    %s33 = scalar_select %p30, %s32, %s21
    %p34 = scmp.ge.s32.totalorder %s33, 1
    %s35 = scalar_select %p34, 0, %s33
    %s36 = sadd.s32 1, %s20
    %s37 = scalar_select %p34, %s36, %s20
    %p38 = scmp.ge.s32.totalorder %s37, 2
    %s39 = scalar_select %p38, 0, %s37
    %s40 = ssub.s32 %s20, %s39
    %s41 = ssub.s32 %s22, %s31
    %s42 = sor.u32 %s40, %s41
    %p43 = scmp.eq.s32.totalorder %s42, 0
    %s45 = sadd.s32 %s44, 1
    %s46 = scalar_select %p43, %s44, %s45
    %p49 = pneg %p43
    %p50 = scmp.eq.s32.totalorder %s13, 1
    %p51 = por %p49, %p50
    %p52 = scmp.ne.s32.totalorder %s44, %s47
    %p53 = scmp.eq.s32.totalorder %s13, 0
    %p54 = por %p52, %p53
    %p55 = scmp.ne.s32.totalorder %s44, %s47
    %p56 = scmp.eq.s32.totalorder %s18, 1
    %p57 = por %p55, %p56
    %p58 = scmp.ne.s32.totalorder %s47, %s48
    %p59 = scmp.eq.s32.totalorder %s18, 0
    %p60 = por %p58, %p59
    %p61 = scmp.ne.s32.totalorder %s47, %s48
    %p62 = scmp.eq.s32.totalorder %s19, 1
    %p63 = por %p61, %p62
    %p65 = scmp.ne.s32.totalorder %s48, %s64
    %p66 = scmp.eq.s32.totalorder %s19, 0
    %p67 = por %p65, %p66
    %s68 = ssub.s32 %s22, %s31
    %p69 = scmp.eq.s32.totalorder %s68, 0
    %s71 = sadd.s32 %s70, 1
    %s72 = scalar_select %p69, %s70, %s71
    %p75 = pneg %p69
    %p76 = scmp.eq.s32.totalorder %s13, 1
    %p77 = por %p75, %p76
    %p78 = scmp.ne.s32.totalorder %s70, %s73
    %p79 = scmp.eq.s32.totalorder %s13, 0
    %p80 = por %p78, %p79
    %p81 = scmp.ne.s32.totalorder %s70, %s73
    %p82 = scmp.eq.s32.totalorder %s18, 1
    %p83 = por %p81, %p82
    %p84 = scmp.ne.s32.totalorder %s73, %s74
    %p85 = scmp.eq.s32.totalorder %s18, 0
    %p86 = por %p84, %p85
    %p87 = scmp.ne.s32.totalorder %s73, %s74
    %p88 = scmp.eq.s32.totalorder %s19, 1
    %p89 = por %p87, %p88
    %p91 = scmp.ne.s32.totalorder %s74, %s90
    %p92 = scmp.eq.s32.totalorder %s19, 0
    %p93 = por %p91, %p92
    %s94 = ssub.s32 %s22, %s31
    %p95 = scmp.eq.s32.totalorder %s94, 0
    %s97 = sadd.s32 %s96, 1
    %s98 = scalar_select %p95, %s96, %s97
    %p101 = pneg %p95
    %p102 = scmp.eq.s32.totalorder %s13, 1
    %p103 = por %p101, %p102
    %p104 = scmp.ne.s32.totalorder %s96, %s99
    %p105 = scmp.eq.s32.totalorder %s13, 0
    %p106 = por %p104, %p105
    %p107 = scmp.ne.s32.totalorder %s96, %s99
    %p108 = scmp.eq.s32.totalorder %s18, 1
    %p109 = por %p107, %p108
    %p110 = scmp.ne.s32.totalorder %s99, %s100
    %p111 = scmp.eq.s32.totalorder %s18, 0
    %p112 = por %p110, %p111
    %p113 = scmp.ne.s32.totalorder %s99, %s100
    %p114 = scmp.eq.s32.totalorder %s19, 1
    %p115 = por %p113, %p114
    %p117 = scmp.ne.s32.totalorder %s100, %s116
    %p118 = scmp.eq.s32.totalorder %s19, 0
    %p119 = por %p117, %p118
    %s120 = ssub.s32 %s22, %s31
    %s121 = ssub.s32 %s21, %s35
    %s122 = sor.u32 %s120, %s121
    %p123 = scmp.eq.s32.totalorder %s122, 0
    %s125 = sadd.s32 %s124, 1
    %s126 = scalar_select %p123, %s124, %s125
    %p129 = pneg %p123
    %p130 = scmp.eq.s32.totalorder %s13, 1
    %p131 = por %p129, %p130
    %p132 = scmp.ne.s32.totalorder %s124, %s127
    %p133 = scmp.eq.s32.totalorder %s13, 0
    %p134 = por %p132, %p133
    %p135 = scmp.ne.s32.totalorder %s124, %s127
    %p136 = scmp.eq.s32.totalorder %s18, 1
    %p137 = por %p135, %p136
    %p138 = scmp.ne.s32.totalorder %s127, %s128
    %p139 = scmp.eq.s32.totalorder %s18, 0
    %p140 = por %p138, %p139
    %p141 = scmp.ne.s32.totalorder %s127, %s128
    %p142 = scmp.eq.s32.totalorder %s19, 1
    %p143 = por %p141, %p142
    %p145 = scmp.ne.s32.totalorder %s128, %s144
    %p146 = scmp.eq.s32.totalorder %s19, 0
    %p147 = por %p145, %p146
    %s148 = ssub.s32 %s20, %s39
    %s149 = ssub.s32 %s21, %s35
    %s150 = sor.u32 %s148, %s149
    %p151 = scmp.eq.s32.totalorder %s150, 0
    %s153 = sadd.s32 %s152, 1
    %s154 = scalar_select %p151, %s152, %s153
    %p157 = pneg %p151
    %p158 = scmp.eq.s32.totalorder %s13, 1
    %p159 = por %p157, %p158
    %p160 = scmp.ne.s32.totalorder %s152, %s155
    %p161 = scmp.eq.s32.totalorder %s13, 0
    %p162 = por %p160, %p161
    %p163 = scmp.ne.s32.totalorder %s152, %s155
    %p164 = scmp.eq.s32.totalorder %s18, 1
    %p165 = por %p163, %p164
    %p166 = scmp.ne.s32.totalorder %s155, %s156
    %p167 = scmp.eq.s32.totalorder %s18, 0
    %p168 = por %p166, %p167
    %p169 = scmp.ne.s32.totalorder %s155, %s156
    %p170 = scmp.eq.s32.totalorder %s19, 1
    %p171 = por %p169, %p170
    %p173 = scmp.ne.s32.totalorder %s156, %s172
    %p174 = scmp.eq.s32.totalorder %s19, 0
    %p175 = por %p173, %p174
    %s176 = ssub.s32 %s20, %s39
    %s177 = ssub.s32 %s21, %s35
    %s178 = sor.u32 %s176, %s177
    %p179 = scmp.eq.s32.totalorder %s178, 0
    %s181 = sadd.s32 %s180, 1
    %s182 = scalar_select %p179, %s180, %s181
    %p185 = pneg %p179
    %p186 = scmp.eq.s32.totalorder %s13, 1
    %p187 = por %p185, %p186
    %p188 = scmp.ne.s32.totalorder %s180, %s183
    %p189 = scmp.eq.s32.totalorder %s13, 0
    %p190 = por %p188, %p189
    %p191 = scmp.ne.s32.totalorder %s180, %s183
    %p192 = scmp.eq.s32.totalorder %s18, 1
    %p193 = por %p191, %p192
    %p194 = scmp.ne.s32.totalorder %s183, %s184
    %p195 = scmp.eq.s32.totalorder %s18, 0
    %p196 = por %p194, %p195
    %p197 = scmp.ne.s32.totalorder %s183, %s184
    %p198 = scmp.eq.s32.totalorder %s19, 1
    %p199 = por %p197, %p198
    %p201 = scmp.ne.s32.totalorder %s184, %s200
    %p202 = scmp.eq.s32.totalorder %s19, 0
    %p203 = por %p201, %p202
    %s204 = ssub.s32 %s20, %s39
    %s205 = ssub.s32 %s21, %s35
    %s206 = sor.u32 %s204, %s205
    %p207 = scmp.eq.s32.totalorder %s206, 0
    %s209 = sadd.s32 %s208, 1
    %s210 = scalar_select %p207, %s208, %s209
    %p213 = pneg %p207
    %p214 = scmp.eq.s32.totalorder %s13, 1
    %p215 = por %p213, %p214
    %p216 = scmp.ne.s32.totalorder %s208, %s211
    %p217 = scmp.eq.s32.totalorder %s13, 0
    %p218 = por %p216, %p217
    %p219 = scmp.ne.s32.totalorder %s208, %s211
    %p220 = scmp.eq.s32.totalorder %s18, 1
    %p221 = por %p219, %p220
    %p222 = scmp.ne.s32.totalorder %s211, %s212
    %p223 = scmp.eq.s32.totalorder %s18, 0
    %p224 = por %p222, %p223
    %p225 = scmp.ne.s32.totalorder %s211, %s212
    %p226 = scmp.eq.s32.totalorder %s19, 1
    %p227 = por %p225, %p226
    %p229 = scmp.ne.s32.totalorder %s212, %s228
    %p230 = scmp.eq.s32.totalorder %s19, 0
    %p231 = por %p229, %p230
    %p232 = scmp.le.s32.totalorder 1, %s13
    %p233 = scmp.lt.s32.totalorder %s13, 3
    %p234 = pnand %p232, %p233
    %p235 = pneg %p234
    // Predicated region
    $region9: #{resnetblock4_forward.8} parent=5 // pred_check
      _
    $region10: #{resnetblock4_forward.8} parent=5 // pred_check_branch
      %237 = sbr.rel (%p234) target = $region12
    $region11: #{resnetblock4_forward.8} parent=5 // pred_region
      %s238 = ssub.s32 %s13, 1
      // Predicated region
      $region13: #{resnetblock4_forward.8} parent=11 // pred_check
        %p239 = pneg %p86
      $region14: #{resnetblock4_forward.8} parent=11 // pred_check_branch
        %241 = sbr.rel (%p239) target = $region16
      $region15: #{resnetblock4_forward.8} parent=11 // pred_region
        %p242 = scmp.lt.s32.totalorder %s25, 0
        %s243 = scalar_select %p242, %s25, 0
        %s244 = scalar_lea.vmem %s1, %s243
      $region16: #{resnetblock4_forward.8} parent=11 // pred_fallthru
        _
      // Predicated region
      $region17: #{resnetblock4_forward.8} parent=11 // pred_check
        %p245 = pneg %p112
      $region18: #{resnetblock4_forward.8} parent=11 // pred_check_branch
        %247 = sbr.rel (%p245) target = $region20
      $region19: #{resnetblock4_forward.8} parent=11 // pred_region
        %p248 = scmp.lt.s32.totalorder %s25, 0
        %s249 = scalar_select %p248, %s25, 0
        %s250 = scalar_lea.vmem %s2, %s249
      $region20: #{resnetblock4_forward.8} parent=11 // pred_fallthru
        _
      // Predicated region
      $region21: #{resnetblock4_forward.8} parent=11 // pred_check
        %p251 = pneg %p140
      $region22: #{resnetblock4_forward.8} parent=11 // pred_check_branch
        %253 = sbr.rel (%p251) target = $region24
      $region23: #{resnetblock4_forward.8} parent=11 // pred_region
        %s254 = smul.u32 8, %s25
        %s255 = smul.u32 2, %s24
        %p256 = scmp.lt.s32.totalorder %s254, 7
        %s257 = scalar_select %p256, %s254, 7
        %p258 = scmp.lt.s32.totalorder %s255, 1
        %s259 = scalar_select %p258, %s255, 1
        %s260 = smul.addr %s257, 2
        %s261 = sadd.s32 %s259, %s260
        %s262 = smul.addr %s261, 4
        %s263 = scalar_lea.vmem %s3, %s262
        %s264 = smul.u32 8, %s25
        %s265 = smul.u32 2, %s24
      $region24: #{resnetblock4_forward.8} parent=11 // pred_fallthru
        _
    $region12: #{resnetblock4_forward.8} parent=5 // pred_fallthru
      _
    %p266 = scmp.lt.s32.totalorder %s13, 2
    // Predicated region
    $region25: #{resnetblock4_forward.8} parent=5 // pred_check
      %p267 = pneg %p266
    $region26: #{resnetblock4_forward.8} parent=5 // pred_check_branch
      %269 = sbr.rel (%p267) target = $region28
    $region27: #{resnetblock4_forward.8} parent=5 // pred_region
      // Predicated region
      $region29: #{resnetblock4_forward.8} parent=27 // pred_check
        %p270 = pneg %p54
      $region30: #{resnetblock4_forward.8} parent=27 // pred_check_branch
        %272 = sbr.rel (%p270) target = $region32
      $region31: #{resnetblock4_forward.8} parent=27 // pred_region
        %s273 = smul.u32 32, %s20
        %p274 = scmp.lt.s32.totalorder %s273, 63
        %s275 = scalar_select %p274, %s273, 63
        %p276 = scmp.lt.s32.totalorder %s22, 0
        %s277 = scalar_select %p276, %s22, 0
        %s278 = sadd.s32 %s277, %s275
        %s279 = smul.addr %s278, 4
        %s280 = scalar_lea.vmem %s0, %s279
        %s281 = smul.u32 32, %s20
      $region32: #{resnetblock4_forward.8} parent=27 // pred_fallthru
        _
    $region28: #{resnetblock4_forward.8} parent=5 // pred_fallthru
      _
    %p282 = scmp.le.s32.totalorder 1, %s13
    %p283 = scmp.lt.s32.totalorder %s13, 3
    %p284 = pnand %p282, %p283
    %p285 = pneg %p284
    // Predicated region
    $region33: #{resnetblock4_forward.8} parent=5 // pred_check
      _
    $region34: #{resnetblock4_forward.8} parent=5 // pred_check_branch
      %287 = sbr.rel (%p284) target = $region36
    $region35: #{resnetblock4_forward.8} parent=5 // pred_region
      %s288 = ssub.s32 %s13, 1
      %s289 = smul.u32 32, %s23
      %p290 = scmp.lt.s32.totalorder %s289, 63
      %s291 = scalar_select %p290, %s289, 63
      %p292 = scmp.lt.s32.totalorder %s25, 0
      %s293 = scalar_select %p292, %s25, 0
      %s294 = sadd.s32 %s293, %s291
      %s295 = smul.addr %s294, 4
      %s296 = scalar_lea.vmem %s0, %s295
      %p297 = pneg %p60
      %p298 = pneg %p57
      %p299 = scmp.lt.s32.totalorder %s25, 0
      %s300 = scalar_select %p299, %s25, 0
      %s301 = scalar_lea.vmem %s1, %s300
      %p302 = pneg %p86
      %p303 = pneg %p83
      %p304 = scmp.lt.s32.totalorder %s25, 0
      %s305 = scalar_select %p304, %s25, 0
      %s306 = scalar_lea.vmem %s2, %s305
      %p307 = pneg %p112
      %p308 = pneg %p109
      %s309 = smul.u32 8, %s25
      %s310 = smul.u32 2, %s24
      %p311 = scmp.lt.s32.totalorder %s309, 7
      %s312 = scalar_select %p311, %s309, 7
      %p313 = scmp.lt.s32.totalorder %s310, 1
      %s314 = scalar_select %p313, %s310, 1
      %s315 = smul.addr %s312, 2
      %s316 = sadd.s32 %s314, %s315
      %s317 = smul.addr %s316, 4
      %s318 = scalar_lea.vmem %s3, %s317
      %p319 = pneg %p140
      %p320 = pneg %p137
      %p321 = pneg %p168
      %p322 = pneg %p165
      %s323 = smul.u32 32, %s23
      %s324 = smul.u32 2, %s24
      %p325 = scmp.lt.s32.totalorder %s323, 63
      %s326 = scalar_select %p325, %s323, 63
      %p327 = scmp.lt.s32.totalorder %s324, 1
      %s328 = scalar_select %p327, %s324, 1
      %s329 = smul.addr %s326, 2
      %s330 = sadd.s32 %s328, %s329
      %s331 = smul.addr %s330, 4
      %s332 = scalar_lea.vmem %s4, %s331
      %p333 = pneg %p196
      %p334 = pneg %p193
      %s335 = smul.u32 2, %s24
      %p336 = scmp.lt.s32.totalorder %s23, 1
      %s337 = scalar_select %p336, %s23, 1
      %p338 = scmp.lt.s32.totalorder %s335, 1
      %s339 = scalar_select %p338, %s335, 1
      %s340 = smul.addr %s337, 2
      %s341 = sadd.s32 %s339, %s340
      %s342 = smul.addr %s341, 8
      %s343 = scalar_lea.vmem %s5, %s342
      %p344 = pneg %p224
      %p345 = pneg %p221
      %s346 = smul.u32 2, %s24
      %p347 = scmp.lt.s32.totalorder %s23, 1
      %s348 = scalar_select %p347, %s23, 1
      %p349 = scmp.lt.s32.totalorder %s346, 1
      %s350 = scalar_select %p349, %s346, 1
      %s351 = smul.addr %s348, 2
      %s352 = sadd.s32 %s350, %s351
      %s353 = smul.addr %s352, 8
      %s354 = scalar_lea.vmem %s6, %s353
      %s355 = smul.u32 32, %s23
      %p356 = scmp.lt.s32.totalorder %s355, 63
      %s357 = scalar_select %p356, %s355, 63
      %p358 = scmp.lt.s32.totalorder %s25, 0
      %s359 = scalar_select %p358, %s25, 0
      %s360 = sadd.s32 %s359, %s357
      %s361 = smul.addr %s360, 4
      %s362 = scalar_lea.vmem %s0, %s361
      %s363 = smul.u32 32, %s23
      %p364 = scmp.lt.s32.totalorder %s25, 0
      %s365 = scalar_select %p364, %s25, 0
      %s366 = scalar_lea.vmem %s1, %s365
      %p367 = scmp.lt.s32.totalorder %s25, 0
      %s368 = scalar_select %p367, %s25, 0
      %s369 = scalar_lea.vmem %s2, %s368
      %s370 = smul.u32 8, %s25
      %s371 = smul.u32 2, %s24
      %p372 = scmp.lt.s32.totalorder %s370, 7
      %s373 = scalar_select %p372, %s370, 7
      %p374 = scmp.lt.s32.totalorder %s371, 1
      %s375 = scalar_select %p374, %s371, 1
      %s376 = smul.addr %s373, 2
      %s377 = sadd.s32 %s375, %s376
      %s378 = smul.addr %s377, 4
      %s379 = scalar_lea.vmem %s3, %s378
      %s380 = smul.u32 8, %s25
      %s381 = smul.u32 2, %s24
      %s382 = smul.u32 32, %s23
      %s383 = smul.u32 2, %s24
      %p384 = scmp.lt.s32.totalorder %s382, 63
      %s385 = scalar_select %p384, %s382, 63
      %p386 = scmp.lt.s32.totalorder %s383, 1
      %s387 = scalar_select %p386, %s383, 1
      %s388 = smul.addr %s385, 2
      %s389 = sadd.s32 %s387, %s388
      %s390 = smul.addr %s389, 4
      %s391 = scalar_lea.vmem %s4, %s390
      %s392 = smul.u32 32, %s23
      %s393 = smul.u32 2, %s24
      %s394 = smul.u32 2, %s24
      %p395 = scmp.lt.s32.totalorder %s23, 1
      %s396 = scalar_select %p395, %s23, 1
      %p397 = scmp.lt.s32.totalorder %s394, 1
      %s398 = scalar_select %p397, %s394, 1
      %s399 = smul.addr %s396, 2
      %s400 = sadd.s32 %s398, %s399
      %s401 = smul.addr %s400, 8
      %s402 = scalar_lea.vmem %s5, %s401
      %s403 = smul.u32 2, %s24
      %s404 = smul.u32 2, %s24
      %p405 = scmp.lt.s32.totalorder %s23, 1
      %s406 = scalar_select %p405, %s23, 1
      %p407 = scmp.lt.s32.totalorder %s404, 1
      %s408 = scalar_select %p407, %s404, 1
      %s409 = smul.addr %s406, 2
      %s410 = sadd.s32 %s408, %s409
      %s411 = smul.addr %s410, 8
      %s412 = scalar_lea.vmem %s6, %s411
      %s413 = smul.u32 2, %s24
      %v415 = vld [vmem:[%s362] sm:$0xf]
      %v416 = vld [vmem:[%s362 + $0x4] sm:$0xf]
      %v417 = vld [vmem:[%s362 + $0x8] sm:$0xf]
      %v418 = vld [vmem:[%s362 + $0xc] sm:$0xf]
      %v419 = vld [vmem:[%s362 + $0x10] sm:$0xf]
      %v420 = vld [vmem:[%s362 + $0x14] sm:$0xf]
      %v421 = vld [vmem:[%s362 + $0x18] sm:$0xf]
      %v422 = vld [vmem:[%s362 + $0x1c] sm:$0xf]
      %v423 = vld [vmem:[%s362 + $0x20] sm:$0xf]
      %v424 = vld [vmem:[%s362 + $0x24] sm:$0xf]
      %v425 = vld [vmem:[%s362 + $0x28] sm:$0xf]
      %v426 = vld [vmem:[%s362 + $0x2c] sm:$0xf]
      %v427 = vld [vmem:[%s362 + $0x30] sm:$0xf]
      %v428 = vld [vmem:[%s362 + $0x34] sm:$0xf]
      %v429 = vld [vmem:[%s362 + $0x38] sm:$0xf]
      %v430 = vld [vmem:[%s362 + $0x3c] sm:$0xf]
      %v431 = vld [vmem:[%s362 + $0x40] sm:$0xf]
      %v432 = vld [vmem:[%s362 + $0x44] sm:$0xf]
      %v433 = vld [vmem:[%s362 + $0x48] sm:$0xf]
      %v434 = vld [vmem:[%s362 + $0x4c] sm:$0xf]
      %v435 = vld [vmem:[%s362 + $0x50] sm:$0xf]
      %v436 = vld [vmem:[%s362 + $0x54] sm:$0xf]
      %v437 = vld [vmem:[%s362 + $0x58] sm:$0xf]
      %v438 = vld [vmem:[%s362 + $0x5c] sm:$0xf]
      %v439 = vld [vmem:[%s362 + $0x60] sm:$0xf]
      %v440 = vld [vmem:[%s362 + $0x64] sm:$0xf]
      %v441 = vld [vmem:[%s362 + $0x68] sm:$0xf]
      %v442 = vld [vmem:[%s362 + $0x6c] sm:$0xf]
      %v443 = vld [vmem:[%s362 + $0x70] sm:$0xf]
      %v444 = vld [vmem:[%s362 + $0x74] sm:$0xf]
      %v445 = vld [vmem:[%s362 + $0x78] sm:$0xf]
      %v446 = vld [vmem:[%s362 + $0x7c] sm:$0xf]
      %v447 = vunpack.c.l.bf16 %v415
      %v448 = vunpack.c.l.bf16 %v416
      %v449 = vunpack.c.l.bf16 %v417
      %v450 = vunpack.c.l.bf16 %v418
      %v451 = vunpack.c.l.bf16 %v419
      %v452 = vunpack.c.l.bf16 %v420
      %v453 = vunpack.c.l.bf16 %v421
      %v454 = vunpack.c.l.bf16 %v422
      %v455 = vunpack.c.l.bf16 %v423
      %v456 = vunpack.c.l.bf16 %v424
      %v457 = vunpack.c.l.bf16 %v425
      %v458 = vunpack.c.l.bf16 %v426
      %v459 = vunpack.c.l.bf16 %v427
      %v460 = vunpack.c.l.bf16 %v428
      %v461 = vunpack.c.l.bf16 %v429
      %v462 = vunpack.c.l.bf16 %v430
      %v463 = vunpack.c.l.bf16 %v431
      %v464 = vunpack.c.l.bf16 %v432
      %v465 = vunpack.c.l.bf16 %v433
      %v466 = vunpack.c.l.bf16 %v434
      %v467 = vunpack.c.l.bf16 %v435
      %v468 = vunpack.c.l.bf16 %v436
      %v469 = vunpack.c.l.bf16 %v437
      %v470 = vunpack.c.l.bf16 %v438
      %v471 = vunpack.c.l.bf16 %v439
      %v472 = vunpack.c.l.bf16 %v440
      %v473 = vunpack.c.l.bf16 %v441
      %v474 = vunpack.c.l.bf16 %v442
      %v475 = vunpack.c.l.bf16 %v443
      %v476 = vunpack.c.l.bf16 %v444
      %v477 = vunpack.c.l.bf16 %v445
      %v478 = vunpack.c.l.bf16 %v446
      %v479 = vld [vmem:[%s366] sm:$0x1]
      %v481 = vlaneseq
      %v482 = vshrl.u32 %v481, 7
      %v483 = vsub.s32 0, %v482
      %v484 = vrot.slane %v479, %v483
      %v486 = vmul.f32 %v447, %v484
      %v487 = vmul.f32 %v448, %v484
      %v488 = vmul.f32 %v449, %v484
      %v489 = vmul.f32 %v450, %v484
      %v490 = vmul.f32 %v451, %v484
      %v491 = vmul.f32 %v452, %v484
      %v492 = vmul.f32 %v453, %v484
      %v493 = vmul.f32 %v454, %v484
      %v494 = vmul.f32 %v455, %v484
      %v495 = vmul.f32 %v456, %v484
      %v496 = vmul.f32 %v457, %v484
      %v497 = vmul.f32 %v458, %v484
      %v498 = vmul.f32 %v459, %v484
      %v499 = vmul.f32 %v460, %v484
      %v500 = vmul.f32 %v461, %v484
      %v501 = vmul.f32 %v462, %v484
      %v502 = vmul.f32 %v463, %v484
      %v503 = vmul.f32 %v464, %v484
      %v504 = vmul.f32 %v465, %v484
      %v505 = vmul.f32 %v466, %v484
      %v506 = vmul.f32 %v467, %v484
      %v507 = vmul.f32 %v468, %v484
      %v508 = vmul.f32 %v469, %v484
      %v509 = vmul.f32 %v470, %v484
      %v510 = vmul.f32 %v471, %v484
      %v511 = vmul.f32 %v472, %v484
      %v512 = vmul.f32 %v473, %v484
      %v513 = vmul.f32 %v474, %v484
      %v514 = vmul.f32 %v475, %v484
      %v515 = vmul.f32 %v476, %v484
      %v516 = vmul.f32 %v477, %v484
      %v517 = vmul.f32 %v478, %v484
      %v518 = vld [vmem:[%s369] sm:$0x1]
      %v520 = vlaneseq
      %v521 = vshrl.u32 %v520, 7
      %v522 = vsub.s32 0, %v521
      %v523 = vrot.slane %v518, %v522
      %v525 = vadd.f32 %v486, %v523
      %v526 = vadd.f32 %v487, %v523
      %v527 = vadd.f32 %v488, %v523
      %v528 = vadd.f32 %v489, %v523
      %v529 = vadd.f32 %v490, %v523
      %v530 = vadd.f32 %v491, %v523
      %v531 = vadd.f32 %v492, %v523
      %v532 = vadd.f32 %v493, %v523
      %v533 = vadd.f32 %v494, %v523
      %v534 = vadd.f32 %v495, %v523
      %v535 = vadd.f32 %v496, %v523
      %v536 = vadd.f32 %v497, %v523
      %v537 = vadd.f32 %v498, %v523
      %v538 = vadd.f32 %v499, %v523
      %v539 = vadd.f32 %v500, %v523
      %v540 = vadd.f32 %v501, %v523
      %v541 = vadd.f32 %v502, %v523
      %v542 = vadd.f32 %v503, %v523
      %v543 = vadd.f32 %v504, %v523
      %v544 = vadd.f32 %v505, %v523
      %v545 = vadd.f32 %v506, %v523
      %v546 = vadd.f32 %v507, %v523
      %v547 = vadd.f32 %v508, %v523
      %v548 = vadd.f32 %v509, %v523
      %v549 = vadd.f32 %v510, %v523
      %v550 = vadd.f32 %v511, %v523
      %v551 = vadd.f32 %v512, %v523
      %v552 = vadd.f32 %v513, %v523
      %v553 = vadd.f32 %v514, %v523
      %v554 = vadd.f32 %v515, %v523
      %v555 = vadd.f32 %v516, %v523
      %v556 = vadd.f32 %v517, %v523
      %v557 = vmax.f32 %v525, 0.0
      %v558 = vmax.f32 %v526, 0.0
      %v559 = vmax.f32 %v527, 0.0
      %v560 = vmax.f32 %v528, 0.0
      %v561 = vmax.f32 %v529, 0.0
      %v562 = vmax.f32 %v530, 0.0
      %v563 = vmax.f32 %v531, 0.0
      %v564 = vmax.f32 %v532, 0.0
      %v565 = vmax.f32 %v533, 0.0
      %v566 = vmax.f32 %v534, 0.0
      %v567 = vmax.f32 %v535, 0.0
      %v568 = vmax.f32 %v536, 0.0
      %v569 = vmax.f32 %v537, 0.0
      %v570 = vmax.f32 %v538, 0.0
      %v571 = vmax.f32 %v539, 0.0
      %v572 = vmax.f32 %v540, 0.0
      %v573 = vmax.f32 %v541, 0.0
      %v574 = vmax.f32 %v542, 0.0
      %v575 = vmax.f32 %v543, 0.0
      %v576 = vmax.f32 %v544, 0.0
      %v577 = vmax.f32 %v545, 0.0
      %v578 = vmax.f32 %v546, 0.0
      %v579 = vmax.f32 %v547, 0.0
      %v580 = vmax.f32 %v548, 0.0
      %v581 = vmax.f32 %v549, 0.0
      %v582 = vmax.f32 %v550, 0.0
      %v583 = vmax.f32 %v551, 0.0
      %v584 = vmax.f32 %v552, 0.0
      %v585 = vmax.f32 %v553, 0.0
      %v586 = vmax.f32 %v554, 0.0
      %v587 = vmax.f32 %v555, 0.0
      %v588 = vmax.f32 %v556, 0.0
      %v589 = vpack.c.bf16 %v558, %v557
      %v590 = vpack.c.bf16 %v560, %v559
      %v591 = vpack.c.bf16 %v562, %v561
      %v592 = vpack.c.bf16 %v564, %v563
      %v593 = vpack.c.bf16 %v566, %v565
      %v594 = vpack.c.bf16 %v568, %v567
      %v595 = vpack.c.bf16 %v570, %v569
      %v596 = vpack.c.bf16 %v572, %v571
      %v597 = vpack.c.bf16 %v574, %v573
      %v598 = vpack.c.bf16 %v576, %v575
      %v599 = vpack.c.bf16 %v578, %v577
      %v600 = vpack.c.bf16 %v580, %v579
      %v601 = vpack.c.bf16 %v582, %v581
      %v602 = vpack.c.bf16 %v584, %v583
      %v603 = vpack.c.bf16 %v586, %v585
      %v604 = vpack.c.bf16 %v588, %v587
      %v605 = vld [vmem:[%s379] sm:$0xff]
      %v606 = vld [vmem:[%s379 + $0x8] sm:$0xff]
      %v607 = vld [vmem:[%s379 + $0x10] sm:$0xff]
      %v608 = vld [vmem:[%s379 + $0x18] sm:$0xff]
      %v609 = vld [vmem:[%s379 + $0x20] sm:$0xff]
      %v610 = vld [vmem:[%s379 + $0x28] sm:$0xff]
      %v611 = vld [vmem:[%s379 + $0x30] sm:$0xff]
      %v612 = vld [vmem:[%s379 + $0x38] sm:$0xff]
      %v621 = vunpack.c.l.b16 %v605
      %v622 = vunpack.c.h.b16 %v605
      %v623 = vunpack.c.l.b16 %v606
      %v624 = vunpack.c.h.b16 %v606
      %v625 = vunpack.c.l.b16 %v607
      %v626 = vunpack.c.h.b16 %v607
      %v627 = vunpack.c.l.b16 %v608
      %v628 = vunpack.c.h.b16 %v608
      %v629 = vunpack.c.l.b16 %v609
      %v630 = vunpack.c.h.b16 %v609
      %v631 = vunpack.c.l.b16 %v610
      %v632 = vunpack.c.h.b16 %v610
      %v633 = vunpack.c.l.b16 %v611
      %v634 = vunpack.c.h.b16 %v611
      %v635 = vunpack.c.l.b16 %v612
      %v636 = vunpack.c.h.b16 %v612
      %v637 = vpack.c.b16 %v623, %v621
      %v638 = vpack.c.b16 %v624, %v622
      %v639 = vpack.c.b16 %v627, %v625
      %v640 = vpack.c.b16 %v628, %v626
      %v641 = vpack.c.b16 %v631, %v629
      %v642 = vpack.c.b16 %v632, %v630
      %v643 = vpack.c.b16 %v635, %v633
      %v644 = vpack.c.b16 %v636, %v634
      %vm653 = vcmask 523264
      %v655 = vsel %vm653, %v589, 0
      %v658 = vsel %vm653, %v590, 0
      %v661 = vsel %vm653, %v591, 0
      %v664 = vsel %vm653, %v592, 0
      %v667 = vsel %vm653, %v593, 0
      %v670 = vsel %vm653, %v594, 0
      %v673 = vsel %vm653, %v595, 0
      %v676 = vsel %vm653, %v596, 0
      %v679 = vsel %vm653, %v597, 0
      %v682 = vsel %vm653, %v598, 0
      %v685 = vsel %vm653, %v599, 0
      %v688 = vsel %vm653, %v600, 0
      %v691 = vsel %vm653, %v601, 0
      %v694 = vsel %vm653, %v602, 0
      %v697 = vsel %vm653, %v603, 0
      %v700 = vsel %vm653, %v604, 0
      %702 = vmatprep.subr.bf16.mxu0 %v638
      %703 = vmatpush1.bf16.msra.mxu0 %v637
      %704 = vmatprep.subr.bf16.mxu0 %v640
      %705 = vmatpush1.bf16.msra.mxu0 %v639
      %706 = vmatprep.subr.bf16.mxu0 %v642
      %707 = vmatpush1.bf16.msra.mxu0 %v641
      %708 = vmatprep.subr.bf16.mxu0 %v644
      %709 = vmatpush1.bf16.msra.mxu0 %v643
      %710 = vmatprep.subr.bf16.mxu0 0
      %711 = vmatpush1.bf16.msra.mxu0 0
      %712 = vmatprep.subr.bf16.mxu0 0
      %713 = vmatpush1.bf16.msra.mxu0 0
      %714 = vmatprep.subr.bf16.mxu0 0
      %715 = vmatpush1.bf16.msra.mxu0 0
      %716 = vmatprep.subr.bf16.mxu0 0
      %717 = vmatpush1.bf16.msra.mxu0 0
      %718 = vmatprep.subr.bf16.mxu0 0
      %719 = vmatpush1.bf16.msra.mxu0 0
      %720 = vmatprep.subr.bf16.mxu0 0
      %721 = vmatpush1.bf16.msra.mxu0 0
      %722 = vmatprep.subr.bf16.mxu0 0
      %723 = vmatpush1.bf16.msra.mxu0 0
      %724 = vmatprep.subr.bf16.mxu0 0
      %725 = vmatpush1.bf16.msra.mxu0 0
      %726 = vmatprep.subr.bf16.mxu0 0
      %727 = vmatpush1.bf16.msra.mxu0 0
      %728 = vmatprep.subr.bf16.mxu0 0
      %729 = vmatpush1.bf16.msra.mxu0 0
      %730 = vmatprep.subr.bf16.mxu0 0
      %731 = vmatpush1.bf16.msra.mxu0 0
      %732 = vmatprep.subr.bf16.mxu0 0
      %733 = vmatpush1.bf16.msra.mxu0 0
      %734 = vmatprep.mubr.bf16.mxu0 0
      %735 = vmatmul.mubr.bf16.gmra.mrb[0].mxu0 %v655
      %v736 = vpop.f32.mrb[0].mxu0
      %v737 = vadd.f32 0.0, %v736
      %v738 = vpop.f32.mrb[0].mxu0
      %v739 = vadd.f32 0.0, %v738
      %v740 = vpop.f32.mrb[0].mxu0
      %v741 = vadd.f32 0.0, %v740
      %v742 = vpop.f32.mrb[0].mxu0
      %v743 = vadd.f32 0.0, %v742
      %744 = vmatprep.mubr.bf16.mxu0 0
      %745 = vmatmul.mubr.bf16.gmra.mrb[0].mxu0 %v658
      %v746 = vpop.f32.mrb[0].mxu0
      %v747 = vadd.f32 0.0, %v746
      %v748 = vpop.f32.mrb[0].mxu0
      %v749 = vadd.f32 0.0, %v748
      %v750 = vpop.f32.mrb[0].mxu0
      %v751 = vadd.f32 0.0, %v750
      %v752 = vpop.f32.mrb[0].mxu0
      %v753 = vadd.f32 0.0, %v752
      %754 = vmatprep.mubr.bf16.mxu0 0
      %755 = vmatmul.mubr.bf16.gmra.mrb[0].mxu0 %v661
      %v756 = vpop.f32.mrb[0].mxu0
      %v757 = vadd.f32 0.0, %v756
      %v758 = vpop.f32.mrb[0].mxu0
      %v759 = vadd.f32 0.0, %v758
      %v760 = vpop.f32.mrb[0].mxu0
      %v761 = vadd.f32 0.0, %v760
      %v762 = vpop.f32.mrb[0].mxu0
      %v763 = vadd.f32 0.0, %v762
      %764 = vmatprep.mubr.bf16.mxu0 0
      %765 = vmatmul.mubr.bf16.gmra.mrb[0].mxu0 %v664
      %v766 = vpop.f32.mrb[0].mxu0
      %v767 = vadd.f32 0.0, %v766
      %v768 = vpop.f32.mrb[0].mxu0
      %v769 = vadd.f32 0.0, %v768
      %v770 = vpop.f32.mrb[0].mxu0
      %v771 = vadd.f32 0.0, %v770
      %v772 = vpop.f32.mrb[0].mxu0
      %v773 = vadd.f32 0.0, %v772
      %774 = vmatprep.mubr.bf16.mxu0 0
      %775 = vmatmul.mubr.bf16.gmra.mrb[0].mxu0 %v667
      %v776 = vpop.f32.mrb[0].mxu0
      %v777 = vadd.f32 0.0, %v776
      %v778 = vpop.f32.mrb[0].mxu0
      %v779 = vadd.f32 0.0, %v778
      %v780 = vpop.f32.mrb[0].mxu0
      %v781 = vadd.f32 0.0, %v780
      %v782 = vpop.f32.mrb[0].mxu0
      %v783 = vadd.f32 0.0, %v782
      %784 = vmatprep.mubr.bf16.mxu0 0
      %785 = vmatmul.mubr.bf16.gmra.mrb[0].mxu0 %v670
      %v786 = vpop.f32.mrb[0].mxu0
      %v787 = vadd.f32 0.0, %v786
      %v788 = vpop.f32.mrb[0].mxu0
      %v789 = vadd.f32 0.0, %v788
      %v790 = vpop.f32.mrb[0].mxu0
      %v791 = vadd.f32 0.0, %v790
      %v792 = vpop.f32.mrb[0].mxu0
      %v793 = vadd.f32 0.0, %v792
      %794 = vmatprep.mubr.bf16.mxu0 0
      %795 = vmatmul.mubr.bf16.gmra.mrb[0].mxu0 %v673
      %v796 = vpop.f32.mrb[0].mxu0
      %v797 = vadd.f32 0.0, %v796
      %v798 = vpop.f32.mrb[0].mxu0
      %v799 = vadd.f32 0.0, %v798
      %v800 = vpop.f32.mrb[0].mxu0
      %v801 = vadd.f32 0.0, %v800
      %v802 = vpop.f32.mrb[0].mxu0
      %v803 = vadd.f32 0.0, %v802
      %804 = vmatprep.mubr.bf16.mxu0 0
      %805 = vmatmul.mubr.bf16.gmra.mrb[0].mxu0 %v676
      %v806 = vpop.f32.mrb[0].mxu0
      %v807 = vadd.f32 0.0, %v806
      %v808 = vpop.f32.mrb[0].mxu0
      %v809 = vadd.f32 0.0, %v808
      %v810 = vpop.f32.mrb[0].mxu0
      %v811 = vadd.f32 0.0, %v810
      %v812 = vpop.f32.mrb[0].mxu0
      %v813 = vadd.f32 0.0, %v812
      %814 = vmatprep.mubr.bf16.mxu0 0
      %815 = vmatmul.mubr.bf16.gmra.mrb[0].mxu0 %v679
      %v816 = vpop.f32.mrb[0].mxu0
      %v817 = vadd.f32 0.0, %v816
      %v818 = vpop.f32.mrb[0].mxu0
      %v819 = vadd.f32 0.0, %v818
      %v820 = vpop.f32.mrb[0].mxu0
      %v821 = vadd.f32 0.0, %v820
      %v822 = vpop.f32.mrb[0].mxu0
      %v823 = vadd.f32 0.0, %v822
      %824 = vmatprep.mubr.bf16.mxu0 0
      %825 = vmatmul.mubr.bf16.gmra.mrb[0].mxu0 %v682
      %v826 = vpop.f32.mrb[0].mxu0
      %v827 = vadd.f32 0.0, %v826
      %v828 = vpop.f32.mrb[0].mxu0
      %v829 = vadd.f32 0.0, %v828
      %v830 = vpop.f32.mrb[0].mxu0
      %v831 = vadd.f32 0.0, %v830
      %v832 = vpop.f32.mrb[0].mxu0
      %v833 = vadd.f32 0.0, %v832
      %834 = vmatprep.mubr.bf16.mxu0 0
      %835 = vmatmul.mubr.bf16.gmra.mrb[0].mxu0 %v685
      %v836 = vpop.f32.mrb[0].mxu0
      %v837 = vadd.f32 0.0, %v836
      %v838 = vpop.f32.mrb[0].mxu0
      %v839 = vadd.f32 0.0, %v838
      %v840 = vpop.f32.mrb[0].mxu0
      %v841 = vadd.f32 0.0, %v840
      %v842 = vpop.f32.mrb[0].mxu0
      %v843 = vadd.f32 0.0, %v842
      %844 = vmatprep.mubr.bf16.mxu0 0
      %845 = vmatmul.mubr.bf16.gmra.mrb[0].mxu0 %v688
      %v846 = vpop.f32.mrb[0].mxu0
      %v847 = vadd.f32 0.0, %v846
      %v848 = vpop.f32.mrb[0].mxu0
      %v849 = vadd.f32 0.0, %v848
      %v850 = vpop.f32.mrb[0].mxu0
      %v851 = vadd.f32 0.0, %v850
      %v852 = vpop.f32.mrb[0].mxu0
      %v853 = vadd.f32 0.0, %v852
      %854 = vmatprep.mubr.bf16.mxu0 0
      %855 = vmatmul.mubr.bf16.gmra.mrb[0].mxu0 %v691
      %v856 = vpop.f32.mrb[0].mxu0
      %v857 = vadd.f32 0.0, %v856
      %v858 = vpop.f32.mrb[0].mxu0
      %v859 = vadd.f32 0.0, %v858
      %v860 = vpop.f32.mrb[0].mxu0
      %v861 = vadd.f32 0.0, %v860
      %v862 = vpop.f32.mrb[0].mxu0
      %v863 = vadd.f32 0.0, %v862
      %864 = vmatprep.mubr.bf16.mxu0 0
      %865 = vmatmul.mubr.bf16.gmra.mrb[0].mxu0 %v694
      %v866 = vpop.f32.mrb[0].mxu0
      %v867 = vadd.f32 0.0, %v866
      %v868 = vpop.f32.mrb[0].mxu0
      %v869 = vadd.f32 0.0, %v868
      %v870 = vpop.f32.mrb[0].mxu0
      %v871 = vadd.f32 0.0, %v870
      %v872 = vpop.f32.mrb[0].mxu0
      %v873 = vadd.f32 0.0, %v872
      %874 = vmatprep.mubr.bf16.mxu0 0
      %875 = vmatmul.mubr.bf16.gmra.mrb[0].mxu0 %v697
      %v876 = vpop.f32.mrb[0].mxu0
      %v877 = vadd.f32 0.0, %v876
      %v878 = vpop.f32.mrb[0].mxu0
      %v879 = vadd.f32 0.0, %v878
      %v880 = vpop.f32.mrb[0].mxu0
      %v881 = vadd.f32 0.0, %v880
      %v882 = vpop.f32.mrb[0].mxu0
      %v883 = vadd.f32 0.0, %v882
      %884 = vmatprep.mubr.bf16.mxu0 0
      %885 = vmatmul.mubr.bf16.gmra.mrb[0].mxu0 %v700
      %v886 = vpop.f32.mrb[0].mxu0
      %v887 = vadd.f32 0.0, %v886
      %v888 = vpop.f32.mrb[0].mxu0
      %v889 = vadd.f32 0.0, %v888
      %v890 = vpop.f32.mrb[0].mxu0
      %v891 = vadd.f32 0.0, %v890
      %v892 = vpop.f32.mrb[0].mxu0
      %v893 = vadd.f32 0.0, %v892
      %894 = vdwg.mxu0
      %v895 = vpack.c.bf16 %v741, %v737
      %v896 = vpack.c.bf16 %v743, %v739
      %v897 = vpack.c.bf16 %v751, %v747
      %v898 = vpack.c.bf16 %v753, %v749
      %v899 = vpack.c.bf16 %v761, %v757
      %v900 = vpack.c.bf16 %v763, %v759
      %v901 = vpack.c.bf16 %v771, %v767
      %v902 = vpack.c.bf16 %v773, %v769
      %v903 = vpack.c.bf16 %v781, %v777
      %v904 = vpack.c.bf16 %v783, %v779
      %v905 = vpack.c.bf16 %v791, %v787
      %v906 = vpack.c.bf16 %v793, %v789
      %v907 = vpack.c.bf16 %v801, %v797
      %v908 = vpack.c.bf16 %v803, %v799
      %v909 = vpack.c.bf16 %v811, %v807
      %v910 = vpack.c.bf16 %v813, %v809
      %v911 = vpack.c.bf16 %v821, %v817
      %v912 = vpack.c.bf16 %v823, %v819
      %v913 = vpack.c.bf16 %v831, %v827
      %v914 = vpack.c.bf16 %v833, %v829
      %v915 = vpack.c.bf16 %v841, %v837
      %v916 = vpack.c.bf16 %v843, %v839
      %v917 = vpack.c.bf16 %v851, %v847
      %v918 = vpack.c.bf16 %v853, %v849
      %v919 = vpack.c.bf16 %v861, %v857
      %v920 = vpack.c.bf16 %v863, %v859
      %v921 = vpack.c.bf16 %v871, %v867
      %v922 = vpack.c.bf16 %v873, %v869
      %v923 = vpack.c.bf16 %v881, %v877
      %v924 = vpack.c.bf16 %v883, %v879
      %v925 = vpack.c.bf16 %v891, %v887
      %v926 = vpack.c.bf16 %v893, %v889
      %v959 = vunpack.c.l.b16 %v895
      %v960 = vunpack.c.l.b16 %v896
      %v961 = vunpack.c.h.b16 %v895
      %v962 = vunpack.c.h.b16 %v896
      %v963 = vunpack.c.l.b16 %v897
      %v964 = vunpack.c.l.b16 %v898
      %v965 = vunpack.c.h.b16 %v897
      %v966 = vunpack.c.h.b16 %v898
      %v967 = vunpack.c.l.b16 %v899
      %v968 = vunpack.c.l.b16 %v900
      %v969 = vunpack.c.h.b16 %v899
      %v970 = vunpack.c.h.b16 %v900
      %v971 = vunpack.c.l.b16 %v901
      %v972 = vunpack.c.l.b16 %v902
      %v973 = vunpack.c.h.b16 %v901
      %v974 = vunpack.c.h.b16 %v902
      %v975 = vunpack.c.l.b16 %v903
      %v976 = vunpack.c.l.b16 %v904
      %v977 = vunpack.c.h.b16 %v903
      %v978 = vunpack.c.h.b16 %v904
      %v979 = vunpack.c.l.b16 %v905
      %v980 = vunpack.c.l.b16 %v906
      %v981 = vunpack.c.h.b16 %v905
      %v982 = vunpack.c.h.b16 %v906
      %v983 = vunpack.c.l.b16 %v907
      %v984 = vunpack.c.l.b16 %v908
      %v985 = vunpack.c.h.b16 %v907
      %v986 = vunpack.c.h.b16 %v908
      %v987 = vunpack.c.l.b16 %v909
      %v988 = vunpack.c.l.b16 %v910
      %v989 = vunpack.c.h.b16 %v909
      %v990 = vunpack.c.h.b16 %v910
      %v991 = vunpack.c.l.b16 %v911
      %v992 = vunpack.c.l.b16 %v912
      %v993 = vunpack.c.h.b16 %v911
      %v994 = vunpack.c.h.b16 %v912
      %v995 = vunpack.c.l.b16 %v913
      %v996 = vunpack.c.l.b16 %v914
      %v997 = vunpack.c.h.b16 %v913
      %v998 = vunpack.c.h.b16 %v914
      %v999 = vunpack.c.l.b16 %v915
      %v1000 = vunpack.c.l.b16 %v916
      %v1001 = vunpack.c.h.b16 %v915
      %v1002 = vunpack.c.h.b16 %v916
      %v1003 = vunpack.c.l.b16 %v917
      %v1004 = vunpack.c.l.b16 %v918
      %v1005 = vunpack.c.h.b16 %v917
      %v1006 = vunpack.c.h.b16 %v918
      %v1007 = vunpack.c.l.b16 %v919
      %v1008 = vunpack.c.l.b16 %v920
      %v1009 = vunpack.c.h.b16 %v919
      %v1010 = vunpack.c.h.b16 %v920
      %v1011 = vunpack.c.l.b16 %v921
      %v1012 = vunpack.c.l.b16 %v922
      %v1013 = vunpack.c.h.b16 %v921
      %v1014 = vunpack.c.h.b16 %v922
      %v1015 = vunpack.c.l.b16 %v923
      %v1016 = vunpack.c.l.b16 %v924
      %v1017 = vunpack.c.h.b16 %v923
      %v1018 = vunpack.c.h.b16 %v924
      %v1019 = vunpack.c.l.b16 %v925
      %v1020 = vunpack.c.l.b16 %v926
      %v1021 = vunpack.c.h.b16 %v925
      %v1022 = vunpack.c.h.b16 %v926
      %v1023 = vpack.c.b16 %v960, %v959
      %v1024 = vpack.c.b16 %v962, %v961
      %v1025 = vpack.c.b16 %v964, %v963
      %v1026 = vpack.c.b16 %v966, %v965
      %v1027 = vpack.c.b16 %v968, %v967
      %v1028 = vpack.c.b16 %v970, %v969
      %v1029 = vpack.c.b16 %v972, %v971
      %v1030 = vpack.c.b16 %v974, %v973
      %v1031 = vpack.c.b16 %v976, %v975
      %v1032 = vpack.c.b16 %v978, %v977
      %v1033 = vpack.c.b16 %v980, %v979
      %v1034 = vpack.c.b16 %v982, %v981
      %v1035 = vpack.c.b16 %v984, %v983
      %v1036 = vpack.c.b16 %v986, %v985
      %v1037 = vpack.c.b16 %v988, %v987
      %v1038 = vpack.c.b16 %v990, %v989
      %v1039 = vpack.c.b16 %v992, %v991
      %v1040 = vpack.c.b16 %v994, %v993
      %v1041 = vpack.c.b16 %v996, %v995
      %v1042 = vpack.c.b16 %v998, %v997
      %v1043 = vpack.c.b16 %v1000, %v999
      %v1044 = vpack.c.b16 %v1002, %v1001
      %v1045 = vpack.c.b16 %v1004, %v1003
      %v1046 = vpack.c.b16 %v1006, %v1005
      %v1047 = vpack.c.b16 %v1008, %v1007
      %v1048 = vpack.c.b16 %v1010, %v1009
      %v1049 = vpack.c.b16 %v1012, %v1011
      %v1050 = vpack.c.b16 %v1014, %v1013
      %v1051 = vpack.c.b16 %v1016, %v1015
      %v1052 = vpack.c.b16 %v1018, %v1017
      %v1053 = vpack.c.b16 %v1020, %v1019
      %v1054 = vpack.c.b16 %v1022, %v1021
      %1087 = vst [vmem:[%s391] sm:$0xff] %v1023
      %1088 = vst [vmem:[%s391 + $0x8] sm:$0xff] %v1024
      %1089 = vst [vmem:[%s391 + $0x10] sm:$0xff] %v1025
      %1090 = vst [vmem:[%s391 + $0x18] sm:$0xff] %v1026
      %1091 = vst [vmem:[%s391 + $0x20] sm:$0xff] %v1027
      %1092 = vst [vmem:[%s391 + $0x28] sm:$0xff] %v1028
      %1093 = vst [vmem:[%s391 + $0x30] sm:$0xff] %v1029
      %1094 = vst [vmem:[%s391 + $0x38] sm:$0xff] %v1030
      %1095 = vst [vmem:[%s391 + $0x40] sm:$0xff] %v1031
      %1096 = vst [vmem:[%s391 + $0x48] sm:$0xff] %v1032
      %1097 = vst [vmem:[%s391 + $0x50] sm:$0xff] %v1033
      %1098 = vst [vmem:[%s391 + $0x58] sm:$0xff] %v1034
      %1099 = vst [vmem:[%s391 + $0x60] sm:$0xff] %v1035
      %1100 = vst [vmem:[%s391 + $0x68] sm:$0xff] %v1036
      %1101 = vst [vmem:[%s391 + $0x70] sm:$0xff] %v1037
      %1102 = vst [vmem:[%s391 + $0x78] sm:$0xff] %v1038
      %1103 = vst [vmem:[%s391 + $0x80] sm:$0xff] %v1039
      %1104 = vst [vmem:[%s391 + $0x88] sm:$0xff] %v1040
      %1105 = vst [vmem:[%s391 + $0x90] sm:$0xff] %v1041
      %1106 = vst [vmem:[%s391 + $0x98] sm:$0xff] %v1042
      %1107 = vst [vmem:[%s391 + $0xa0] sm:$0xff] %v1043
      %1108 = vst [vmem:[%s391 + $0xa8] sm:$0xff] %v1044
      %1109 = vst [vmem:[%s391 + $0xb0] sm:$0xff] %v1045
      %1110 = vst [vmem:[%s391 + $0xb8] sm:$0xff] %v1046
      %1111 = vst [vmem:[%s391 + $0xc0] sm:$0xff] %v1047
      %1112 = vst [vmem:[%s391 + $0xc8] sm:$0xff] %v1048
      %1113 = vst [vmem:[%s391 + $0xd0] sm:$0xff] %v1049
      %1114 = vst [vmem:[%s391 + $0xd8] sm:$0xff] %v1050
      %1115 = vst [vmem:[%s391 + $0xe0] sm:$0xff] %v1051
      %1116 = vst [vmem:[%s391 + $0xe8] sm:$0xff] %v1052
      %1117 = vst [vmem:[%s391 + $0xf0] sm:$0xff] %v1053
      %1118 = vst [vmem:[%s391 + $0xf8] sm:$0xff] %v1054
      %v1119 = vadd.f32 %v737, %v741
      %v1120 = vadd.f32 %v1119, %v747
      %v1121 = vadd.f32 %v1120, %v751
      %v1122 = vadd.f32 %v1121, %v757
      %v1123 = vadd.f32 %v1122, %v761
      %v1124 = vadd.f32 %v1123, %v767
      %v1125 = vadd.f32 %v1124, %v771
      %v1126 = vadd.f32 %v1125, %v777
      %v1127 = vadd.f32 %v1126, %v781
      %v1128 = vadd.f32 %v1127, %v787
      %v1129 = vadd.f32 %v1128, %v791
      %v1130 = vadd.f32 %v1129, %v797
      %v1131 = vadd.f32 %v1130, %v801
      %v1132 = vadd.f32 %v1131, %v807
      %v1133 = vadd.f32 %v1132, %v811
      %v1134 = vadd.f32 %v1133, %v817
      %v1135 = vadd.f32 %v1134, %v821
      %v1136 = vadd.f32 %v1135, %v827
      %v1137 = vadd.f32 %v1136, %v831
      %v1138 = vadd.f32 %v1137, %v837
      %v1139 = vadd.f32 %v1138, %v841
      %v1140 = vadd.f32 %v1139, %v847
      %v1141 = vadd.f32 %v1140, %v851
      %v1142 = vadd.f32 %v1141, %v857
      %v1143 = vadd.f32 %v1142, %v861
      %v1144 = vadd.f32 %v1143, %v867
      %v1145 = vadd.f32 %v1144, %v871
      %v1146 = vadd.f32 %v1145, %v877
      %v1147 = vadd.f32 %v1146, %v881
      %v1148 = vadd.f32 %v1147, %v887
      %v1149 = vadd.f32 %v1148, %v891
      %v1150 = vrot.slane %v1149, 4
      %v1151 = vadd.f32 %v1149, %v1150
      %v1152 = vrot.slane %v1151, 2
      %v1153 = vadd.f32 %v1151, %v1152
      %v1154 = vrot.slane %v1153, 1
      %v1155 = vadd.f32 %v1153, %v1154
      %v1156 = vadd.f32 %v739, %v743
      %v1157 = vadd.f32 %v1156, %v749
      %v1158 = vadd.f32 %v1157, %v753
      %v1159 = vadd.f32 %v1158, %v759
      %v1160 = vadd.f32 %v1159, %v763
      %v1161 = vadd.f32 %v1160, %v769
      %v1162 = vadd.f32 %v1161, %v773
      %v1163 = vadd.f32 %v1162, %v779
      %v1164 = vadd.f32 %v1163, %v783
      %v1165 = vadd.f32 %v1164, %v789
      %v1166 = vadd.f32 %v1165, %v793
      %v1167 = vadd.f32 %v1166, %v799
      %v1168 = vadd.f32 %v1167, %v803
      %v1169 = vadd.f32 %v1168, %v809
      %v1170 = vadd.f32 %v1169, %v813
      %v1171 = vadd.f32 %v1170, %v819
      %v1172 = vadd.f32 %v1171, %v823
      %v1173 = vadd.f32 %v1172, %v829
      %v1174 = vadd.f32 %v1173, %v833
      %v1175 = vadd.f32 %v1174, %v839
      %v1176 = vadd.f32 %v1175, %v843
      %v1177 = vadd.f32 %v1176, %v849
      %v1178 = vadd.f32 %v1177, %v853
      %v1179 = vadd.f32 %v1178, %v859
      %v1180 = vadd.f32 %v1179, %v863
      %v1181 = vadd.f32 %v1180, %v869
      %v1182 = vadd.f32 %v1181, %v873
      %v1183 = vadd.f32 %v1182, %v879
      %v1184 = vadd.f32 %v1183, %v883
      %v1185 = vadd.f32 %v1184, %v889
      %v1186 = vadd.f32 %v1185, %v893
      %v1187 = vrot.slane %v1186, 4
      %v1188 = vadd.f32 %v1186, %v1187
      %v1189 = vrot.slane %v1188, 2
      %v1190 = vadd.f32 %v1188, %v1189
      %v1191 = vrot.slane %v1190, 1
      %v1192 = vadd.f32 %v1190, %v1191
      %v1193 = vmul.f32 %v737, %v737
      %v1194 = vmul.f32 %v739, %v739
      %v1195 = vmul.f32 %v741, %v741
      %v1196 = vmul.f32 %v743, %v743
      %v1197 = vmul.f32 %v747, %v747
      %v1198 = vmul.f32 %v749, %v749
      %v1199 = vmul.f32 %v751, %v751
      %v1200 = vmul.f32 %v753, %v753
      %v1201 = vmul.f32 %v757, %v757
      %v1202 = vmul.f32 %v759, %v759
      %v1203 = vmul.f32 %v761, %v761
      %v1204 = vmul.f32 %v763, %v763
      %v1205 = vmul.f32 %v767, %v767
      %v1206 = vmul.f32 %v769, %v769
      %v1207 = vmul.f32 %v771, %v771
      %v1208 = vmul.f32 %v773, %v773
      %v1209 = vmul.f32 %v777, %v777
      %v1210 = vmul.f32 %v779, %v779
      %v1211 = vmul.f32 %v781, %v781
      %v1212 = vmul.f32 %v783, %v783
      %v1213 = vmul.f32 %v787, %v787
      %v1214 = vmul.f32 %v789, %v789
      %v1215 = vmul.f32 %v791, %v791
      %v1216 = vmul.f32 %v793, %v793
      %v1217 = vmul.f32 %v797, %v797
      %v1218 = vmul.f32 %v799, %v799
      %v1219 = vmul.f32 %v801, %v801
      %v1220 = vmul.f32 %v803, %v803
      %v1221 = vmul.f32 %v807, %v807
      %v1222 = vmul.f32 %v809, %v809
      %v1223 = vmul.f32 %v811, %v811
      %v1224 = vmul.f32 %v813, %v813
      %v1225 = vmul.f32 %v817, %v817
      %v1226 = vmul.f32 %v819, %v819
      %v1227 = vmul.f32 %v821, %v821
      %v1228 = vmul.f32 %v823, %v823
      %v1229 = vmul.f32 %v827, %v827
      %v1230 = vmul.f32 %v829, %v829
      %v1231 = vmul.f32 %v831, %v831
      %v1232 = vmul.f32 %v833, %v833
      %v1233 = vmul.f32 %v837, %v837
      %v1234 = vmul.f32 %v839, %v839
      %v1235 = vmul.f32 %v841, %v841
      %v1236 = vmul.f32 %v843, %v843
      %v1237 = vmul.f32 %v847, %v847
      %v1238 = vmul.f32 %v849, %v849
      %v1239 = vmul.f32 %v851, %v851
      %v1240 = vmul.f32 %v853, %v853
      %v1241 = vmul.f32 %v857, %v857
      %v1242 = vmul.f32 %v859, %v859
      %v1243 = vmul.f32 %v861, %v861
      %v1244 = vmul.f32 %v863, %v863
      %v1245 = vmul.f32 %v867, %v867
      %v1246 = vmul.f32 %v869, %v869
      %v1247 = vmul.f32 %v871, %v871
      %v1248 = vmul.f32 %v873, %v873
      %v1249 = vmul.f32 %v877, %v877
      %v1250 = vmul.f32 %v879, %v879
      %v1251 = vmul.f32 %v881, %v881
      %v1252 = vmul.f32 %v883, %v883
      %v1253 = vmul.f32 %v887, %v887
      %v1254 = vmul.f32 %v889, %v889
      %v1255 = vmul.f32 %v891, %v891
      %v1256 = vmul.f32 %v893, %v893
      %v1257 = vadd.f32 %v1193, %v1195
      %v1258 = vadd.f32 %v1257, %v1197
      %v1259 = vadd.f32 %v1258, %v1199
      %v1260 = vadd.f32 %v1259, %v1201
      %v1261 = vadd.f32 %v1260, %v1203
      %v1262 = vadd.f32 %v1261, %v1205
      %v1263 = vadd.f32 %v1262, %v1207
      %v1264 = vadd.f32 %v1263, %v1209
      %v1265 = vadd.f32 %v1264, %v1211
      %v1266 = vadd.f32 %v1265, %v1213
      %v1267 = vadd.f32 %v1266, %v1215
      %v1268 = vadd.f32 %v1267, %v1217
      %v1269 = vadd.f32 %v1268, %v1219
      %v1270 = vadd.f32 %v1269, %v1221
      %v1271 = vadd.f32 %v1270, %v1223
      %v1272 = vadd.f32 %v1271, %v1225
      %v1273 = vadd.f32 %v1272, %v1227
      %v1274 = vadd.f32 %v1273, %v1229
      %v1275 = vadd.f32 %v1274, %v1231
      %v1276 = vadd.f32 %v1275, %v1233
      %v1277 = vadd.f32 %v1276, %v1235
      %v1278 = vadd.f32 %v1277, %v1237
      %v1279 = vadd.f32 %v1278, %v1239
      %v1280 = vadd.f32 %v1279, %v1241
      %v1281 = vadd.f32 %v1280, %v1243
      %v1282 = vadd.f32 %v1281, %v1245
      %v1283 = vadd.f32 %v1282, %v1247
      %v1284 = vadd.f32 %v1283, %v1249
      %v1285 = vadd.f32 %v1284, %v1251
      %v1286 = vadd.f32 %v1285, %v1253
      %v1287 = vadd.f32 %v1286, %v1255
      %v1288 = vrot.slane %v1287, 4
      %v1289 = vadd.f32 %v1287, %v1288
      %v1290 = vrot.slane %v1289, 2
      %v1291 = vadd.f32 %v1289, %v1290
      %v1292 = vrot.slane %v1291, 1
      %v1293 = vadd.f32 %v1291, %v1292
      %v1294 = vadd.f32 %v1194, %v1196
      %v1295 = vadd.f32 %v1294, %v1198
      %v1296 = vadd.f32 %v1295, %v1200
      %v1297 = vadd.f32 %v1296, %v1202
      %v1298 = vadd.f32 %v1297, %v1204
      %v1299 = vadd.f32 %v1298, %v1206
      %v1300 = vadd.f32 %v1299, %v1208
      %v1301 = vadd.f32 %v1300, %v1210
      %v1302 = vadd.f32 %v1301, %v1212
      %v1303 = vadd.f32 %v1302, %v1214
      %v1304 = vadd.f32 %v1303, %v1216
      %v1305 = vadd.f32 %v1304, %v1218
      %v1306 = vadd.f32 %v1305, %v1220
      %v1307 = vadd.f32 %v1306, %v1222
      %v1308 = vadd.f32 %v1307, %v1224
      %v1309 = vadd.f32 %v1308, %v1226
      %v1310 = vadd.f32 %v1309, %v1228
      %v1311 = vadd.f32 %v1310, %v1230
      %v1312 = vadd.f32 %v1311, %v1232
      %v1313 = vadd.f32 %v1312, %v1234
      %v1314 = vadd.f32 %v1313, %v1236
      %v1315 = vadd.f32 %v1314, %v1238
      %v1316 = vadd.f32 %v1315, %v1240
      %v1317 = vadd.f32 %v1316, %v1242
      %v1318 = vadd.f32 %v1317, %v1244
      %v1319 = vadd.f32 %v1318, %v1246
      %v1320 = vadd.f32 %v1319, %v1248
      %v1321 = vadd.f32 %v1320, %v1250
      %v1322 = vadd.f32 %v1321, %v1252
      %v1323 = vadd.f32 %v1322, %v1254
      %v1324 = vadd.f32 %v1323, %v1256
      %v1325 = vrot.slane %v1324, 4
      %v1326 = vadd.f32 %v1324, %v1325
      %v1327 = vrot.slane %v1326, 2
      %v1328 = vadd.f32 %v1326, %v1327
      %v1329 = vrot.slane %v1328, 1
      %v1330 = vadd.f32 %v1328, %v1329
      %v1331 = vlaneseq
      %v1332 = vshrl.u32 %v1331, 7
      %vm1333 = vcmp.eq.s32.totalorder %v1332, 0
      %v1334 = vsel %vm1333, %v1155, 0.0
      %v1335 = vsel %vm1333, %v1192, 0.0
      %1336 = vst [vmem:[%s402] sm:$0xff] %v1334
      %1337 = vst [vmem:[%s402 + $0x8] sm:$0xff] %v1335
      %v1338 = vsel %vm1333, %v1293, 0.0
      %v1339 = vsel %vm1333, %v1330, 0.0
      %1340 = vst [vmem:[%s412] sm:$0xff] %v1338
      %1341 = vst [vmem:[%s412 + $0x8] sm:$0xff] %v1339
      %s1342 = smul.u32 32, %s23
      %s1343 = smul.u32 2, %s24
      %p1344 = scmp.lt.s32.totalorder %s1342, 63
      %s1345 = scalar_select %p1344, %s1342, 63
      %p1346 = scmp.lt.s32.totalorder %s1343, 1
      %s1347 = scalar_select %p1346, %s1343, 1
      %s1348 = smul.addr %s1345, 2
      %s1349 = sadd.s32 %s1347, %s1348
      %s1350 = smul.addr %s1349, 4
      %s1351 = scalar_lea.vmem %s4, %s1350
      %s1352 = smul.u32 2, %s24
      %p1353 = scmp.lt.s32.totalorder %s23, 1
      %s1354 = scalar_select %p1353, %s23, 1
      %p1355 = scmp.lt.s32.totalorder %s1352, 1
      %s1356 = scalar_select %p1355, %s1352, 1
      %s1357 = smul.addr %s1354, 2
      %s1358 = sadd.s32 %s1356, %s1357
      %s1359 = smul.addr %s1358, 8
      %s1360 = scalar_lea.vmem %s5, %s1359
      %s1361 = smul.u32 2, %s24
      %p1362 = scmp.lt.s32.totalorder %s23, 1
      %s1363 = scalar_select %p1362, %s23, 1
      %p1364 = scmp.lt.s32.totalorder %s1361, 1
      %s1365 = scalar_select %p1364, %s1361, 1
      %s1366 = smul.addr %s1363, 2
      %s1367 = sadd.s32 %s1365, %s1366
      %s1368 = smul.addr %s1367, 8
      %s1369 = scalar_lea.vmem %s6, %s1368
      // Predicated region
      $region37: #{resnetblock4_forward.8} parent=35 // pred_check
        %p1370 = pneg %p165
      $region38: #{resnetblock4_forward.8} parent=35 // pred_check_branch
        %1372 = sbr.rel (%p1370) target = $region40
      $region39: #{resnetblock4_forward.8} parent=35 // pred_region
        %s1373 = smul.u32 32, %s23
        %s1374 = smul.u32 2, %s24
      $region40: #{resnetblock4_forward.8} parent=35 // pred_fallthru
        _
      // Predicated region
      $region41: #{resnetblock4_forward.8} parent=35 // pred_check
        %p1375 = pneg %p193
      $region42: #{resnetblock4_forward.8} parent=35 // pred_check_branch
        %1377 = sbr.rel (%p1375) target = $region44
      $region43: #{resnetblock4_forward.8} parent=35 // pred_region
        %s1378 = smul.u32 2, %s24
      $region44: #{resnetblock4_forward.8} parent=35 // pred_fallthru
        _
      // Predicated region
      $region45: #{resnetblock4_forward.8} parent=35 // pred_check
        %p1379 = pneg %p221
      $region46: #{resnetblock4_forward.8} parent=35 // pred_check_branch
        %1381 = sbr.rel (%p1379) target = $region48
      $region47: #{resnetblock4_forward.8} parent=35 // pred_region
        %s1382 = smul.u32 2, %s24
      $region48: #{resnetblock4_forward.8} parent=35 // pred_fallthru
        _
    $region36: #{resnetblock4_forward.8} parent=5 // pred_fallthru
      _
    %p1383 = scmp.le.s32.totalorder 2, %s13
    // Predicated region
    $region49: #{resnetblock4_forward.8} parent=5 // pred_check
      %p1384 = pneg %p1383
    $region50: #{resnetblock4_forward.8} parent=5 // pred_check_branch
      %1386 = sbr.rel (%p1384) target = $region52
    $region51: #{resnetblock4_forward.8} parent=5 // pred_region
      %s1387 = ssub.s32 %s13, 2
      // Predicated region
      $region53: #{resnetblock4_forward.8} parent=51 // pred_check
        %p1388 = pneg %p171
      $region54: #{resnetblock4_forward.8} parent=51 // pred_check_branch
        %1390 = sbr.rel (%p1388) target = $region56
      $region55: #{resnetblock4_forward.8} parent=51 // pred_region
        %s1391 = smul.u32 32, %s26
        %s1392 = smul.u32 2, %s27
        %p1393 = scmp.lt.s32.totalorder %s1391, 63
        %s1394 = scalar_select %p1393, %s1391, 63
        %p1395 = scmp.lt.s32.totalorder %s1392, 1
        %s1396 = scalar_select %p1395, %s1392, 1
        %s1397 = smul.addr %s1394, 2
        %s1398 = sadd.s32 %s1396, %s1397
        %s1399 = smul.addr %s1398, 4
        %s1400 = scalar_lea.vmem %s4, %s1399
      $region56: #{resnetblock4_forward.8} parent=51 // pred_fallthru
        _
      // Predicated region
      $region57: #{resnetblock4_forward.8} parent=51 // pred_check
        %p1401 = pneg %p199
      $region58: #{resnetblock4_forward.8} parent=51 // pred_check_branch
        %1403 = sbr.rel (%p1401) target = $region60
      $region59: #{resnetblock4_forward.8} parent=51 // pred_region
        %s1404 = smul.u32 2, %s27
        %p1405 = scmp.lt.s32.totalorder %s26, 1
        %s1406 = scalar_select %p1405, %s26, 1
        %p1407 = scmp.lt.s32.totalorder %s1404, 1
        %s1408 = scalar_select %p1407, %s1404, 1
        %s1409 = smul.addr %s1406, 2
        %s1410 = sadd.s32 %s1408, %s1409
        %s1411 = smul.addr %s1410, 8
        %s1412 = scalar_lea.vmem %s5, %s1411
      $region60: #{resnetblock4_forward.8} parent=51 // pred_fallthru
        _
      // Predicated region
      $region61: #{resnetblock4_forward.8} parent=51 // pred_check
        %p1413 = pneg %p227
      $region62: #{resnetblock4_forward.8} parent=51 // pred_check_branch
        %1415 = sbr.rel (%p1413) target = $region64
      $region63: #{resnetblock4_forward.8} parent=51 // pred_region
        %s1416 = smul.u32 2, %s27
        %p1417 = scmp.lt.s32.totalorder %s26, 1
        %s1418 = scalar_select %p1417, %s26, 1
        %p1419 = scmp.lt.s32.totalorder %s1416, 1
        %s1420 = scalar_select %p1419, %s1416, 1
        %s1421 = smul.addr %s1418, 2
        %s1422 = sadd.s32 %s1420, %s1421
        %s1423 = smul.addr %s1422, 8
        %s1424 = scalar_lea.vmem %s6, %s1423
      $region64: #{resnetblock4_forward.8} parent=51 // pred_fallthru
        _
    $region52: #{resnetblock4_forward.8} parent=5 // pred_fallthru
      _
  $region6: #{resnetblock4_forward.8} parent=0 // loop_footer
    %s17 = sadd.s32 1, %s13
  $region7: #{resnetblock4_forward.8} parent=0 // loop_footer_branch
    %12 = sbr.rel target = $region3
  $region8: #{resnetblock4_forward.8} parent=0 // loop_exit
    _

// kernel: resnetblock4_forward.7
$region0: #{resnetblock4_forward.7}
  #allocation0 [shape = 'u32[]', space=smem, size = 0x4, offset = 0x4, fixed_abs, tag = 'smem constant byte address 0x4 - core index']
  #allocation1 [shape = 'u32[144,128]{1,0:T(1,128)}', space=vmem, size = 0x12000, scoped, tag = 'internal scratch']
  %s0 = inlined_call_operand.vmem [shape: bf16[2,18,18,64], index: 0, kind: input, shape index: {}]
  %s1 = inlined_call_operand.vmem [shape: bf16[3,3,64,64], index: 1, kind: input, shape index: {}]
  %s2 = inlined_call_operand.vmem [shape: bf16[2,256,64], index: 2, kind: output, shape index: {0}]
  %s3 = inlined_call_operand.vmem [shape: f32[16,64], index: 3, kind: output, shape index: {1}]
  %s4 = inlined_call_operand.vmem [shape: f32[16,64], index: 4, kind: output, shape index: {2}]
  %5 = xla_tuple %s2, %s3, %s4
  %s6 = sld [smem:[#allocation0]]
  $region57: #{resnetblock4_forward.7} parent=0
    _
  %s8 = ssub.s32 1, %s6
  %s9 = scalar_select 0, %s8, %s6
  loop: start=0, step=1, limit=4
  $region2: #{resnetblock4_forward.7} parent=0 // loop_pre_header
    _
  $region3: #{resnetblock4_forward.7} parent=0 // loop_header
    %s11 = sphi 0, %s15
    %p12 = scmp.ge.s32.totalorder %s11, 4
    %s21 = sphi 0, %s23
    %s24 = sphi 0, %s21
    %s25 = sphi 0, %s24
    %s41 = sphi 0, %s25
    %s45 = sphi 0, %s45
    %s47 = sphi 0, %s45
    %s48 = sphi 0, %s47
    %s62 = sphi 0, %s48
    %s68 = sphi 0, %s70
    %s71 = sphi 0, %s68
    %s72 = sphi 0, %s71
    %s88 = sphi 0, %s72
    %s94 = sphi 0, %s96
    %s97 = sphi 0, %s94
    %s98 = sphi 0, %s97
    %s114 = sphi 0, %s98
    %s120 = sphi 0, %s122
    %s123 = sphi 0, %s120
    %s124 = sphi 0, %s123
    %s140 = sphi 0, %s124
  $region4: #{resnetblock4_forward.7} parent=0 // loop_header_branch
    %14 = sbr.rel (%p12) target = $region8
  $region5: #{resnetblock4_forward.7} parent=0 // loop_body
    %s16 = ssub.s32 %s11, 1
    %s17 = ssub.s32 %s11, 2
    %s18 = sadd.s32 %s11, 1
    %s19 = ssub.s32 %s11, %s18
    %p20 = scmp.eq.s32.totalorder %s19, 0
    %s22 = sadd.s32 %s21, 1
    %s23 = scalar_select %p20, %s21, %s22
    %p26 = pneg %p20
    %p27 = scmp.eq.s32.totalorder %s11, 1
    %p28 = por %p26, %p27
    %p29 = scmp.ne.s32.totalorder %s21, %s24
    %p30 = scmp.eq.s32.totalorder %s11, 0
    %p31 = por %p29, %p30
    %p32 = scmp.ne.s32.totalorder %s21, %s24
    %p33 = scmp.eq.s32.totalorder %s16, 1
    %p34 = por %p32, %p33
    %p35 = scmp.ne.s32.totalorder %s24, %s25
    %p36 = scmp.eq.s32.totalorder %s16, 0
    %p37 = por %p35, %p36
    %p38 = scmp.ne.s32.totalorder %s24, %s25
    %p39 = scmp.eq.s32.totalorder %s17, 1
    %p40 = por %p38, %p39
    %p42 = scmp.ne.s32.totalorder %s25, %s41
    %p43 = scmp.eq.s32.totalorder %s17, 0
    %p44 = por %p42, %p43
    %s46 = sadd.s32 %s45, 1
    %p49 = scmp.eq.s32.totalorder %s11, 1
    %p50 = scmp.ne.s32.totalorder %s45, %s47
    %p51 = scmp.eq.s32.totalorder %s11, 0
    %p52 = por %p50, %p51
    %p53 = scmp.ne.s32.totalorder %s45, %s47
    %p54 = scmp.eq.s32.totalorder %s16, 1
    %p55 = por %p53, %p54
    %p56 = scmp.ne.s32.totalorder %s47, %s48
    %p57 = scmp.eq.s32.totalorder %s16, 0
    %p58 = por %p56, %p57
    %p59 = scmp.ne.s32.totalorder %s47, %s48
    %p60 = scmp.eq.s32.totalorder %s17, 1
    %p61 = por %p59, %p60
    %p63 = scmp.ne.s32.totalorder %s48, %s62
    %p64 = scmp.eq.s32.totalorder %s17, 0
    %p65 = por %p63, %p64
    %s66 = ssub.s32 %s11, %s18
    %p67 = scmp.eq.s32.totalorder %s66, 0
    %s69 = sadd.s32 %s68, 1
    %s70 = scalar_select %p67, %s68, %s69
    %p73 = pneg %p67
    %p74 = scmp.eq.s32.totalorder %s11, 1
    %p75 = por %p73, %p74
    %p76 = scmp.ne.s32.totalorder %s68, %s71
    %p77 = scmp.eq.s32.totalorder %s11, 0
    %p78 = por %p76, %p77
    %p79 = scmp.ne.s32.totalorder %s68, %s71
    %p80 = scmp.eq.s32.totalorder %s16, 1
    %p81 = por %p79, %p80
    %p82 = scmp.ne.s32.totalorder %s71, %s72
    %p83 = scmp.eq.s32.totalorder %s16, 0
    %p84 = por %p82, %p83
    %p85 = scmp.ne.s32.totalorder %s71, %s72
    %p86 = scmp.eq.s32.totalorder %s17, 1
    %p87 = por %p85, %p86
    %p89 = scmp.ne.s32.totalorder %s72, %s88
    %p90 = scmp.eq.s32.totalorder %s17, 0
    %p91 = por %p89, %p90
    %s92 = ssub.s32 %s11, %s18
    %p93 = scmp.eq.s32.totalorder %s92, 0
    %s95 = sadd.s32 %s94, 1
    %s96 = scalar_select %p93, %s94, %s95
    %p99 = pneg %p93
    %p100 = scmp.eq.s32.totalorder %s11, 1
    %p101 = por %p99, %p100
    %p102 = scmp.ne.s32.totalorder %s94, %s97
    %p103 = scmp.eq.s32.totalorder %s11, 0
    %p104 = por %p102, %p103
    %p105 = scmp.ne.s32.totalorder %s94, %s97
    %p106 = scmp.eq.s32.totalorder %s16, 1
    %p107 = por %p105, %p106
    %p108 = scmp.ne.s32.totalorder %s97, %s98
    %p109 = scmp.eq.s32.totalorder %s16, 0
    %p110 = por %p108, %p109
    %p111 = scmp.ne.s32.totalorder %s97, %s98
    %p112 = scmp.eq.s32.totalorder %s17, 1
    %p113 = por %p111, %p112
    %p115 = scmp.ne.s32.totalorder %s98, %s114
    %p116 = scmp.eq.s32.totalorder %s17, 0
    %p117 = por %p115, %p116
    %s118 = ssub.s32 %s11, %s18
    %p119 = scmp.eq.s32.totalorder %s118, 0
    %s121 = sadd.s32 %s120, 1
    %s122 = scalar_select %p119, %s120, %s121
    %p125 = pneg %p119
    %p126 = scmp.eq.s32.totalorder %s11, 1
    %p127 = por %p125, %p126
    %p128 = scmp.ne.s32.totalorder %s120, %s123
    %p129 = scmp.eq.s32.totalorder %s11, 0
    %p130 = por %p128, %p129
    %p131 = scmp.ne.s32.totalorder %s120, %s123
    %p132 = scmp.eq.s32.totalorder %s16, 1
    %p133 = por %p131, %p132
    %p134 = scmp.ne.s32.totalorder %s123, %s124
    %p135 = scmp.eq.s32.totalorder %s16, 0
    %p136 = por %p134, %p135
    %p137 = scmp.ne.s32.totalorder %s123, %s124
    %p138 = scmp.eq.s32.totalorder %s17, 1
    %p139 = por %p137, %p138
    %p141 = scmp.ne.s32.totalorder %s124, %s140
    %p142 = scmp.eq.s32.totalorder %s17, 0
    %p143 = por %p141, %p142
    %p144 = scmp.le.s32.totalorder 1, %s11
    %p145 = scmp.lt.s32.totalorder %s11, 3
    %p146 = pnand %p144, %p145
    %p147 = pneg %p146
    // Predicated region
    $region9: #{resnetblock4_forward.7} parent=5 // pred_check
      _
    $region10: #{resnetblock4_forward.7} parent=5 // pred_check_branch
      %149 = sbr.rel (%p146) target = $region12
    $region11: #{resnetblock4_forward.7} parent=5 // pred_region
      %s150 = ssub.s32 %s11, 1
      // Predicated region
      $region13: #{resnetblock4_forward.7} parent=11 // pred_check
        %p151 = pneg %p58
      $region14: #{resnetblock4_forward.7} parent=11 // pred_check_branch
        %153 = sbr.rel (%p151) target = $region16
      $region15: #{resnetblock4_forward.7} parent=11 // pred_region
        _
      $region16: #{resnetblock4_forward.7} parent=11 // pred_fallthru
        _
    $region12: #{resnetblock4_forward.7} parent=5 // pred_fallthru
      _
    %p154 = scmp.lt.s32.totalorder %s11, 2
    // Predicated region
    $region17: #{resnetblock4_forward.7} parent=5 // pred_check
      %p155 = pneg %p154
    $region18: #{resnetblock4_forward.7} parent=5 // pred_check_branch
      %157 = sbr.rel (%p155) target = $region20
    $region19: #{resnetblock4_forward.7} parent=5 // pred_region
      // Predicated region
      $region21: #{resnetblock4_forward.7} parent=19 // pred_check
        %p158 = pneg %p31
      $region22: #{resnetblock4_forward.7} parent=19 // pred_check_branch
        %160 = sbr.rel (%p158) target = $region24
      $region23: #{resnetblock4_forward.7} parent=19 // pred_region
        %p161 = scmp.lt.s32.totalorder %s11, 1
        %s162 = scalar_select %p161, %s11, 1
        %s163 = smul.addr %s162, 54
        %s164 = smul.addr %s163, 4
        %s165 = scalar_lea.vmem %s0, %s164
      $region24: #{resnetblock4_forward.7} parent=19 // pred_fallthru
        _
    $region20: #{resnetblock4_forward.7} parent=5 // pred_fallthru
      _
    %p166 = scmp.le.s32.totalorder 1, %s11
    %p167 = scmp.lt.s32.totalorder %s11, 3
    %p168 = pnand %p166, %p167
    %p169 = pneg %p168
    // Predicated region
    $region25: #{resnetblock4_forward.7} parent=5 // pred_check
      _
    $region26: #{resnetblock4_forward.7} parent=5 // pred_check_branch
      %171 = sbr.rel (%p168) target = $region28
    $region27: #{resnetblock4_forward.7} parent=5 // pred_region
      %s172 = ssub.s32 %s11, 1
      %p173 = scmp.lt.s32.totalorder %s16, 1
      %s174 = scalar_select %p173, %s16, 1
      %s175 = smul.addr %s174, 54
      %s176 = smul.addr %s175, 4
      %s177 = scalar_lea.vmem %s0, %s176
      %p178 = pneg %p37
      %p179 = pneg %p34
      %p180 = pneg %p58
      %p181 = pneg %p55
      %p182 = pneg %p84
      %p183 = pneg %p81
      %p184 = scmp.lt.s32.totalorder %s16, 1
      %s185 = scalar_select %p184, %s16, 1
      %s186 = smul.addr %s185, 32
      %s187 = smul.addr %s186, 4
      %s188 = scalar_lea.vmem %s2, %s187
      %p189 = pneg %p110
      %p190 = pneg %p107
      %p191 = scmp.lt.s32.totalorder %s16, 1
      %s192 = scalar_select %p191, %s16, 1
      %s193 = smul.addr %s192, 8
      %s194 = scalar_lea.vmem %s3, %s193
      %p195 = pneg %p136
      %p196 = pneg %p133
      %p197 = scmp.lt.s32.totalorder %s16, 1
      %s198 = scalar_select %p197, %s16, 1
      %s199 = smul.addr %s198, 8
      %s200 = scalar_lea.vmem %s4, %s199
      %p201 = scmp.lt.s32.totalorder %s16, 1
      %s202 = scalar_select %p201, %s16, 1
      %s203 = smul.addr %s202, 54
      %s204 = smul.addr %s203, 4
      %s205 = scalar_lea.vmem %s0, %s204
      %p206 = scmp.lt.s32.totalorder %s16, 1
      %s207 = scalar_select %p206, %s16, 1
      %s208 = smul.addr %s207, 32
      %s209 = smul.addr %s208, 4
      %s210 = scalar_lea.vmem %s2, %s209
      %p211 = scmp.lt.s32.totalorder %s16, 1
      %s212 = scalar_select %p211, %s16, 1
      %s213 = smul.addr %s212, 8
      %s214 = scalar_lea.vmem %s3, %s213
      %p215 = scmp.lt.s32.totalorder %s16, 1
      %s216 = scalar_select %p215, %s16, 1
      %s217 = smul.addr %s216, 8
      %s218 = scalar_lea.vmem %s4, %s217
      %v220 = vld [vmem:[%s205] sm:$0xf]
      %v221 = vld [vmem:[%s205 + $0x4] sm:$0xf]
      %v222 = vld [vmem:[%s205 + $0xc] sm:$0xf]
      %v223 = vld [vmem:[%s205 + $0x10] sm:$0xf]
      %v224 = vld [vmem:[%s205 + $0x18] sm:$0xf]
      %v225 = vld [vmem:[%s205 + $0x1c] sm:$0xf]
      %v226 = vld [vmem:[%s205 + $0x24] sm:$0xf]
      %v227 = vld [vmem:[%s205 + $0x28] sm:$0xf]
      %v228 = vld [vmem:[%s205 + $0x30] sm:$0xf]
      %v229 = vld [vmem:[%s205 + $0x34] sm:$0xf]
      %v230 = vld [vmem:[%s205 + $0x3c] sm:$0xf]
      %v231 = vld [vmem:[%s205 + $0x40] sm:$0xf]
      %v232 = vld [vmem:[%s205 + $0x48] sm:$0xf]
      %v233 = vld [vmem:[%s205 + $0x4c] sm:$0xf]
      %v234 = vld [vmem:[%s205 + $0x54] sm:$0xf]
      %v235 = vld [vmem:[%s205 + $0x58] sm:$0xf]
      %v236 = vld [vmem:[%s205 + $0x60] sm:$0xf]
      %v237 = vld [vmem:[%s205 + $0x64] sm:$0xf]
      %v238 = vld [vmem:[%s205 + $0x6c] sm:$0xf]
      %v239 = vld [vmem:[%s205 + $0x70] sm:$0xf]
      %v240 = vld [vmem:[%s205 + $0x78] sm:$0xf]
      %v241 = vld [vmem:[%s205 + $0x7c] sm:$0xf]
      %v242 = vld [vmem:[%s205 + $0x84] sm:$0xf]
      %v243 = vld [vmem:[%s205 + $0x88] sm:$0xf]
      %v244 = vld [vmem:[%s205 + $0x90] sm:$0xf]
      %v245 = vld [vmem:[%s205 + $0x94] sm:$0xf]
      %v246 = vld [vmem:[%s205 + $0x9c] sm:$0xf]
      %v247 = vld [vmem:[%s205 + $0xa0] sm:$0xf]
      %v248 = vld [vmem:[%s205 + $0xa8] sm:$0xf]
      %v249 = vld [vmem:[%s205 + $0xac] sm:$0xf]
      %v250 = vld [vmem:[%s205 + $0xb4] sm:$0xf]
      %v251 = vld [vmem:[%s205 + $0xb8] sm:$0xf]
      %v252 = vld [vmem:[%s1] sm:$0xf]
      %v253 = vld [vmem:[%s1 + $0x4] sm:$0xf]
      %v254 = vld [vmem:[%s1 + $0x8] sm:$0xf]
      %v255 = vld [vmem:[%s1 + $0xc] sm:$0xf]
      %v256 = vld [vmem:[%s1 + $0x10] sm:$0xf]
      %v257 = vld [vmem:[%s1 + $0x14] sm:$0xf]
      %v258 = vld [vmem:[%s1 + $0x18] sm:$0xf]
      %v259 = vld [vmem:[%s1 + $0x1c] sm:$0xf]
      %v260 = vld [vmem:[%s205 + $0x8] sm:$0x1]
      %v261 = vld [vmem:[%s205 + $0x14] sm:$0x1]
      %v262 = vld [vmem:[%s205 + $0x20] sm:$0x1]
      %v263 = vld [vmem:[%s205 + $0x2c] sm:$0x1]
      %v264 = vld [vmem:[%s205 + $0x38] sm:$0x1]
      %v265 = vld [vmem:[%s205 + $0x44] sm:$0x1]
      %v266 = vld [vmem:[%s205 + $0x50] sm:$0x1]
      %v267 = vld [vmem:[%s205 + $0x5c] sm:$0x1]
      %v268 = vld [vmem:[%s205 + $0x68] sm:$0x1]
      %v269 = vld [vmem:[%s205 + $0x74] sm:$0x1]
      %v270 = vld [vmem:[%s205 + $0x80] sm:$0x1]
      %v271 = vld [vmem:[%s205 + $0x8c] sm:$0x1]
      %v272 = vld [vmem:[%s205 + $0x98] sm:$0x1]
      %v273 = vld [vmem:[%s205 + $0xa4] sm:$0x1]
      %v274 = vld [vmem:[%s205 + $0xb0] sm:$0x1]
      %v275 = vld [vmem:[%s205 + $0xbc] sm:$0x1]
      %vm276 = vsmask.f32 3328
      %vm277 = vsmask.f32 7440
      %vm278 = vmor %vm276, %vm277
      %v280 = vshrl.u32 %v220, 16
      %v282 = vrot.slane %v280, 4
      %v283 = vshll.u32 %v220, 16
      %v285 = vrot.slane %v283, 5
      %v286 = vor.u32 %v282, %v285
      %v287 = vrot.slane %v286, 4
      %v289 = vshll.u32 %v221, 16
      %v291 = vrot.slane %v289, 5
      %v292 = vsel %vm278, %v287, %v291
      %v293 = vshrl.u32 %v221, 16
      %v295 = vrot.slane %v293, 4
      %v296 = vor.u32 %v295, %v291
      %v297 = vrot.slane %v296, 4
      %v299 = vshll.u32 %v260, 16
      %v301 = vrot.slane %v299, 5
      %v302 = vsel %vm278, %v297, %v301
      %v304 = vshrl.u32 %v222, 16
      %v306 = vrot.slane %v304, 4
      %v307 = vshll.u32 %v222, 16
      %v309 = vrot.slane %v307, 5
      %v310 = vor.u32 %v306, %v309
      %v311 = vrot.slane %v310, 4
      %v313 = vshll.u32 %v223, 16
      %v315 = vrot.slane %v313, 5
      %v316 = vsel %vm278, %v311, %v315
      %v317 = vshrl.u32 %v223, 16
      %v319 = vrot.slane %v317, 4
      %v320 = vor.u32 %v319, %v315
      %v321 = vrot.slane %v320, 4
      %v323 = vshll.u32 %v261, 16
      %v325 = vrot.slane %v323, 5
      %v326 = vsel %vm278, %v321, %v325
      %v328 = vshrl.u32 %v224, 16
      %v330 = vrot.slane %v328, 4
      %v331 = vshll.u32 %v224, 16
      %v333 = vrot.slane %v331, 5
      %v334 = vor.u32 %v330, %v333
      %v335 = vrot.slane %v334, 4
      %v337 = vshll.u32 %v225, 16
      %v339 = vrot.slane %v337, 5
      %v340 = vsel %vm278, %v335, %v339
      %v341 = vshrl.u32 %v225, 16
      %v343 = vrot.slane %v341, 4
      %v344 = vor.u32 %v343, %v339
      %v345 = vrot.slane %v344, 4
      %v347 = vshll.u32 %v262, 16
      %v349 = vrot.slane %v347, 5
      %v350 = vsel %vm278, %v345, %v349
      %v352 = vshrl.u32 %v226, 16
      %v354 = vrot.slane %v352, 4
      %v355 = vshll.u32 %v226, 16
      %v357 = vrot.slane %v355, 5
      %v358 = vor.u32 %v354, %v357
      %v359 = vrot.slane %v358, 4
      %v361 = vshll.u32 %v227, 16
      %v363 = vrot.slane %v361, 5
      %v364 = vsel %vm278, %v359, %v363
      %v365 = vshrl.u32 %v227, 16
      %v367 = vrot.slane %v365, 4
      %v368 = vor.u32 %v367, %v363
      %v369 = vrot.slane %v368, 4
      %v371 = vshll.u32 %v263, 16
      %v373 = vrot.slane %v371, 5
      %v374 = vsel %vm278, %v369, %v373
      %v376 = vshrl.u32 %v228, 16
      %v378 = vrot.slane %v376, 4
      %v379 = vshll.u32 %v228, 16
      %v381 = vrot.slane %v379, 5
      %v382 = vor.u32 %v378, %v381
      %v383 = vrot.slane %v382, 4
      %v385 = vshll.u32 %v229, 16
      %v387 = vrot.slane %v385, 5
      %v388 = vsel %vm278, %v383, %v387
      %v389 = vshrl.u32 %v229, 16
      %v391 = vrot.slane %v389, 4
      %v392 = vor.u32 %v391, %v387
      %v393 = vrot.slane %v392, 4
      %v395 = vshll.u32 %v264, 16
      %v397 = vrot.slane %v395, 5
      %v398 = vsel %vm278, %v393, %v397
      %v400 = vshrl.u32 %v230, 16
      %v402 = vrot.slane %v400, 4
      %v403 = vshll.u32 %v230, 16
      %v405 = vrot.slane %v403, 5
      %v406 = vor.u32 %v402, %v405
      %v407 = vrot.slane %v406, 4
      %v409 = vshll.u32 %v231, 16
      %v411 = vrot.slane %v409, 5
      %v412 = vsel %vm278, %v407, %v411
      %v413 = vshrl.u32 %v231, 16
      %v415 = vrot.slane %v413, 4
      %v416 = vor.u32 %v415, %v411
      %v417 = vrot.slane %v416, 4
      %v419 = vshll.u32 %v265, 16
      %v421 = vrot.slane %v419, 5
      %v422 = vsel %vm278, %v417, %v421
      %v424 = vshrl.u32 %v232, 16
      %v426 = vrot.slane %v424, 4
      %v427 = vshll.u32 %v232, 16
      %v429 = vrot.slane %v427, 5
      %v430 = vor.u32 %v426, %v429
      %v431 = vrot.slane %v430, 4
      %v433 = vshll.u32 %v233, 16
      %v435 = vrot.slane %v433, 5
      %v436 = vsel %vm278, %v431, %v435
      %v437 = vshrl.u32 %v233, 16
      %v439 = vrot.slane %v437, 4
      %v440 = vor.u32 %v439, %v435
      %v441 = vrot.slane %v440, 4
      %v443 = vshll.u32 %v266, 16
      %v445 = vrot.slane %v443, 5
      %v446 = vsel %vm278, %v441, %v445
      %v448 = vshrl.u32 %v234, 16
      %v450 = vrot.slane %v448, 4
      %v451 = vshll.u32 %v234, 16
      %v453 = vrot.slane %v451, 5
      %v454 = vor.u32 %v450, %v453
      %v455 = vrot.slane %v454, 4
      %v457 = vshll.u32 %v235, 16
      %v459 = vrot.slane %v457, 5
      %v460 = vsel %vm278, %v455, %v459
      %v461 = vshrl.u32 %v235, 16
      %v463 = vrot.slane %v461, 4
      %v464 = vor.u32 %v463, %v459
      %v465 = vrot.slane %v464, 4
      %v467 = vshll.u32 %v267, 16
      %v469 = vrot.slane %v467, 5
      %v470 = vsel %vm278, %v465, %v469
      %v472 = vshrl.u32 %v236, 16
      %v474 = vrot.slane %v472, 4
      %v475 = vshll.u32 %v236, 16
      %v477 = vrot.slane %v475, 5
      %v478 = vor.u32 %v474, %v477
      %v479 = vrot.slane %v478, 4
      %v481 = vshll.u32 %v237, 16
      %v483 = vrot.slane %v481, 5
      %v484 = vsel %vm278, %v479, %v483
      %v485 = vshrl.u32 %v237, 16
      %v487 = vrot.slane %v485, 4
      %v488 = vor.u32 %v487, %v483
      %v489 = vrot.slane %v488, 4
      %v491 = vshll.u32 %v268, 16
      %v493 = vrot.slane %v491, 5
      %v494 = vsel %vm278, %v489, %v493
      %v496 = vshrl.u32 %v238, 16
      %v498 = vrot.slane %v496, 4
      %v499 = vshll.u32 %v238, 16
      %v501 = vrot.slane %v499, 5
      %v502 = vor.u32 %v498, %v501
      %v503 = vrot.slane %v502, 4
      %v505 = vshll.u32 %v239, 16
      %v507 = vrot.slane %v505, 5
      %v508 = vsel %vm278, %v503, %v507
      %v509 = vshrl.u32 %v239, 16
      %v511 = vrot.slane %v509, 4
      %v512 = vor.u32 %v511, %v507
      %v513 = vrot.slane %v512, 4
      %v515 = vshll.u32 %v269, 16
      %v517 = vrot.slane %v515, 5
      %v518 = vsel %vm278, %v513, %v517
      %v520 = vshrl.u32 %v240, 16
      %v522 = vrot.slane %v520, 4
      %v523 = vshll.u32 %v240, 16
      %v525 = vrot.slane %v523, 5
      %v526 = vor.u32 %v522, %v525
      %v527 = vrot.slane %v526, 4
      %v529 = vshll.u32 %v241, 16
      %v531 = vrot.slane %v529, 5
      %v532 = vsel %vm278, %v527, %v531
      %v533 = vshrl.u32 %v241, 16
      %v535 = vrot.slane %v533, 4
      %v536 = vor.u32 %v535, %v531
      %v537 = vrot.slane %v536, 4
      %v539 = vshll.u32 %v270, 16
      %v541 = vrot.slane %v539, 5
      %v542 = vsel %vm278, %v537, %v541
      %v544 = vshrl.u32 %v242, 16
      %v546 = vrot.slane %v544, 4
      %v547 = vshll.u32 %v242, 16
      %v549 = vrot.slane %v547, 5
      %v550 = vor.u32 %v546, %v549
      %v551 = vrot.slane %v550, 4
      %v553 = vshll.u32 %v243, 16
      %v555 = vrot.slane %v553, 5
      %v556 = vsel %vm278, %v551, %v555
      %v557 = vshrl.u32 %v243, 16
      %v559 = vrot.slane %v557, 4
      %v560 = vor.u32 %v559, %v555
      %v561 = vrot.slane %v560, 4
      %v563 = vshll.u32 %v271, 16
      %v565 = vrot.slane %v563, 5
      %v566 = vsel %vm278, %v561, %v565
      %v568 = vshrl.u32 %v244, 16
      %v570 = vrot.slane %v568, 4
      %v571 = vshll.u32 %v244, 16
      %v573 = vrot.slane %v571, 5
      %v574 = vor.u32 %v570, %v573
      %v575 = vrot.slane %v574, 4
      %v577 = vshll.u32 %v245, 16
      %v579 = vrot.slane %v577, 5
      %v580 = vsel %vm278, %v575, %v579
      %v581 = vshrl.u32 %v245, 16
      %v583 = vrot.slane %v581, 4
      %v584 = vor.u32 %v583, %v579
      %v585 = vrot.slane %v584, 4
      %v587 = vshll.u32 %v272, 16
      %v589 = vrot.slane %v587, 5
      %v590 = vsel %vm278, %v585, %v589
      %v592 = vshrl.u32 %v246, 16
      %v594 = vrot.slane %v592, 4
      %v595 = vshll.u32 %v246, 16
      %v597 = vrot.slane %v595, 5
      %v598 = vor.u32 %v594, %v597
      %v599 = vrot.slane %v598, 4
      %v601 = vshll.u32 %v247, 16
      %v603 = vrot.slane %v601, 5
      %v604 = vsel %vm278, %v599, %v603
      %v605 = vshrl.u32 %v247, 16
      %v607 = vrot.slane %v605, 4
      %v608 = vor.u32 %v607, %v603
      %v609 = vrot.slane %v608, 4
      %v611 = vshll.u32 %v273, 16
      %v613 = vrot.slane %v611, 5
      %v614 = vsel %vm278, %v609, %v613
      %v616 = vshrl.u32 %v248, 16
      %v618 = vrot.slane %v616, 4
      %v619 = vshll.u32 %v248, 16
      %v621 = vrot.slane %v619, 5
      %v622 = vor.u32 %v618, %v621
      %v623 = vrot.slane %v622, 4
      %v625 = vshll.u32 %v249, 16
      %v627 = vrot.slane %v625, 5
      %v628 = vsel %vm278, %v623, %v627
      %v629 = vshrl.u32 %v249, 16
      %v631 = vrot.slane %v629, 4
      %v632 = vor.u32 %v631, %v627
      %v633 = vrot.slane %v632, 4
      %v635 = vshll.u32 %v274, 16
      %v637 = vrot.slane %v635, 5
      %v638 = vsel %vm278, %v633, %v637
      %v640 = vshrl.u32 %v250, 16
      %v642 = vrot.slane %v640, 4
      %v643 = vshll.u32 %v250, 16
      %v645 = vrot.slane %v643, 5
      %v646 = vor.u32 %v642, %v645
      %v647 = vrot.slane %v646, 4
      %v649 = vshll.u32 %v251, 16
      %v651 = vrot.slane %v649, 5
      %v652 = vsel %vm278, %v647, %v651
      %v653 = vshrl.u32 %v251, 16
      %v655 = vrot.slane %v653, 4
      %v656 = vor.u32 %v655, %v651
      %v657 = vrot.slane %v656, 4
      %v659 = vshll.u32 %v275, 16
      %v661 = vrot.slane %v659, 5
      %v662 = vsel %vm278, %v657, %v661
      %s663 = scalar_lea.vmem %s1, 32
      %v664 = vld [vmem:[%s663] sm:$0xf]
      %v665 = vld [vmem:[%s663 + $0x4] sm:$0xf]
      %v666 = vld [vmem:[%s663 + $0x8] sm:$0xf]
      %v667 = vld [vmem:[%s663 + $0xc] sm:$0xf]
      %v668 = vld [vmem:[%s663 + $0x10] sm:$0xf]
      %v669 = vld [vmem:[%s663 + $0x14] sm:$0xf]
      %v670 = vld [vmem:[%s663 + $0x18] sm:$0xf]
      %v671 = vld [vmem:[%s663 + $0x1c] sm:$0xf]
      %v672 = vunpack.c.l.b16 %v292
      %v673 = vunpack.c.l.b16 %v302
      %v674 = vunpack.c.l.b16 %v316
      %v675 = vunpack.c.l.b16 %v326
      %v676 = vunpack.c.l.b16 %v340
      %v677 = vunpack.c.l.b16 %v350
      %v678 = vunpack.c.l.b16 %v364
      %v679 = vunpack.c.l.b16 %v374
      %v680 = vunpack.c.l.b16 %v388
      %v681 = vunpack.c.l.b16 %v398
      %v682 = vunpack.c.l.b16 %v412
      %v683 = vunpack.c.l.b16 %v422
      %v684 = vunpack.c.l.b16 %v436
      %v685 = vunpack.c.l.b16 %v446
      %v686 = vunpack.c.l.b16 %v460
      %v687 = vunpack.c.l.b16 %v470
      %v688 = vunpack.c.l.b16 %v484
      %v689 = vunpack.c.l.b16 %v494
      %v690 = vunpack.c.l.b16 %v508
      %v691 = vunpack.c.l.b16 %v518
      %v692 = vunpack.c.l.b16 %v532
      %v693 = vunpack.c.l.b16 %v542
      %v694 = vunpack.c.l.b16 %v556
      %v695 = vunpack.c.l.b16 %v566
      %v696 = vunpack.c.l.b16 %v580
      %v697 = vunpack.c.l.b16 %v590
      %v698 = vunpack.c.l.b16 %v604
      %v699 = vunpack.c.l.b16 %v614
      %v700 = vunpack.c.l.b16 %v628
      %v701 = vunpack.c.l.b16 %v638
      %v702 = vunpack.c.l.b16 %v652
      %v703 = vunpack.c.l.b16 %v662
      %v704 = vpack.c.b16 %v673, %v672
      %v705 = vpack.c.b16 %v675, %v674
      %v706 = vpack.c.b16 %v677, %v676
      %v707 = vpack.c.b16 %v679, %v678
      %v708 = vpack.c.b16 %v681, %v680
      %v709 = vpack.c.b16 %v683, %v682
      %v710 = vpack.c.b16 %v685, %v684
      %v711 = vpack.c.b16 %v687, %v686
      %v712 = vpack.c.b16 %v689, %v688
      %v713 = vpack.c.b16 %v691, %v690
      %v714 = vpack.c.b16 %v693, %v692
      %v715 = vpack.c.b16 %v695, %v694
      %v716 = vpack.c.b16 %v697, %v696
      %v717 = vpack.c.b16 %v699, %v698
      %v718 = vpack.c.b16 %v701, %v700
      %v719 = vpack.c.b16 %v703, %v702
      %v728 = vunpack.c.l.b16 %v664
      %v729 = vunpack.c.l.b16 %v665
      %v730 = vunpack.c.l.b16 %v666
      %v731 = vunpack.c.l.b16 %v667
      %v732 = vunpack.c.l.b16 %v668
      %v733 = vunpack.c.l.b16 %v669
      %v734 = vunpack.c.l.b16 %v670
      %v735 = vunpack.c.l.b16 %v671
      %v736 = vpack.c.b16 %v729, %v728
      %v737 = vpack.c.b16 %v731, %v730
      %v738 = vpack.c.b16 %v733, %v732
      %v739 = vpack.c.b16 %v735, %v734
      %vm744 = vcmask 523264
      %v746 = vsel %vm744, %v704, 0
      %v749 = vsel %vm744, %v705, 0
      %v752 = vsel %vm744, %v706, 0
      %v755 = vsel %vm744, %v707, 0
      %v758 = vsel %vm744, %v708, 0
      %v761 = vsel %vm744, %v709, 0
      %v764 = vsel %vm744, %v710, 0
      %v767 = vsel %vm744, %v711, 0
      %v770 = vsel %vm744, %v712, 0
      %v773 = vsel %vm744, %v713, 0
      %v776 = vsel %vm744, %v714, 0
      %v779 = vsel %vm744, %v715, 0
      %v782 = vsel %vm744, %v716, 0
      %v785 = vsel %vm744, %v717, 0
      %v788 = vsel %vm744, %v718, 0
      %v791 = vsel %vm744, %v719, 0
      %793 = vmatprep.subr.bf16.mxu0 0
      %794 = vmatpush1.bf16.msra.mxu0 %v736
      %795 = vmatprep.subr.bf16.mxu0 0
      %796 = vmatpush1.bf16.msra.mxu0 %v737
      %797 = vmatprep.subr.bf16.mxu0 0
      %798 = vmatpush1.bf16.msra.mxu0 %v738
      %799 = vmatprep.subr.bf16.mxu0 0
      %800 = vmatpush1.bf16.msra.mxu0 %v739
      %801 = vmatprep.subr.bf16.mxu0 0
      %802 = vmatpush1.bf16.msra.mxu0 0
      %803 = vmatprep.subr.bf16.mxu0 0
      %804 = vmatpush1.bf16.msra.mxu0 0
      %805 = vmatprep.subr.bf16.mxu0 0
      %806 = vmatpush1.bf16.msra.mxu0 0
      %807 = vmatprep.subr.bf16.mxu0 0
      %808 = vmatpush1.bf16.msra.mxu0 0
      %809 = vmatprep.subr.bf16.mxu0 0
      %810 = vmatpush1.bf16.msra.mxu0 0
      %811 = vmatprep.subr.bf16.mxu0 0
      %812 = vmatpush1.bf16.msra.mxu0 0
      %813 = vmatprep.subr.bf16.mxu0 0
      %814 = vmatpush1.bf16.msra.mxu0 0
      %815 = vmatprep.subr.bf16.mxu0 0
      %816 = vmatpush1.bf16.msra.mxu0 0
      %817 = vmatprep.subr.bf16.mxu0 0
      %818 = vmatpush1.bf16.msra.mxu0 0
      %819 = vmatprep.subr.bf16.mxu0 0
      %820 = vmatpush1.bf16.msra.mxu0 0
      %821 = vmatprep.subr.bf16.mxu0 0
      %822 = vmatpush1.bf16.msra.mxu0 0
      %823 = vmatprep.subr.bf16.mxu0 0
      %824 = vmatpush1.bf16.msra.mxu0 0
      %825 = vmatprep.mubr.bf16.mxu0 0
      %826 = vmatmul.mubr.bf16.gmra.mrb[0].mxu0 %v746
      %v827 = vpop.f32.mrb[0].mxu0
      %v828 = vadd.f32 0.0, %v827
      %v829 = vpop.f32.mrb[0].mxu0
      %v830 = vpop.f32.mrb[0].mxu0
      %v831 = vadd.f32 0.0, %v830
      %v832 = vpop.f32.mrb[0].mxu0
      %833 = vmatprep.mubr.bf16.mxu0 0
      %834 = vmatmul.mubr.bf16.gmra.mrb[0].mxu0 %v749
      %v835 = vpop.f32.mrb[0].mxu0
      %v836 = vadd.f32 0.0, %v835
      %v837 = vpop.f32.mrb[0].mxu0
      %v838 = vpop.f32.mrb[0].mxu0
      %v839 = vadd.f32 0.0, %v838
      %v840 = vpop.f32.mrb[0].mxu0
      %841 = vmatprep.mubr.bf16.mxu0 0
      %842 = vmatmul.mubr.bf16.gmra.mrb[0].mxu0 %v752
      %v843 = vpop.f32.mrb[0].mxu0
      %v844 = vadd.f32 0.0, %v843
      %v845 = vpop.f32.mrb[0].mxu0
      %v846 = vpop.f32.mrb[0].mxu0
      %v847 = vadd.f32 0.0, %v846
      %v848 = vpop.f32.mrb[0].mxu0
      %849 = vmatprep.mubr.bf16.mxu0 0
      %850 = vmatmul.mubr.bf16.gmra.mrb[0].mxu0 %v755
      %v851 = vpop.f32.mrb[0].mxu0
      %v852 = vadd.f32 0.0, %v851
      %v853 = vpop.f32.mrb[0].mxu0
      %v854 = vpop.f32.mrb[0].mxu0
      %v855 = vadd.f32 0.0, %v854
      %v856 = vpop.f32.mrb[0].mxu0
      %857 = vmatprep.mubr.bf16.mxu0 0
      %858 = vmatmul.mubr.bf16.gmra.mrb[0].mxu0 %v758
      %v859 = vpop.f32.mrb[0].mxu0
      %v860 = vadd.f32 0.0, %v859
      %v861 = vpop.f32.mrb[0].mxu0
      %v862 = vpop.f32.mrb[0].mxu0
      %v863 = vadd.f32 0.0, %v862
      %v864 = vpop.f32.mrb[0].mxu0
      %865 = vmatprep.mubr.bf16.mxu0 0
      %866 = vmatmul.mubr.bf16.gmra.mrb[0].mxu0 %v761
      %v867 = vpop.f32.mrb[0].mxu0
      %v868 = vadd.f32 0.0, %v867
      %v869 = vpop.f32.mrb[0].mxu0
      %v870 = vpop.f32.mrb[0].mxu0
      %v871 = vadd.f32 0.0, %v870
      %v872 = vpop.f32.mrb[0].mxu0
      %873 = vmatprep.mubr.bf16.mxu0 0
      %874 = vmatmul.mubr.bf16.gmra.mrb[0].mxu0 %v764
      %v875 = vpop.f32.mrb[0].mxu0
      %v876 = vadd.f32 0.0, %v875
      %v877 = vpop.f32.mrb[0].mxu0
      %v878 = vpop.f32.mrb[0].mxu0
      %v879 = vadd.f32 0.0, %v878
      %v880 = vpop.f32.mrb[0].mxu0
      %881 = vmatprep.mubr.bf16.mxu0 0
      %882 = vmatmul.mubr.bf16.gmra.mrb[0].mxu0 %v767
      %v883 = vpop.f32.mrb[0].mxu0
      %v884 = vadd.f32 0.0, %v883
      %v885 = vpop.f32.mrb[0].mxu0
      %v886 = vpop.f32.mrb[0].mxu0
      %v887 = vadd.f32 0.0, %v886
      %v888 = vpop.f32.mrb[0].mxu0
      %889 = vmatprep.mubr.bf16.mxu0 0
      %890 = vmatmul.mubr.bf16.gmra.mrb[0].mxu0 %v770
      %v891 = vpop.f32.mrb[0].mxu0
      %v892 = vadd.f32 0.0, %v891
      %v893 = vpop.f32.mrb[0].mxu0
      %v894 = vpop.f32.mrb[0].mxu0
      %v895 = vadd.f32 0.0, %v894
      %v896 = vpop.f32.mrb[0].mxu0
      %897 = vmatprep.mubr.bf16.mxu0 0
      %898 = vmatmul.mubr.bf16.gmra.mrb[0].mxu0 %v773
      %v899 = vpop.f32.mrb[0].mxu0
      %v900 = vadd.f32 0.0, %v899
      %v901 = vpop.f32.mrb[0].mxu0
      %v902 = vpop.f32.mrb[0].mxu0
      %v903 = vadd.f32 0.0, %v902
      %v904 = vpop.f32.mrb[0].mxu0
      %905 = vmatprep.mubr.bf16.mxu0 0
      %906 = vmatmul.mubr.bf16.gmra.mrb[0].mxu0 %v776
      %v907 = vpop.f32.mrb[0].mxu0
      %v908 = vadd.f32 0.0, %v907
      %v909 = vpop.f32.mrb[0].mxu0
      %v910 = vpop.f32.mrb[0].mxu0
      %v911 = vadd.f32 0.0, %v910
      %v912 = vpop.f32.mrb[0].mxu0
      %913 = vmatprep.mubr.bf16.mxu0 0
      %914 = vmatmul.mubr.bf16.gmra.mrb[0].mxu0 %v779
      %v915 = vpop.f32.mrb[0].mxu0
      %v916 = vadd.f32 0.0, %v915
      %v917 = vpop.f32.mrb[0].mxu0
      %v918 = vpop.f32.mrb[0].mxu0
      %v919 = vadd.f32 0.0, %v918
      %v920 = vpop.f32.mrb[0].mxu0
      %921 = vmatprep.mubr.bf16.mxu0 0
      %922 = vmatmul.mubr.bf16.gmra.mrb[0].mxu0 %v782
      %v923 = vpop.f32.mrb[0].mxu0
      %v924 = vadd.f32 0.0, %v923
      %v925 = vpop.f32.mrb[0].mxu0
      %v926 = vpop.f32.mrb[0].mxu0
      %v927 = vadd.f32 0.0, %v926
      %v928 = vpop.f32.mrb[0].mxu0
      %929 = vmatprep.mubr.bf16.mxu0 0
      %930 = vmatmul.mubr.bf16.gmra.mrb[0].mxu0 %v785
      %v931 = vpop.f32.mrb[0].mxu0
      %v932 = vadd.f32 0.0, %v931
      %v933 = vpop.f32.mrb[0].mxu0
      %v934 = vpop.f32.mrb[0].mxu0
      %v935 = vadd.f32 0.0, %v934
      %v936 = vpop.f32.mrb[0].mxu0
      %937 = vmatprep.mubr.bf16.mxu0 0
      %938 = vmatmul.mubr.bf16.gmra.mrb[0].mxu0 %v788
      %v939 = vpop.f32.mrb[0].mxu0
      %v940 = vadd.f32 0.0, %v939
      %v941 = vpop.f32.mrb[0].mxu0
      %v942 = vpop.f32.mrb[0].mxu0
      %v943 = vadd.f32 0.0, %v942
      %v944 = vpop.f32.mrb[0].mxu0
      %945 = vmatprep.mubr.bf16.mxu0 0
      %946 = vmatmul.mubr.bf16.gmra.mrb[0].mxu0 %v791
      %v947 = vpop.f32.mrb[0].mxu0
      %v948 = vadd.f32 0.0, %v947
      %v949 = vpop.f32.mrb[0].mxu0
      %v950 = vpop.f32.mrb[0].mxu0
      %v951 = vadd.f32 0.0, %v950
      %v952 = vpop.f32.mrb[0].mxu0
      %953 = vdwg.mxu0
      %v986 = vunpack.c.l.b16 %v220
      %v987 = vunpack.c.l.b16 %v221
      %v988 = vunpack.c.l.b16 %v222
      %v989 = vunpack.c.l.b16 %v223
      %v990 = vunpack.c.l.b16 %v224
      %v991 = vunpack.c.l.b16 %v225
      %v992 = vunpack.c.l.b16 %v226
      %v993 = vunpack.c.l.b16 %v227
      %v994 = vunpack.c.l.b16 %v228
      %v995 = vunpack.c.l.b16 %v229
      %v996 = vunpack.c.l.b16 %v230
      %v997 = vunpack.c.l.b16 %v231
      %v998 = vunpack.c.l.b16 %v232
      %v999 = vunpack.c.l.b16 %v233
      %v1000 = vunpack.c.l.b16 %v234
      %v1001 = vunpack.c.l.b16 %v235
      %v1002 = vunpack.c.l.b16 %v236
      %v1003 = vunpack.c.l.b16 %v237
      %v1004 = vunpack.c.l.b16 %v238
      %v1005 = vunpack.c.l.b16 %v239
      %v1006 = vunpack.c.l.b16 %v240
      %v1007 = vunpack.c.l.b16 %v241
      %v1008 = vunpack.c.l.b16 %v242
      %v1009 = vunpack.c.l.b16 %v243
      %v1010 = vunpack.c.l.b16 %v244
      %v1011 = vunpack.c.l.b16 %v245
      %v1012 = vunpack.c.l.b16 %v246
      %v1013 = vunpack.c.l.b16 %v247
      %v1014 = vunpack.c.l.b16 %v248
      %v1015 = vunpack.c.l.b16 %v249
      %v1016 = vunpack.c.l.b16 %v250
      %v1017 = vunpack.c.l.b16 %v251
      %v1018 = vpack.c.b16 %v987, %v986
      %v1019 = vpack.c.b16 %v989, %v988
      %v1020 = vpack.c.b16 %v991, %v990
      %v1021 = vpack.c.b16 %v993, %v992
      %v1022 = vpack.c.b16 %v995, %v994
      %v1023 = vpack.c.b16 %v997, %v996
      %v1024 = vpack.c.b16 %v999, %v998
      %v1025 = vpack.c.b16 %v1001, %v1000
      %v1026 = vpack.c.b16 %v1003, %v1002
      %v1027 = vpack.c.b16 %v1005, %v1004
      %v1028 = vpack.c.b16 %v1007, %v1006
      %v1029 = vpack.c.b16 %v1009, %v1008
      %v1030 = vpack.c.b16 %v1011, %v1010
      %v1031 = vpack.c.b16 %v1013, %v1012
      %v1032 = vpack.c.b16 %v1015, %v1014
      %v1033 = vpack.c.b16 %v1017, %v1016
      %v1042 = vunpack.c.l.b16 %v252
      %v1043 = vunpack.c.l.b16 %v253
      %v1044 = vunpack.c.l.b16 %v254
      %v1045 = vunpack.c.l.b16 %v255
      %v1046 = vunpack.c.l.b16 %v256
      %v1047 = vunpack.c.l.b16 %v257
      %v1048 = vunpack.c.l.b16 %v258
      %v1049 = vunpack.c.l.b16 %v259
      %v1050 = vpack.c.b16 %v1043, %v1042
      %v1051 = vpack.c.b16 %v1045, %v1044
      %v1052 = vpack.c.b16 %v1047, %v1046
      %v1053 = vpack.c.b16 %v1049, %v1048
      %v1059 = vsel %vm744, %v1018, 0
      %v1062 = vsel %vm744, %v1019, 0
      %v1065 = vsel %vm744, %v1020, 0
      %v1068 = vsel %vm744, %v1021, 0
      %v1071 = vsel %vm744, %v1022, 0
      %v1074 = vsel %vm744, %v1023, 0
      %v1077 = vsel %vm744, %v1024, 0
      %v1080 = vsel %vm744, %v1025, 0
      %v1083 = vsel %vm744, %v1026, 0
      %v1086 = vsel %vm744, %v1027, 0
      %v1089 = vsel %vm744, %v1028, 0
      %v1092 = vsel %vm744, %v1029, 0
      %v1095 = vsel %vm744, %v1030, 0
      %v1098 = vsel %vm744, %v1031, 0
      %v1101 = vsel %vm744, %v1032, 0
      %v1104 = vsel %vm744, %v1033, 0
      %1106 = vmatprep.subr.bf16.mxu0 0
      %1107 = vmatpush1.bf16.msra.mxu0 %v1050
      %1108 = vmatprep.subr.bf16.mxu0 0
      %1109 = vmatpush1.bf16.msra.mxu0 %v1051
      %1110 = vmatprep.subr.bf16.mxu0 0
      %1111 = vmatpush1.bf16.msra.mxu0 %v1052
      %1112 = vmatprep.subr.bf16.mxu0 0
      %1113 = vmatpush1.bf16.msra.mxu0 %v1053
      %1114 = vmatprep.subr.bf16.mxu0 0
      %1115 = vmatpush1.bf16.msra.mxu0 0
      %1116 = vmatprep.subr.bf16.mxu0 0
      %1117 = vmatpush1.bf16.msra.mxu0 0
      %1118 = vmatprep.subr.bf16.mxu0 0
      %1119 = vmatpush1.bf16.msra.mxu0 0
      %1120 = vmatprep.subr.bf16.mxu0 0
      %1121 = vmatpush1.bf16.msra.mxu0 0
      %1122 = vmatprep.subr.bf16.mxu0 0
      %1123 = vmatpush1.bf16.msra.mxu0 0
      %1124 = vmatprep.subr.bf16.mxu0 0
      %1125 = vmatpush1.bf16.msra.mxu0 0
      %1126 = vmatprep.subr.bf16.mxu0 0
      %1127 = vmatpush1.bf16.msra.mxu0 0
      %1128 = vmatprep.subr.bf16.mxu0 0
      %1129 = vmatpush1.bf16.msra.mxu0 0
      %1130 = vmatprep.subr.bf16.mxu0 0
      %1131 = vmatpush1.bf16.msra.mxu0 0
      %1132 = vmatprep.subr.bf16.mxu0 0
      %1133 = vmatpush1.bf16.msra.mxu0 0
      %1134 = vmatprep.subr.bf16.mxu0 0
      %1135 = vmatpush1.bf16.msra.mxu0 0
      %1136 = vmatprep.subr.bf16.mxu0 0
      %1137 = vmatpush1.bf16.msra.mxu0 0
      %1138 = vmatprep.mubr.bf16.mxu0 0
      %1139 = vmatmul.mubr.bf16.gmra.mrb[0].mxu0 %v1059
      %v1140 = vpop.f32.mrb[0].mxu0
      %v1141 = vadd.f32 %v828, %v1140
      %v1142 = vpop.f32.mrb[0].mxu0
      %v1143 = vpop.f32.mrb[0].mxu0
      %v1144 = vadd.f32 %v831, %v1143
      %v1145 = vpop.f32.mrb[0].mxu0
      %1146 = vmatprep.mubr.bf16.mxu0 0
      %1147 = vmatmul.mubr.bf16.gmra.mrb[0].mxu0 %v1062
      %v1148 = vpop.f32.mrb[0].mxu0
      %v1149 = vadd.f32 %v836, %v1148
      %v1150 = vpop.f32.mrb[0].mxu0
      %v1151 = vpop.f32.mrb[0].mxu0
      %v1152 = vadd.f32 %v839, %v1151
      %v1153 = vpop.f32.mrb[0].mxu0
      %1154 = vmatprep.mubr.bf16.mxu0 0
      %1155 = vmatmul.mubr.bf16.gmra.mrb[0].mxu0 %v1065
      %v1156 = vpop.f32.mrb[0].mxu0
      %v1157 = vadd.f32 %v844, %v1156
      %v1158 = vpop.f32.mrb[0].mxu0
      %v1159 = vpop.f32.mrb[0].mxu0
      %v1160 = vadd.f32 %v847, %v1159
      %v1161 = vpop.f32.mrb[0].mxu0
      %1162 = vmatprep.mubr.bf16.mxu0 0
      %1163 = vmatmul.mubr.bf16.gmra.mrb[0].mxu0 %v1068
      %v1164 = vpop.f32.mrb[0].mxu0
      %v1165 = vadd.f32 %v852, %v1164
      %v1166 = vpop.f32.mrb[0].mxu0
      %v1167 = vpop.f32.mrb[0].mxu0
      %v1168 = vadd.f32 %v855, %v1167
      %v1169 = vpop.f32.mrb[0].mxu0
      %1170 = vmatprep.mubr.bf16.mxu0 0
      %1171 = vmatmul.mubr.bf16.gmra.mrb[0].mxu0 %v1071
      %v1172 = vpop.f32.mrb[0].mxu0
      %v1173 = vadd.f32 %v860, %v1172
      %v1174 = vpop.f32.mrb[0].mxu0
      %v1175 = vpop.f32.mrb[0].mxu0
      %v1176 = vadd.f32 %v863, %v1175
      %v1177 = vpop.f32.mrb[0].mxu0
      %1178 = vmatprep.mubr.bf16.mxu0 0
      %1179 = vmatmul.mubr.bf16.gmra.mrb[0].mxu0 %v1074
      %v1180 = vpop.f32.mrb[0].mxu0
      %v1181 = vadd.f32 %v868, %v1180
      %v1182 = vpop.f32.mrb[0].mxu0
      %v1183 = vpop.f32.mrb[0].mxu0
      %v1184 = vadd.f32 %v871, %v1183
      %v1185 = vpop.f32.mrb[0].mxu0
      %1186 = vmatprep.mubr.bf16.mxu0 0
      %1187 = vmatmul.mubr.bf16.gmra.mrb[0].mxu0 %v1077
      %v1188 = vpop.f32.mrb[0].mxu0
      %v1189 = vadd.f32 %v876, %v1188
      %v1190 = vpop.f32.mrb[0].mxu0
      %v1191 = vpop.f32.mrb[0].mxu0
      %v1192 = vadd.f32 %v879, %v1191
      %v1193 = vpop.f32.mrb[0].mxu0
      %1194 = vmatprep.mubr.bf16.mxu0 0
      %1195 = vmatmul.mubr.bf16.gmra.mrb[0].mxu0 %v1080
      %v1196 = vpop.f32.mrb[0].mxu0
      %v1197 = vadd.f32 %v884, %v1196
      %v1198 = vpop.f32.mrb[0].mxu0
      %v1199 = vpop.f32.mrb[0].mxu0
      %v1200 = vadd.f32 %v887, %v1199
      %v1201 = vpop.f32.mrb[0].mxu0
      %1202 = vmatprep.mubr.bf16.mxu0 0
      %1203 = vmatmul.mubr.bf16.gmra.mrb[0].mxu0 %v1083
      %v1204 = vpop.f32.mrb[0].mxu0
      %v1205 = vadd.f32 %v892, %v1204
      %v1206 = vpop.f32.mrb[0].mxu0
      %v1207 = vpop.f32.mrb[0].mxu0
      %v1208 = vadd.f32 %v895, %v1207
      %v1209 = vpop.f32.mrb[0].mxu0
      %1210 = vmatprep.mubr.bf16.mxu0 0
      %1211 = vmatmul.mubr.bf16.gmra.mrb[0].mxu0 %v1086
      %v1212 = vpop.f32.mrb[0].mxu0
      %v1213 = vadd.f32 %v900, %v1212
      %v1214 = vpop.f32.mrb[0].mxu0
      %v1215 = vpop.f32.mrb[0].mxu0
      %v1216 = vadd.f32 %v903, %v1215
      %v1217 = vpop.f32.mrb[0].mxu0
      %1218 = vmatprep.mubr.bf16.mxu0 0
      %1219 = vmatmul.mubr.bf16.gmra.mrb[0].mxu0 %v1089
      %v1220 = vpop.f32.mrb[0].mxu0
      %v1221 = vadd.f32 %v908, %v1220
      %v1222 = vpop.f32.mrb[0].mxu0
      %v1223 = vpop.f32.mrb[0].mxu0
      %v1224 = vadd.f32 %v911, %v1223
      %v1225 = vpop.f32.mrb[0].mxu0
      %1226 = vmatprep.mubr.bf16.mxu0 0
      %1227 = vmatmul.mubr.bf16.gmra.mrb[0].mxu0 %v1092
      %v1228 = vpop.f32.mrb[0].mxu0
      %v1229 = vadd.f32 %v916, %v1228
      %v1230 = vpop.f32.mrb[0].mxu0
      %v1231 = vpop.f32.mrb[0].mxu0
      %v1232 = vadd.f32 %v919, %v1231
      %v1233 = vpop.f32.mrb[0].mxu0
      %1234 = vmatprep.mubr.bf16.mxu0 0
      %1235 = vmatmul.mubr.bf16.gmra.mrb[0].mxu0 %v1095
      %v1236 = vpop.f32.mrb[0].mxu0
      %v1237 = vadd.f32 %v924, %v1236
      %v1238 = vpop.f32.mrb[0].mxu0
      %v1239 = vpop.f32.mrb[0].mxu0
      %v1240 = vadd.f32 %v927, %v1239
      %v1241 = vpop.f32.mrb[0].mxu0
      %1242 = vmatprep.mubr.bf16.mxu0 0
      %1243 = vmatmul.mubr.bf16.gmra.mrb[0].mxu0 %v1098
      %v1244 = vpop.f32.mrb[0].mxu0
      %v1245 = vadd.f32 %v932, %v1244
      %v1246 = vpop.f32.mrb[0].mxu0
      %v1247 = vpop.f32.mrb[0].mxu0
      %v1248 = vadd.f32 %v935, %v1247
      %v1249 = vpop.f32.mrb[0].mxu0
      %1250 = vmatprep.mubr.bf16.mxu0 0
      %1251 = vmatmul.mubr.bf16.gmra.mrb[0].mxu0 %v1101
      %v1252 = vpop.f32.mrb[0].mxu0
      %v1253 = vadd.f32 %v940, %v1252
      %v1254 = vpop.f32.mrb[0].mxu0
      %v1255 = vpop.f32.mrb[0].mxu0
      %v1256 = vadd.f32 %v943, %v1255
      %v1257 = vpop.f32.mrb[0].mxu0
      %1258 = vmatprep.mubr.bf16.mxu0 0
      %1259 = vmatmul.mubr.bf16.gmra.mrb[0].mxu0 %v1104
      %v1260 = vpop.f32.mrb[0].mxu0
      %v1261 = vadd.f32 %v948, %v1260
      %v1262 = vpop.f32.mrb[0].mxu0
      %v1263 = vpop.f32.mrb[0].mxu0
      %v1264 = vadd.f32 %v951, %v1263
      %v1265 = vpop.f32.mrb[0].mxu0
      %1266 = vdwg.mxu0
      %v1267 = vld [vmem:[%s205] sm:$0xe]
      %v1268 = vld [vmem:[%s205 + $0xc] sm:$0xe]
      %v1269 = vld [vmem:[%s205 + $0x18] sm:$0xe]
      %v1270 = vld [vmem:[%s205 + $0x24] sm:$0xe]
      %v1271 = vld [vmem:[%s205 + $0x30] sm:$0xe]
      %v1272 = vld [vmem:[%s205 + $0x3c] sm:$0xe]
      %v1273 = vld [vmem:[%s205 + $0x48] sm:$0xe]
      %v1274 = vld [vmem:[%s205 + $0x54] sm:$0xe]
      %v1275 = vld [vmem:[%s205 + $0x60] sm:$0xe]
      %v1276 = vld [vmem:[%s205 + $0x6c] sm:$0xe]
      %v1277 = vld [vmem:[%s205 + $0x78] sm:$0xe]
      %v1278 = vld [vmem:[%s205 + $0x84] sm:$0xe]
      %v1279 = vld [vmem:[%s205 + $0x90] sm:$0xe]
      %v1280 = vld [vmem:[%s205 + $0x9c] sm:$0xe]
      %v1281 = vld [vmem:[%s205 + $0xa8] sm:$0xe]
      %v1282 = vld [vmem:[%s205 + $0xb4] sm:$0xe]
      %vm1315 = vcmask 1042432
      %vm1316 = vcmask 1046532
      %vm1317 = vmor %vm1315, %vm1316
      %v1318 = vrot.slane %v1267, 5
      %v1319 = vrot.slane %v1318, 4
      %v1320 = vrot.slane %v221, 5
      %v1321 = vsel %vm1317, %v1319, %v1320
      %v1322 = vrot.slane %v1320, 4
      %v1323 = vrot.slane %v260, 5
      %v1324 = vsel %vm1317, %v1322, %v1323
      %v1325 = vrot.slane %v1268, 5
      %v1326 = vrot.slane %v1325, 4
      %v1327 = vrot.slane %v223, 5
      %v1328 = vsel %vm1317, %v1326, %v1327
      %v1329 = vrot.slane %v1327, 4
      %v1330 = vrot.slane %v261, 5
      %v1331 = vsel %vm1317, %v1329, %v1330
      %v1332 = vrot.slane %v1269, 5
      %v1333 = vrot.slane %v1332, 4
      %v1334 = vrot.slane %v225, 5
      %v1335 = vsel %vm1317, %v1333, %v1334
      %v1336 = vrot.slane %v1334, 4
      %v1337 = vrot.slane %v262, 5
      %v1338 = vsel %vm1317, %v1336, %v1337
      %v1339 = vrot.slane %v1270, 5
      %v1340 = vrot.slane %v1339, 4
      %v1341 = vrot.slane %v227, 5
      %v1342 = vsel %vm1317, %v1340, %v1341
      %v1343 = vrot.slane %v1341, 4
      %v1344 = vrot.slane %v263, 5
      %v1345 = vsel %vm1317, %v1343, %v1344
      %v1346 = vrot.slane %v1271, 5
      %v1347 = vrot.slane %v1346, 4
      %v1348 = vrot.slane %v229, 5
      %v1349 = vsel %vm1317, %v1347, %v1348
      %v1350 = vrot.slane %v1348, 4
      %v1351 = vrot.slane %v264, 5
      %v1352 = vsel %vm1317, %v1350, %v1351
      %v1353 = vrot.slane %v1272, 5
      %v1354 = vrot.slane %v1353, 4
      %v1355 = vrot.slane %v231, 5
      %v1356 = vsel %vm1317, %v1354, %v1355
      %v1357 = vrot.slane %v1355, 4
      %v1358 = vrot.slane %v265, 5
      %v1359 = vsel %vm1317, %v1357, %v1358
      %v1360 = vrot.slane %v1273, 5
      %v1361 = vrot.slane %v1360, 4
      %v1362 = vrot.slane %v233, 5
      %v1363 = vsel %vm1317, %v1361, %v1362
      %v1364 = vrot.slane %v1362, 4
      %v1365 = vrot.slane %v266, 5
      %v1366 = vsel %vm1317, %v1364, %v1365
      %v1367 = vrot.slane %v1274, 5
      %v1368 = vrot.slane %v1367, 4
      %v1369 = vrot.slane %v235, 5
      %v1370 = vsel %vm1317, %v1368, %v1369
      %v1371 = vrot.slane %v1369, 4
      %v1372 = vrot.slane %v267, 5
      %v1373 = vsel %vm1317, %v1371, %v1372
      %v1374 = vrot.slane %v1275, 5
      %v1375 = vrot.slane %v1374, 4
      %v1376 = vrot.slane %v237, 5
      %v1377 = vsel %vm1317, %v1375, %v1376
      %v1378 = vrot.slane %v1376, 4
      %v1379 = vrot.slane %v268, 5
      %v1380 = vsel %vm1317, %v1378, %v1379
      %v1381 = vrot.slane %v1276, 5
      %v1382 = vrot.slane %v1381, 4
      %v1383 = vrot.slane %v239, 5
      %v1384 = vsel %vm1317, %v1382, %v1383
      %v1385 = vrot.slane %v1383, 4
      %v1386 = vrot.slane %v269, 5
      %v1387 = vsel %vm1317, %v1385, %v1386
      %v1388 = vrot.slane %v1277, 5
      %v1389 = vrot.slane %v1388, 4
      %v1390 = vrot.slane %v241, 5
      %v1391 = vsel %vm1317, %v1389, %v1390
      %v1392 = vrot.slane %v1390, 4
      %v1393 = vrot.slane %v270, 5
      %v1394 = vsel %vm1317, %v1392, %v1393
      %v1395 = vrot.slane %v1278, 5
      %v1396 = vrot.slane %v1395, 4
      %v1397 = vrot.slane %v243, 5
      %v1398 = vsel %vm1317, %v1396, %v1397
      %v1399 = vrot.slane %v1397, 4
      %v1400 = vrot.slane %v271, 5
      %v1401 = vsel %vm1317, %v1399, %v1400
      %v1402 = vrot.slane %v1279, 5
      %v1403 = vrot.slane %v1402, 4
      %v1404 = vrot.slane %v245, 5
      %v1405 = vsel %vm1317, %v1403, %v1404
      %v1406 = vrot.slane %v1404, 4
      %v1407 = vrot.slane %v272, 5
      %v1408 = vsel %vm1317, %v1406, %v1407
      %v1409 = vrot.slane %v1280, 5
      %v1410 = vrot.slane %v1409, 4
      %v1411 = vrot.slane %v247, 5
      %v1412 = vsel %vm1317, %v1410, %v1411
      %v1413 = vrot.slane %v1411, 4
      %v1414 = vrot.slane %v273, 5
      %v1415 = vsel %vm1317, %v1413, %v1414
      %v1416 = vrot.slane %v1281, 5
      %v1417 = vrot.slane %v1416, 4
      %v1418 = vrot.slane %v249, 5
      %v1419 = vsel %vm1317, %v1417, %v1418
      %v1420 = vrot.slane %v1418, 4
      %v1421 = vrot.slane %v274, 5
      %v1422 = vsel %vm1317, %v1420, %v1421
      %v1423 = vrot.slane %v1282, 5
      %v1424 = vrot.slane %v1423, 4
      %v1425 = vrot.slane %v251, 5
      %v1426 = vsel %vm1317, %v1424, %v1425
      %v1427 = vrot.slane %v1425, 4
      %v1428 = vrot.slane %v275, 5
      %v1429 = vsel %vm1317, %v1427, %v1428
      %s1430 = scalar_lea.vmem %s1, 64
      %v1431 = vld [vmem:[%s1430] sm:$0xf]
      %v1432 = vld [vmem:[%s1430 + $0x4] sm:$0xf]
      %v1433 = vld [vmem:[%s1430 + $0x8] sm:$0xf]
      %v1434 = vld [vmem:[%s1430 + $0xc] sm:$0xf]
      %v1435 = vld [vmem:[%s1430 + $0x10] sm:$0xf]
      %v1436 = vld [vmem:[%s1430 + $0x14] sm:$0xf]
      %v1437 = vld [vmem:[%s1430 + $0x18] sm:$0xf]
      %v1438 = vld [vmem:[%s1430 + $0x1c] sm:$0xf]
      %v1439 = vunpack.c.l.b16 %v1321
      %v1440 = vunpack.c.l.b16 %v1324
      %v1441 = vunpack.c.l.b16 %v1328
      %v1442 = vunpack.c.l.b16 %v1331
      %v1443 = vunpack.c.l.b16 %v1335
      %v1444 = vunpack.c.l.b16 %v1338
      %v1445 = vunpack.c.l.b16 %v1342
      %v1446 = vunpack.c.l.b16 %v1345
      %v1447 = vunpack.c.l.b16 %v1349
      %v1448 = vunpack.c.l.b16 %v1352
      %v1449 = vunpack.c.l.b16 %v1356
      %v1450 = vunpack.c.l.b16 %v1359
      %v1451 = vunpack.c.l.b16 %v1363
      %v1452 = vunpack.c.l.b16 %v1366
      %v1453 = vunpack.c.l.b16 %v1370
      %v1454 = vunpack.c.l.b16 %v1373
      %v1455 = vunpack.c.l.b16 %v1377
      %v1456 = vunpack.c.l.b16 %v1380
      %v1457 = vunpack.c.l.b16 %v1384
      %v1458 = vunpack.c.l.b16 %v1387
      %v1459 = vunpack.c.l.b16 %v1391
      %v1460 = vunpack.c.l.b16 %v1394
      %v1461 = vunpack.c.l.b16 %v1398
      %v1462 = vunpack.c.l.b16 %v1401
      %v1463 = vunpack.c.l.b16 %v1405
      %v1464 = vunpack.c.l.b16 %v1408
      %v1465 = vunpack.c.l.b16 %v1412
      %v1466 = vunpack.c.l.b16 %v1415
      %v1467 = vunpack.c.l.b16 %v1419
      %v1468 = vunpack.c.l.b16 %v1422
      %v1469 = vunpack.c.l.b16 %v1426
      %v1470 = vunpack.c.l.b16 %v1429
      %v1471 = vpack.c.b16 %v1440, %v1439
      %v1472 = vpack.c.b16 %v1442, %v1441
      %v1473 = vpack.c.b16 %v1444, %v1443
      %v1474 = vpack.c.b16 %v1446, %v1445
      %v1475 = vpack.c.b16 %v1448, %v1447
      %v1476 = vpack.c.b16 %v1450, %v1449
      %v1477 = vpack.c.b16 %v1452, %v1451
      %v1478 = vpack.c.b16 %v1454, %v1453
      %v1479 = vpack.c.b16 %v1456, %v1455
      %v1480 = vpack.c.b16 %v1458, %v1457
      %v1481 = vpack.c.b16 %v1460, %v1459
      %v1482 = vpack.c.b16 %v1462, %v1461
      %v1483 = vpack.c.b16 %v1464, %v1463
      %v1484 = vpack.c.b16 %v1466, %v1465
      %v1485 = vpack.c.b16 %v1468, %v1467
      %v1486 = vpack.c.b16 %v1470, %v1469
      %v1495 = vunpack.c.l.b16 %v1431
      %v1496 = vunpack.c.l.b16 %v1432
      %v1497 = vunpack.c.l.b16 %v1433
      %v1498 = vunpack.c.l.b16 %v1434
      %v1499 = vunpack.c.l.b16 %v1435
      %v1500 = vunpack.c.l.b16 %v1436
      %v1501 = vunpack.c.l.b16 %v1437
      %v1502 = vunpack.c.l.b16 %v1438
      %v1503 = vpack.c.b16 %v1496, %v1495
      %v1504 = vpack.c.b16 %v1498, %v1497
      %v1505 = vpack.c.b16 %v1500, %v1499
      %v1506 = vpack.c.b16 %v1502, %v1501
      %v1512 = vsel %vm744, %v1471, 0
      %v1515 = vsel %vm744, %v1472, 0
      %v1518 = vsel %vm744, %v1473, 0
      %v1521 = vsel %vm744, %v1474, 0
      %v1524 = vsel %vm744, %v1475, 0
      %v1527 = vsel %vm744, %v1476, 0
      %v1530 = vsel %vm744, %v1477, 0
      %v1533 = vsel %vm744, %v1478, 0
      %v1536 = vsel %vm744, %v1479, 0
      %v1539 = vsel %vm744, %v1480, 0
      %v1542 = vsel %vm744, %v1481, 0
      %v1545 = vsel %vm744, %v1482, 0
      %v1548 = vsel %vm744, %v1483, 0
      %v1551 = vsel %vm744, %v1484, 0
      %v1554 = vsel %vm744, %v1485, 0
      %v1557 = vsel %vm744, %v1486, 0
      %1559 = vmatprep.subr.bf16.mxu0 0
      %1560 = vmatpush1.bf16.msra.mxu0 %v1503
      %1561 = vmatprep.subr.bf16.mxu0 0
      %1562 = vmatpush1.bf16.msra.mxu0 %v1504
      %1563 = vmatprep.subr.bf16.mxu0 0
      %1564 = vmatpush1.bf16.msra.mxu0 %v1505
      %1565 = vmatprep.subr.bf16.mxu0 0
      %1566 = vmatpush1.bf16.msra.mxu0 %v1506
      %1567 = vmatprep.subr.bf16.mxu0 0
      %1568 = vmatpush1.bf16.msra.mxu0 0
      %1569 = vmatprep.subr.bf16.mxu0 0
      %1570 = vmatpush1.bf16.msra.mxu0 0
      %1571 = vmatprep.subr.bf16.mxu0 0
      %1572 = vmatpush1.bf16.msra.mxu0 0
      %1573 = vmatprep.subr.bf16.mxu0 0
      %1574 = vmatpush1.bf16.msra.mxu0 0
      %1575 = vmatprep.subr.bf16.mxu0 0
      %1576 = vmatpush1.bf16.msra.mxu0 0
      %1577 = vmatprep.subr.bf16.mxu0 0
      %1578 = vmatpush1.bf16.msra.mxu0 0
      %1579 = vmatprep.subr.bf16.mxu0 0
      %1580 = vmatpush1.bf16.msra.mxu0 0
      %1581 = vmatprep.subr.bf16.mxu0 0
      %1582 = vmatpush1.bf16.msra.mxu0 0
      %1583 = vmatprep.subr.bf16.mxu0 0
      %1584 = vmatpush1.bf16.msra.mxu0 0
      %1585 = vmatprep.subr.bf16.mxu0 0
      %1586 = vmatpush1.bf16.msra.mxu0 0
      %1587 = vmatprep.subr.bf16.mxu0 0
      %1588 = vmatpush1.bf16.msra.mxu0 0
      %1589 = vmatprep.subr.bf16.mxu0 0
      %1590 = vmatpush1.bf16.msra.mxu0 0
      %1591 = vmatprep.mubr.bf16.mxu0 0
      %1592 = vmatmul.mubr.bf16.gmra.mrb[0].mxu0 %v1512
      %v1593 = vpop.f32.mrb[0].mxu0
      %v1594 = vadd.f32 0.0, %v1593
      %v1595 = vpop.f32.mrb[0].mxu0
      %v1596 = vpop.f32.mrb[0].mxu0
      %v1597 = vadd.f32 0.0, %v1596
      %v1598 = vpop.f32.mrb[0].mxu0
      %1599 = vmatprep.mubr.bf16.mxu0 0
      %1600 = vmatmul.mubr.bf16.gmra.mrb[0].mxu0 %v1515
      %v1601 = vpop.f32.mrb[0].mxu0
      %v1602 = vadd.f32 0.0, %v1601
      %v1603 = vpop.f32.mrb[0].mxu0
      %v1604 = vpop.f32.mrb[0].mxu0
      %v1605 = vadd.f32 0.0, %v1604
      %v1606 = vpop.f32.mrb[0].mxu0
      %1607 = vmatprep.mubr.bf16.mxu0 0
      %1608 = vmatmul.mubr.bf16.gmra.mrb[0].mxu0 %v1518
      %v1609 = vpop.f32.mrb[0].mxu0
      %v1610 = vadd.f32 0.0, %v1609
      %v1611 = vpop.f32.mrb[0].mxu0
      %v1612 = vpop.f32.mrb[0].mxu0
      %v1613 = vadd.f32 0.0, %v1612
      %v1614 = vpop.f32.mrb[0].mxu0
      %1615 = vmatprep.mubr.bf16.mxu0 0
      %1616 = vmatmul.mubr.bf16.gmra.mrb[0].mxu0 %v1521
      %v1617 = vpop.f32.mrb[0].mxu0
      %v1618 = vadd.f32 0.0, %v1617
      %v1619 = vpop.f32.mrb[0].mxu0
      %v1620 = vpop.f32.mrb[0].mxu0
      %v1621 = vadd.f32 0.0, %v1620
      %v1622 = vpop.f32.mrb[0].mxu0
      %1623 = vmatprep.mubr.bf16.mxu0 0
      %1624 = vmatmul.mubr.bf16.gmra.mrb[0].mxu0 %v1524
      %v1625 = vpop.f32.mrb[0].mxu0
      %v1626 = vadd.f32 0.0, %v1625
      %v1627 = vpop.f32.mrb[0].mxu0
      %v1628 = vpop.f32.mrb[0].mxu0
      %v1629 = vadd.f32 0.0, %v1628
      %v1630 = vpop.f32.mrb[0].mxu0
      %1631 = vmatprep.mubr.bf16.mxu0 0
      %1632 = vmatmul.mubr.bf16.gmra.mrb[0].mxu0 %v1527
      %v1633 = vpop.f32.mrb[0].mxu0
      %v1634 = vadd.f32 0.0, %v1633
      %v1635 = vpop.f32.mrb[0].mxu0
      %v1636 = vpop.f32.mrb[0].mxu0
      %v1637 = vadd.f32 0.0, %v1636
      %v1638 = vpop.f32.mrb[0].mxu0
      %1639 = vmatprep.mubr.bf16.mxu0 0
      %1640 = vmatmul.mubr.bf16.gmra.mrb[0].mxu0 %v1530
      %v1641 = vpop.f32.mrb[0].mxu0
      %v1642 = vadd.f32 0.0, %v1641
      %v1643 = vpop.f32.mrb[0].mxu0
      %v1644 = vpop.f32.mrb[0].mxu0
      %v1645 = vadd.f32 0.0, %v1644
      %v1646 = vpop.f32.mrb[0].mxu0
      %1647 = vmatprep.mubr.bf16.mxu0 0
      %1648 = vmatmul.mubr.bf16.gmra.mrb[0].mxu0 %v1533
      %v1649 = vpop.f32.mrb[0].mxu0
      %v1650 = vadd.f32 0.0, %v1649
      %v1651 = vpop.f32.mrb[0].mxu0
      %v1652 = vpop.f32.mrb[0].mxu0
      %v1653 = vadd.f32 0.0, %v1652
      %v1654 = vpop.f32.mrb[0].mxu0
      %1655 = vmatprep.mubr.bf16.mxu0 0
      %1656 = vmatmul.mubr.bf16.gmra.mrb[0].mxu0 %v1536
      %v1657 = vpop.f32.mrb[0].mxu0
      %v1658 = vadd.f32 0.0, %v1657
      %v1659 = vpop.f32.mrb[0].mxu0
      %v1660 = vpop.f32.mrb[0].mxu0
      %v1661 = vadd.f32 0.0, %v1660
      %v1662 = vpop.f32.mrb[0].mxu0
      %1663 = vmatprep.mubr.bf16.mxu0 0
      %1664 = vmatmul.mubr.bf16.gmra.mrb[0].mxu0 %v1539
      %v1665 = vpop.f32.mrb[0].mxu0
      %v1666 = vadd.f32 0.0, %v1665
      %v1667 = vpop.f32.mrb[0].mxu0
      %v1668 = vpop.f32.mrb[0].mxu0
      %v1669 = vadd.f32 0.0, %v1668
      %v1670 = vpop.f32.mrb[0].mxu0
      %1671 = vmatprep.mubr.bf16.mxu0 0
      %1672 = vmatmul.mubr.bf16.gmra.mrb[0].mxu0 %v1542
      %v1673 = vpop.f32.mrb[0].mxu0
      %v1674 = vadd.f32 0.0, %v1673
      %v1675 = vpop.f32.mrb[0].mxu0
      %v1676 = vpop.f32.mrb[0].mxu0
      %v1677 = vadd.f32 0.0, %v1676
      %v1678 = vpop.f32.mrb[0].mxu0
      %1679 = vmatprep.mubr.bf16.mxu0 0
      %1680 = vmatmul.mubr.bf16.gmra.mrb[0].mxu0 %v1545
      %v1681 = vpop.f32.mrb[0].mxu0
      %v1682 = vadd.f32 0.0, %v1681
      %v1683 = vpop.f32.mrb[0].mxu0
      %v1684 = vpop.f32.mrb[0].mxu0
      %v1685 = vadd.f32 0.0, %v1684
      %v1686 = vpop.f32.mrb[0].mxu0
      %1687 = vmatprep.mubr.bf16.mxu0 0
      %1688 = vmatmul.mubr.bf16.gmra.mrb[0].mxu0 %v1548
      %v1689 = vpop.f32.mrb[0].mxu0
      %v1690 = vadd.f32 0.0, %v1689
      %v1691 = vpop.f32.mrb[0].mxu0
      %v1692 = vpop.f32.mrb[0].mxu0
      %v1693 = vadd.f32 0.0, %v1692
      %v1694 = vpop.f32.mrb[0].mxu0
      %1695 = vmatprep.mubr.bf16.mxu0 0
      %1696 = vmatmul.mubr.bf16.gmra.mrb[0].mxu0 %v1551
      %v1697 = vpop.f32.mrb[0].mxu0
      %v1698 = vadd.f32 0.0, %v1697
      %v1699 = vpop.f32.mrb[0].mxu0
      %v1700 = vpop.f32.mrb[0].mxu0
      %v1701 = vadd.f32 0.0, %v1700
      %v1702 = vpop.f32.mrb[0].mxu0
      %1703 = vmatprep.mubr.bf16.mxu0 0
      %1704 = vmatmul.mubr.bf16.gmra.mrb[0].mxu0 %v1554
      %v1705 = vpop.f32.mrb[0].mxu0
      %v1706 = vadd.f32 0.0, %v1705
      %v1707 = vpop.f32.mrb[0].mxu0
      %v1708 = vpop.f32.mrb[0].mxu0
      %v1709 = vadd.f32 0.0, %v1708
      %v1710 = vpop.f32.mrb[0].mxu0
      %1711 = vmatprep.mubr.bf16.mxu0 0
      %1712 = vmatmul.mubr.bf16.gmra.mrb[0].mxu0 %v1557
      %v1713 = vpop.f32.mrb[0].mxu0
      %v1714 = vadd.f32 0.0, %v1713
      %v1715 = vpop.f32.mrb[0].mxu0
      %v1716 = vpop.f32.mrb[0].mxu0
      %v1717 = vadd.f32 0.0, %v1716
      %v1718 = vpop.f32.mrb[0].mxu0
      %1719 = vdwg.mxu0
      %v1720 = vadd.f32 %v1141, %v1594
      %v1721 = vadd.f32 %v1144, %v1597
      %v1722 = vadd.f32 %v1149, %v1602
      %v1723 = vadd.f32 %v1152, %v1605
      %v1724 = vadd.f32 %v1157, %v1610
      %v1725 = vadd.f32 %v1160, %v1613
      %v1726 = vadd.f32 %v1165, %v1618
      %v1727 = vadd.f32 %v1168, %v1621
      %v1728 = vadd.f32 %v1173, %v1626
      %v1729 = vadd.f32 %v1176, %v1629
      %v1730 = vadd.f32 %v1181, %v1634
      %v1731 = vadd.f32 %v1184, %v1637
      %v1732 = vadd.f32 %v1189, %v1642
      %v1733 = vadd.f32 %v1192, %v1645
      %v1734 = vadd.f32 %v1197, %v1650
      %v1735 = vadd.f32 %v1200, %v1653
      %v1736 = vadd.f32 %v1205, %v1658
      %v1737 = vadd.f32 %v1208, %v1661
      %v1738 = vadd.f32 %v1213, %v1666
      %v1739 = vadd.f32 %v1216, %v1669
      %v1740 = vadd.f32 %v1221, %v1674
      %v1741 = vadd.f32 %v1224, %v1677
      %v1742 = vadd.f32 %v1229, %v1682
      %v1743 = vadd.f32 %v1232, %v1685
      %v1744 = vadd.f32 %v1237, %v1690
      %v1745 = vadd.f32 %v1240, %v1693
      %v1746 = vadd.f32 %v1245, %v1698
      %v1747 = vadd.f32 %v1248, %v1701
      %v1748 = vadd.f32 %v1253, %v1706
      %v1749 = vadd.f32 %v1256, %v1709
      %v1750 = vadd.f32 %v1261, %v1714
      %v1751 = vadd.f32 %v1264, %v1717
      %s1752 = scalar_lea.vmem %s205, 12
      %v1753 = vld [vmem:[%s1752] sm:$0xf]
      %v1754 = vld [vmem:[%s1752 + $0x4] sm:$0xf]
      %v1755 = vld [vmem:[%s1752 + $0xc] sm:$0xf]
      %v1756 = vld [vmem:[%s1752 + $0x10] sm:$0xf]
      %v1757 = vld [vmem:[%s1752 + $0x18] sm:$0xf]
      %v1758 = vld [vmem:[%s1752 + $0x1c] sm:$0xf]
      %v1759 = vld [vmem:[%s1752 + $0x24] sm:$0xf]
      %v1760 = vld [vmem:[%s1752 + $0x28] sm:$0xf]
      %v1761 = vld [vmem:[%s1752 + $0x30] sm:$0xf]
      %v1762 = vld [vmem:[%s1752 + $0x34] sm:$0xf]
      %v1763 = vld [vmem:[%s1752 + $0x3c] sm:$0xf]
      %v1764 = vld [vmem:[%s1752 + $0x40] sm:$0xf]
      %v1765 = vld [vmem:[%s1752 + $0x48] sm:$0xf]
      %v1766 = vld [vmem:[%s1752 + $0x4c] sm:$0xf]
      %v1767 = vld [vmem:[%s1752 + $0x54] sm:$0xf]
      %v1768 = vld [vmem:[%s1752 + $0x58] sm:$0xf]
      %v1769 = vld [vmem:[%s1752 + $0x60] sm:$0xf]
      %v1770 = vld [vmem:[%s1752 + $0x64] sm:$0xf]
      %v1771 = vld [vmem:[%s1752 + $0x6c] sm:$0xf]
      %v1772 = vld [vmem:[%s1752 + $0x70] sm:$0xf]
      %v1773 = vld [vmem:[%s1752 + $0x78] sm:$0xf]
      %v1774 = vld [vmem:[%s1752 + $0x7c] sm:$0xf]
      %v1775 = vld [vmem:[%s1752 + $0x84] sm:$0xf]
      %v1776 = vld [vmem:[%s1752 + $0x88] sm:$0xf]
      %v1777 = vld [vmem:[%s1752 + $0x90] sm:$0xf]
      %v1778 = vld [vmem:[%s1752 + $0x94] sm:$0xf]
      %v1779 = vld [vmem:[%s1752 + $0x9c] sm:$0xf]
      %v1780 = vld [vmem:[%s1752 + $0xa0] sm:$0xf]
      %v1781 = vld [vmem:[%s1752 + $0xa8] sm:$0xf]
      %v1782 = vld [vmem:[%s1752 + $0xac] sm:$0xf]
      %v1783 = vld [vmem:[%s1752 + $0xb4] sm:$0xf]
      %v1784 = vld [vmem:[%s1752 + $0xb8] sm:$0xf]
      %s1785 = scalar_lea.vmem %s1, 96
      %v1786 = vld [vmem:[%s1785] sm:$0xf]
      %v1787 = vld [vmem:[%s1785 + $0x4] sm:$0xf]
      %v1788 = vld [vmem:[%s1785 + $0x8] sm:$0xf]
      %v1789 = vld [vmem:[%s1785 + $0xc] sm:$0xf]
      %v1790 = vld [vmem:[%s1785 + $0x10] sm:$0xf]
      %v1791 = vld [vmem:[%s1785 + $0x14] sm:$0xf]
      %v1792 = vld [vmem:[%s1785 + $0x18] sm:$0xf]
      %v1793 = vld [vmem:[%s1785 + $0x1c] sm:$0xf]
      %v1826 = vunpack.c.l.b16 %v1753
      %v1827 = vunpack.c.l.b16 %v1754
      %v1828 = vunpack.c.l.b16 %v1755
      %v1829 = vunpack.c.l.b16 %v1756
      %v1830 = vunpack.c.l.b16 %v1757
      %v1831 = vunpack.c.l.b16 %v1758
      %v1832 = vunpack.c.l.b16 %v1759
      %v1833 = vunpack.c.l.b16 %v1760
      %v1834 = vunpack.c.l.b16 %v1761
      %v1835 = vunpack.c.l.b16 %v1762
      %v1836 = vunpack.c.l.b16 %v1763
      %v1837 = vunpack.c.l.b16 %v1764
      %v1838 = vunpack.c.l.b16 %v1765
      %v1839 = vunpack.c.l.b16 %v1766
      %v1840 = vunpack.c.l.b16 %v1767
      %v1841 = vunpack.c.l.b16 %v1768
      %v1842 = vunpack.c.l.b16 %v1769
      %v1843 = vunpack.c.l.b16 %v1770
      %v1844 = vunpack.c.l.b16 %v1771
      %v1845 = vunpack.c.l.b16 %v1772
      %v1846 = vunpack.c.l.b16 %v1773
      %v1847 = vunpack.c.l.b16 %v1774
      %v1848 = vunpack.c.l.b16 %v1775
      %v1849 = vunpack.c.l.b16 %v1776
      %v1850 = vunpack.c.l.b16 %v1777
      %v1851 = vunpack.c.l.b16 %v1778
      %v1852 = vunpack.c.l.b16 %v1779
      %v1853 = vunpack.c.l.b16 %v1780
      %v1854 = vunpack.c.l.b16 %v1781
      %v1855 = vunpack.c.l.b16 %v1782
      %v1856 = vunpack.c.l.b16 %v1783
      %v1857 = vunpack.c.l.b16 %v1784
      %v1858 = vpack.c.b16 %v1827, %v1826
      %v1859 = vpack.c.b16 %v1829, %v1828
      %v1860 = vpack.c.b16 %v1831, %v1830
      %v1861 = vpack.c.b16 %v1833, %v1832
      %v1862 = vpack.c.b16 %v1835, %v1834
      %v1863 = vpack.c.b16 %v1837, %v1836
      %v1864 = vpack.c.b16 %v1839, %v1838
      %v1865 = vpack.c.b16 %v1841, %v1840
      %v1866 = vpack.c.b16 %v1843, %v1842
      %v1867 = vpack.c.b16 %v1845, %v1844
      %v1868 = vpack.c.b16 %v1847, %v1846
      %v1869 = vpack.c.b16 %v1849, %v1848
      %v1870 = vpack.c.b16 %v1851, %v1850
      %v1871 = vpack.c.b16 %v1853, %v1852
      %v1872 = vpack.c.b16 %v1855, %v1854
      %v1873 = vpack.c.b16 %v1857, %v1856
      %v1882 = vunpack.c.l.b16 %v1786
      %v1883 = vunpack.c.l.b16 %v1787
      %v1884 = vunpack.c.l.b16 %v1788
      %v1885 = vunpack.c.l.b16 %v1789
      %v1886 = vunpack.c.l.b16 %v1790
      %v1887 = vunpack.c.l.b16 %v1791
      %v1888 = vunpack.c.l.b16 %v1792
      %v1889 = vunpack.c.l.b16 %v1793
      %v1890 = vpack.c.b16 %v1883, %v1882
      %v1891 = vpack.c.b16 %v1885, %v1884
      %v1892 = vpack.c.b16 %v1887, %v1886
      %v1893 = vpack.c.b16 %v1889, %v1888
      %v1899 = vsel %vm744, %v1858, 0
      %v1902 = vsel %vm744, %v1859, 0
      %v1905 = vsel %vm744, %v1860, 0
      %v1908 = vsel %vm744, %v1861, 0
      %v1911 = vsel %vm744, %v1862, 0
      %v1914 = vsel %vm744, %v1863, 0
      %v1917 = vsel %vm744, %v1864, 0
      %v1920 = vsel %vm744, %v1865, 0
      %v1923 = vsel %vm744, %v1866, 0
      %v1926 = vsel %vm744, %v1867, 0
      %v1929 = vsel %vm744, %v1868, 0
      %v1932 = vsel %vm744, %v1869, 0
      %v1935 = vsel %vm744, %v1870, 0
      %v1938 = vsel %vm744, %v1871, 0
      %v1941 = vsel %vm744, %v1872, 0
      %v1944 = vsel %vm744, %v1873, 0
      %1946 = vmatprep.subr.bf16.mxu0 0
      %1947 = vmatpush1.bf16.msra.mxu0 %v1890
      %1948 = vmatprep.subr.bf16.mxu0 0
      %1949 = vmatpush1.bf16.msra.mxu0 %v1891
      %1950 = vmatprep.subr.bf16.mxu0 0
      %1951 = vmatpush1.bf16.msra.mxu0 %v1892
      %1952 = vmatprep.subr.bf16.mxu0 0
      %1953 = vmatpush1.bf16.msra.mxu0 %v1893
      %1954 = vmatprep.subr.bf16.mxu0 0
      %1955 = vmatpush1.bf16.msra.mxu0 0
      %1956 = vmatprep.subr.bf16.mxu0 0
      %1957 = vmatpush1.bf16.msra.mxu0 0
      %1958 = vmatprep.subr.bf16.mxu0 0
      %1959 = vmatpush1.bf16.msra.mxu0 0
      %1960 = vmatprep.subr.bf16.mxu0 0
      %1961 = vmatpush1.bf16.msra.mxu0 0
      %1962 = vmatprep.subr.bf16.mxu0 0
      %1963 = vmatpush1.bf16.msra.mxu0 0
      %1964 = vmatprep.subr.bf16.mxu0 0
      %1965 = vmatpush1.bf16.msra.mxu0 0
      %1966 = vmatprep.subr.bf16.mxu0 0
      %1967 = vmatpush1.bf16.msra.mxu0 0
      %1968 = vmatprep.subr.bf16.mxu0 0
      %1969 = vmatpush1.bf16.msra.mxu0 0
      %1970 = vmatprep.subr.bf16.mxu0 0
      %1971 = vmatpush1.bf16.msra.mxu0 0
      %1972 = vmatprep.subr.bf16.mxu0 0
      %1973 = vmatpush1.bf16.msra.mxu0 0
      %1974 = vmatprep.subr.bf16.mxu0 0
      %1975 = vmatpush1.bf16.msra.mxu0 0
      %1976 = vmatprep.subr.bf16.mxu0 0
      %1977 = vmatpush1.bf16.msra.mxu0 0
      %1978 = vmatprep.mubr.bf16.mxu0 0
      %1979 = vmatmul.mubr.bf16.gmra.mrb[0].mxu0 %v1899
      %v1980 = vpop.f32.mrb[0].mxu0
      %v1981 = vadd.f32 0.0, %v1980
      %v1982 = vpop.f32.mrb[0].mxu0
      %v1983 = vpop.f32.mrb[0].mxu0
      %v1984 = vadd.f32 0.0, %v1983
      %v1985 = vpop.f32.mrb[0].mxu0
      %1986 = vmatprep.mubr.bf16.mxu0 0
      %1987 = vmatmul.mubr.bf16.gmra.mrb[0].mxu0 %v1902
      %v1988 = vpop.f32.mrb[0].mxu0
      %v1989 = vadd.f32 0.0, %v1988
      %v1990 = vpop.f32.mrb[0].mxu0
      %v1991 = vpop.f32.mrb[0].mxu0
      %v1992 = vadd.f32 0.0, %v1991
      %v1993 = vpop.f32.mrb[0].mxu0
      %1994 = vmatprep.mubr.bf16.mxu0 0
      %1995 = vmatmul.mubr.bf16.gmra.mrb[0].mxu0 %v1905
      %v1996 = vpop.f32.mrb[0].mxu0
      %v1997 = vadd.f32 0.0, %v1996
      %v1998 = vpop.f32.mrb[0].mxu0
      %v1999 = vpop.f32.mrb[0].mxu0
      %v2000 = vadd.f32 0.0, %v1999
      %v2001 = vpop.f32.mrb[0].mxu0
      %2002 = vmatprep.mubr.bf16.mxu0 0
      %2003 = vmatmul.mubr.bf16.gmra.mrb[0].mxu0 %v1908
      %v2004 = vpop.f32.mrb[0].mxu0
      %v2005 = vadd.f32 0.0, %v2004
      %v2006 = vpop.f32.mrb[0].mxu0
      %v2007 = vpop.f32.mrb[0].mxu0
      %v2008 = vadd.f32 0.0, %v2007
      %v2009 = vpop.f32.mrb[0].mxu0
      %2010 = vmatprep.mubr.bf16.mxu0 0
      %2011 = vmatmul.mubr.bf16.gmra.mrb[0].mxu0 %v1911
      %v2012 = vpop.f32.mrb[0].mxu0
      %v2013 = vadd.f32 0.0, %v2012
      %v2014 = vpop.f32.mrb[0].mxu0
      %v2015 = vpop.f32.mrb[0].mxu0
      %v2016 = vadd.f32 0.0, %v2015
      %v2017 = vpop.f32.mrb[0].mxu0
      %2018 = vmatprep.mubr.bf16.mxu0 0
      %2019 = vmatmul.mubr.bf16.gmra.mrb[0].mxu0 %v1914
      %v2020 = vpop.f32.mrb[0].mxu0
      %v2021 = vadd.f32 0.0, %v2020
      %v2022 = vpop.f32.mrb[0].mxu0
      %v2023 = vpop.f32.mrb[0].mxu0
      %v2024 = vadd.f32 0.0, %v2023
      %v2025 = vpop.f32.mrb[0].mxu0
      %2026 = vmatprep.mubr.bf16.mxu0 0
      %2027 = vmatmul.mubr.bf16.gmra.mrb[0].mxu0 %v1917
      %v2028 = vpop.f32.mrb[0].mxu0
      %v2029 = vadd.f32 0.0, %v2028
      %v2030 = vpop.f32.mrb[0].mxu0
      %v2031 = vpop.f32.mrb[0].mxu0
      %v2032 = vadd.f32 0.0, %v2031
      %v2033 = vpop.f32.mrb[0].mxu0
      %2034 = vmatprep.mubr.bf16.mxu0 0
      %2035 = vmatmul.mubr.bf16.gmra.mrb[0].mxu0 %v1920
      %v2036 = vpop.f32.mrb[0].mxu0
      %v2037 = vadd.f32 0.0, %v2036
      %v2038 = vpop.f32.mrb[0].mxu0
      %v2039 = vpop.f32.mrb[0].mxu0
      %v2040 = vadd.f32 0.0, %v2039
      %v2041 = vpop.f32.mrb[0].mxu0
      %2042 = vmatprep.mubr.bf16.mxu0 0
      %2043 = vmatmul.mubr.bf16.gmra.mrb[0].mxu0 %v1923
      %v2044 = vpop.f32.mrb[0].mxu0
      %v2045 = vadd.f32 0.0, %v2044
      %v2046 = vpop.f32.mrb[0].mxu0
      %v2047 = vpop.f32.mrb[0].mxu0
      %v2048 = vadd.f32 0.0, %v2047
      %v2049 = vpop.f32.mrb[0].mxu0
      %2050 = vmatprep.mubr.bf16.mxu0 0
      %2051 = vmatmul.mubr.bf16.gmra.mrb[0].mxu0 %v1926
      %v2052 = vpop.f32.mrb[0].mxu0
      %v2053 = vadd.f32 0.0, %v2052
      %v2054 = vpop.f32.mrb[0].mxu0
      %v2055 = vpop.f32.mrb[0].mxu0
      %v2056 = vadd.f32 0.0, %v2055
      %v2057 = vpop.f32.mrb[0].mxu0
      %2058 = vmatprep.mubr.bf16.mxu0 0
      %2059 = vmatmul.mubr.bf16.gmra.mrb[0].mxu0 %v1929
      %v2060 = vpop.f32.mrb[0].mxu0
      %v2061 = vadd.f32 0.0, %v2060
      %v2062 = vpop.f32.mrb[0].mxu0
      %v2063 = vpop.f32.mrb[0].mxu0
      %v2064 = vadd.f32 0.0, %v2063
      %v2065 = vpop.f32.mrb[0].mxu0
      %2066 = vmatprep.mubr.bf16.mxu0 0
      %2067 = vmatmul.mubr.bf16.gmra.mrb[0].mxu0 %v1932
      %v2068 = vpop.f32.mrb[0].mxu0
      %v2069 = vadd.f32 0.0, %v2068
      %v2070 = vpop.f32.mrb[0].mxu0
      %v2071 = vpop.f32.mrb[0].mxu0
      %v2072 = vadd.f32 0.0, %v2071
      %v2073 = vpop.f32.mrb[0].mxu0
      %2074 = vmatprep.mubr.bf16.mxu0 0
      %2075 = vmatmul.mubr.bf16.gmra.mrb[0].mxu0 %v1935
      %v2076 = vpop.f32.mrb[0].mxu0
      %v2077 = vadd.f32 0.0, %v2076
      %v2078 = vpop.f32.mrb[0].mxu0
      %v2079 = vpop.f32.mrb[0].mxu0
      %v2080 = vadd.f32 0.0, %v2079
      %v2081 = vpop.f32.mrb[0].mxu0
      %2082 = vmatprep.mubr.bf16.mxu0 0
      %2083 = vmatmul.mubr.bf16.gmra.mrb[0].mxu0 %v1938
      %v2084 = vpop.f32.mrb[0].mxu0
      %v2085 = vadd.f32 0.0, %v2084
      %v2086 = vpop.f32.mrb[0].mxu0
      %v2087 = vpop.f32.mrb[0].mxu0
      %v2088 = vadd.f32 0.0, %v2087
      %v2089 = vpop.f32.mrb[0].mxu0
      %2090 = vmatprep.mubr.bf16.mxu0 0
      %2091 = vmatmul.mubr.bf16.gmra.mrb[0].mxu0 %v1941
      %v2092 = vpop.f32.mrb[0].mxu0
      %v2093 = vadd.f32 0.0, %v2092
      %v2094 = vpop.f32.mrb[0].mxu0
      %v2095 = vpop.f32.mrb[0].mxu0
      %v2096 = vadd.f32 0.0, %v2095
      %v2097 = vpop.f32.mrb[0].mxu0
      %2098 = vmatprep.mubr.bf16.mxu0 0
      %2099 = vmatmul.mubr.bf16.gmra.mrb[0].mxu0 %v1944
      %v2100 = vpop.f32.mrb[0].mxu0
      %v2101 = vadd.f32 0.0, %v2100
      %v2102 = vpop.f32.mrb[0].mxu0
      %v2103 = vpop.f32.mrb[0].mxu0
      %v2104 = vadd.f32 0.0, %v2103
      %v2105 = vpop.f32.mrb[0].mxu0
      %2106 = vdwg.mxu0
      %v2107 = vadd.f32 %v1720, %v1981
      %v2108 = vadd.f32 %v1721, %v1984
      %v2109 = vadd.f32 %v1722, %v1989
      %v2110 = vadd.f32 %v1723, %v1992
      %v2111 = vadd.f32 %v1724, %v1997
      %v2112 = vadd.f32 %v1725, %v2000
      %v2113 = vadd.f32 %v1726, %v2005
      %v2114 = vadd.f32 %v1727, %v2008
      %v2115 = vadd.f32 %v1728, %v2013
      %v2116 = vadd.f32 %v1729, %v2016
      %v2117 = vadd.f32 %v1730, %v2021
      %v2118 = vadd.f32 %v1731, %v2024
      %v2119 = vadd.f32 %v1732, %v2029
      %v2120 = vadd.f32 %v1733, %v2032
      %v2121 = vadd.f32 %v1734, %v2037
      %v2122 = vadd.f32 %v1735, %v2040
      %v2123 = vadd.f32 %v1736, %v2045
      %v2124 = vadd.f32 %v1737, %v2048
      %v2125 = vadd.f32 %v1738, %v2053
      %v2126 = vadd.f32 %v1739, %v2056
      %v2127 = vadd.f32 %v1740, %v2061
      %v2128 = vadd.f32 %v1741, %v2064
      %v2129 = vadd.f32 %v1742, %v2069
      %v2130 = vadd.f32 %v1743, %v2072
      %v2131 = vadd.f32 %v1744, %v2077
      %v2132 = vadd.f32 %v1745, %v2080
      %v2133 = vadd.f32 %v1746, %v2085
      %v2134 = vadd.f32 %v1747, %v2088
      %v2135 = vadd.f32 %v1748, %v2093
      %v2136 = vadd.f32 %v1749, %v2096
      %v2137 = vadd.f32 %v1750, %v2101
      %v2138 = vadd.f32 %v1751, %v2104
      %v2139 = vld [vmem:[%s1752] sm:$0xf]
      %v2140 = vld [vmem:[%s1752 + $0x4] sm:$0xf]
      %v2141 = vld [vmem:[%s1752 + $0x8] sm:$0x1]
      %v2142 = vld [vmem:[%s1752 + $0xc] sm:$0xf]
      %v2143 = vld [vmem:[%s1752 + $0x10] sm:$0xf]
      %v2144 = vld [vmem:[%s1752 + $0x14] sm:$0x1]
      %v2145 = vld [vmem:[%s1752 + $0x18] sm:$0xf]
      %v2146 = vld [vmem:[%s1752 + $0x1c] sm:$0xf]
      %v2147 = vld [vmem:[%s1752 + $0x20] sm:$0x1]
      %v2148 = vld [vmem:[%s1752 + $0x24] sm:$0xf]
      %v2149 = vld [vmem:[%s1752 + $0x28] sm:$0xf]
      %v2150 = vld [vmem:[%s1752 + $0x2c] sm:$0x1]
      %v2151 = vld [vmem:[%s1752 + $0x30] sm:$0xf]
      %v2152 = vld [vmem:[%s1752 + $0x34] sm:$0xf]
      %v2153 = vld [vmem:[%s1752 + $0x38] sm:$0x1]
      %v2154 = vld [vmem:[%s1752 + $0x3c] sm:$0xf]
      %v2155 = vld [vmem:[%s1752 + $0x40] sm:$0xf]
      %v2156 = vld [vmem:[%s1752 + $0x44] sm:$0x1]
      %v2157 = vld [vmem:[%s1752 + $0x48] sm:$0xf]
      %v2158 = vld [vmem:[%s1752 + $0x4c] sm:$0xf]
      %v2159 = vld [vmem:[%s1752 + $0x50] sm:$0x1]
      %v2160 = vld [vmem:[%s1752 + $0x54] sm:$0xf]
      %v2161 = vld [vmem:[%s1752 + $0x58] sm:$0xf]
      %v2162 = vld [vmem:[%s1752 + $0x5c] sm:$0x1]
      %v2163 = vld [vmem:[%s1752 + $0x60] sm:$0xf]
      %v2164 = vld [vmem:[%s1752 + $0x64] sm:$0xf]
      %v2165 = vld [vmem:[%s1752 + $0x68] sm:$0x1]
      %v2166 = vld [vmem:[%s1752 + $0x6c] sm:$0xf]
      %v2167 = vld [vmem:[%s1752 + $0x70] sm:$0xf]
      %v2168 = vld [vmem:[%s1752 + $0x74] sm:$0x1]
      %v2169 = vld [vmem:[%s1752 + $0x78] sm:$0xf]
      %v2170 = vld [vmem:[%s1752 + $0x7c] sm:$0xf]
      %v2171 = vld [vmem:[%s1752 + $0x80] sm:$0x1]
      %v2172 = vld [vmem:[%s1752 + $0x84] sm:$0xf]
      %v2173 = vld [vmem:[%s1752 + $0x88] sm:$0xf]
      %v2174 = vld [vmem:[%s1752 + $0x8c] sm:$0x1]
      %v2175 = vld [vmem:[%s1752 + $0x90] sm:$0xf]
      %v2176 = vld [vmem:[%s1752 + $0x94] sm:$0xf]
      %v2177 = vld [vmem:[%s1752 + $0x98] sm:$0x1]
      %v2178 = vld [vmem:[%s1752 + $0x9c] sm:$0xf]
      %v2179 = vld [vmem:[%s1752 + $0xa0] sm:$0xf]
      %v2180 = vld [vmem:[%s1752 + $0xa4] sm:$0x1]
      %v2181 = vld [vmem:[%s1752 + $0xa8] sm:$0xf]
      %v2182 = vld [vmem:[%s1752 + $0xac] sm:$0xf]
      %v2183 = vld [vmem:[%s1752 + $0xb0] sm:$0x1]
      %v2184 = vld [vmem:[%s1752 + $0xb4] sm:$0xf]
      %v2185 = vld [vmem:[%s1752 + $0xb8] sm:$0xf]
      %v2186 = vld [vmem:[%s1752 + $0xbc] sm:$0x1]
      %v2188 = vshrl.u32 %v2139, 16
      %v2190 = vrot.slane %v2188, 4
      %v2191 = vshll.u32 %v2139, 16
      %v2193 = vrot.slane %v2191, 5
      %v2194 = vor.u32 %v2190, %v2193
      %v2195 = vrot.slane %v2194, 4
      %v2197 = vshll.u32 %v2140, 16
      %v2199 = vrot.slane %v2197, 5
      %v2200 = vsel %vm278, %v2195, %v2199
      %v2201 = vshrl.u32 %v2140, 16
      %v2203 = vrot.slane %v2201, 4
      %v2204 = vor.u32 %v2203, %v2199
      %v2205 = vrot.slane %v2204, 4
      %v2207 = vshll.u32 %v2141, 16
      %v2209 = vrot.slane %v2207, 5
      %v2210 = vsel %vm278, %v2205, %v2209
      %v2212 = vshrl.u32 %v2142, 16
      %v2214 = vrot.slane %v2212, 4
      %v2215 = vshll.u32 %v2142, 16
      %v2217 = vrot.slane %v2215, 5
      %v2218 = vor.u32 %v2214, %v2217
      %v2219 = vrot.slane %v2218, 4
      %v2221 = vshll.u32 %v2143, 16
      %v2223 = vrot.slane %v2221, 5
      %v2224 = vsel %vm278, %v2219, %v2223
      %v2225 = vshrl.u32 %v2143, 16
      %v2227 = vrot.slane %v2225, 4
      %v2228 = vor.u32 %v2227, %v2223
      %v2229 = vrot.slane %v2228, 4
      %v2231 = vshll.u32 %v2144, 16
      %v2233 = vrot.slane %v2231, 5
      %v2234 = vsel %vm278, %v2229, %v2233
      %v2236 = vshrl.u32 %v2145, 16
      %v2238 = vrot.slane %v2236, 4
      %v2239 = vshll.u32 %v2145, 16
      %v2241 = vrot.slane %v2239, 5
      %v2242 = vor.u32 %v2238, %v2241
      %v2243 = vrot.slane %v2242, 4
      %v2245 = vshll.u32 %v2146, 16
      %v2247 = vrot.slane %v2245, 5
      %v2248 = vsel %vm278, %v2243, %v2247
      %v2249 = vshrl.u32 %v2146, 16
      %v2251 = vrot.slane %v2249, 4
      %v2252 = vor.u32 %v2251, %v2247
      %v2253 = vrot.slane %v2252, 4
      %v2255 = vshll.u32 %v2147, 16
      %v2257 = vrot.slane %v2255, 5
      %v2258 = vsel %vm278, %v2253, %v2257
      %v2260 = vshrl.u32 %v2148, 16
      %v2262 = vrot.slane %v2260, 4
      %v2263 = vshll.u32 %v2148, 16
      %v2265 = vrot.slane %v2263, 5
      %v2266 = vor.u32 %v2262, %v2265
      %v2267 = vrot.slane %v2266, 4
      %v2269 = vshll.u32 %v2149, 16
      %v2271 = vrot.slane %v2269, 5
      %v2272 = vsel %vm278, %v2267, %v2271
      %v2273 = vshrl.u32 %v2149, 16
      %v2275 = vrot.slane %v2273, 4
      %v2276 = vor.u32 %v2275, %v2271
      %v2277 = vrot.slane %v2276, 4
      %v2279 = vshll.u32 %v2150, 16
      %v2281 = vrot.slane %v2279, 5
      %v2282 = vsel %vm278, %v2277, %v2281
      %v2284 = vshrl.u32 %v2151, 16
      %v2286 = vrot.slane %v2284, 4
      %v2287 = vshll.u32 %v2151, 16
      %v2289 = vrot.slane %v2287, 5
      %v2290 = vor.u32 %v2286, %v2289
      %v2291 = vrot.slane %v2290, 4
      %v2293 = vshll.u32 %v2152, 16
      %v2295 = vrot.slane %v2293, 5
      %v2296 = vsel %vm278, %v2291, %v2295
      %v2297 = vshrl.u32 %v2152, 16
      %v2299 = vrot.slane %v2297, 4
      %v2300 = vor.u32 %v2299, %v2295
      %v2301 = vrot.slane %v2300, 4
      %v2303 = vshll.u32 %v2153, 16
      %v2305 = vrot.slane %v2303, 5
      %v2306 = vsel %vm278, %v2301, %v2305
      %v2308 = vshrl.u32 %v2154, 16
      %v2310 = vrot.slane %v2308, 4
      %v2311 = vshll.u32 %v2154, 16
      %v2313 = vrot.slane %v2311, 5
      %v2314 = vor.u32 %v2310, %v2313
      %v2315 = vrot.slane %v2314, 4
      %v2317 = vshll.u32 %v2155, 16
      %v2319 = vrot.slane %v2317, 5
      %v2320 = vsel %vm278, %v2315, %v2319
      %v2321 = vshrl.u32 %v2155, 16
      %v2323 = vrot.slane %v2321, 4
      %v2324 = vor.u32 %v2323, %v2319
      %v2325 = vrot.slane %v2324, 4
      %v2327 = vshll.u32 %v2156, 16
      %v2329 = vrot.slane %v2327, 5
      %v2330 = vsel %vm278, %v2325, %v2329
      %v2332 = vshrl.u32 %v2157, 16
      %v2334 = vrot.slane %v2332, 4
      %v2335 = vshll.u32 %v2157, 16
      %v2337 = vrot.slane %v2335, 5
      %v2338 = vor.u32 %v2334, %v2337
      %v2339 = vrot.slane %v2338, 4
      %v2341 = vshll.u32 %v2158, 16
      %v2343 = vrot.slane %v2341, 5
      %v2344 = vsel %vm278, %v2339, %v2343
      %v2345 = vshrl.u32 %v2158, 16
      %v2347 = vrot.slane %v2345, 4
      %v2348 = vor.u32 %v2347, %v2343
      %v2349 = vrot.slane %v2348, 4
      %v2351 = vshll.u32 %v2159, 16
      %v2353 = vrot.slane %v2351, 5
      %v2354 = vsel %vm278, %v2349, %v2353
      %v2356 = vshrl.u32 %v2160, 16
      %v2358 = vrot.slane %v2356, 4
      %v2359 = vshll.u32 %v2160, 16
      %v2361 = vrot.slane %v2359, 5
      %v2362 = vor.u32 %v2358, %v2361
      %v2363 = vrot.slane %v2362, 4
      %v2365 = vshll.u32 %v2161, 16
      %v2367 = vrot.slane %v2365, 5
      %v2368 = vsel %vm278, %v2363, %v2367
      %v2369 = vshrl.u32 %v2161, 16
      %v2371 = vrot.slane %v2369, 4
      %v2372 = vor.u32 %v2371, %v2367
      %v2373 = vrot.slane %v2372, 4
      %v2375 = vshll.u32 %v2162, 16
      %v2377 = vrot.slane %v2375, 5
      %v2378 = vsel %vm278, %v2373, %v2377
      %v2380 = vshrl.u32 %v2163, 16
      %v2382 = vrot.slane %v2380, 4
      %v2383 = vshll.u32 %v2163, 16
      %v2385 = vrot.slane %v2383, 5
      %v2386 = vor.u32 %v2382, %v2385
      %v2387 = vrot.slane %v2386, 4
      %v2389 = vshll.u32 %v2164, 16
      %v2391 = vrot.slane %v2389, 5
      %v2392 = vsel %vm278, %v2387, %v2391
      %v2393 = vshrl.u32 %v2164, 16
      %v2395 = vrot.slane %v2393, 4
      %v2396 = vor.u32 %v2395, %v2391
      %v2397 = vrot.slane %v2396, 4
      %v2399 = vshll.u32 %v2165, 16
      %v2401 = vrot.slane %v2399, 5
      %v2402 = vsel %vm278, %v2397, %v2401
      %v2404 = vshrl.u32 %v2166, 16
      %v2406 = vrot.slane %v2404, 4
      %v2407 = vshll.u32 %v2166, 16
      %v2409 = vrot.slane %v2407, 5
      %v2410 = vor.u32 %v2406, %v2409
      %v2411 = vrot.slane %v2410, 4
      %v2413 = vshll.u32 %v2167, 16
      %v2415 = vrot.slane %v2413, 5
      %v2416 = vsel %vm278, %v2411, %v2415
      %v2417 = vshrl.u32 %v2167, 16
      %v2419 = vrot.slane %v2417, 4
      %v2420 = vor.u32 %v2419, %v2415
      %v2421 = vrot.slane %v2420, 4
      %v2423 = vshll.u32 %v2168, 16
      %v2425 = vrot.slane %v2423, 5
      %v2426 = vsel %vm278, %v2421, %v2425
      %v2428 = vshrl.u32 %v2169, 16
      %v2430 = vrot.slane %v2428, 4
      %v2431 = vshll.u32 %v2169, 16
      %v2433 = vrot.slane %v2431, 5
      %v2434 = vor.u32 %v2430, %v2433
      %v2435 = vrot.slane %v2434, 4
      %v2437 = vshll.u32 %v2170, 16
      %v2439 = vrot.slane %v2437, 5
      %v2440 = vsel %vm278, %v2435, %v2439
      %v2441 = vshrl.u32 %v2170, 16
      %v2443 = vrot.slane %v2441, 4
      %v2444 = vor.u32 %v2443, %v2439
      %v2445 = vrot.slane %v2444, 4
      %v2447 = vshll.u32 %v2171, 16
      %v2449 = vrot.slane %v2447, 5
      %v2450 = vsel %vm278, %v2445, %v2449
      %v2452 = vshrl.u32 %v2172, 16
      %v2454 = vrot.slane %v2452, 4
      %v2455 = vshll.u32 %v2172, 16
      %v2457 = vrot.slane %v2455, 5
      %v2458 = vor.u32 %v2454, %v2457
      %v2459 = vrot.slane %v2458, 4
      %v2461 = vshll.u32 %v2173, 16
      %v2463 = vrot.slane %v2461, 5
      %v2464 = vsel %vm278, %v2459, %v2463
      %v2465 = vshrl.u32 %v2173, 16
      %v2467 = vrot.slane %v2465, 4
      %v2468 = vor.u32 %v2467, %v2463
      %v2469 = vrot.slane %v2468, 4
      %v2471 = vshll.u32 %v2174, 16
      %v2473 = vrot.slane %v2471, 5
      %v2474 = vsel %vm278, %v2469, %v2473
      %v2476 = vshrl.u32 %v2175, 16
      %v2478 = vrot.slane %v2476, 4
      %v2479 = vshll.u32 %v2175, 16
      %v2481 = vrot.slane %v2479, 5
      %v2482 = vor.u32 %v2478, %v2481
      %v2483 = vrot.slane %v2482, 4
      %v2485 = vshll.u32 %v2176, 16
      %v2487 = vrot.slane %v2485, 5
      %v2488 = vsel %vm278, %v2483, %v2487
      %v2489 = vshrl.u32 %v2176, 16
      %v2491 = vrot.slane %v2489, 4
      %v2492 = vor.u32 %v2491, %v2487
      %v2493 = vrot.slane %v2492, 4
      %v2495 = vshll.u32 %v2177, 16
      %v2497 = vrot.slane %v2495, 5
      %v2498 = vsel %vm278, %v2493, %v2497
      %v2500 = vshrl.u32 %v2178, 16
      %v2502 = vrot.slane %v2500, 4
      %v2503 = vshll.u32 %v2178, 16
      %v2505 = vrot.slane %v2503, 5
      %v2506 = vor.u32 %v2502, %v2505
      %v2507 = vrot.slane %v2506, 4
      %v2509 = vshll.u32 %v2179, 16
      %v2511 = vrot.slane %v2509, 5
      %v2512 = vsel %vm278, %v2507, %v2511
      %v2513 = vshrl.u32 %v2179, 16
      %v2515 = vrot.slane %v2513, 4
      %v2516 = vor.u32 %v2515, %v2511
      %v2517 = vrot.slane %v2516, 4
      %v2519 = vshll.u32 %v2180, 16
      %v2521 = vrot.slane %v2519, 5
      %v2522 = vsel %vm278, %v2517, %v2521
      %v2524 = vshrl.u32 %v2181, 16
      %v2526 = vrot.slane %v2524, 4
      %v2527 = vshll.u32 %v2181, 16
      %v2529 = vrot.slane %v2527, 5
      %v2530 = vor.u32 %v2526, %v2529
      %v2531 = vrot.slane %v2530, 4
      %v2533 = vshll.u32 %v2182, 16
      %v2535 = vrot.slane %v2533, 5
      %v2536 = vsel %vm278, %v2531, %v2535
      %v2537 = vshrl.u32 %v2182, 16
      %v2539 = vrot.slane %v2537, 4
      %v2540 = vor.u32 %v2539, %v2535
      %v2541 = vrot.slane %v2540, 4
      %v2543 = vshll.u32 %v2183, 16
      %v2545 = vrot.slane %v2543, 5
      %v2546 = vsel %vm278, %v2541, %v2545
      %v2548 = vshrl.u32 %v2184, 16
      %v2550 = vrot.slane %v2548, 4
      %v2551 = vshll.u32 %v2184, 16
      %v2553 = vrot.slane %v2551, 5
      %v2554 = vor.u32 %v2550, %v2553
      %v2555 = vrot.slane %v2554, 4
      %v2557 = vshll.u32 %v2185, 16
      %v2559 = vrot.slane %v2557, 5
      %v2560 = vsel %vm278, %v2555, %v2559
      %v2561 = vshrl.u32 %v2185, 16
      %v2563 = vrot.slane %v2561, 4
      %v2564 = vor.u32 %v2563, %v2559
      %v2565 = vrot.slane %v2564, 4
      %v2567 = vshll.u32 %v2186, 16
      %v2569 = vrot.slane %v2567, 5
      %v2570 = vsel %vm278, %v2565, %v2569
      %s2571 = scalar_lea.vmem %s1, 128
      %v2572 = vld [vmem:[%s2571] sm:$0xf]
      %v2573 = vld [vmem:[%s2571 + $0x4] sm:$0xf]
      %v2574 = vld [vmem:[%s2571 + $0x8] sm:$0xf]
      %v2575 = vld [vmem:[%s2571 + $0xc] sm:$0xf]
      %v2576 = vld [vmem:[%s2571 + $0x10] sm:$0xf]
      %v2577 = vld [vmem:[%s2571 + $0x14] sm:$0xf]
      %v2578 = vld [vmem:[%s2571 + $0x18] sm:$0xf]
      %v2579 = vld [vmem:[%s2571 + $0x1c] sm:$0xf]
      %v2580 = vunpack.c.l.b16 %v2200
      %v2581 = vunpack.c.l.b16 %v2210
      %v2582 = vunpack.c.l.b16 %v2224
      %v2583 = vunpack.c.l.b16 %v2234
      %v2584 = vunpack.c.l.b16 %v2248
      %v2585 = vunpack.c.l.b16 %v2258
      %v2586 = vunpack.c.l.b16 %v2272
      %v2587 = vunpack.c.l.b16 %v2282
      %v2588 = vunpack.c.l.b16 %v2296
      %v2589 = vunpack.c.l.b16 %v2306
      %v2590 = vunpack.c.l.b16 %v2320
      %v2591 = vunpack.c.l.b16 %v2330
      %v2592 = vunpack.c.l.b16 %v2344
      %v2593 = vunpack.c.l.b16 %v2354
      %v2594 = vunpack.c.l.b16 %v2368
      %v2595 = vunpack.c.l.b16 %v2378
      %v2596 = vunpack.c.l.b16 %v2392
      %v2597 = vunpack.c.l.b16 %v2402
      %v2598 = vunpack.c.l.b16 %v2416
      %v2599 = vunpack.c.l.b16 %v2426
      %v2600 = vunpack.c.l.b16 %v2440
      %v2601 = vunpack.c.l.b16 %v2450
      %v2602 = vunpack.c.l.b16 %v2464
      %v2603 = vunpack.c.l.b16 %v2474
      %v2604 = vunpack.c.l.b16 %v2488
      %v2605 = vunpack.c.l.b16 %v2498
      %v2606 = vunpack.c.l.b16 %v2512
      %v2607 = vunpack.c.l.b16 %v2522
      %v2608 = vunpack.c.l.b16 %v2536
      %v2609 = vunpack.c.l.b16 %v2546
      %v2610 = vunpack.c.l.b16 %v2560
      %v2611 = vunpack.c.l.b16 %v2570
      %v2612 = vpack.c.b16 %v2581, %v2580
      %v2613 = vpack.c.b16 %v2583, %v2582
      %v2614 = vpack.c.b16 %v2585, %v2584
      %v2615 = vpack.c.b16 %v2587, %v2586
      %v2616 = vpack.c.b16 %v2589, %v2588
      %v2617 = vpack.c.b16 %v2591, %v2590
      %v2618 = vpack.c.b16 %v2593, %v2592
      %v2619 = vpack.c.b16 %v2595, %v2594
      %v2620 = vpack.c.b16 %v2597, %v2596
      %v2621 = vpack.c.b16 %v2599, %v2598
      %v2622 = vpack.c.b16 %v2601, %v2600
      %v2623 = vpack.c.b16 %v2603, %v2602
      %v2624 = vpack.c.b16 %v2605, %v2604
      %v2625 = vpack.c.b16 %v2607, %v2606
      %v2626 = vpack.c.b16 %v2609, %v2608
      %v2627 = vpack.c.b16 %v2611, %v2610
      %v2636 = vunpack.c.l.b16 %v2572
      %v2637 = vunpack.c.l.b16 %v2573
      %v2638 = vunpack.c.l.b16 %v2574
      %v2639 = vunpack.c.l.b16 %v2575
      %v2640 = vunpack.c.l.b16 %v2576
      %v2641 = vunpack.c.l.b16 %v2577
      %v2642 = vunpack.c.l.b16 %v2578
      %v2643 = vunpack.c.l.b16 %v2579
      %v2644 = vpack.c.b16 %v2637, %v2636
      %v2645 = vpack.c.b16 %v2639, %v2638
      %v2646 = vpack.c.b16 %v2641, %v2640
      %v2647 = vpack.c.b16 %v2643, %v2642
      %v2653 = vsel %vm744, %v2612, 0
      %v2656 = vsel %vm744, %v2613, 0
      %v2659 = vsel %vm744, %v2614, 0
      %v2662 = vsel %vm744, %v2615, 0
      %v2665 = vsel %vm744, %v2616, 0
      %v2668 = vsel %vm744, %v2617, 0
      %v2671 = vsel %vm744, %v2618, 0
      %v2674 = vsel %vm744, %v2619, 0
      %v2677 = vsel %vm744, %v2620, 0
      %v2680 = vsel %vm744, %v2621, 0
      %v2683 = vsel %vm744, %v2622, 0
      %v2686 = vsel %vm744, %v2623, 0
      %v2689 = vsel %vm744, %v2624, 0
      %v2692 = vsel %vm744, %v2625, 0
      %v2695 = vsel %vm744, %v2626, 0
      %v2698 = vsel %vm744, %v2627, 0
      %2700 = vmatprep.subr.bf16.mxu0 0
      %2701 = vmatpush1.bf16.msra.mxu0 %v2644
      %2702 = vmatprep.subr.bf16.mxu0 0
      %2703 = vmatpush1.bf16.msra.mxu0 %v2645
      %2704 = vmatprep.subr.bf16.mxu0 0
      %2705 = vmatpush1.bf16.msra.mxu0 %v2646
      %2706 = vmatprep.subr.bf16.mxu0 0
      %2707 = vmatpush1.bf16.msra.mxu0 %v2647
      %2708 = vmatprep.subr.bf16.mxu0 0
      %2709 = vmatpush1.bf16.msra.mxu0 0
      %2710 = vmatprep.subr.bf16.mxu0 0
      %2711 = vmatpush1.bf16.msra.mxu0 0
      %2712 = vmatprep.subr.bf16.mxu0 0
      %2713 = vmatpush1.bf16.msra.mxu0 0
      %2714 = vmatprep.subr.bf16.mxu0 0
      %2715 = vmatpush1.bf16.msra.mxu0 0
      %2716 = vmatprep.subr.bf16.mxu0 0
      %2717 = vmatpush1.bf16.msra.mxu0 0
      %2718 = vmatprep.subr.bf16.mxu0 0
      %2719 = vmatpush1.bf16.msra.mxu0 0
      %2720 = vmatprep.subr.bf16.mxu0 0
      %2721 = vmatpush1.bf16.msra.mxu0 0
      %2722 = vmatprep.subr.bf16.mxu0 0
      %2723 = vmatpush1.bf16.msra.mxu0 0
      %2724 = vmatprep.subr.bf16.mxu0 0
      %2725 = vmatpush1.bf16.msra.mxu0 0
      %2726 = vmatprep.subr.bf16.mxu0 0
      %2727 = vmatpush1.bf16.msra.mxu0 0
      %2728 = vmatprep.subr.bf16.mxu0 0
      %2729 = vmatpush1.bf16.msra.mxu0 0
      %2730 = vmatprep.subr.bf16.mxu0 0
      %2731 = vmatpush1.bf16.msra.mxu0 0
      %2732 = vmatprep.mubr.bf16.mxu0 0
      %2733 = vmatmul.mubr.bf16.gmra.mrb[0].mxu0 %v2653
      %v2734 = vpop.f32.mrb[0].mxu0
      %v2735 = vadd.f32 0.0, %v2734
      %v2736 = vpop.f32.mrb[0].mxu0
      %v2737 = vpop.f32.mrb[0].mxu0
      %v2738 = vadd.f32 0.0, %v2737
      %v2739 = vpop.f32.mrb[0].mxu0
      %2740 = vmatprep.mubr.bf16.mxu0 0
      %2741 = vmatmul.mubr.bf16.gmra.mrb[0].mxu0 %v2656
      %v2742 = vpop.f32.mrb[0].mxu0
      %v2743 = vadd.f32 0.0, %v2742
      %v2744 = vpop.f32.mrb[0].mxu0
      %v2745 = vpop.f32.mrb[0].mxu0
      %v2746 = vadd.f32 0.0, %v2745
      %v2747 = vpop.f32.mrb[0].mxu0
      %2748 = vmatprep.mubr.bf16.mxu0 0
      %2749 = vmatmul.mubr.bf16.gmra.mrb[0].mxu0 %v2659
      %v2750 = vpop.f32.mrb[0].mxu0
      %v2751 = vadd.f32 0.0, %v2750
      %v2752 = vpop.f32.mrb[0].mxu0
      %v2753 = vpop.f32.mrb[0].mxu0
      %v2754 = vadd.f32 0.0, %v2753
      %v2755 = vpop.f32.mrb[0].mxu0
      %2756 = vmatprep.mubr.bf16.mxu0 0
      %2757 = vmatmul.mubr.bf16.gmra.mrb[0].mxu0 %v2662
      %v2758 = vpop.f32.mrb[0].mxu0
      %v2759 = vadd.f32 0.0, %v2758
      %v2760 = vpop.f32.mrb[0].mxu0
      %v2761 = vpop.f32.mrb[0].mxu0
      %v2762 = vadd.f32 0.0, %v2761
      %v2763 = vpop.f32.mrb[0].mxu0
      %2764 = vmatprep.mubr.bf16.mxu0 0
      %2765 = vmatmul.mubr.bf16.gmra.mrb[0].mxu0 %v2665
      %v2766 = vpop.f32.mrb[0].mxu0
      %v2767 = vadd.f32 0.0, %v2766
      %v2768 = vpop.f32.mrb[0].mxu0
      %v2769 = vpop.f32.mrb[0].mxu0
      %v2770 = vadd.f32 0.0, %v2769
      %v2771 = vpop.f32.mrb[0].mxu0
      %2772 = vmatprep.mubr.bf16.mxu0 0
      %2773 = vmatmul.mubr.bf16.gmra.mrb[0].mxu0 %v2668
      %v2774 = vpop.f32.mrb[0].mxu0
      %v2775 = vadd.f32 0.0, %v2774
      %v2776 = vpop.f32.mrb[0].mxu0
      %v2777 = vpop.f32.mrb[0].mxu0
      %v2778 = vadd.f32 0.0, %v2777
      %v2779 = vpop.f32.mrb[0].mxu0
      %2780 = vmatprep.mubr.bf16.mxu0 0
      %2781 = vmatmul.mubr.bf16.gmra.mrb[0].mxu0 %v2671
      %v2782 = vpop.f32.mrb[0].mxu0
      %v2783 = vadd.f32 0.0, %v2782
      %v2784 = vpop.f32.mrb[0].mxu0
      %v2785 = vpop.f32.mrb[0].mxu0
      %v2786 = vadd.f32 0.0, %v2785
      %v2787 = vpop.f32.mrb[0].mxu0
      %2788 = vmatprep.mubr.bf16.mxu0 0
      %2789 = vmatmul.mubr.bf16.gmra.mrb[0].mxu0 %v2674
      %v2790 = vpop.f32.mrb[0].mxu0
      %v2791 = vadd.f32 0.0, %v2790
      %v2792 = vpop.f32.mrb[0].mxu0
      %v2793 = vpop.f32.mrb[0].mxu0
      %v2794 = vadd.f32 0.0, %v2793
      %v2795 = vpop.f32.mrb[0].mxu0
      %2796 = vmatprep.mubr.bf16.mxu0 0
      %2797 = vmatmul.mubr.bf16.gmra.mrb[0].mxu0 %v2677
      %v2798 = vpop.f32.mrb[0].mxu0
      %v2799 = vadd.f32 0.0, %v2798
      %v2800 = vpop.f32.mrb[0].mxu0
      %v2801 = vpop.f32.mrb[0].mxu0
      %v2802 = vadd.f32 0.0, %v2801
      %v2803 = vpop.f32.mrb[0].mxu0
      %2804 = vmatprep.mubr.bf16.mxu0 0
      %2805 = vmatmul.mubr.bf16.gmra.mrb[0].mxu0 %v2680
      %v2806 = vpop.f32.mrb[0].mxu0
      %v2807 = vadd.f32 0.0, %v2806
      %v2808 = vpop.f32.mrb[0].mxu0
      %v2809 = vpop.f32.mrb[0].mxu0
      %v2810 = vadd.f32 0.0, %v2809
      %v2811 = vpop.f32.mrb[0].mxu0
      %2812 = vmatprep.mubr.bf16.mxu0 0
      %2813 = vmatmul.mubr.bf16.gmra.mrb[0].mxu0 %v2683
      %v2814 = vpop.f32.mrb[0].mxu0
      %v2815 = vadd.f32 0.0, %v2814
      %v2816 = vpop.f32.mrb[0].mxu0
      %v2817 = vpop.f32.mrb[0].mxu0
      %v2818 = vadd.f32 0.0, %v2817
      %v2819 = vpop.f32.mrb[0].mxu0
      %2820 = vmatprep.mubr.bf16.mxu0 0
      %2821 = vmatmul.mubr.bf16.gmra.mrb[0].mxu0 %v2686
      %v2822 = vpop.f32.mrb[0].mxu0
      %v2823 = vadd.f32 0.0, %v2822
      %v2824 = vpop.f32.mrb[0].mxu0
      %v2825 = vpop.f32.mrb[0].mxu0
      %v2826 = vadd.f32 0.0, %v2825
      %v2827 = vpop.f32.mrb[0].mxu0
      %2828 = vmatprep.mubr.bf16.mxu0 0
      %2829 = vmatmul.mubr.bf16.gmra.mrb[0].mxu0 %v2689
      %v2830 = vpop.f32.mrb[0].mxu0
      %v2831 = vadd.f32 0.0, %v2830
      %v2832 = vpop.f32.mrb[0].mxu0
      %v2833 = vpop.f32.mrb[0].mxu0
      %v2834 = vadd.f32 0.0, %v2833
      %v2835 = vpop.f32.mrb[0].mxu0
      %2836 = vmatprep.mubr.bf16.mxu0 0
      %2837 = vmatmul.mubr.bf16.gmra.mrb[0].mxu0 %v2692
      %v2838 = vpop.f32.mrb[0].mxu0
      %v2839 = vadd.f32 0.0, %v2838
      %v2840 = vpop.f32.mrb[0].mxu0
      %v2841 = vpop.f32.mrb[0].mxu0
      %v2842 = vadd.f32 0.0, %v2841
      %v2843 = vpop.f32.mrb[0].mxu0
      %2844 = vmatprep.mubr.bf16.mxu0 0
      %2845 = vmatmul.mubr.bf16.gmra.mrb[0].mxu0 %v2695
      %v2846 = vpop.f32.mrb[0].mxu0
      %v2847 = vadd.f32 0.0, %v2846
      %v2848 = vpop.f32.mrb[0].mxu0
      %v2849 = vpop.f32.mrb[0].mxu0
      %v2850 = vadd.f32 0.0, %v2849
      %v2851 = vpop.f32.mrb[0].mxu0
      %2852 = vmatprep.mubr.bf16.mxu0 0
      %2853 = vmatmul.mubr.bf16.gmra.mrb[0].mxu0 %v2698
      %v2854 = vpop.f32.mrb[0].mxu0
      %v2855 = vadd.f32 0.0, %v2854
      %v2856 = vpop.f32.mrb[0].mxu0
      %v2857 = vpop.f32.mrb[0].mxu0
      %v2858 = vadd.f32 0.0, %v2857
      %v2859 = vpop.f32.mrb[0].mxu0
      %2860 = vdwg.mxu0
      %v2861 = vadd.f32 %v2107, %v2735
      %v2862 = vadd.f32 %v2108, %v2738
      %v2863 = vadd.f32 %v2109, %v2743
      %v2864 = vadd.f32 %v2110, %v2746
      %v2865 = vadd.f32 %v2111, %v2751
      %v2866 = vadd.f32 %v2112, %v2754
      %v2867 = vadd.f32 %v2113, %v2759
      %v2868 = vadd.f32 %v2114, %v2762
      %v2869 = vadd.f32 %v2115, %v2767
      %v2870 = vadd.f32 %v2116, %v2770
      %v2871 = vadd.f32 %v2117, %v2775
      %v2872 = vadd.f32 %v2118, %v2778
      %v2873 = vadd.f32 %v2119, %v2783
      %v2874 = vadd.f32 %v2120, %v2786
      %v2875 = vadd.f32 %v2121, %v2791
      %v2876 = vadd.f32 %v2122, %v2794
      %v2877 = vadd.f32 %v2123, %v2799
      %v2878 = vadd.f32 %v2124, %v2802
      %v2879 = vadd.f32 %v2125, %v2807
      %v2880 = vadd.f32 %v2126, %v2810
      %v2881 = vadd.f32 %v2127, %v2815
      %v2882 = vadd.f32 %v2128, %v2818
      %v2883 = vadd.f32 %v2129, %v2823
      %v2884 = vadd.f32 %v2130, %v2826
      %v2885 = vadd.f32 %v2131, %v2831
      %v2886 = vadd.f32 %v2132, %v2834
      %v2887 = vadd.f32 %v2133, %v2839
      %v2888 = vadd.f32 %v2134, %v2842
      %v2889 = vadd.f32 %v2135, %v2847
      %v2890 = vadd.f32 %v2136, %v2850
      %v2891 = vadd.f32 %v2137, %v2855
      %v2892 = vadd.f32 %v2138, %v2858
      %v2893 = vld [vmem:[%s1752] sm:$0xe]
      %v2894 = vld [vmem:[%s1752 + $0xc] sm:$0xe]
      %v2895 = vld [vmem:[%s1752 + $0x18] sm:$0xe]
      %v2896 = vld [vmem:[%s1752 + $0x24] sm:$0xe]
      %v2897 = vld [vmem:[%s1752 + $0x30] sm:$0xe]
      %v2898 = vld [vmem:[%s1752 + $0x3c] sm:$0xe]
      %v2899 = vld [vmem:[%s1752 + $0x48] sm:$0xe]
      %v2900 = vld [vmem:[%s1752 + $0x54] sm:$0xe]
      %v2901 = vld [vmem:[%s1752 + $0x60] sm:$0xe]
      %v2902 = vld [vmem:[%s1752 + $0x6c] sm:$0xe]
      %v2903 = vld [vmem:[%s1752 + $0x78] sm:$0xe]
      %v2904 = vld [vmem:[%s1752 + $0x84] sm:$0xe]
      %v2905 = vld [vmem:[%s1752 + $0x90] sm:$0xe]
      %v2906 = vld [vmem:[%s1752 + $0x9c] sm:$0xe]
      %v2907 = vld [vmem:[%s1752 + $0xa8] sm:$0xe]
      %v2908 = vld [vmem:[%s1752 + $0xb4] sm:$0xe]
      %v2957 = vrot.slane %v2893, 5
      %v2958 = vrot.slane %v2957, 4
      %v2959 = vrot.slane %v2140, 5
      %v2960 = vsel %vm1317, %v2958, %v2959
      %v2961 = vrot.slane %v2959, 4
      %v2962 = vrot.slane %v2141, 5
      %v2963 = vsel %vm1317, %v2961, %v2962
      %v2964 = vrot.slane %v2894, 5
      %v2965 = vrot.slane %v2964, 4
      %v2966 = vrot.slane %v2143, 5
      %v2967 = vsel %vm1317, %v2965, %v2966
      %v2968 = vrot.slane %v2966, 4
      %v2969 = vrot.slane %v2144, 5
      %v2970 = vsel %vm1317, %v2968, %v2969
      %v2971 = vrot.slane %v2895, 5
      %v2972 = vrot.slane %v2971, 4
      %v2973 = vrot.slane %v2146, 5
      %v2974 = vsel %vm1317, %v2972, %v2973
      %v2975 = vrot.slane %v2973, 4
      %v2976 = vrot.slane %v2147, 5
      %v2977 = vsel %vm1317, %v2975, %v2976
      %v2978 = vrot.slane %v2896, 5
      %v2979 = vrot.slane %v2978, 4
      %v2980 = vrot.slane %v2149, 5
      %v2981 = vsel %vm1317, %v2979, %v2980
      %v2982 = vrot.slane %v2980, 4
      %v2983 = vrot.slane %v2150, 5
      %v2984 = vsel %vm1317, %v2982, %v2983
      %v2985 = vrot.slane %v2897, 5
      %v2986 = vrot.slane %v2985, 4
      %v2987 = vrot.slane %v2152, 5
      %v2988 = vsel %vm1317, %v2986, %v2987
      %v2989 = vrot.slane %v2987, 4
      %v2990 = vrot.slane %v2153, 5
      %v2991 = vsel %vm1317, %v2989, %v2990
      %v2992 = vrot.slane %v2898, 5
      %v2993 = vrot.slane %v2992, 4
      %v2994 = vrot.slane %v2155, 5
      %v2995 = vsel %vm1317, %v2993, %v2994
      %v2996 = vrot.slane %v2994, 4
      %v2997 = vrot.slane %v2156, 5
      %v2998 = vsel %vm1317, %v2996, %v2997
      %v2999 = vrot.slane %v2899, 5
      %v3000 = vrot.slane %v2999, 4
      %v3001 = vrot.slane %v2158, 5
      %v3002 = vsel %vm1317, %v3000, %v3001
      %v3003 = vrot.slane %v3001, 4
      %v3004 = vrot.slane %v2159, 5
      %v3005 = vsel %vm1317, %v3003, %v3004
      %v3006 = vrot.slane %v2900, 5
      %v3007 = vrot.slane %v3006, 4
      %v3008 = vrot.slane %v2161, 5
      %v3009 = vsel %vm1317, %v3007, %v3008
      %v3010 = vrot.slane %v3008, 4
      %v3011 = vrot.slane %v2162, 5
      %v3012 = vsel %vm1317, %v3010, %v3011
      %v3013 = vrot.slane %v2901, 5
      %v3014 = vrot.slane %v3013, 4
      %v3015 = vrot.slane %v2164, 5
      %v3016 = vsel %vm1317, %v3014, %v3015
      %v3017 = vrot.slane %v3015, 4
      %v3018 = vrot.slane %v2165, 5
      %v3019 = vsel %vm1317, %v3017, %v3018
      %v3020 = vrot.slane %v2902, 5
      %v3021 = vrot.slane %v3020, 4
      %v3022 = vrot.slane %v2167, 5
      %v3023 = vsel %vm1317, %v3021, %v3022
      %v3024 = vrot.slane %v3022, 4
      %v3025 = vrot.slane %v2168, 5
      %v3026 = vsel %vm1317, %v3024, %v3025
      %v3027 = vrot.slane %v2903, 5
      %v3028 = vrot.slane %v3027, 4
      %v3029 = vrot.slane %v2170, 5
      %v3030 = vsel %vm1317, %v3028, %v3029
      %v3031 = vrot.slane %v3029, 4
      %v3032 = vrot.slane %v2171, 5
      %v3033 = vsel %vm1317, %v3031, %v3032
      %v3034 = vrot.slane %v2904, 5
      %v3035 = vrot.slane %v3034, 4
      %v3036 = vrot.slane %v2173, 5
      %v3037 = vsel %vm1317, %v3035, %v3036
      %v3038 = vrot.slane %v3036, 4
      %v3039 = vrot.slane %v2174, 5
      %v3040 = vsel %vm1317, %v3038, %v3039
      %v3041 = vrot.slane %v2905, 5
      %v3042 = vrot.slane %v3041, 4
      %v3043 = vrot.slane %v2176, 5
      %v3044 = vsel %vm1317, %v3042, %v3043
      %v3045 = vrot.slane %v3043, 4
      %v3046 = vrot.slane %v2177, 5
      %v3047 = vsel %vm1317, %v3045, %v3046
      %v3048 = vrot.slane %v2906, 5
      %v3049 = vrot.slane %v3048, 4
      %v3050 = vrot.slane %v2179, 5
      %v3051 = vsel %vm1317, %v3049, %v3050
      %v3052 = vrot.slane %v3050, 4
      %v3053 = vrot.slane %v2180, 5
      %v3054 = vsel %vm1317, %v3052, %v3053
      %v3055 = vrot.slane %v2907, 5
      %v3056 = vrot.slane %v3055, 4
      %v3057 = vrot.slane %v2182, 5
      %v3058 = vsel %vm1317, %v3056, %v3057
      %v3059 = vrot.slane %v3057, 4
      %v3060 = vrot.slane %v2183, 5
      %v3061 = vsel %vm1317, %v3059, %v3060
      %v3062 = vrot.slane %v2908, 5
      %v3063 = vrot.slane %v3062, 4
      %v3064 = vrot.slane %v2185, 5
      %v3065 = vsel %vm1317, %v3063, %v3064
      %v3066 = vrot.slane %v3064, 4
      %v3067 = vrot.slane %v2186, 5
      %v3068 = vsel %vm1317, %v3066, %v3067
      %s3069 = scalar_lea.vmem %s1, 160
      %v3070 = vld [vmem:[%s3069] sm:$0xf]
      %v3071 = vld [vmem:[%s3069 + $0x4] sm:$0xf]
      %v3072 = vld [vmem:[%s3069 + $0x8] sm:$0xf]
      %v3073 = vld [vmem:[%s3069 + $0xc] sm:$0xf]
      %v3074 = vld [vmem:[%s3069 + $0x10] sm:$0xf]
      %v3075 = vld [vmem:[%s3069 + $0x14] sm:$0xf]
      %v3076 = vld [vmem:[%s3069 + $0x18] sm:$0xf]
      %v3077 = vld [vmem:[%s3069 + $0x1c] sm:$0xf]
      %v3078 = vunpack.c.l.b16 %v2960
      %v3079 = vunpack.c.l.b16 %v2963
      %v3080 = vunpack.c.l.b16 %v2967
      %v3081 = vunpack.c.l.b16 %v2970
      %v3082 = vunpack.c.l.b16 %v2974
      %v3083 = vunpack.c.l.b16 %v2977
      %v3084 = vunpack.c.l.b16 %v2981
      %v3085 = vunpack.c.l.b16 %v2984
      %v3086 = vunpack.c.l.b16 %v2988
      %v3087 = vunpack.c.l.b16 %v2991
      %v3088 = vunpack.c.l.b16 %v2995
      %v3089 = vunpack.c.l.b16 %v2998
      %v3090 = vunpack.c.l.b16 %v3002
      %v3091 = vunpack.c.l.b16 %v3005
      %v3092 = vunpack.c.l.b16 %v3009
      %v3093 = vunpack.c.l.b16 %v3012
      %v3094 = vunpack.c.l.b16 %v3016
      %v3095 = vunpack.c.l.b16 %v3019
      %v3096 = vunpack.c.l.b16 %v3023
      %v3097 = vunpack.c.l.b16 %v3026
      %v3098 = vunpack.c.l.b16 %v3030
      %v3099 = vunpack.c.l.b16 %v3033
      %v3100 = vunpack.c.l.b16 %v3037
      %v3101 = vunpack.c.l.b16 %v3040
      %v3102 = vunpack.c.l.b16 %v3044
      %v3103 = vunpack.c.l.b16 %v3047
      %v3104 = vunpack.c.l.b16 %v3051
      %v3105 = vunpack.c.l.b16 %v3054
      %v3106 = vunpack.c.l.b16 %v3058
      %v3107 = vunpack.c.l.b16 %v3061
      %v3108 = vunpack.c.l.b16 %v3065
      %v3109 = vunpack.c.l.b16 %v3068
      %v3110 = vpack.c.b16 %v3079, %v3078
      %v3111 = vpack.c.b16 %v3081, %v3080
      %v3112 = vpack.c.b16 %v3083, %v3082
      %v3113 = vpack.c.b16 %v3085, %v3084
      %v3114 = vpack.c.b16 %v3087, %v3086
      %v3115 = vpack.c.b16 %v3089, %v3088
      %v3116 = vpack.c.b16 %v3091, %v3090
      %v3117 = vpack.c.b16 %v3093, %v3092
      %v3118 = vpack.c.b16 %v3095, %v3094
      %v3119 = vpack.c.b16 %v3097, %v3096
      %v3120 = vpack.c.b16 %v3099, %v3098
      %v3121 = vpack.c.b16 %v3101, %v3100
      %v3122 = vpack.c.b16 %v3103, %v3102
      %v3123 = vpack.c.b16 %v3105, %v3104
      %v3124 = vpack.c.b16 %v3107, %v3106
      %v3125 = vpack.c.b16 %v3109, %v3108
      %v3134 = vunpack.c.l.b16 %v3070
      %v3135 = vunpack.c.l.b16 %v3071
      %v3136 = vunpack.c.l.b16 %v3072
      %v3137 = vunpack.c.l.b16 %v3073
      %v3138 = vunpack.c.l.b16 %v3074
      %v3139 = vunpack.c.l.b16 %v3075
      %v3140 = vunpack.c.l.b16 %v3076
      %v3141 = vunpack.c.l.b16 %v3077
      %v3142 = vpack.c.b16 %v3135, %v3134
      %v3143 = vpack.c.b16 %v3137, %v3136
      %v3144 = vpack.c.b16 %v3139, %v3138
      %v3145 = vpack.c.b16 %v3141, %v3140
      %v3151 = vsel %vm744, %v3110, 0
      %v3154 = vsel %vm744, %v3111, 0
      %v3157 = vsel %vm744, %v3112, 0
      %v3160 = vsel %vm744, %v3113, 0
      %v3163 = vsel %vm744, %v3114, 0
      %v3166 = vsel %vm744, %v3115, 0
      %v3169 = vsel %vm744, %v3116, 0
      %v3172 = vsel %vm744, %v3117, 0
      %v3175 = vsel %vm744, %v3118, 0
      %v3178 = vsel %vm744, %v3119, 0
      %v3181 = vsel %vm744, %v3120, 0
      %v3184 = vsel %vm744, %v3121, 0
      %v3187 = vsel %vm744, %v3122, 0
      %v3190 = vsel %vm744, %v3123, 0
      %v3193 = vsel %vm744, %v3124, 0
      %v3196 = vsel %vm744, %v3125, 0
      %3198 = vmatprep.subr.bf16.mxu0 0
      %3199 = vmatpush1.bf16.msra.mxu0 %v3142
      %3200 = vmatprep.subr.bf16.mxu0 0
      %3201 = vmatpush1.bf16.msra.mxu0 %v3143
      %3202 = vmatprep.subr.bf16.mxu0 0
      %3203 = vmatpush1.bf16.msra.mxu0 %v3144
      %3204 = vmatprep.subr.bf16.mxu0 0
      %3205 = vmatpush1.bf16.msra.mxu0 %v3145
      %3206 = vmatprep.subr.bf16.mxu0 0
      %3207 = vmatpush1.bf16.msra.mxu0 0
      %3208 = vmatprep.subr.bf16.mxu0 0
      %3209 = vmatpush1.bf16.msra.mxu0 0
      %3210 = vmatprep.subr.bf16.mxu0 0
      %3211 = vmatpush1.bf16.msra.mxu0 0
      %3212 = vmatprep.subr.bf16.mxu0 0
      %3213 = vmatpush1.bf16.msra.mxu0 0
      %3214 = vmatprep.subr.bf16.mxu0 0
      %3215 = vmatpush1.bf16.msra.mxu0 0
      %3216 = vmatprep.subr.bf16.mxu0 0
      %3217 = vmatpush1.bf16.msra.mxu0 0
      %3218 = vmatprep.subr.bf16.mxu0 0
      %3219 = vmatpush1.bf16.msra.mxu0 0
      %3220 = vmatprep.subr.bf16.mxu0 0
      %3221 = vmatpush1.bf16.msra.mxu0 0
      %3222 = vmatprep.subr.bf16.mxu0 0
      %3223 = vmatpush1.bf16.msra.mxu0 0
      %3224 = vmatprep.subr.bf16.mxu0 0
      %3225 = vmatpush1.bf16.msra.mxu0 0
      %3226 = vmatprep.subr.bf16.mxu0 0
      %3227 = vmatpush1.bf16.msra.mxu0 0
      %3228 = vmatprep.subr.bf16.mxu0 0
      %3229 = vmatpush1.bf16.msra.mxu0 0
      %3230 = vmatprep.mubr.bf16.mxu0 0
      %3231 = vmatmul.mubr.bf16.gmra.mrb[0].mxu0 %v3151
      %v3232 = vpop.f32.mrb[0].mxu0
      %v3233 = vadd.f32 0.0, %v3232
      %v3234 = vpop.f32.mrb[0].mxu0
      %v3235 = vpop.f32.mrb[0].mxu0
      %v3236 = vadd.f32 0.0, %v3235
      %v3237 = vpop.f32.mrb[0].mxu0
      %3238 = vmatprep.mubr.bf16.mxu0 0
      %3239 = vmatmul.mubr.bf16.gmra.mrb[0].mxu0 %v3154
      %v3240 = vpop.f32.mrb[0].mxu0
      %v3241 = vadd.f32 0.0, %v3240
      %v3242 = vpop.f32.mrb[0].mxu0
      %v3243 = vpop.f32.mrb[0].mxu0
      %v3244 = vadd.f32 0.0, %v3243
      %v3245 = vpop.f32.mrb[0].mxu0
      %3246 = vmatprep.mubr.bf16.mxu0 0
      %3247 = vmatmul.mubr.bf16.gmra.mrb[0].mxu0 %v3157
      %v3248 = vpop.f32.mrb[0].mxu0
      %v3249 = vadd.f32 0.0, %v3248
      %v3250 = vpop.f32.mrb[0].mxu0
      %v3251 = vpop.f32.mrb[0].mxu0
      %v3252 = vadd.f32 0.0, %v3251
      %v3253 = vpop.f32.mrb[0].mxu0
      %3254 = vmatprep.mubr.bf16.mxu0 0
      %3255 = vmatmul.mubr.bf16.gmra.mrb[0].mxu0 %v3160
      %v3256 = vpop.f32.mrb[0].mxu0
      %v3257 = vadd.f32 0.0, %v3256
      %v3258 = vpop.f32.mrb[0].mxu0
      %v3259 = vpop.f32.mrb[0].mxu0
      %v3260 = vadd.f32 0.0, %v3259
      %v3261 = vpop.f32.mrb[0].mxu0
      %3262 = vmatprep.mubr.bf16.mxu0 0
      %3263 = vmatmul.mubr.bf16.gmra.mrb[0].mxu0 %v3163
      %v3264 = vpop.f32.mrb[0].mxu0
      %v3265 = vadd.f32 0.0, %v3264
      %v3266 = vpop.f32.mrb[0].mxu0
      %v3267 = vpop.f32.mrb[0].mxu0
      %v3268 = vadd.f32 0.0, %v3267
      %v3269 = vpop.f32.mrb[0].mxu0
      %3270 = vmatprep.mubr.bf16.mxu0 0
      %3271 = vmatmul.mubr.bf16.gmra.mrb[0].mxu0 %v3166
      %v3272 = vpop.f32.mrb[0].mxu0
      %v3273 = vadd.f32 0.0, %v3272
      %v3274 = vpop.f32.mrb[0].mxu0
      %v3275 = vpop.f32.mrb[0].mxu0
      %v3276 = vadd.f32 0.0, %v3275
      %v3277 = vpop.f32.mrb[0].mxu0
      %3278 = vmatprep.mubr.bf16.mxu0 0
      %3279 = vmatmul.mubr.bf16.gmra.mrb[0].mxu0 %v3169
      %v3280 = vpop.f32.mrb[0].mxu0
      %v3281 = vadd.f32 0.0, %v3280
      %v3282 = vpop.f32.mrb[0].mxu0
      %v3283 = vpop.f32.mrb[0].mxu0
      %v3284 = vadd.f32 0.0, %v3283
      %v3285 = vpop.f32.mrb[0].mxu0
      %3286 = vmatprep.mubr.bf16.mxu0 0
      %3287 = vmatmul.mubr.bf16.gmra.mrb[0].mxu0 %v3172
      %v3288 = vpop.f32.mrb[0].mxu0
      %v3289 = vadd.f32 0.0, %v3288
      %v3290 = vpop.f32.mrb[0].mxu0
      %v3291 = vpop.f32.mrb[0].mxu0
      %v3292 = vadd.f32 0.0, %v3291
      %v3293 = vpop.f32.mrb[0].mxu0
      %3294 = vmatprep.mubr.bf16.mxu0 0
      %3295 = vmatmul.mubr.bf16.gmra.mrb[0].mxu0 %v3175
      %v3296 = vpop.f32.mrb[0].mxu0
      %v3297 = vadd.f32 0.0, %v3296
      %v3298 = vpop.f32.mrb[0].mxu0
      %v3299 = vpop.f32.mrb[0].mxu0
      %v3300 = vadd.f32 0.0, %v3299
      %v3301 = vpop.f32.mrb[0].mxu0
      %3302 = vmatprep.mubr.bf16.mxu0 0
      %3303 = vmatmul.mubr.bf16.gmra.mrb[0].mxu0 %v3178
      %v3304 = vpop.f32.mrb[0].mxu0
      %v3305 = vadd.f32 0.0, %v3304
      %v3306 = vpop.f32.mrb[0].mxu0
      %v3307 = vpop.f32.mrb[0].mxu0
      %v3308 = vadd.f32 0.0, %v3307
      %v3309 = vpop.f32.mrb[0].mxu0
      %3310 = vmatprep.mubr.bf16.mxu0 0
      %3311 = vmatmul.mubr.bf16.gmra.mrb[0].mxu0 %v3181
      %v3312 = vpop.f32.mrb[0].mxu0
      %v3313 = vadd.f32 0.0, %v3312
      %v3314 = vpop.f32.mrb[0].mxu0
      %v3315 = vpop.f32.mrb[0].mxu0
      %v3316 = vadd.f32 0.0, %v3315
      %v3317 = vpop.f32.mrb[0].mxu0
      %3318 = vmatprep.mubr.bf16.mxu0 0
      %3319 = vmatmul.mubr.bf16.gmra.mrb[0].mxu0 %v3184
      %v3320 = vpop.f32.mrb[0].mxu0
      %v3321 = vadd.f32 0.0, %v3320
      %v3322 = vpop.f32.mrb[0].mxu0
      %v3323 = vpop.f32.mrb[0].mxu0
      %v3324 = vadd.f32 0.0, %v3323
      %v3325 = vpop.f32.mrb[0].mxu0
      %3326 = vmatprep.mubr.bf16.mxu0 0
      %3327 = vmatmul.mubr.bf16.gmra.mrb[0].mxu0 %v3187
      %v3328 = vpop.f32.mrb[0].mxu0
      %v3329 = vadd.f32 0.0, %v3328
      %v3330 = vpop.f32.mrb[0].mxu0
      %v3331 = vpop.f32.mrb[0].mxu0
      %v3332 = vadd.f32 0.0, %v3331
      %v3333 = vpop.f32.mrb[0].mxu0
      %3334 = vmatprep.mubr.bf16.mxu0 0
      %3335 = vmatmul.mubr.bf16.gmra.mrb[0].mxu0 %v3190
      %v3336 = vpop.f32.mrb[0].mxu0
      %v3337 = vadd.f32 0.0, %v3336
      %v3338 = vpop.f32.mrb[0].mxu0
      %v3339 = vpop.f32.mrb[0].mxu0
      %v3340 = vadd.f32 0.0, %v3339
      %v3341 = vpop.f32.mrb[0].mxu0
      %3342 = vmatprep.mubr.bf16.mxu0 0
      %3343 = vmatmul.mubr.bf16.gmra.mrb[0].mxu0 %v3193
      %v3344 = vpop.f32.mrb[0].mxu0
      %v3345 = vadd.f32 0.0, %v3344
      %v3346 = vpop.f32.mrb[0].mxu0
      %v3347 = vpop.f32.mrb[0].mxu0
      %v3348 = vadd.f32 0.0, %v3347
      %v3349 = vpop.f32.mrb[0].mxu0
      %3350 = vmatprep.mubr.bf16.mxu0 0
      %3351 = vmatmul.mubr.bf16.gmra.mrb[0].mxu0 %v3196
      %v3352 = vpop.f32.mrb[0].mxu0
      %v3353 = vadd.f32 0.0, %v3352
      %v3354 = vpop.f32.mrb[0].mxu0
      %v3355 = vpop.f32.mrb[0].mxu0
      %v3356 = vadd.f32 0.0, %v3355
      %v3357 = vpop.f32.mrb[0].mxu0
      %3358 = vdwg.mxu0
      %v3359 = vadd.f32 %v2861, %v3233
      %v3360 = vadd.f32 %v2862, %v3236
      %v3361 = vadd.f32 %v2863, %v3241
      %v3362 = vadd.f32 %v2864, %v3244
      %v3363 = vadd.f32 %v2865, %v3249
      %v3364 = vadd.f32 %v2866, %v3252
      %v3365 = vadd.f32 %v2867, %v3257
      %v3366 = vadd.f32 %v2868, %v3260
      %v3367 = vadd.f32 %v2869, %v3265
      %v3368 = vadd.f32 %v2870, %v3268
      %v3369 = vadd.f32 %v2871, %v3273
      %v3370 = vadd.f32 %v2872, %v3276
      %v3371 = vadd.f32 %v2873, %v3281
      %v3372 = vadd.f32 %v2874, %v3284
      %v3373 = vadd.f32 %v2875, %v3289
      %v3374 = vadd.f32 %v2876, %v3292
      %v3375 = vadd.f32 %v2877, %v3297
      %v3376 = vadd.f32 %v2878, %v3300
      %v3377 = vadd.f32 %v2879, %v3305
      %v3378 = vadd.f32 %v2880, %v3308
      %v3379 = vadd.f32 %v2881, %v3313
      %v3380 = vadd.f32 %v2882, %v3316
      %v3381 = vadd.f32 %v2883, %v3321
      %v3382 = vadd.f32 %v2884, %v3324
      %v3383 = vadd.f32 %v2885, %v3329
      %v3384 = vadd.f32 %v2886, %v3332
      %v3385 = vadd.f32 %v2887, %v3337
      %v3386 = vadd.f32 %v2888, %v3340
      %v3387 = vadd.f32 %v2889, %v3345
      %v3388 = vadd.f32 %v2890, %v3348
      %v3389 = vadd.f32 %v2891, %v3353
      %v3390 = vadd.f32 %v2892, %v3356
      %s3391 = scalar_lea.vmem %s205, 24
      %v3392 = vld [vmem:[%s3391] sm:$0xf]
      %v3393 = vld [vmem:[%s3391 + $0x4] sm:$0xf]
      %v3394 = vld [vmem:[%s3391 + $0xc] sm:$0xf]
      %v3395 = vld [vmem:[%s3391 + $0x10] sm:$0xf]
      %v3396 = vld [vmem:[%s3391 + $0x18] sm:$0xf]
      %v3397 = vld [vmem:[%s3391 + $0x1c] sm:$0xf]
      %v3398 = vld [vmem:[%s3391 + $0x24] sm:$0xf]
      %v3399 = vld [vmem:[%s3391 + $0x28] sm:$0xf]
      %v3400 = vld [vmem:[%s3391 + $0x30] sm:$0xf]
      %v3401 = vld [vmem:[%s3391 + $0x34] sm:$0xf]
      %v3402 = vld [vmem:[%s3391 + $0x3c] sm:$0xf]
      %v3403 = vld [vmem:[%s3391 + $0x40] sm:$0xf]
      %v3404 = vld [vmem:[%s3391 + $0x48] sm:$0xf]
      %v3405 = vld [vmem:[%s3391 + $0x4c] sm:$0xf]
      %v3406 = vld [vmem:[%s3391 + $0x54] sm:$0xf]
      %v3407 = vld [vmem:[%s3391 + $0x58] sm:$0xf]
      %v3408 = vld [vmem:[%s3391 + $0x60] sm:$0xf]
      %v3409 = vld [vmem:[%s3391 + $0x64] sm:$0xf]
      %v3410 = vld [vmem:[%s3391 + $0x6c] sm:$0xf]
      %v3411 = vld [vmem:[%s3391 + $0x70] sm:$0xf]
      %v3412 = vld [vmem:[%s3391 + $0x78] sm:$0xf]
      %v3413 = vld [vmem:[%s3391 + $0x7c] sm:$0xf]
      %v3414 = vld [vmem:[%s3391 + $0x84] sm:$0xf]
      %v3415 = vld [vmem:[%s3391 + $0x88] sm:$0xf]
      %v3416 = vld [vmem:[%s3391 + $0x90] sm:$0xf]
      %v3417 = vld [vmem:[%s3391 + $0x94] sm:$0xf]
      %v3418 = vld [vmem:[%s3391 + $0x9c] sm:$0xf]
      %v3419 = vld [vmem:[%s3391 + $0xa0] sm:$0xf]
      %v3420 = vld [vmem:[%s3391 + $0xa8] sm:$0xf]
      %v3421 = vld [vmem:[%s3391 + $0xac] sm:$0xf]
      %v3422 = vld [vmem:[%s3391 + $0xb4] sm:$0xf]
      %v3423 = vld [vmem:[%s3391 + $0xb8] sm:$0xf]
      %s3424 = scalar_lea.vmem %s1, 192
      %v3425 = vld [vmem:[%s3424] sm:$0xf]
      %v3426 = vld [vmem:[%s3424 + $0x4] sm:$0xf]
      %v3427 = vld [vmem:[%s3424 + $0x8] sm:$0xf]
      %v3428 = vld [vmem:[%s3424 + $0xc] sm:$0xf]
      %v3429 = vld [vmem:[%s3424 + $0x10] sm:$0xf]
      %v3430 = vld [vmem:[%s3424 + $0x14] sm:$0xf]
      %v3431 = vld [vmem:[%s3424 + $0x18] sm:$0xf]
      %v3432 = vld [vmem:[%s3424 + $0x1c] sm:$0xf]
      %v3465 = vunpack.c.l.b16 %v3392
      %v3466 = vunpack.c.l.b16 %v3393
      %v3467 = vunpack.c.l.b16 %v3394
      %v3468 = vunpack.c.l.b16 %v3395
      %v3469 = vunpack.c.l.b16 %v3396
      %v3470 = vunpack.c.l.b16 %v3397
      %v3471 = vunpack.c.l.b16 %v3398
      %v3472 = vunpack.c.l.b16 %v3399
      %v3473 = vunpack.c.l.b16 %v3400
      %v3474 = vunpack.c.l.b16 %v3401
      %v3475 = vunpack.c.l.b16 %v3402
      %v3476 = vunpack.c.l.b16 %v3403
      %v3477 = vunpack.c.l.b16 %v3404
      %v3478 = vunpack.c.l.b16 %v3405
      %v3479 = vunpack.c.l.b16 %v3406
      %v3480 = vunpack.c.l.b16 %v3407
      %v3481 = vunpack.c.l.b16 %v3408
      %v3482 = vunpack.c.l.b16 %v3409
      %v3483 = vunpack.c.l.b16 %v3410
      %v3484 = vunpack.c.l.b16 %v3411
      %v3485 = vunpack.c.l.b16 %v3412
      %v3486 = vunpack.c.l.b16 %v3413
      %v3487 = vunpack.c.l.b16 %v3414
      %v3488 = vunpack.c.l.b16 %v3415
      %v3489 = vunpack.c.l.b16 %v3416
      %v3490 = vunpack.c.l.b16 %v3417
      %v3491 = vunpack.c.l.b16 %v3418
      %v3492 = vunpack.c.l.b16 %v3419
      %v3493 = vunpack.c.l.b16 %v3420
      %v3494 = vunpack.c.l.b16 %v3421
      %v3495 = vunpack.c.l.b16 %v3422
      %v3496 = vunpack.c.l.b16 %v3423
      %v3497 = vpack.c.b16 %v3466, %v3465
      %v3498 = vpack.c.b16 %v3468, %v3467
      %v3499 = vpack.c.b16 %v3470, %v3469
      %v3500 = vpack.c.b16 %v3472, %v3471
      %v3501 = vpack.c.b16 %v3474, %v3473
      %v3502 = vpack.c.b16 %v3476, %v3475
      %v3503 = vpack.c.b16 %v3478, %v3477
      %v3504 = vpack.c.b16 %v3480, %v3479
      %v3505 = vpack.c.b16 %v3482, %v3481
      %v3506 = vpack.c.b16 %v3484, %v3483
      %v3507 = vpack.c.b16 %v3486, %v3485
      %v3508 = vpack.c.b16 %v3488, %v3487
      %v3509 = vpack.c.b16 %v3490, %v3489
      %v3510 = vpack.c.b16 %v3492, %v3491
      %v3511 = vpack.c.b16 %v3494, %v3493
      %v3512 = vpack.c.b16 %v3496, %v3495
      %v3521 = vunpack.c.l.b16 %v3425
      %v3522 = vunpack.c.l.b16 %v3426
      %v3523 = vunpack.c.l.b16 %v3427
      %v3524 = vunpack.c.l.b16 %v3428
      %v3525 = vunpack.c.l.b16 %v3429
      %v3526 = vunpack.c.l.b16 %v3430
      %v3527 = vunpack.c.l.b16 %v3431
      %v3528 = vunpack.c.l.b16 %v3432
      %v3529 = vpack.c.b16 %v3522, %v3521
      %v3530 = vpack.c.b16 %v3524, %v3523
      %v3531 = vpack.c.b16 %v3526, %v3525
      %v3532 = vpack.c.b16 %v3528, %v3527
      %v3538 = vsel %vm744, %v3497, 0
      %v3541 = vsel %vm744, %v3498, 0
      %v3544 = vsel %vm744, %v3499, 0
      %v3547 = vsel %vm744, %v3500, 0
      %v3550 = vsel %vm744, %v3501, 0
      %v3553 = vsel %vm744, %v3502, 0
      %v3556 = vsel %vm744, %v3503, 0
      %v3559 = vsel %vm744, %v3504, 0
      %v3562 = vsel %vm744, %v3505, 0
      %v3565 = vsel %vm744, %v3506, 0
      %v3568 = vsel %vm744, %v3507, 0
      %v3571 = vsel %vm744, %v3508, 0
      %v3574 = vsel %vm744, %v3509, 0
      %v3577 = vsel %vm744, %v3510, 0
      %v3580 = vsel %vm744, %v3511, 0
      %v3583 = vsel %vm744, %v3512, 0
      %3585 = vmatprep.subr.bf16.mxu0 0
      %3586 = vmatpush1.bf16.msra.mxu0 %v3529
      %3587 = vmatprep.subr.bf16.mxu0 0
      %3588 = vmatpush1.bf16.msra.mxu0 %v3530
      %3589 = vmatprep.subr.bf16.mxu0 0
      %3590 = vmatpush1.bf16.msra.mxu0 %v3531
      %3591 = vmatprep.subr.bf16.mxu0 0
      %3592 = vmatpush1.bf16.msra.mxu0 %v3532
      %3593 = vmatprep.subr.bf16.mxu0 0
      %3594 = vmatpush1.bf16.msra.mxu0 0
      %3595 = vmatprep.subr.bf16.mxu0 0
      %3596 = vmatpush1.bf16.msra.mxu0 0
      %3597 = vmatprep.subr.bf16.mxu0 0
      %3598 = vmatpush1.bf16.msra.mxu0 0
      %3599 = vmatprep.subr.bf16.mxu0 0
      %3600 = vmatpush1.bf16.msra.mxu0 0
      %3601 = vmatprep.subr.bf16.mxu0 0
      %3602 = vmatpush1.bf16.msra.mxu0 0
      %3603 = vmatprep.subr.bf16.mxu0 0
      %3604 = vmatpush1.bf16.msra.mxu0 0
      %3605 = vmatprep.subr.bf16.mxu0 0
      %3606 = vmatpush1.bf16.msra.mxu0 0
      %3607 = vmatprep.subr.bf16.mxu0 0
      %3608 = vmatpush1.bf16.msra.mxu0 0
      %3609 = vmatprep.subr.bf16.mxu0 0
      %3610 = vmatpush1.bf16.msra.mxu0 0
      %3611 = vmatprep.subr.bf16.mxu0 0
      %3612 = vmatpush1.bf16.msra.mxu0 0
      %3613 = vmatprep.subr.bf16.mxu0 0
      %3614 = vmatpush1.bf16.msra.mxu0 0
      %3615 = vmatprep.subr.bf16.mxu0 0
      %3616 = vmatpush1.bf16.msra.mxu0 0
      %3617 = vmatprep.mubr.bf16.mxu0 0
      %3618 = vmatmul.mubr.bf16.gmra.mrb[0].mxu0 %v3538
      %v3619 = vpop.f32.mrb[0].mxu0
      %v3620 = vadd.f32 0.0, %v3619
      %v3621 = vpop.f32.mrb[0].mxu0
      %v3622 = vpop.f32.mrb[0].mxu0
      %v3623 = vadd.f32 0.0, %v3622
      %v3624 = vpop.f32.mrb[0].mxu0
      %3625 = vmatprep.mubr.bf16.mxu0 0
      %3626 = vmatmul.mubr.bf16.gmra.mrb[0].mxu0 %v3541
      %v3627 = vpop.f32.mrb[0].mxu0
      %v3628 = vadd.f32 0.0, %v3627
      %v3629 = vpop.f32.mrb[0].mxu0
      %v3630 = vpop.f32.mrb[0].mxu0
      %v3631 = vadd.f32 0.0, %v3630
      %v3632 = vpop.f32.mrb[0].mxu0
      %3633 = vmatprep.mubr.bf16.mxu0 0
      %3634 = vmatmul.mubr.bf16.gmra.mrb[0].mxu0 %v3544
      %v3635 = vpop.f32.mrb[0].mxu0
      %v3636 = vadd.f32 0.0, %v3635
      %v3637 = vpop.f32.mrb[0].mxu0
      %v3638 = vpop.f32.mrb[0].mxu0
      %v3639 = vadd.f32 0.0, %v3638
      %v3640 = vpop.f32.mrb[0].mxu0
      %3641 = vmatprep.mubr.bf16.mxu0 0
      %3642 = vmatmul.mubr.bf16.gmra.mrb[0].mxu0 %v3547
      %v3643 = vpop.f32.mrb[0].mxu0
      %v3644 = vadd.f32 0.0, %v3643
      %v3645 = vpop.f32.mrb[0].mxu0
      %v3646 = vpop.f32.mrb[0].mxu0
      %v3647 = vadd.f32 0.0, %v3646
      %v3648 = vpop.f32.mrb[0].mxu0
      %3649 = vmatprep.mubr.bf16.mxu0 0
      %3650 = vmatmul.mubr.bf16.gmra.mrb[0].mxu0 %v3550
      %v3651 = vpop.f32.mrb[0].mxu0
      %v3652 = vadd.f32 0.0, %v3651
      %v3653 = vpop.f32.mrb[0].mxu0
      %v3654 = vpop.f32.mrb[0].mxu0
      %v3655 = vadd.f32 0.0, %v3654
      %v3656 = vpop.f32.mrb[0].mxu0
      %3657 = vmatprep.mubr.bf16.mxu0 0
      %3658 = vmatmul.mubr.bf16.gmra.mrb[0].mxu0 %v3553
      %v3659 = vpop.f32.mrb[0].mxu0
      %v3660 = vadd.f32 0.0, %v3659
      %v3661 = vpop.f32.mrb[0].mxu0
      %v3662 = vpop.f32.mrb[0].mxu0
      %v3663 = vadd.f32 0.0, %v3662
      %v3664 = vpop.f32.mrb[0].mxu0
      %3665 = vmatprep.mubr.bf16.mxu0 0
      %3666 = vmatmul.mubr.bf16.gmra.mrb[0].mxu0 %v3556
      %v3667 = vpop.f32.mrb[0].mxu0
      %v3668 = vadd.f32 0.0, %v3667
      %v3669 = vpop.f32.mrb[0].mxu0
      %v3670 = vpop.f32.mrb[0].mxu0
      %v3671 = vadd.f32 0.0, %v3670
      %v3672 = vpop.f32.mrb[0].mxu0
      %3673 = vmatprep.mubr.bf16.mxu0 0
      %3674 = vmatmul.mubr.bf16.gmra.mrb[0].mxu0 %v3559
      %v3675 = vpop.f32.mrb[0].mxu0
      %v3676 = vadd.f32 0.0, %v3675
      %v3677 = vpop.f32.mrb[0].mxu0
      %v3678 = vpop.f32.mrb[0].mxu0
      %v3679 = vadd.f32 0.0, %v3678
      %v3680 = vpop.f32.mrb[0].mxu0
      %3681 = vmatprep.mubr.bf16.mxu0 0
      %3682 = vmatmul.mubr.bf16.gmra.mrb[0].mxu0 %v3562
      %v3683 = vpop.f32.mrb[0].mxu0
      %v3684 = vadd.f32 0.0, %v3683
      %v3685 = vpop.f32.mrb[0].mxu0
      %v3686 = vpop.f32.mrb[0].mxu0
      %v3687 = vadd.f32 0.0, %v3686
      %v3688 = vpop.f32.mrb[0].mxu0
      %3689 = vmatprep.mubr.bf16.mxu0 0
      %3690 = vmatmul.mubr.bf16.gmra.mrb[0].mxu0 %v3565
      %v3691 = vpop.f32.mrb[0].mxu0
      %v3692 = vadd.f32 0.0, %v3691
      %v3693 = vpop.f32.mrb[0].mxu0
      %v3694 = vpop.f32.mrb[0].mxu0
      %v3695 = vadd.f32 0.0, %v3694
      %v3696 = vpop.f32.mrb[0].mxu0
      %3697 = vmatprep.mubr.bf16.mxu0 0
      %3698 = vmatmul.mubr.bf16.gmra.mrb[0].mxu0 %v3568
      %v3699 = vpop.f32.mrb[0].mxu0
      %v3700 = vadd.f32 0.0, %v3699
      %v3701 = vpop.f32.mrb[0].mxu0
      %v3702 = vpop.f32.mrb[0].mxu0
      %v3703 = vadd.f32 0.0, %v3702
      %v3704 = vpop.f32.mrb[0].mxu0
      %3705 = vmatprep.mubr.bf16.mxu0 0
      %3706 = vmatmul.mubr.bf16.gmra.mrb[0].mxu0 %v3571
      %v3707 = vpop.f32.mrb[0].mxu0
      %v3708 = vadd.f32 0.0, %v3707
      %v3709 = vpop.f32.mrb[0].mxu0
      %v3710 = vpop.f32.mrb[0].mxu0
      %v3711 = vadd.f32 0.0, %v3710
      %v3712 = vpop.f32.mrb[0].mxu0
      %3713 = vmatprep.mubr.bf16.mxu0 0
      %3714 = vmatmul.mubr.bf16.gmra.mrb[0].mxu0 %v3574
      %v3715 = vpop.f32.mrb[0].mxu0
      %v3716 = vadd.f32 0.0, %v3715
      %v3717 = vpop.f32.mrb[0].mxu0
      %v3718 = vpop.f32.mrb[0].mxu0
      %v3719 = vadd.f32 0.0, %v3718
      %v3720 = vpop.f32.mrb[0].mxu0
      %3721 = vmatprep.mubr.bf16.mxu0 0
      %3722 = vmatmul.mubr.bf16.gmra.mrb[0].mxu0 %v3577
      %v3723 = vpop.f32.mrb[0].mxu0
      %v3724 = vadd.f32 0.0, %v3723
      %v3725 = vpop.f32.mrb[0].mxu0
      %v3726 = vpop.f32.mrb[0].mxu0
      %v3727 = vadd.f32 0.0, %v3726
      %v3728 = vpop.f32.mrb[0].mxu0
      %3729 = vmatprep.mubr.bf16.mxu0 0
      %3730 = vmatmul.mubr.bf16.gmra.mrb[0].mxu0 %v3580
      %v3731 = vpop.f32.mrb[0].mxu0
      %v3732 = vadd.f32 0.0, %v3731
      %v3733 = vpop.f32.mrb[0].mxu0
      %v3734 = vpop.f32.mrb[0].mxu0
      %v3735 = vadd.f32 0.0, %v3734
      %v3736 = vpop.f32.mrb[0].mxu0
      %3737 = vmatprep.mubr.bf16.mxu0 0
      %3738 = vmatmul.mubr.bf16.gmra.mrb[0].mxu0 %v3583
      %v3739 = vpop.f32.mrb[0].mxu0
      %v3740 = vadd.f32 0.0, %v3739
      %v3741 = vpop.f32.mrb[0].mxu0
      %v3742 = vpop.f32.mrb[0].mxu0
      %v3743 = vadd.f32 0.0, %v3742
      %v3744 = vpop.f32.mrb[0].mxu0
      %3745 = vdwg.mxu0
      %v3746 = vadd.f32 %v3359, %v3620
      %v3747 = vadd.f32 %v3360, %v3623
      %v3748 = vadd.f32 %v3361, %v3628
      %v3749 = vadd.f32 %v3362, %v3631
      %v3750 = vadd.f32 %v3363, %v3636
      %v3751 = vadd.f32 %v3364, %v3639
      %v3752 = vadd.f32 %v3365, %v3644
      %v3753 = vadd.f32 %v3366, %v3647
      %v3754 = vadd.f32 %v3367, %v3652
      %v3755 = vadd.f32 %v3368, %v3655
      %v3756 = vadd.f32 %v3369, %v3660
      %v3757 = vadd.f32 %v3370, %v3663
      %v3758 = vadd.f32 %v3371, %v3668
      %v3759 = vadd.f32 %v3372, %v3671
      %v3760 = vadd.f32 %v3373, %v3676
      %v3761 = vadd.f32 %v3374, %v3679
      %v3762 = vadd.f32 %v3375, %v3684
      %v3763 = vadd.f32 %v3376, %v3687
      %v3764 = vadd.f32 %v3377, %v3692
      %v3765 = vadd.f32 %v3378, %v3695
      %v3766 = vadd.f32 %v3379, %v3700
      %v3767 = vadd.f32 %v3380, %v3703
      %v3768 = vadd.f32 %v3381, %v3708
      %v3769 = vadd.f32 %v3382, %v3711
      %v3770 = vadd.f32 %v3383, %v3716
      %v3771 = vadd.f32 %v3384, %v3719
      %v3772 = vadd.f32 %v3385, %v3724
      %v3773 = vadd.f32 %v3386, %v3727
      %v3774 = vadd.f32 %v3387, %v3732
      %v3775 = vadd.f32 %v3388, %v3735
      %v3776 = vadd.f32 %v3389, %v3740
      %v3777 = vadd.f32 %v3390, %v3743
      %v3778 = vld [vmem:[%s3391] sm:$0xf]
      %v3779 = vld [vmem:[%s3391 + $0x4] sm:$0xf]
      %v3780 = vld [vmem:[%s3391 + $0x8] sm:$0x1]
      %v3781 = vld [vmem:[%s3391 + $0xc] sm:$0xf]
      %v3782 = vld [vmem:[%s3391 + $0x10] sm:$0xf]
      %v3783 = vld [vmem:[%s3391 + $0x14] sm:$0x1]
      %v3784 = vld [vmem:[%s3391 + $0x18] sm:$0xf]
      %v3785 = vld [vmem:[%s3391 + $0x1c] sm:$0xf]
      %v3786 = vld [vmem:[%s3391 + $0x20] sm:$0x1]
      %v3787 = vld [vmem:[%s3391 + $0x24] sm:$0xf]
      %v3788 = vld [vmem:[%s3391 + $0x28] sm:$0xf]
      %v3789 = vld [vmem:[%s3391 + $0x2c] sm:$0x1]
      %v3790 = vld [vmem:[%s3391 + $0x30] sm:$0xf]
      %v3791 = vld [vmem:[%s3391 + $0x34] sm:$0xf]
      %v3792 = vld [vmem:[%s3391 + $0x38] sm:$0x1]
      %v3793 = vld [vmem:[%s3391 + $0x3c] sm:$0xf]
      %v3794 = vld [vmem:[%s3391 + $0x40] sm:$0xf]
      %v3795 = vld [vmem:[%s3391 + $0x44] sm:$0x1]
      %v3796 = vld [vmem:[%s3391 + $0x48] sm:$0xf]
      %v3797 = vld [vmem:[%s3391 + $0x4c] sm:$0xf]
      %v3798 = vld [vmem:[%s3391 + $0x50] sm:$0x1]
      %v3799 = vld [vmem:[%s3391 + $0x54] sm:$0xf]
      %v3800 = vld [vmem:[%s3391 + $0x58] sm:$0xf]
      %v3801 = vld [vmem:[%s3391 + $0x5c] sm:$0x1]
      %v3802 = vld [vmem:[%s3391 + $0x60] sm:$0xf]
      %v3803 = vld [vmem:[%s3391 + $0x64] sm:$0xf]
      %v3804 = vld [vmem:[%s3391 + $0x68] sm:$0x1]
      %v3805 = vld [vmem:[%s3391 + $0x6c] sm:$0xf]
      %v3806 = vld [vmem:[%s3391 + $0x70] sm:$0xf]
      %v3807 = vld [vmem:[%s3391 + $0x74] sm:$0x1]
      %v3808 = vld [vmem:[%s3391 + $0x78] sm:$0xf]
      %v3809 = vld [vmem:[%s3391 + $0x7c] sm:$0xf]
      %v3810 = vld [vmem:[%s3391 + $0x80] sm:$0x1]
      %v3811 = vld [vmem:[%s3391 + $0x84] sm:$0xf]
      %v3812 = vld [vmem:[%s3391 + $0x88] sm:$0xf]
      %v3813 = vld [vmem:[%s3391 + $0x8c] sm:$0x1]
      %v3814 = vld [vmem:[%s3391 + $0x90] sm:$0xf]
      %v3815 = vld [vmem:[%s3391 + $0x94] sm:$0xf]
      %v3816 = vld [vmem:[%s3391 + $0x98] sm:$0x1]
      %v3817 = vld [vmem:[%s3391 + $0x9c] sm:$0xf]
      %v3818 = vld [vmem:[%s3391 + $0xa0] sm:$0xf]
      %v3819 = vld [vmem:[%s3391 + $0xa4] sm:$0x1]
      %v3820 = vld [vmem:[%s3391 + $0xa8] sm:$0xf]
      %v3821 = vld [vmem:[%s3391 + $0xac] sm:$0xf]
      %v3822 = vld [vmem:[%s3391 + $0xb0] sm:$0x1]
      %v3823 = vld [vmem:[%s3391 + $0xb4] sm:$0xf]
      %v3824 = vld [vmem:[%s3391 + $0xb8] sm:$0xf]
      %v3825 = vld [vmem:[%s3391 + $0xbc] sm:$0x1]
      %v3827 = vshrl.u32 %v3778, 16
      %v3829 = vrot.slane %v3827, 4
      %v3830 = vshll.u32 %v3778, 16
      %v3832 = vrot.slane %v3830, 5
      %v3833 = vor.u32 %v3829, %v3832
      %v3834 = vrot.slane %v3833, 4
      %v3836 = vshll.u32 %v3779, 16
      %v3838 = vrot.slane %v3836, 5
      %v3839 = vsel %vm278, %v3834, %v3838
      %v3840 = vshrl.u32 %v3779, 16
      %v3842 = vrot.slane %v3840, 4
      %v3843 = vor.u32 %v3842, %v3838
      %v3844 = vrot.slane %v3843, 4
      %v3846 = vshll.u32 %v3780, 16
      %v3848 = vrot.slane %v3846, 5
      %v3849 = vsel %vm278, %v3844, %v3848
      %v3851 = vshrl.u32 %v3781, 16
      %v3853 = vrot.slane %v3851, 4
      %v3854 = vshll.u32 %v3781, 16
      %v3856 = vrot.slane %v3854, 5
      %v3857 = vor.u32 %v3853, %v3856
      %v3858 = vrot.slane %v3857, 4
      %v3860 = vshll.u32 %v3782, 16
      %v3862 = vrot.slane %v3860, 5
      %v3863 = vsel %vm278, %v3858, %v3862
      %v3864 = vshrl.u32 %v3782, 16
      %v3866 = vrot.slane %v3864, 4
      %v3867 = vor.u32 %v3866, %v3862
      %v3868 = vrot.slane %v3867, 4
      %v3870 = vshll.u32 %v3783, 16
      %v3872 = vrot.slane %v3870, 5
      %v3873 = vsel %vm278, %v3868, %v3872
      %v3875 = vshrl.u32 %v3784, 16
      %v3877 = vrot.slane %v3875, 4
      %v3878 = vshll.u32 %v3784, 16
      %v3880 = vrot.slane %v3878, 5
      %v3881 = vor.u32 %v3877, %v3880
      %v3882 = vrot.slane %v3881, 4
      %v3884 = vshll.u32 %v3785, 16
      %v3886 = vrot.slane %v3884, 5
      %v3887 = vsel %vm278, %v3882, %v3886
      %v3888 = vshrl.u32 %v3785, 16
      %v3890 = vrot.slane %v3888, 4
      %v3891 = vor.u32 %v3890, %v3886
      %v3892 = vrot.slane %v3891, 4
      %v3894 = vshll.u32 %v3786, 16
      %v3896 = vrot.slane %v3894, 5
      %v3897 = vsel %vm278, %v3892, %v3896
      %v3899 = vshrl.u32 %v3787, 16
      %v3901 = vrot.slane %v3899, 4
      %v3902 = vshll.u32 %v3787, 16
      %v3904 = vrot.slane %v3902, 5
      %v3905 = vor.u32 %v3901, %v3904
      %v3906 = vrot.slane %v3905, 4
      %v3908 = vshll.u32 %v3788, 16
      %v3910 = vrot.slane %v3908, 5
      %v3911 = vsel %vm278, %v3906, %v3910
      %v3912 = vshrl.u32 %v3788, 16
      %v3914 = vrot.slane %v3912, 4
      %v3915 = vor.u32 %v3914, %v3910
      %v3916 = vrot.slane %v3915, 4
      %v3918 = vshll.u32 %v3789, 16
      %v3920 = vrot.slane %v3918, 5
      %v3921 = vsel %vm278, %v3916, %v3920
      %v3923 = vshrl.u32 %v3790, 16
      %v3925 = vrot.slane %v3923, 4
      %v3926 = vshll.u32 %v3790, 16
      %v3928 = vrot.slane %v3926, 5
      %v3929 = vor.u32 %v3925, %v3928
      %v3930 = vrot.slane %v3929, 4
      %v3932 = vshll.u32 %v3791, 16
      %v3934 = vrot.slane %v3932, 5
      %v3935 = vsel %vm278, %v3930, %v3934
      %v3936 = vshrl.u32 %v3791, 16
      %v3938 = vrot.slane %v3936, 4
      %v3939 = vor.u32 %v3938, %v3934
      %v3940 = vrot.slane %v3939, 4
      %v3942 = vshll.u32 %v3792, 16
      %v3944 = vrot.slane %v3942, 5
      %v3945 = vsel %vm278, %v3940, %v3944
      %v3947 = vshrl.u32 %v3793, 16
      %v3949 = vrot.slane %v3947, 4
      %v3950 = vshll.u32 %v3793, 16
      %v3952 = vrot.slane %v3950, 5
      %v3953 = vor.u32 %v3949, %v3952
      %v3954 = vrot.slane %v3953, 4
      %v3956 = vshll.u32 %v3794, 16
      %v3958 = vrot.slane %v3956, 5
      %v3959 = vsel %vm278, %v3954, %v3958
      %v3960 = vshrl.u32 %v3794, 16
      %v3962 = vrot.slane %v3960, 4
      %v3963 = vor.u32 %v3962, %v3958
      %v3964 = vrot.slane %v3963, 4
      %v3966 = vshll.u32 %v3795, 16
      %v3968 = vrot.slane %v3966, 5
      %v3969 = vsel %vm278, %v3964, %v3968
      %v3971 = vshrl.u32 %v3796, 16
      %v3973 = vrot.slane %v3971, 4
      %v3974 = vshll.u32 %v3796, 16
      %v3976 = vrot.slane %v3974, 5
      %v3977 = vor.u32 %v3973, %v3976
      %v3978 = vrot.slane %v3977, 4
      %v3980 = vshll.u32 %v3797, 16
      %v3982 = vrot.slane %v3980, 5
      %v3983 = vsel %vm278, %v3978, %v3982
      %v3984 = vshrl.u32 %v3797, 16
      %v3986 = vrot.slane %v3984, 4
      %v3987 = vor.u32 %v3986, %v3982
      %v3988 = vrot.slane %v3987, 4
      %v3990 = vshll.u32 %v3798, 16
      %v3992 = vrot.slane %v3990, 5
      %v3993 = vsel %vm278, %v3988, %v3992
      %v3995 = vshrl.u32 %v3799, 16
      %v3997 = vrot.slane %v3995, 4
      %v3998 = vshll.u32 %v3799, 16
      %v4000 = vrot.slane %v3998, 5
      %v4001 = vor.u32 %v3997, %v4000
      %v4002 = vrot.slane %v4001, 4
      %v4004 = vshll.u32 %v3800, 16
      %v4006 = vrot.slane %v4004, 5
      %v4007 = vsel %vm278, %v4002, %v4006
      %v4008 = vshrl.u32 %v3800, 16
      %v4010 = vrot.slane %v4008, 4
      %v4011 = vor.u32 %v4010, %v4006
      %v4012 = vrot.slane %v4011, 4
      %v4014 = vshll.u32 %v3801, 16
      %v4016 = vrot.slane %v4014, 5
      %v4017 = vsel %vm278, %v4012, %v4016
      %v4019 = vshrl.u32 %v3802, 16
      %v4021 = vrot.slane %v4019, 4
      %v4022 = vshll.u32 %v3802, 16
      %v4024 = vrot.slane %v4022, 5
      %v4025 = vor.u32 %v4021, %v4024
      %v4026 = vrot.slane %v4025, 4
      %v4028 = vshll.u32 %v3803, 16
      %v4030 = vrot.slane %v4028, 5
      %v4031 = vsel %vm278, %v4026, %v4030
      %v4032 = vshrl.u32 %v3803, 16
      %v4034 = vrot.slane %v4032, 4
      %v4035 = vor.u32 %v4034, %v4030
      %v4036 = vrot.slane %v4035, 4
      %v4038 = vshll.u32 %v3804, 16
      %v4040 = vrot.slane %v4038, 5
      %v4041 = vsel %vm278, %v4036, %v4040
      %v4043 = vshrl.u32 %v3805, 16
      %v4045 = vrot.slane %v4043, 4
      %v4046 = vshll.u32 %v3805, 16
      %v4048 = vrot.slane %v4046, 5
      %v4049 = vor.u32 %v4045, %v4048
      %v4050 = vrot.slane %v4049, 4
      %v4052 = vshll.u32 %v3806, 16
      %v4054 = vrot.slane %v4052, 5
      %v4055 = vsel %vm278, %v4050, %v4054
      %v4056 = vshrl.u32 %v3806, 16
      %v4058 = vrot.slane %v4056, 4
      %v4059 = vor.u32 %v4058, %v4054
      %v4060 = vrot.slane %v4059, 4
      %v4062 = vshll.u32 %v3807, 16
      %v4064 = vrot.slane %v4062, 5
      %v4065 = vsel %vm278, %v4060, %v4064
      %v4067 = vshrl.u32 %v3808, 16
      %v4069 = vrot.slane %v4067, 4
      %v4070 = vshll.u32 %v3808, 16
      %v4072 = vrot.slane %v4070, 5
      %v4073 = vor.u32 %v4069, %v4072
      %v4074 = vrot.slane %v4073, 4
      %v4076 = vshll.u32 %v3809, 16
      %v4078 = vrot.slane %v4076, 5
      %v4079 = vsel %vm278, %v4074, %v4078
      %v4080 = vshrl.u32 %v3809, 16
      %v4082 = vrot.slane %v4080, 4
      %v4083 = vor.u32 %v4082, %v4078
      %v4084 = vrot.slane %v4083, 4
      %v4086 = vshll.u32 %v3810, 16
      %v4088 = vrot.slane %v4086, 5
      %v4089 = vsel %vm278, %v4084, %v4088
      %v4091 = vshrl.u32 %v3811, 16
      %v4093 = vrot.slane %v4091, 4
      %v4094 = vshll.u32 %v3811, 16
      %v4096 = vrot.slane %v4094, 5
      %v4097 = vor.u32 %v4093, %v4096
      %v4098 = vrot.slane %v4097, 4
      %v4100 = vshll.u32 %v3812, 16
      %v4102 = vrot.slane %v4100, 5
      %v4103 = vsel %vm278, %v4098, %v4102
      %v4104 = vshrl.u32 %v3812, 16
      %v4106 = vrot.slane %v4104, 4
      %v4107 = vor.u32 %v4106, %v4102
      %v4108 = vrot.slane %v4107, 4
      %v4110 = vshll.u32 %v3813, 16
      %v4112 = vrot.slane %v4110, 5
      %v4113 = vsel %vm278, %v4108, %v4112
      %v4115 = vshrl.u32 %v3814, 16
      %v4117 = vrot.slane %v4115, 4
      %v4118 = vshll.u32 %v3814, 16
      %v4120 = vrot.slane %v4118, 5
      %v4121 = vor.u32 %v4117, %v4120
      %v4122 = vrot.slane %v4121, 4
      %v4124 = vshll.u32 %v3815, 16
      %v4126 = vrot.slane %v4124, 5
      %v4127 = vsel %vm278, %v4122, %v4126
      %v4128 = vshrl.u32 %v3815, 16
      %v4130 = vrot.slane %v4128, 4
      %v4131 = vor.u32 %v4130, %v4126
      %v4132 = vrot.slane %v4131, 4
      %v4134 = vshll.u32 %v3816, 16
      %v4136 = vrot.slane %v4134, 5
      %v4137 = vsel %vm278, %v4132, %v4136
      %v4139 = vshrl.u32 %v3817, 16
      %v4141 = vrot.slane %v4139, 4
      %v4142 = vshll.u32 %v3817, 16
      %v4144 = vrot.slane %v4142, 5
      %v4145 = vor.u32 %v4141, %v4144
      %v4146 = vrot.slane %v4145, 4
      %v4148 = vshll.u32 %v3818, 16
      %v4150 = vrot.slane %v4148, 5
      %v4151 = vsel %vm278, %v4146, %v4150
      %v4152 = vshrl.u32 %v3818, 16
      %v4154 = vrot.slane %v4152, 4
      %v4155 = vor.u32 %v4154, %v4150
      %v4156 = vrot.slane %v4155, 4
      %v4158 = vshll.u32 %v3819, 16
      %v4160 = vrot.slane %v4158, 5
      %v4161 = vsel %vm278, %v4156, %v4160
      %v4163 = vshrl.u32 %v3820, 16
      %v4165 = vrot.slane %v4163, 4
      %v4166 = vshll.u32 %v3820, 16
      %v4168 = vrot.slane %v4166, 5
      %v4169 = vor.u32 %v4165, %v4168
      %v4170 = vrot.slane %v4169, 4
      %v4172 = vshll.u32 %v3821, 16
      %v4174 = vrot.slane %v4172, 5
      %v4175 = vsel %vm278, %v4170, %v4174
      %v4176 = vshrl.u32 %v3821, 16
      %v4178 = vrot.slane %v4176, 4
      %v4179 = vor.u32 %v4178, %v4174
      %v4180 = vrot.slane %v4179, 4
      %v4182 = vshll.u32 %v3822, 16
      %v4184 = vrot.slane %v4182, 5
      %v4185 = vsel %vm278, %v4180, %v4184
      %v4187 = vshrl.u32 %v3823, 16
      %v4189 = vrot.slane %v4187, 4
      %v4190 = vshll.u32 %v3823, 16
      %v4192 = vrot.slane %v4190, 5
      %v4193 = vor.u32 %v4189, %v4192
      %v4194 = vrot.slane %v4193, 4
      %v4196 = vshll.u32 %v3824, 16
      %v4198 = vrot.slane %v4196, 5
      %v4199 = vsel %vm278, %v4194, %v4198
      %v4200 = vshrl.u32 %v3824, 16
      %v4202 = vrot.slane %v4200, 4
      %v4203 = vor.u32 %v4202, %v4198
      %v4204 = vrot.slane %v4203, 4
      %v4206 = vshll.u32 %v3825, 16
      %v4208 = vrot.slane %v4206, 5
      %v4209 = vsel %vm278, %v4204, %v4208
      %s4210 = scalar_lea.vmem %s1, 224
      %v4211 = vld [vmem:[%s4210] sm:$0xf]
      %v4212 = vld [vmem:[%s4210 + $0x4] sm:$0xf]
      %v4213 = vld [vmem:[%s4210 + $0x8] sm:$0xf]
      %v4214 = vld [vmem:[%s4210 + $0xc] sm:$0xf]
      %v4215 = vld [vmem:[%s4210 + $0x10] sm:$0xf]
      %v4216 = vld [vmem:[%s4210 + $0x14] sm:$0xf]
      %v4217 = vld [vmem:[%s4210 + $0x18] sm:$0xf]
      %v4218 = vld [vmem:[%s4210 + $0x1c] sm:$0xf]
      %v4219 = vunpack.c.l.b16 %v3839
      %v4220 = vunpack.c.l.b16 %v3849
      %v4221 = vunpack.c.l.b16 %v3863
      %v4222 = vunpack.c.l.b16 %v3873
      %v4223 = vunpack.c.l.b16 %v3887
      %v4224 = vunpack.c.l.b16 %v3897
      %v4225 = vunpack.c.l.b16 %v3911
      %v4226 = vunpack.c.l.b16 %v3921
      %v4227 = vunpack.c.l.b16 %v3935
      %v4228 = vunpack.c.l.b16 %v3945
      %v4229 = vunpack.c.l.b16 %v3959
      %v4230 = vunpack.c.l.b16 %v3969
      %v4231 = vunpack.c.l.b16 %v3983
      %v4232 = vunpack.c.l.b16 %v3993
      %v4233 = vunpack.c.l.b16 %v4007
      %v4234 = vunpack.c.l.b16 %v4017
      %v4235 = vunpack.c.l.b16 %v4031
      %v4236 = vunpack.c.l.b16 %v4041
      %v4237 = vunpack.c.l.b16 %v4055
      %v4238 = vunpack.c.l.b16 %v4065
      %v4239 = vunpack.c.l.b16 %v4079
      %v4240 = vunpack.c.l.b16 %v4089
      %v4241 = vunpack.c.l.b16 %v4103
      %v4242 = vunpack.c.l.b16 %v4113
      %v4243 = vunpack.c.l.b16 %v4127
      %v4244 = vunpack.c.l.b16 %v4137
      %v4245 = vunpack.c.l.b16 %v4151
      %v4246 = vunpack.c.l.b16 %v4161
      %v4247 = vunpack.c.l.b16 %v4175
      %v4248 = vunpack.c.l.b16 %v4185
      %v4249 = vunpack.c.l.b16 %v4199
      %v4250 = vunpack.c.l.b16 %v4209
      %v4251 = vpack.c.b16 %v4220, %v4219
      %v4252 = vpack.c.b16 %v4222, %v4221
      %v4253 = vpack.c.b16 %v4224, %v4223
      %v4254 = vpack.c.b16 %v4226, %v4225
      %v4255 = vpack.c.b16 %v4228, %v4227
      %v4256 = vpack.c.b16 %v4230, %v4229
      %v4257 = vpack.c.b16 %v4232, %v4231
      %v4258 = vpack.c.b16 %v4234, %v4233
      %v4259 = vpack.c.b16 %v4236, %v4235
      %v4260 = vpack.c.b16 %v4238, %v4237
      %v4261 = vpack.c.b16 %v4240, %v4239
      %v4262 = vpack.c.b16 %v4242, %v4241
      %v4263 = vpack.c.b16 %v4244, %v4243
      %v4264 = vpack.c.b16 %v4246, %v4245
      %v4265 = vpack.c.b16 %v4248, %v4247
      %v4266 = vpack.c.b16 %v4250, %v4249
      %v4275 = vunpack.c.l.b16 %v4211
      %v4276 = vunpack.c.l.b16 %v4212
      %v4277 = vunpack.c.l.b16 %v4213
      %v4278 = vunpack.c.l.b16 %v4214
      %v4279 = vunpack.c.l.b16 %v4215
      %v4280 = vunpack.c.l.b16 %v4216
      %v4281 = vunpack.c.l.b16 %v4217
      %v4282 = vunpack.c.l.b16 %v4218
      %v4283 = vpack.c.b16 %v4276, %v4275
      %v4284 = vpack.c.b16 %v4278, %v4277
      %v4285 = vpack.c.b16 %v4280, %v4279
      %v4286 = vpack.c.b16 %v4282, %v4281
      %v4292 = vsel %vm744, %v4251, 0
      %v4295 = vsel %vm744, %v4252, 0
      %v4298 = vsel %vm744, %v4253, 0
      %v4301 = vsel %vm744, %v4254, 0
      %v4304 = vsel %vm744, %v4255, 0
      %v4307 = vsel %vm744, %v4256, 0
      %v4310 = vsel %vm744, %v4257, 0
      %v4313 = vsel %vm744, %v4258, 0
      %v4316 = vsel %vm744, %v4259, 0
      %v4319 = vsel %vm744, %v4260, 0
      %v4322 = vsel %vm744, %v4261, 0
      %v4325 = vsel %vm744, %v4262, 0
      %v4328 = vsel %vm744, %v4263, 0
      %v4331 = vsel %vm744, %v4264, 0
      %v4334 = vsel %vm744, %v4265, 0
      %v4337 = vsel %vm744, %v4266, 0
      %4339 = vmatprep.subr.bf16.mxu0 0
      %4340 = vmatpush1.bf16.msra.mxu0 %v4283
      %4341 = vmatprep.subr.bf16.mxu0 0
      %4342 = vmatpush1.bf16.msra.mxu0 %v4284
      %4343 = vmatprep.subr.bf16.mxu0 0
      %4344 = vmatpush1.bf16.msra.mxu0 %v4285
      %4345 = vmatprep.subr.bf16.mxu0 0
      %4346 = vmatpush1.bf16.msra.mxu0 %v4286
      %4347 = vmatprep.subr.bf16.mxu0 0
      %4348 = vmatpush1.bf16.msra.mxu0 0
      %4349 = vmatprep.subr.bf16.mxu0 0
      %4350 = vmatpush1.bf16.msra.mxu0 0
      %4351 = vmatprep.subr.bf16.mxu0 0
      %4352 = vmatpush1.bf16.msra.mxu0 0
      %4353 = vmatprep.subr.bf16.mxu0 0
      %4354 = vmatpush1.bf16.msra.mxu0 0
      %4355 = vmatprep.subr.bf16.mxu0 0
      %4356 = vmatpush1.bf16.msra.mxu0 0
      %4357 = vmatprep.subr.bf16.mxu0 0
      %4358 = vmatpush1.bf16.msra.mxu0 0
      %4359 = vmatprep.subr.bf16.mxu0 0
      %4360 = vmatpush1.bf16.msra.mxu0 0
      %4361 = vmatprep.subr.bf16.mxu0 0
      %4362 = vmatpush1.bf16.msra.mxu0 0
      %4363 = vmatprep.subr.bf16.mxu0 0
      %4364 = vmatpush1.bf16.msra.mxu0 0
      %4365 = vmatprep.subr.bf16.mxu0 0
      %4366 = vmatpush1.bf16.msra.mxu0 0
      %4367 = vmatprep.subr.bf16.mxu0 0
      %4368 = vmatpush1.bf16.msra.mxu0 0
      %4369 = vmatprep.subr.bf16.mxu0 0
      %4370 = vmatpush1.bf16.msra.mxu0 0
      %4371 = vmatprep.mubr.bf16.mxu0 0
      %4372 = vmatmul.mubr.bf16.gmra.mrb[0].mxu0 %v4292
      %v4373 = vpop.f32.mrb[0].mxu0
      %v4374 = vadd.f32 0.0, %v4373
      %v4375 = vpop.f32.mrb[0].mxu0
      %v4376 = vpop.f32.mrb[0].mxu0
      %v4377 = vadd.f32 0.0, %v4376
      %v4378 = vpop.f32.mrb[0].mxu0
      %4379 = vmatprep.mubr.bf16.mxu0 0
      %4380 = vmatmul.mubr.bf16.gmra.mrb[0].mxu0 %v4295
      %v4381 = vpop.f32.mrb[0].mxu0
      %v4382 = vadd.f32 0.0, %v4381
      %v4383 = vpop.f32.mrb[0].mxu0
      %v4384 = vpop.f32.mrb[0].mxu0
      %v4385 = vadd.f32 0.0, %v4384
      %v4386 = vpop.f32.mrb[0].mxu0
      %4387 = vmatprep.mubr.bf16.mxu0 0
      %4388 = vmatmul.mubr.bf16.gmra.mrb[0].mxu0 %v4298
      %v4389 = vpop.f32.mrb[0].mxu0
      %v4390 = vadd.f32 0.0, %v4389
      %v4391 = vpop.f32.mrb[0].mxu0
      %v4392 = vpop.f32.mrb[0].mxu0
      %v4393 = vadd.f32 0.0, %v4392
      %v4394 = vpop.f32.mrb[0].mxu0
      %4395 = vmatprep.mubr.bf16.mxu0 0
      %4396 = vmatmul.mubr.bf16.gmra.mrb[0].mxu0 %v4301
      %v4397 = vpop.f32.mrb[0].mxu0
      %v4398 = vadd.f32 0.0, %v4397
      %v4399 = vpop.f32.mrb[0].mxu0
      %v4400 = vpop.f32.mrb[0].mxu0
      %v4401 = vadd.f32 0.0, %v4400
      %v4402 = vpop.f32.mrb[0].mxu0
      %4403 = vmatprep.mubr.bf16.mxu0 0
      %4404 = vmatmul.mubr.bf16.gmra.mrb[0].mxu0 %v4304
      %v4405 = vpop.f32.mrb[0].mxu0
      %v4406 = vadd.f32 0.0, %v4405
      %v4407 = vpop.f32.mrb[0].mxu0
      %v4408 = vpop.f32.mrb[0].mxu0
      %v4409 = vadd.f32 0.0, %v4408
      %v4410 = vpop.f32.mrb[0].mxu0
      %4411 = vmatprep.mubr.bf16.mxu0 0
      %4412 = vmatmul.mubr.bf16.gmra.mrb[0].mxu0 %v4307
      %v4413 = vpop.f32.mrb[0].mxu0
      %v4414 = vadd.f32 0.0, %v4413
      %v4415 = vpop.f32.mrb[0].mxu0
      %v4416 = vpop.f32.mrb[0].mxu0
      %v4417 = vadd.f32 0.0, %v4416
      %v4418 = vpop.f32.mrb[0].mxu0
      %4419 = vmatprep.mubr.bf16.mxu0 0
      %4420 = vmatmul.mubr.bf16.gmra.mrb[0].mxu0 %v4310
      %v4421 = vpop.f32.mrb[0].mxu0
      %v4422 = vadd.f32 0.0, %v4421
      %v4423 = vpop.f32.mrb[0].mxu0
      %v4424 = vpop.f32.mrb[0].mxu0
      %v4425 = vadd.f32 0.0, %v4424
      %v4426 = vpop.f32.mrb[0].mxu0
      %4427 = vmatprep.mubr.bf16.mxu0 0
      %4428 = vmatmul.mubr.bf16.gmra.mrb[0].mxu0 %v4313
      %v4429 = vpop.f32.mrb[0].mxu0
      %v4430 = vadd.f32 0.0, %v4429
      %v4431 = vpop.f32.mrb[0].mxu0
      %v4432 = vpop.f32.mrb[0].mxu0
      %v4433 = vadd.f32 0.0, %v4432
      %v4434 = vpop.f32.mrb[0].mxu0
      %4435 = vmatprep.mubr.bf16.mxu0 0
      %4436 = vmatmul.mubr.bf16.gmra.mrb[0].mxu0 %v4316
      %v4437 = vpop.f32.mrb[0].mxu0
      %v4438 = vadd.f32 0.0, %v4437
      %v4439 = vpop.f32.mrb[0].mxu0
      %v4440 = vpop.f32.mrb[0].mxu0
      %v4441 = vadd.f32 0.0, %v4440
      %v4442 = vpop.f32.mrb[0].mxu0
      %4443 = vmatprep.mubr.bf16.mxu0 0
      %4444 = vmatmul.mubr.bf16.gmra.mrb[0].mxu0 %v4319
      %v4445 = vpop.f32.mrb[0].mxu0
      %v4446 = vadd.f32 0.0, %v4445
      %v4447 = vpop.f32.mrb[0].mxu0
      %v4448 = vpop.f32.mrb[0].mxu0
      %v4449 = vadd.f32 0.0, %v4448
      %v4450 = vpop.f32.mrb[0].mxu0
      %4451 = vmatprep.mubr.bf16.mxu0 0
      %4452 = vmatmul.mubr.bf16.gmra.mrb[0].mxu0 %v4322
      %v4453 = vpop.f32.mrb[0].mxu0
      %v4454 = vadd.f32 0.0, %v4453
      %v4455 = vpop.f32.mrb[0].mxu0
      %v4456 = vpop.f32.mrb[0].mxu0
      %v4457 = vadd.f32 0.0, %v4456
      %v4458 = vpop.f32.mrb[0].mxu0
      %4459 = vmatprep.mubr.bf16.mxu0 0
      %4460 = vmatmul.mubr.bf16.gmra.mrb[0].mxu0 %v4325
      %v4461 = vpop.f32.mrb[0].mxu0
      %v4462 = vadd.f32 0.0, %v4461
      %v4463 = vpop.f32.mrb[0].mxu0
      %v4464 = vpop.f32.mrb[0].mxu0
      %v4465 = vadd.f32 0.0, %v4464
      %v4466 = vpop.f32.mrb[0].mxu0
      %4467 = vmatprep.mubr.bf16.mxu0 0
      %4468 = vmatmul.mubr.bf16.gmra.mrb[0].mxu0 %v4328
      %v4469 = vpop.f32.mrb[0].mxu0
      %v4470 = vadd.f32 0.0, %v4469
      %v4471 = vpop.f32.mrb[0].mxu0
      %v4472 = vpop.f32.mrb[0].mxu0
      %v4473 = vadd.f32 0.0, %v4472
      %v4474 = vpop.f32.mrb[0].mxu0
      %4475 = vmatprep.mubr.bf16.mxu0 0
      %4476 = vmatmul.mubr.bf16.gmra.mrb[0].mxu0 %v4331
      %v4477 = vpop.f32.mrb[0].mxu0
      %v4478 = vadd.f32 0.0, %v4477
      %v4479 = vpop.f32.mrb[0].mxu0
      %v4480 = vpop.f32.mrb[0].mxu0
      %v4481 = vadd.f32 0.0, %v4480
      %v4482 = vpop.f32.mrb[0].mxu0
      %4483 = vmatprep.mubr.bf16.mxu0 0
      %4484 = vmatmul.mubr.bf16.gmra.mrb[0].mxu0 %v4334
      %v4485 = vpop.f32.mrb[0].mxu0
      %v4486 = vadd.f32 0.0, %v4485
      %v4487 = vpop.f32.mrb[0].mxu0
      %v4488 = vpop.f32.mrb[0].mxu0
      %v4489 = vadd.f32 0.0, %v4488
      %v4490 = vpop.f32.mrb[0].mxu0
      %4491 = vmatprep.mubr.bf16.mxu0 0
      %4492 = vmatmul.mubr.bf16.gmra.mrb[0].mxu0 %v4337
      %v4493 = vpop.f32.mrb[0].mxu0
      %v4494 = vadd.f32 0.0, %v4493
      %v4495 = vpop.f32.mrb[0].mxu0
      %v4496 = vpop.f32.mrb[0].mxu0
      %v4497 = vadd.f32 0.0, %v4496
      %v4498 = vpop.f32.mrb[0].mxu0
      %4499 = vdwg.mxu0
      %v4500 = vadd.f32 %v3746, %v4374
      %v4501 = vadd.f32 %v3747, %v4377
      %v4502 = vadd.f32 %v3748, %v4382
      %v4503 = vadd.f32 %v3749, %v4385
      %v4504 = vadd.f32 %v3750, %v4390
      %v4505 = vadd.f32 %v3751, %v4393
      %v4506 = vadd.f32 %v3752, %v4398
      %v4507 = vadd.f32 %v3753, %v4401
      %v4508 = vadd.f32 %v3754, %v4406
      %v4509 = vadd.f32 %v3755, %v4409
      %v4510 = vadd.f32 %v3756, %v4414
      %v4511 = vadd.f32 %v3757, %v4417
      %v4512 = vadd.f32 %v3758, %v4422
      %v4513 = vadd.f32 %v3759, %v4425
      %v4514 = vadd.f32 %v3760, %v4430
      %v4515 = vadd.f32 %v3761, %v4433
      %v4516 = vadd.f32 %v3762, %v4438
      %v4517 = vadd.f32 %v3763, %v4441
      %v4518 = vadd.f32 %v3764, %v4446
      %v4519 = vadd.f32 %v3765, %v4449
      %v4520 = vadd.f32 %v3766, %v4454
      %v4521 = vadd.f32 %v3767, %v4457
      %v4522 = vadd.f32 %v3768, %v4462
      %v4523 = vadd.f32 %v3769, %v4465
      %v4524 = vadd.f32 %v3770, %v4470
      %v4525 = vadd.f32 %v3771, %v4473
      %v4526 = vadd.f32 %v3772, %v4478
      %v4527 = vadd.f32 %v3773, %v4481
      %v4528 = vadd.f32 %v3774, %v4486
      %v4529 = vadd.f32 %v3775, %v4489
      %v4530 = vadd.f32 %v3776, %v4494
      %v4531 = vadd.f32 %v3777, %v4497
      %v4532 = vld [vmem:[%s3391] sm:$0xe]
      %v4533 = vld [vmem:[%s3391 + $0xc] sm:$0xe]
      %v4534 = vld [vmem:[%s3391 + $0x18] sm:$0xe]
      %v4535 = vld [vmem:[%s3391 + $0x24] sm:$0xe]
      %v4536 = vld [vmem:[%s3391 + $0x30] sm:$0xe]
      %v4537 = vld [vmem:[%s3391 + $0x3c] sm:$0xe]
      %v4538 = vld [vmem:[%s3391 + $0x48] sm:$0xe]
      %v4539 = vld [vmem:[%s3391 + $0x54] sm:$0xe]
      %v4540 = vld [vmem:[%s3391 + $0x60] sm:$0xe]
      %v4541 = vld [vmem:[%s3391 + $0x6c] sm:$0xe]
      %v4542 = vld [vmem:[%s3391 + $0x78] sm:$0xe]
      %v4543 = vld [vmem:[%s3391 + $0x84] sm:$0xe]
      %v4544 = vld [vmem:[%s3391 + $0x90] sm:$0xe]
      %v4545 = vld [vmem:[%s3391 + $0x9c] sm:$0xe]
      %v4546 = vld [vmem:[%s3391 + $0xa8] sm:$0xe]
      %v4547 = vld [vmem:[%s3391 + $0xb4] sm:$0xe]
      %v4596 = vrot.slane %v4532, 5
      %v4597 = vrot.slane %v4596, 4
      %v4598 = vrot.slane %v3779, 5
      %v4599 = vsel %vm1317, %v4597, %v4598
      %v4600 = vrot.slane %v4598, 4
      %v4601 = vrot.slane %v3780, 5
      %v4602 = vsel %vm1317, %v4600, %v4601
      %v4603 = vrot.slane %v4533, 5
      %v4604 = vrot.slane %v4603, 4
      %v4605 = vrot.slane %v3782, 5
      %v4606 = vsel %vm1317, %v4604, %v4605
      %v4607 = vrot.slane %v4605, 4
      %v4608 = vrot.slane %v3783, 5
      %v4609 = vsel %vm1317, %v4607, %v4608
      %v4610 = vrot.slane %v4534, 5
      %v4611 = vrot.slane %v4610, 4
      %v4612 = vrot.slane %v3785, 5
      %v4613 = vsel %vm1317, %v4611, %v4612
      %v4614 = vrot.slane %v4612, 4
      %v4615 = vrot.slane %v3786, 5
      %v4616 = vsel %vm1317, %v4614, %v4615
      %v4617 = vrot.slane %v4535, 5
      %v4618 = vrot.slane %v4617, 4
      %v4619 = vrot.slane %v3788, 5
      %v4620 = vsel %vm1317, %v4618, %v4619
      %v4621 = vrot.slane %v4619, 4
      %v4622 = vrot.slane %v3789, 5
      %v4623 = vsel %vm1317, %v4621, %v4622
      %v4624 = vrot.slane %v4536, 5
      %v4625 = vrot.slane %v4624, 4
      %v4626 = vrot.slane %v3791, 5
      %v4627 = vsel %vm1317, %v4625, %v4626
      %v4628 = vrot.slane %v4626, 4
      %v4629 = vrot.slane %v3792, 5
      %v4630 = vsel %vm1317, %v4628, %v4629
      %v4631 = vrot.slane %v4537, 5
      %v4632 = vrot.slane %v4631, 4
      %v4633 = vrot.slane %v3794, 5
      %v4634 = vsel %vm1317, %v4632, %v4633
      %v4635 = vrot.slane %v4633, 4
      %v4636 = vrot.slane %v3795, 5
      %v4637 = vsel %vm1317, %v4635, %v4636
      %v4638 = vrot.slane %v4538, 5
      %v4639 = vrot.slane %v4638, 4
      %v4640 = vrot.slane %v3797, 5
      %v4641 = vsel %vm1317, %v4639, %v4640
      %v4642 = vrot.slane %v4640, 4
      %v4643 = vrot.slane %v3798, 5
      %v4644 = vsel %vm1317, %v4642, %v4643
      %v4645 = vrot.slane %v4539, 5
      %v4646 = vrot.slane %v4645, 4
      %v4647 = vrot.slane %v3800, 5
      %v4648 = vsel %vm1317, %v4646, %v4647
      %v4649 = vrot.slane %v4647, 4
      %v4650 = vrot.slane %v3801, 5
      %v4651 = vsel %vm1317, %v4649, %v4650
      %v4652 = vrot.slane %v4540, 5
      %v4653 = vrot.slane %v4652, 4
      %v4654 = vrot.slane %v3803, 5
      %v4655 = vsel %vm1317, %v4653, %v4654
      %v4656 = vrot.slane %v4654, 4
      %v4657 = vrot.slane %v3804, 5
      %v4658 = vsel %vm1317, %v4656, %v4657
      %v4659 = vrot.slane %v4541, 5
      %v4660 = vrot.slane %v4659, 4
      %v4661 = vrot.slane %v3806, 5
      %v4662 = vsel %vm1317, %v4660, %v4661
      %v4663 = vrot.slane %v4661, 4
      %v4664 = vrot.slane %v3807, 5
      %v4665 = vsel %vm1317, %v4663, %v4664
      %v4666 = vrot.slane %v4542, 5
      %v4667 = vrot.slane %v4666, 4
      %v4668 = vrot.slane %v3809, 5
      %v4669 = vsel %vm1317, %v4667, %v4668
      %v4670 = vrot.slane %v4668, 4
      %v4671 = vrot.slane %v3810, 5
      %v4672 = vsel %vm1317, %v4670, %v4671
      %v4673 = vrot.slane %v4543, 5
      %v4674 = vrot.slane %v4673, 4
      %v4675 = vrot.slane %v3812, 5
      %v4676 = vsel %vm1317, %v4674, %v4675
      %v4677 = vrot.slane %v4675, 4
      %v4678 = vrot.slane %v3813, 5
      %v4679 = vsel %vm1317, %v4677, %v4678
      %v4680 = vrot.slane %v4544, 5
      %v4681 = vrot.slane %v4680, 4
      %v4682 = vrot.slane %v3815, 5
      %v4683 = vsel %vm1317, %v4681, %v4682
      %v4684 = vrot.slane %v4682, 4
      %v4685 = vrot.slane %v3816, 5
      %v4686 = vsel %vm1317, %v4684, %v4685
      %v4687 = vrot.slane %v4545, 5
      %v4688 = vrot.slane %v4687, 4
      %v4689 = vrot.slane %v3818, 5
      %v4690 = vsel %vm1317, %v4688, %v4689
      %v4691 = vrot.slane %v4689, 4
      %v4692 = vrot.slane %v3819, 5
      %v4693 = vsel %vm1317, %v4691, %v4692
      %v4694 = vrot.slane %v4546, 5
      %v4695 = vrot.slane %v4694, 4
      %v4696 = vrot.slane %v3821, 5
      %v4697 = vsel %vm1317, %v4695, %v4696
      %v4698 = vrot.slane %v4696, 4
      %v4699 = vrot.slane %v3822, 5
      %v4700 = vsel %vm1317, %v4698, %v4699
      %v4701 = vrot.slane %v4547, 5
      %v4702 = vrot.slane %v4701, 4
      %v4703 = vrot.slane %v3824, 5
      %v4704 = vsel %vm1317, %v4702, %v4703
      %v4705 = vrot.slane %v4703, 4
      %v4706 = vrot.slane %v3825, 5
      %v4707 = vsel %vm1317, %v4705, %v4706
      %s4708 = scalar_lea.vmem %s1, 256
      %v4709 = vld [vmem:[%s4708] sm:$0xf]
      %v4710 = vld [vmem:[%s4708 + $0x4] sm:$0xf]
      %v4711 = vld [vmem:[%s4708 + $0x8] sm:$0xf]
      %v4712 = vld [vmem:[%s4708 + $0xc] sm:$0xf]
      %v4713 = vld [vmem:[%s4708 + $0x10] sm:$0xf]
      %v4714 = vld [vmem:[%s4708 + $0x14] sm:$0xf]
      %v4715 = vld [vmem:[%s4708 + $0x18] sm:$0xf]
      %v4716 = vld [vmem:[%s4708 + $0x1c] sm:$0xf]
      %v4717 = vunpack.c.l.b16 %v4599
      %v4718 = vunpack.c.l.b16 %v4602
      %v4719 = vunpack.c.l.b16 %v4606
      %v4720 = vunpack.c.l.b16 %v4609
      %v4721 = vunpack.c.l.b16 %v4613
      %v4722 = vunpack.c.l.b16 %v4616
      %v4723 = vunpack.c.l.b16 %v4620
      %v4724 = vunpack.c.l.b16 %v4623
      %v4725 = vunpack.c.l.b16 %v4627
      %v4726 = vunpack.c.l.b16 %v4630
      %v4727 = vunpack.c.l.b16 %v4634
      %v4728 = vunpack.c.l.b16 %v4637
      %v4729 = vunpack.c.l.b16 %v4641
      %v4730 = vunpack.c.l.b16 %v4644
      %v4731 = vunpack.c.l.b16 %v4648
      %v4732 = vunpack.c.l.b16 %v4651
      %v4733 = vunpack.c.l.b16 %v4655
      %v4734 = vunpack.c.l.b16 %v4658
      %v4735 = vunpack.c.l.b16 %v4662
      %v4736 = vunpack.c.l.b16 %v4665
      %v4737 = vunpack.c.l.b16 %v4669
      %v4738 = vunpack.c.l.b16 %v4672
      %v4739 = vunpack.c.l.b16 %v4676
      %v4740 = vunpack.c.l.b16 %v4679
      %v4741 = vunpack.c.l.b16 %v4683
      %v4742 = vunpack.c.l.b16 %v4686
      %v4743 = vunpack.c.l.b16 %v4690
      %v4744 = vunpack.c.l.b16 %v4693
      %v4745 = vunpack.c.l.b16 %v4697
      %v4746 = vunpack.c.l.b16 %v4700
      %v4747 = vunpack.c.l.b16 %v4704
      %v4748 = vunpack.c.l.b16 %v4707
      %v4749 = vpack.c.b16 %v4718, %v4717
      %v4750 = vpack.c.b16 %v4720, %v4719
      %v4751 = vpack.c.b16 %v4722, %v4721
      %v4752 = vpack.c.b16 %v4724, %v4723
      %v4753 = vpack.c.b16 %v4726, %v4725
      %v4754 = vpack.c.b16 %v4728, %v4727
      %v4755 = vpack.c.b16 %v4730, %v4729
      %v4756 = vpack.c.b16 %v4732, %v4731
      %v4757 = vpack.c.b16 %v4734, %v4733
      %v4758 = vpack.c.b16 %v4736, %v4735
      %v4759 = vpack.c.b16 %v4738, %v4737
      %v4760 = vpack.c.b16 %v4740, %v4739
      %v4761 = vpack.c.b16 %v4742, %v4741
      %v4762 = vpack.c.b16 %v4744, %v4743
      %v4763 = vpack.c.b16 %v4746, %v4745
      %v4764 = vpack.c.b16 %v4748, %v4747
      %v4773 = vunpack.c.l.b16 %v4709
      %v4774 = vunpack.c.l.b16 %v4710
      %v4775 = vunpack.c.l.b16 %v4711
      %v4776 = vunpack.c.l.b16 %v4712
      %v4777 = vunpack.c.l.b16 %v4713
      %v4778 = vunpack.c.l.b16 %v4714
      %v4779 = vunpack.c.l.b16 %v4715
      %v4780 = vunpack.c.l.b16 %v4716
      %v4781 = vpack.c.b16 %v4774, %v4773
      %v4782 = vpack.c.b16 %v4776, %v4775
      %v4783 = vpack.c.b16 %v4778, %v4777
      %v4784 = vpack.c.b16 %v4780, %v4779
      %v4790 = vsel %vm744, %v4749, 0
      %v4793 = vsel %vm744, %v4750, 0
      %v4796 = vsel %vm744, %v4751, 0
      %v4799 = vsel %vm744, %v4752, 0
      %v4802 = vsel %vm744, %v4753, 0
      %v4805 = vsel %vm744, %v4754, 0
      %v4808 = vsel %vm744, %v4755, 0
      %v4811 = vsel %vm744, %v4756, 0
      %v4814 = vsel %vm744, %v4757, 0
      %v4817 = vsel %vm744, %v4758, 0
      %v4820 = vsel %vm744, %v4759, 0
      %v4823 = vsel %vm744, %v4760, 0
      %v4826 = vsel %vm744, %v4761, 0
      %v4829 = vsel %vm744, %v4762, 0
      %v4832 = vsel %vm744, %v4763, 0
      %v4835 = vsel %vm744, %v4764, 0
      %4837 = vmatprep.subr.bf16.mxu0 0
      %4838 = vmatpush1.bf16.msra.mxu0 %v4781
      %4839 = vmatprep.subr.bf16.mxu0 0
      %4840 = vmatpush1.bf16.msra.mxu0 %v4782
      %4841 = vmatprep.subr.bf16.mxu0 0
      %4842 = vmatpush1.bf16.msra.mxu0 %v4783
      %4843 = vmatprep.subr.bf16.mxu0 0
      %4844 = vmatpush1.bf16.msra.mxu0 %v4784
      %4845 = vmatprep.subr.bf16.mxu0 0
      %4846 = vmatpush1.bf16.msra.mxu0 0
      %4847 = vmatprep.subr.bf16.mxu0 0
      %4848 = vmatpush1.bf16.msra.mxu0 0
      %4849 = vmatprep.subr.bf16.mxu0 0
      %4850 = vmatpush1.bf16.msra.mxu0 0
      %4851 = vmatprep.subr.bf16.mxu0 0
      %4852 = vmatpush1.bf16.msra.mxu0 0
      %4853 = vmatprep.subr.bf16.mxu0 0
      %4854 = vmatpush1.bf16.msra.mxu0 0
      %4855 = vmatprep.subr.bf16.mxu0 0
      %4856 = vmatpush1.bf16.msra.mxu0 0
      %4857 = vmatprep.subr.bf16.mxu0 0
      %4858 = vmatpush1.bf16.msra.mxu0 0
      %4859 = vmatprep.subr.bf16.mxu0 0
      %4860 = vmatpush1.bf16.msra.mxu0 0
      %4861 = vmatprep.subr.bf16.mxu0 0
      %4862 = vmatpush1.bf16.msra.mxu0 0
      %4863 = vmatprep.subr.bf16.mxu0 0
      %4864 = vmatpush1.bf16.msra.mxu0 0
      %4865 = vmatprep.subr.bf16.mxu0 0
      %4866 = vmatpush1.bf16.msra.mxu0 0
      %4867 = vmatprep.subr.bf16.mxu0 0
      %4868 = vmatpush1.bf16.msra.mxu0 0
      %4869 = vmatprep.mubr.bf16.mxu0 0
      %4870 = vmatmul.mubr.bf16.gmra.mrb[0].mxu0 %v4790
      %v4871 = vpop.f32.mrb[0].mxu0
      %v4872 = vadd.f32 0.0, %v4871
      %v4873 = vpop.f32.mrb[0].mxu0
      %v4874 = vpop.f32.mrb[0].mxu0
      %v4875 = vadd.f32 0.0, %v4874
      %v4876 = vpop.f32.mrb[0].mxu0
      %4877 = vmatprep.mubr.bf16.mxu0 0
      %4878 = vmatmul.mubr.bf16.gmra.mrb[0].mxu0 %v4793
      %v4879 = vpop.f32.mrb[0].mxu0
      %v4880 = vadd.f32 0.0, %v4879
      %v4881 = vpop.f32.mrb[0].mxu0
      %v4882 = vpop.f32.mrb[0].mxu0
      %v4883 = vadd.f32 0.0, %v4882
      %v4884 = vpop.f32.mrb[0].mxu0
      %4885 = vmatprep.mubr.bf16.mxu0 0
      %4886 = vmatmul.mubr.bf16.gmra.mrb[0].mxu0 %v4796
      %v4887 = vpop.f32.mrb[0].mxu0
      %v4888 = vadd.f32 0.0, %v4887
      %v4889 = vpop.f32.mrb[0].mxu0
      %v4890 = vpop.f32.mrb[0].mxu0
      %v4891 = vadd.f32 0.0, %v4890
      %v4892 = vpop.f32.mrb[0].mxu0
      %4893 = vmatprep.mubr.bf16.mxu0 0
      %4894 = vmatmul.mubr.bf16.gmra.mrb[0].mxu0 %v4799
      %v4895 = vpop.f32.mrb[0].mxu0
      %v4896 = vadd.f32 0.0, %v4895
      %v4897 = vpop.f32.mrb[0].mxu0
      %v4898 = vpop.f32.mrb[0].mxu0
      %v4899 = vadd.f32 0.0, %v4898
      %v4900 = vpop.f32.mrb[0].mxu0
      %4901 = vmatprep.mubr.bf16.mxu0 0
      %4902 = vmatmul.mubr.bf16.gmra.mrb[0].mxu0 %v4802
      %v4903 = vpop.f32.mrb[0].mxu0
      %v4904 = vadd.f32 0.0, %v4903
      %v4905 = vpop.f32.mrb[0].mxu0
      %v4906 = vpop.f32.mrb[0].mxu0
      %v4907 = vadd.f32 0.0, %v4906
      %v4908 = vpop.f32.mrb[0].mxu0
      %4909 = vmatprep.mubr.bf16.mxu0 0
      %4910 = vmatmul.mubr.bf16.gmra.mrb[0].mxu0 %v4805
      %v4911 = vpop.f32.mrb[0].mxu0
      %v4912 = vadd.f32 0.0, %v4911
      %v4913 = vpop.f32.mrb[0].mxu0
      %v4914 = vpop.f32.mrb[0].mxu0
      %v4915 = vadd.f32 0.0, %v4914
      %v4916 = vpop.f32.mrb[0].mxu0
      %4917 = vmatprep.mubr.bf16.mxu0 0
      %4918 = vmatmul.mubr.bf16.gmra.mrb[0].mxu0 %v4808
      %v4919 = vpop.f32.mrb[0].mxu0
      %v4920 = vadd.f32 0.0, %v4919
      %v4921 = vpop.f32.mrb[0].mxu0
      %v4922 = vpop.f32.mrb[0].mxu0
      %v4923 = vadd.f32 0.0, %v4922
      %v4924 = vpop.f32.mrb[0].mxu0
      %4925 = vmatprep.mubr.bf16.mxu0 0
      %4926 = vmatmul.mubr.bf16.gmra.mrb[0].mxu0 %v4811
      %v4927 = vpop.f32.mrb[0].mxu0
      %v4928 = vadd.f32 0.0, %v4927
      %v4929 = vpop.f32.mrb[0].mxu0
      %v4930 = vpop.f32.mrb[0].mxu0
      %v4931 = vadd.f32 0.0, %v4930
      %v4932 = vpop.f32.mrb[0].mxu0
      %4933 = vmatprep.mubr.bf16.mxu0 0
      %4934 = vmatmul.mubr.bf16.gmra.mrb[0].mxu0 %v4814
      %v4935 = vpop.f32.mrb[0].mxu0
      %v4936 = vadd.f32 0.0, %v4935
      %v4937 = vpop.f32.mrb[0].mxu0
      %v4938 = vpop.f32.mrb[0].mxu0
      %v4939 = vadd.f32 0.0, %v4938
      %v4940 = vpop.f32.mrb[0].mxu0
      %4941 = vmatprep.mubr.bf16.mxu0 0
      %4942 = vmatmul.mubr.bf16.gmra.mrb[0].mxu0 %v4817
      %v4943 = vpop.f32.mrb[0].mxu0
      %v4944 = vadd.f32 0.0, %v4943
      %v4945 = vpop.f32.mrb[0].mxu0
      %v4946 = vpop.f32.mrb[0].mxu0
      %v4947 = vadd.f32 0.0, %v4946
      %v4948 = vpop.f32.mrb[0].mxu0
      %4949 = vmatprep.mubr.bf16.mxu0 0
      %4950 = vmatmul.mubr.bf16.gmra.mrb[0].mxu0 %v4820
      %v4951 = vpop.f32.mrb[0].mxu0
      %v4952 = vadd.f32 0.0, %v4951
      %v4953 = vpop.f32.mrb[0].mxu0
      %v4954 = vpop.f32.mrb[0].mxu0
      %v4955 = vadd.f32 0.0, %v4954
      %v4956 = vpop.f32.mrb[0].mxu0
      %4957 = vmatprep.mubr.bf16.mxu0 0
      %4958 = vmatmul.mubr.bf16.gmra.mrb[0].mxu0 %v4823
      %v4959 = vpop.f32.mrb[0].mxu0
      %v4960 = vadd.f32 0.0, %v4959
      %v4961 = vpop.f32.mrb[0].mxu0
      %v4962 = vpop.f32.mrb[0].mxu0
      %v4963 = vadd.f32 0.0, %v4962
      %v4964 = vpop.f32.mrb[0].mxu0
      %4965 = vmatprep.mubr.bf16.mxu0 0
      %4966 = vmatmul.mubr.bf16.gmra.mrb[0].mxu0 %v4826
      %v4967 = vpop.f32.mrb[0].mxu0
      %v4968 = vadd.f32 0.0, %v4967
      %v4969 = vpop.f32.mrb[0].mxu0
      %v4970 = vpop.f32.mrb[0].mxu0
      %v4971 = vadd.f32 0.0, %v4970
      %v4972 = vpop.f32.mrb[0].mxu0
      %4973 = vmatprep.mubr.bf16.mxu0 0
      %4974 = vmatmul.mubr.bf16.gmra.mrb[0].mxu0 %v4829
      %v4975 = vpop.f32.mrb[0].mxu0
      %v4976 = vadd.f32 0.0, %v4975
      %v4977 = vpop.f32.mrb[0].mxu0
      %v4978 = vpop.f32.mrb[0].mxu0
      %v4979 = vadd.f32 0.0, %v4978
      %v4980 = vpop.f32.mrb[0].mxu0
      %4981 = vmatprep.mubr.bf16.mxu0 0
      %4982 = vmatmul.mubr.bf16.gmra.mrb[0].mxu0 %v4832
      %v4983 = vpop.f32.mrb[0].mxu0
      %v4984 = vadd.f32 0.0, %v4983
      %v4985 = vpop.f32.mrb[0].mxu0
      %v4986 = vpop.f32.mrb[0].mxu0
      %v4987 = vadd.f32 0.0, %v4986
      %v4988 = vpop.f32.mrb[0].mxu0
      %4989 = vmatprep.mubr.bf16.mxu0 0
      %4990 = vmatmul.mubr.bf16.gmra.mrb[0].mxu0 %v4835
      %v4991 = vpop.f32.mrb[0].mxu0
      %v4992 = vadd.f32 0.0, %v4991
      %v4993 = vpop.f32.mrb[0].mxu0
      %v4994 = vpop.f32.mrb[0].mxu0
      %v4995 = vadd.f32 0.0, %v4994
      %v4996 = vpop.f32.mrb[0].mxu0
      %4997 = vdwg.mxu0
      %v4998 = vadd.f32 %v4500, %v4872
      %v4999 = vadd.f32 %v4501, %v4875
      %v5000 = vadd.f32 %v4502, %v4880
      %v5001 = vadd.f32 %v4503, %v4883
      %v5002 = vadd.f32 %v4504, %v4888
      %v5003 = vadd.f32 %v4505, %v4891
      %v5004 = vadd.f32 %v4506, %v4896
      %v5005 = vadd.f32 %v4507, %v4899
      %v5006 = vadd.f32 %v4508, %v4904
      %v5007 = vadd.f32 %v4509, %v4907
      %v5008 = vadd.f32 %v4510, %v4912
      %v5009 = vadd.f32 %v4511, %v4915
      %v5010 = vadd.f32 %v4512, %v4920
      %v5011 = vadd.f32 %v4513, %v4923
      %v5012 = vadd.f32 %v4514, %v4928
      %v5013 = vadd.f32 %v4515, %v4931
      %v5014 = vadd.f32 %v4516, %v4936
      %v5015 = vadd.f32 %v4517, %v4939
      %v5016 = vadd.f32 %v4518, %v4944
      %v5017 = vadd.f32 %v4519, %v4947
      %v5018 = vadd.f32 %v4520, %v4952
      %v5019 = vadd.f32 %v4521, %v4955
      %v5020 = vadd.f32 %v4522, %v4960
      %v5021 = vadd.f32 %v4523, %v4963
      %v5022 = vadd.f32 %v4524, %v4968
      %v5023 = vadd.f32 %v4525, %v4971
      %v5024 = vadd.f32 %v4526, %v4976
      %v5025 = vadd.f32 %v4527, %v4979
      %v5026 = vadd.f32 %v4528, %v4984
      %v5027 = vadd.f32 %v4529, %v4987
      %v5028 = vadd.f32 %v4530, %v4992
      %v5029 = vadd.f32 %v4531, %v4995
      %v5030 = vpack.c.bf16 %v4999, %v4998
      %v5031 = vpack.c.bf16 %v5001, %v5000
      %v5032 = vpack.c.bf16 %v5003, %v5002
      %v5033 = vpack.c.bf16 %v5005, %v5004
      %v5034 = vpack.c.bf16 %v5007, %v5006
      %v5035 = vpack.c.bf16 %v5009, %v5008
      %v5036 = vpack.c.bf16 %v5011, %v5010
      %v5037 = vpack.c.bf16 %v5013, %v5012
      %v5038 = vpack.c.bf16 %v5015, %v5014
      %v5039 = vpack.c.bf16 %v5017, %v5016
      %v5040 = vpack.c.bf16 %v5019, %v5018
      %v5041 = vpack.c.bf16 %v5021, %v5020
      %v5042 = vpack.c.bf16 %v5023, %v5022
      %v5043 = vpack.c.bf16 %v5025, %v5024
      %v5044 = vpack.c.bf16 %v5027, %v5026
      %v5045 = vpack.c.bf16 %v5029, %v5028
      %v5062 = vunpack.c.l.b16 %v5030
      %v5063 = vunpack.c.h.b16 %v5030
      %v5064 = vunpack.c.l.b16 %v5031
      %v5065 = vunpack.c.h.b16 %v5031
      %v5066 = vunpack.c.l.b16 %v5032
      %v5067 = vunpack.c.h.b16 %v5032
      %v5068 = vunpack.c.l.b16 %v5033
      %v5069 = vunpack.c.h.b16 %v5033
      %v5070 = vunpack.c.l.b16 %v5034
      %v5071 = vunpack.c.h.b16 %v5034
      %v5072 = vunpack.c.l.b16 %v5035
      %v5073 = vunpack.c.h.b16 %v5035
      %v5074 = vunpack.c.l.b16 %v5036
      %v5075 = vunpack.c.h.b16 %v5036
      %v5076 = vunpack.c.l.b16 %v5037
      %v5077 = vunpack.c.h.b16 %v5037
      %v5078 = vunpack.c.l.b16 %v5038
      %v5079 = vunpack.c.h.b16 %v5038
      %v5080 = vunpack.c.l.b16 %v5039
      %v5081 = vunpack.c.h.b16 %v5039
      %v5082 = vunpack.c.l.b16 %v5040
      %v5083 = vunpack.c.h.b16 %v5040
      %v5084 = vunpack.c.l.b16 %v5041
      %v5085 = vunpack.c.h.b16 %v5041
      %v5086 = vunpack.c.l.b16 %v5042
      %v5087 = vunpack.c.h.b16 %v5042
      %v5088 = vunpack.c.l.b16 %v5043
      %v5089 = vunpack.c.h.b16 %v5043
      %v5090 = vunpack.c.l.b16 %v5044
      %v5091 = vunpack.c.h.b16 %v5044
      %v5092 = vunpack.c.l.b16 %v5045
      %v5093 = vunpack.c.h.b16 %v5045
      %v5094 = vpack.c.b16 %v5062, %v5062
      %v5095 = vpack.c.b16 %v5063, %v5063
      %v5096 = vpack.c.b16 %v5064, %v5064
      %v5097 = vpack.c.b16 %v5065, %v5065
      %v5098 = vpack.c.b16 %v5066, %v5066
      %v5099 = vpack.c.b16 %v5067, %v5067
      %v5100 = vpack.c.b16 %v5068, %v5068
      %v5101 = vpack.c.b16 %v5069, %v5069
      %v5102 = vpack.c.b16 %v5070, %v5070
      %v5103 = vpack.c.b16 %v5071, %v5071
      %v5104 = vpack.c.b16 %v5072, %v5072
      %v5105 = vpack.c.b16 %v5073, %v5073
      %v5106 = vpack.c.b16 %v5074, %v5074
      %v5107 = vpack.c.b16 %v5075, %v5075
      %v5108 = vpack.c.b16 %v5076, %v5076
      %v5109 = vpack.c.b16 %v5077, %v5077
      %v5110 = vpack.c.b16 %v5078, %v5078
      %v5111 = vpack.c.b16 %v5079, %v5079
      %v5112 = vpack.c.b16 %v5080, %v5080
      %v5113 = vpack.c.b16 %v5081, %v5081
      %v5114 = vpack.c.b16 %v5082, %v5082
      %v5115 = vpack.c.b16 %v5083, %v5083
      %v5116 = vpack.c.b16 %v5084, %v5084
      %v5117 = vpack.c.b16 %v5085, %v5085
      %v5118 = vpack.c.b16 %v5086, %v5086
      %v5119 = vpack.c.b16 %v5087, %v5087
      %v5120 = vpack.c.b16 %v5088, %v5088
      %v5121 = vpack.c.b16 %v5089, %v5089
      %v5122 = vpack.c.b16 %v5090, %v5090
      %v5123 = vpack.c.b16 %v5091, %v5091
      %v5124 = vpack.c.b16 %v5092, %v5092
      %v5125 = vpack.c.b16 %v5093, %v5093
      %vm5158 = vcmask 519168
      %5159 = vst.msk [vmem:[%s210] sm:$0xf] %vm5158, %v5094
      %5160 = vst.msk [vmem:[%s210 + $0x4] sm:$0xf] %vm5158, %v5095
      %5161 = vst.msk [vmem:[%s210 + $0x8] sm:$0xf] %vm5158, %v5096
      %5162 = vst.msk [vmem:[%s210 + $0xc] sm:$0xf] %vm5158, %v5097
      %5163 = vst.msk [vmem:[%s210 + $0x10] sm:$0xf] %vm5158, %v5098
      %5164 = vst.msk [vmem:[%s210 + $0x14] sm:$0xf] %vm5158, %v5099
      %5165 = vst.msk [vmem:[%s210 + $0x18] sm:$0xf] %vm5158, %v5100
      %5166 = vst.msk [vmem:[%s210 + $0x1c] sm:$0xf] %vm5158, %v5101
      %5167 = vst.msk [vmem:[%s210 + $0x20] sm:$0xf] %vm5158, %v5102
      %5168 = vst.msk [vmem:[%s210 + $0x24] sm:$0xf] %vm5158, %v5103
      %5169 = vst.msk [vmem:[%s210 + $0x28] sm:$0xf] %vm5158, %v5104
      %5170 = vst.msk [vmem:[%s210 + $0x2c] sm:$0xf] %vm5158, %v5105
      %5171 = vst.msk [vmem:[%s210 + $0x30] sm:$0xf] %vm5158, %v5106
      %5172 = vst.msk [vmem:[%s210 + $0x34] sm:$0xf] %vm5158, %v5107
      %5173 = vst.msk [vmem:[%s210 + $0x38] sm:$0xf] %vm5158, %v5108
      %5174 = vst.msk [vmem:[%s210 + $0x3c] sm:$0xf] %vm5158, %v5109
      %5175 = vst.msk [vmem:[%s210 + $0x40] sm:$0xf] %vm5158, %v5110
      %5176 = vst.msk [vmem:[%s210 + $0x44] sm:$0xf] %vm5158, %v5111
      %5177 = vst.msk [vmem:[%s210 + $0x48] sm:$0xf] %vm5158, %v5112
      %5178 = vst.msk [vmem:[%s210 + $0x4c] sm:$0xf] %vm5158, %v5113
      %5179 = vst.msk [vmem:[%s210 + $0x50] sm:$0xf] %vm5158, %v5114
      %5180 = vst.msk [vmem:[%s210 + $0x54] sm:$0xf] %vm5158, %v5115
      %5181 = vst.msk [vmem:[%s210 + $0x58] sm:$0xf] %vm5158, %v5116
      %5182 = vst.msk [vmem:[%s210 + $0x5c] sm:$0xf] %vm5158, %v5117
      %5183 = vst.msk [vmem:[%s210 + $0x60] sm:$0xf] %vm5158, %v5118
      %5184 = vst.msk [vmem:[%s210 + $0x64] sm:$0xf] %vm5158, %v5119
      %5185 = vst.msk [vmem:[%s210 + $0x68] sm:$0xf] %vm5158, %v5120
      %5186 = vst.msk [vmem:[%s210 + $0x6c] sm:$0xf] %vm5158, %v5121
      %5187 = vst.msk [vmem:[%s210 + $0x70] sm:$0xf] %vm5158, %v5122
      %5188 = vst.msk [vmem:[%s210 + $0x74] sm:$0xf] %vm5158, %v5123
      %5189 = vst.msk [vmem:[%s210 + $0x78] sm:$0xf] %vm5158, %v5124
      %5190 = vst.msk [vmem:[%s210 + $0x7c] sm:$0xf] %vm5158, %v5125
      %v5191 = vsel %vm744, %v4998, 0.0
      %v5192 = vsel %vm744, %v4999, 0.0
      %v5193 = vadd.f32 %v5191, %v5192
      %v5194 = vsel %vm744, %v5000, 0.0
      %v5195 = vadd.f32 %v5193, %v5194
      %v5196 = vsel %vm744, %v5001, 0.0
      %v5197 = vadd.f32 %v5195, %v5196
      %v5198 = vsel %vm744, %v5002, 0.0
      %v5199 = vadd.f32 %v5197, %v5198
      %v5200 = vsel %vm744, %v5003, 0.0
      %v5201 = vadd.f32 %v5199, %v5200
      %v5202 = vsel %vm744, %v5004, 0.0
      %v5203 = vadd.f32 %v5201, %v5202
      %v5204 = vsel %vm744, %v5005, 0.0
      %v5205 = vadd.f32 %v5203, %v5204
      %v5206 = vsel %vm744, %v5006, 0.0
      %v5207 = vadd.f32 %v5205, %v5206
      %v5208 = vsel %vm744, %v5007, 0.0
      %v5209 = vadd.f32 %v5207, %v5208
      %v5210 = vsel %vm744, %v5008, 0.0
      %v5211 = vadd.f32 %v5209, %v5210
      %v5212 = vsel %vm744, %v5009, 0.0
      %v5213 = vadd.f32 %v5211, %v5212
      %v5214 = vsel %vm744, %v5010, 0.0
      %v5215 = vadd.f32 %v5213, %v5214
      %v5216 = vsel %vm744, %v5011, 0.0
      %v5217 = vadd.f32 %v5215, %v5216
      %v5218 = vsel %vm744, %v5012, 0.0
      %v5219 = vadd.f32 %v5217, %v5218
      %v5220 = vsel %vm744, %v5013, 0.0
      %v5221 = vadd.f32 %v5219, %v5220
      %v5222 = vsel %vm744, %v5014, 0.0
      %v5223 = vadd.f32 %v5221, %v5222
      %v5224 = vsel %vm744, %v5015, 0.0
      %v5225 = vadd.f32 %v5223, %v5224
      %v5226 = vsel %vm744, %v5016, 0.0
      %v5227 = vadd.f32 %v5225, %v5226
      %v5228 = vsel %vm744, %v5017, 0.0
      %v5229 = vadd.f32 %v5227, %v5228
      %v5230 = vsel %vm744, %v5018, 0.0
      %v5231 = vadd.f32 %v5229, %v5230
      %v5232 = vsel %vm744, %v5019, 0.0
      %v5233 = vadd.f32 %v5231, %v5232
      %v5234 = vsel %vm744, %v5020, 0.0
      %v5235 = vadd.f32 %v5233, %v5234
      %v5236 = vsel %vm744, %v5021, 0.0
      %v5237 = vadd.f32 %v5235, %v5236
      %v5238 = vsel %vm744, %v5022, 0.0
      %v5239 = vadd.f32 %v5237, %v5238
      %v5240 = vsel %vm744, %v5023, 0.0
      %v5241 = vadd.f32 %v5239, %v5240
      %v5242 = vsel %vm744, %v5024, 0.0
      %v5243 = vadd.f32 %v5241, %v5242
      %v5244 = vsel %vm744, %v5025, 0.0
      %v5245 = vadd.f32 %v5243, %v5244
      %v5246 = vsel %vm744, %v5026, 0.0
      %v5247 = vadd.f32 %v5245, %v5246
      %v5248 = vsel %vm744, %v5027, 0.0
      %v5249 = vadd.f32 %v5247, %v5248
      %v5250 = vsel %vm744, %v5028, 0.0
      %v5251 = vadd.f32 %v5249, %v5250
      %v5252 = vsel %vm744, %v5029, 0.0
      %v5253 = vadd.f32 %v5251, %v5252
      %v5254 = vrot.slane %v5253, 4
      %v5255 = vadd.f32 %v5253, %v5254
      %v5256 = vrot.slane %v5255, 2
      %v5257 = vadd.f32 %v5255, %v5256
      %v5258 = vrot.slane %v5257, 1
      %v5259 = vadd.f32 %v5257, %v5258
      %v5260 = vmul.f32 %v4998, %v4998
      %v5261 = vmul.f32 %v4999, %v4999
      %v5262 = vmul.f32 %v5000, %v5000
      %v5263 = vmul.f32 %v5001, %v5001
      %v5264 = vmul.f32 %v5002, %v5002
      %v5265 = vmul.f32 %v5003, %v5003
      %v5266 = vmul.f32 %v5004, %v5004
      %v5267 = vmul.f32 %v5005, %v5005
      %v5268 = vmul.f32 %v5006, %v5006
      %v5269 = vmul.f32 %v5007, %v5007
      %v5270 = vmul.f32 %v5008, %v5008
      %v5271 = vmul.f32 %v5009, %v5009
      %v5272 = vmul.f32 %v5010, %v5010
      %v5273 = vmul.f32 %v5011, %v5011
      %v5274 = vmul.f32 %v5012, %v5012
      %v5275 = vmul.f32 %v5013, %v5013
      %v5276 = vmul.f32 %v5014, %v5014
      %v5277 = vmul.f32 %v5015, %v5015
      %v5278 = vmul.f32 %v5016, %v5016
      %v5279 = vmul.f32 %v5017, %v5017
      %v5280 = vmul.f32 %v5018, %v5018
      %v5281 = vmul.f32 %v5019, %v5019
      %v5282 = vmul.f32 %v5020, %v5020
      %v5283 = vmul.f32 %v5021, %v5021
      %v5284 = vmul.f32 %v5022, %v5022
      %v5285 = vmul.f32 %v5023, %v5023
      %v5286 = vmul.f32 %v5024, %v5024
      %v5287 = vmul.f32 %v5025, %v5025
      %v5288 = vmul.f32 %v5026, %v5026
      %v5289 = vmul.f32 %v5027, %v5027
      %v5290 = vmul.f32 %v5028, %v5028
      %v5291 = vmul.f32 %v5029, %v5029
      %v5292 = vsel %vm744, %v5260, 0.0
      %v5293 = vsel %vm744, %v5261, 0.0
      %v5294 = vadd.f32 %v5292, %v5293
      %v5295 = vsel %vm744, %v5262, 0.0
      %v5296 = vadd.f32 %v5294, %v5295
      %v5297 = vsel %vm744, %v5263, 0.0
      %v5298 = vadd.f32 %v5296, %v5297
      %v5299 = vsel %vm744, %v5264, 0.0
      %v5300 = vadd.f32 %v5298, %v5299
      %v5301 = vsel %vm744, %v5265, 0.0
      %v5302 = vadd.f32 %v5300, %v5301
      %v5303 = vsel %vm744, %v5266, 0.0
      %v5304 = vadd.f32 %v5302, %v5303
      %v5305 = vsel %vm744, %v5267, 0.0
      %v5306 = vadd.f32 %v5304, %v5305
      %v5307 = vsel %vm744, %v5268, 0.0
      %v5308 = vadd.f32 %v5306, %v5307
      %v5309 = vsel %vm744, %v5269, 0.0
      %v5310 = vadd.f32 %v5308, %v5309
      %v5311 = vsel %vm744, %v5270, 0.0
      %v5312 = vadd.f32 %v5310, %v5311
      %v5313 = vsel %vm744, %v5271, 0.0
      %v5314 = vadd.f32 %v5312, %v5313
      %v5315 = vsel %vm744, %v5272, 0.0
      %v5316 = vadd.f32 %v5314, %v5315
      %v5317 = vsel %vm744, %v5273, 0.0
      %v5318 = vadd.f32 %v5316, %v5317
      %v5319 = vsel %vm744, %v5274, 0.0
      %v5320 = vadd.f32 %v5318, %v5319
      %v5321 = vsel %vm744, %v5275, 0.0
      %v5322 = vadd.f32 %v5320, %v5321
      %v5323 = vsel %vm744, %v5276, 0.0
      %v5324 = vadd.f32 %v5322, %v5323
      %v5325 = vsel %vm744, %v5277, 0.0
      %v5326 = vadd.f32 %v5324, %v5325
      %v5327 = vsel %vm744, %v5278, 0.0
      %v5328 = vadd.f32 %v5326, %v5327
      %v5329 = vsel %vm744, %v5279, 0.0
      %v5330 = vadd.f32 %v5328, %v5329
      %v5331 = vsel %vm744, %v5280, 0.0
      %v5332 = vadd.f32 %v5330, %v5331
      %v5333 = vsel %vm744, %v5281, 0.0
      %v5334 = vadd.f32 %v5332, %v5333
      %v5335 = vsel %vm744, %v5282, 0.0
      %v5336 = vadd.f32 %v5334, %v5335
      %v5337 = vsel %vm744, %v5283, 0.0
      %v5338 = vadd.f32 %v5336, %v5337
      %v5339 = vsel %vm744, %v5284, 0.0
      %v5340 = vadd.f32 %v5338, %v5339
      %v5341 = vsel %vm744, %v5285, 0.0
      %v5342 = vadd.f32 %v5340, %v5341
      %v5343 = vsel %vm744, %v5286, 0.0
      %v5344 = vadd.f32 %v5342, %v5343
      %v5345 = vsel %vm744, %v5287, 0.0
      %v5346 = vadd.f32 %v5344, %v5345
      %v5347 = vsel %vm744, %v5288, 0.0
      %v5348 = vadd.f32 %v5346, %v5347
      %v5349 = vsel %vm744, %v5289, 0.0
      %v5350 = vadd.f32 %v5348, %v5349
      %v5351 = vsel %vm744, %v5290, 0.0
      %v5352 = vadd.f32 %v5350, %v5351
      %v5353 = vsel %vm744, %v5291, 0.0
      %v5354 = vadd.f32 %v5352, %v5353
      %v5355 = vrot.slane %v5354, 4
      %v5356 = vadd.f32 %v5354, %v5355
      %v5357 = vrot.slane %v5356, 2
      %v5358 = vadd.f32 %v5356, %v5357
      %v5359 = vrot.slane %v5358, 1
      %v5360 = vadd.f32 %v5358, %v5359
      %v5361 = vlaneseq
      %v5362 = vshrl.u32 %v5361, 7
      %vm5363 = vcmp.eq.s32.totalorder %v5362, 0
      %v5364 = vsel %vm5363, %v5259, 0.0
      %5365 = vst.msk [vmem:[%s214] sm:$0xff] %vm744, %v5364
      %v5366 = vsel %vm5363, %v5360, 0.0
      %5367 = vst.msk [vmem:[%s218] sm:$0xff] %vm744, %v5366
      %p5368 = scmp.lt.s32.totalorder %s16, 1
      %s5369 = scalar_select %p5368, %s16, 1
      %s5370 = smul.addr %s5369, 32
      %s5371 = smul.addr %s5370, 4
      %s5372 = scalar_lea.vmem %s2, %s5371
      %p5373 = scmp.lt.s32.totalorder %s16, 1
      %s5374 = scalar_select %p5373, %s16, 1
      %s5375 = smul.addr %s5374, 8
      %s5376 = scalar_lea.vmem %s3, %s5375
      %p5377 = scmp.lt.s32.totalorder %s16, 1
      %s5378 = scalar_select %p5377, %s16, 1
      %s5379 = smul.addr %s5378, 8
      %s5380 = scalar_lea.vmem %s4, %s5379
      // Predicated region
      $region29: #{resnetblock4_forward.7} parent=27 // pred_check
        %p5381 = pneg %p81
      $region30: #{resnetblock4_forward.7} parent=27 // pred_check_branch
        %5383 = sbr.rel (%p5381) target = $region32
      $region31: #{resnetblock4_forward.7} parent=27 // pred_region
        _
      $region32: #{resnetblock4_forward.7} parent=27 // pred_fallthru
        _
      // Predicated region
      $region33: #{resnetblock4_forward.7} parent=27 // pred_check
        %p5384 = pneg %p107
      $region34: #{resnetblock4_forward.7} parent=27 // pred_check_branch
        %5386 = sbr.rel (%p5384) target = $region36
      $region35: #{resnetblock4_forward.7} parent=27 // pred_region
        _
      $region36: #{resnetblock4_forward.7} parent=27 // pred_fallthru
        _
      // Predicated region
      $region37: #{resnetblock4_forward.7} parent=27 // pred_check
        %p5387 = pneg %p133
      $region38: #{resnetblock4_forward.7} parent=27 // pred_check_branch
        %5389 = sbr.rel (%p5387) target = $region40
      $region39: #{resnetblock4_forward.7} parent=27 // pred_region
        _
      $region40: #{resnetblock4_forward.7} parent=27 // pred_fallthru
        _
    $region28: #{resnetblock4_forward.7} parent=5 // pred_fallthru
      _
    %p5390 = scmp.le.s32.totalorder 2, %s11
    // Predicated region
    $region41: #{resnetblock4_forward.7} parent=5 // pred_check
      %p5391 = pneg %p5390
    $region42: #{resnetblock4_forward.7} parent=5 // pred_check_branch
      %5393 = sbr.rel (%p5391) target = $region44
    $region43: #{resnetblock4_forward.7} parent=5 // pred_region
      %s5394 = ssub.s32 %s11, 2
      // Predicated region
      $region45: #{resnetblock4_forward.7} parent=43 // pred_check
        %p5395 = pneg %p87
      $region46: #{resnetblock4_forward.7} parent=43 // pred_check_branch
        %5397 = sbr.rel (%p5395) target = $region48
      $region47: #{resnetblock4_forward.7} parent=43 // pred_region
        %p5398 = scmp.lt.s32.totalorder %s17, 1
        %s5399 = scalar_select %p5398, %s17, 1
        %s5400 = smul.addr %s5399, 32
        %s5401 = smul.addr %s5400, 4
        %s5402 = scalar_lea.vmem %s2, %s5401
      $region48: #{resnetblock4_forward.7} parent=43 // pred_fallthru
        _
      // Predicated region
      $region49: #{resnetblock4_forward.7} parent=43 // pred_check
        %p5403 = pneg %p113
      $region50: #{resnetblock4_forward.7} parent=43 // pred_check_branch
        %5405 = sbr.rel (%p5403) target = $region52
      $region51: #{resnetblock4_forward.7} parent=43 // pred_region
        %p5406 = scmp.lt.s32.totalorder %s17, 1
        %s5407 = scalar_select %p5406, %s17, 1
        %s5408 = smul.addr %s5407, 8
        %s5409 = scalar_lea.vmem %s3, %s5408
      $region52: #{resnetblock4_forward.7} parent=43 // pred_fallthru
        _
      // Predicated region
      $region53: #{resnetblock4_forward.7} parent=43 // pred_check
        %p5410 = pneg %p139
      $region54: #{resnetblock4_forward.7} parent=43 // pred_check_branch
        %5412 = sbr.rel (%p5410) target = $region56
      $region55: #{resnetblock4_forward.7} parent=43 // pred_region
        %p5413 = scmp.lt.s32.totalorder %s17, 1
        %s5414 = scalar_select %p5413, %s17, 1
        %s5415 = smul.addr %s5414, 8
        %s5416 = scalar_lea.vmem %s4, %s5415
      $region56: #{resnetblock4_forward.7} parent=43 // pred_fallthru
        _
    $region44: #{resnetblock4_forward.7} parent=5 // pred_fallthru
      _
  $region6: #{resnetblock4_forward.7} parent=0 // loop_footer
    %s15 = sadd.s32 1, %s11
  $region7: #{resnetblock4_forward.7} parent=0 // loop_footer_branch
    %10 = sbr.rel target = $region3
  $region8: #{resnetblock4_forward.7} parent=0 // loop_exit
    _

</llo_original>
